<compile_context>
chip_gen: v7x
topology: tpu7x:2x2x1
jax: 0.10.0
libtpu: 0.0.40
codegen_flags: <defaults>
</compile_context>

<pallas_src>
import functools

import numpy as np
import jax
import jax.numpy as jnp
from jax.experimental import pallas as pl
from jax.experimental.pallas import tpu as pltpu

_BN_EPS = 1e-5
_LANES = 128
_STATS_ROWS = 8          # per-tile (sum, sumsq) rows, padded to a sublane tile


def _round_up(x, m):
    return ((x + m - 1) // m) * m


@functools.lru_cache(maxsize=None)
def _tile_config():
    """Returns (max M-tile rows, vmem_limit_bytes) per TPU generation."""
    try:
        kind = jax.devices()[0].device_kind.lower()
    except Exception:  # pragma: no cover - defensive fallback
        kind = ""
    if "v7" in kind:      # 64 MiB VMEM/core: cap tiles to keep double buffering
        return 1024, 48 * 1024 * 1024
    if "v6" in kind:      # 128 MiB VMEM
        return 2048, 64 * 1024 * 1024
    if "v5" in kind:      # 128 MiB VMEM, lowest HBM BW -> biggest tiles
        return 4096, 96 * 1024 * 1024
    return 1024, 32 * 1024 * 1024


# ---------------------------------------------------------------------------
# Pallas kernels
# ---------------------------------------------------------------------------
def _gemm_stats_kernel(p_ref, w_ref, y_ref, ps_ref):
    """Stem pass 1: (tile_m, K) x (K, Cout) GEMM (bf16 -> f32 acc) plus this
    tile's per-channel sum / sum-of-squares in rows 0 and 1 of ps_ref."""
    y = jnp.dot(p_ref[...], w_ref[...], preferred_element_type=jnp.float32)
    ps_ref[0:1, :] = jnp.sum(y, axis=0, keepdims=True)
    ps_ref[1:2, :] = jnp.sum(y * y, axis=0, keepdims=True)
    y_ref[...] = y.astype(y_ref.dtype)


def _conv3x3_stats_kernel(x_ref, w_ref, mask_ref, y_ref, ps_ref, *, wp, ext):
    """3x3/s1/p1 conv pass 1 without im2col.

    x_ref holds the whole zero-padded, per-image flattened activation
    (resident in VMEM, fetched from HBM once).  The 9 taps are shifted
    (tile_m, Cin) x (Cin, Cout) matmuls accumulated in f32.  Outputs live on
    the padded (H+2)x(W+2) frame; mask_ref (1.0 on valid rows) keeps the
    frame's garbage columns/rows out of the BN statistics.
    """
    tile_m, cout = y_ref.shape
    i = pl.program_id(0)
    base = pl.multiple_of(i * tile_m, 256)
    xt = x_ref[pl.ds(base, tile_m + ext), :]          # one aligned window load
    acc = jnp.zeros((tile_m, cout), jnp.float32)
    for di in range(3):
        for dj in range(3):
            off = di * wp + dj
            acc = acc + jnp.dot(xt[off:off + tile_m, :],
                                w_ref[di * 3 + dj],
                                preferred_element_type=jnp.float32)
    valid = mask_ref[...]                             # (tile_m, 1) f32
    yv = acc * valid
    ps_ref[0:1, :] = jnp.sum(yv, axis=0, keepdims=True)
    ps_ref[1:2, :] = jnp.sum(yv * acc, axis=0, keepdims=True)
    y_ref[...] = acc.astype(y_ref.dtype)


def _affine_relu_kernel(y_ref, sc_ref, sh_ref, o_ref):
    """Pass 2: lane-dense fused BN affine + ReLU (bf16 in / bf16 out)."""
    y = y_ref[...].astype(jnp.float32)
    o_ref[...] = jnp.maximum(y * sc_ref[...] + sh_ref[...], 0.0).astype(o_ref.dtype)


def _maxpool_kernel(ee_ref, eo_ref, oe_ref, oo_ref, o_ref):
    """3x3 / stride-2 max pool as a 9-tap max over 4 parity-split slabs."""
    oh, ow = oo_ref.shape[1], oo_ref.shape[2]
    ee = ee_ref[...]          # (1, oh+1, ow+1, C)  even rows / even cols
    eo = eo_ref[...]          # (1, oh+1, ow,   C)  even rows / odd  cols
    oe = oe_ref[...]          # (1, oh,   ow+1, C)  odd  rows / even cols
    m = oo_ref[...]           # (1, oh,   ow,   C)  odd  rows / odd  cols
    m = jnp.maximum(m, ee[:, :oh, :ow, :])
    m = jnp.maximum(m, ee[:, :oh, 1:, :])
    m = jnp.maximum(m, ee[:, 1:, :ow, :])
    m = jnp.maximum(m, ee[:, 1:, 1:, :])
    m = jnp.maximum(m, eo[:, :oh, :, :])
    m = jnp.maximum(m, eo[:, 1:, :, :])
    m = jnp.maximum(m, oe[:, :, :ow, :])
    m = jnp.maximum(m, oe[:, :, 1:, :])
    o_ref[...] = m


def _head_kernel(x_ref, w_ref, b_ref, o_ref, *, inv_hw):
    """AdaptiveAvgPool(1,1) + Linear + sigmoid fused in one kernel."""
    pooled = jnp.sum(x_ref[...].astype(jnp.float32), axis=1) * inv_hw   # (N, C)
    logits = jnp.dot(pooled, w_ref[...],
                     preferred_element_type=jnp.float32) + b_ref[...]
    o_ref[...] = 0.5 * (jnp.tanh(0.5 * logits) + 1.0)                   # sigmoid


# ---------------------------------------------------------------------------
# Shared helpers
# ---------------------------------------------------------------------------
def _scale_shift(psum, count, gamma, beta):
    """Combine per-tile (sum, sumsq) partials and fold BN gamma/beta into a
    single per-channel affine (scale, shift).  f32 throughout."""
    cout = psum.shape[-1]
    s = psum.reshape(-1, _STATS_ROWS, cout)[:, :2, :].sum(axis=0)   # (2, cout)
    mean = s[0] / count
    var = jnp.maximum(s[1] / count - mean * mean, 0.0)
    scale = gamma * jax.lax.rsqrt(var + _BN_EPS)
    shift = beta - mean * scale
    return scale, shift


def _apply_affine_relu(y, scale, shift, tile_m, vmem_limit):
    """Pass 2.  For Cout < 128 the (M, Cout) slab is viewed as a lane-dense
    (M/fold, 128) slab (pure layout plumbing, undone by the caller)."""
    m_pad, cout = y.shape
    if cout < _LANES and _LANES % cout == 0 and tile_m % (_LANES // cout) == 0:
        fold = _LANES // cout
    else:
        fold = 1
    c_f = cout * fold
    m_f = m_pad // fold
    tile_f = tile_m // fold

    y_f = y.reshape(m_f, c_f)                                   # free view
    sc = jnp.tile(scale.reshape(1, cout), (1, fold)).astype(jnp.float32)
    sh = jnp.tile(shift.reshape(1, cout), (1, fold)).astype(jnp.float32)

    act = pl.pallas_call(
        _affine_relu_kernel,
        grid=(m_f // tile_f,),
        in_specs=[
            pl.BlockSpec((tile_f, c_f), lambda i: (i, 0)),
            pl.BlockSpec((1, c_f), lambda i: (0, 0)),
            pl.BlockSpec((1, c_f), lambda i: (0, 0)),
        ],
        out_specs=pl.BlockSpec((tile_f, c_f), lambda i: (i, 0)),
        out_shape=jax.ShapeDtypeStruct((m_f, c_f), jnp.bfloat16),
        compiler_params=pltpu.CompilerParams(
            dimension_semantics=("parallel",),
            vmem_limit_bytes=vmem_limit,
        ),
    )(y_f, sc, sh)
    return act.reshape(m_pad, cout)


def _im2col_bf16(x_nhwc, kh, kw, stride, pad):
    """im2col on an already-bf16 activation (stem only)."""
    x = jnp.pad(x_nhwc, ((0, 0), (pad, pad), (pad, pad), (0, 0)))
    n, h, w, c = x.shape
    oh = (h - kh) // stride + 1
    ow = (w - kw) // stride + 1
    cols = []
    for i in range(kh):
        for j in range(kw):
            cols.append(x[:, i:i + stride * oh:stride, j:j + stride * ow:stride, :])
    patches = jnp.concatenate(cols, axis=-1)          # (N, oh, ow, kh*kw*C)
    return patches.reshape(n * oh * ow, kh * kw * c), oh, ow


# ---------------------------------------------------------------------------
# Layer wrappers
# ---------------------------------------------------------------------------
def conv7x7_bn_relu(x_nhwc, p):
    """Stem: 7x7/s2/p3 conv (bf16 im2col GEMM) + BN(batch stats) + ReLU."""
    n = x_nhwc.shape[0]
    cout = p["w"].shape[1]
    tile_max, vmem_limit = _tile_config()

    patches, oh, ow = _im2col_bf16(x_nhwc, 7, 7, 2, 3)     # (M, K) bf16
    m_true, k = patches.shape
    k_pad = _round_up(k, _LANES)
    tile_m = min(tile_max, _round_up(m_true, 256))
    m_pad = _round_up(m_true, tile_m)
    n_tiles = m_pad // tile_m

    patches = jnp.pad(patches, ((0, m_pad - m_true), (0, k_pad - k)))
    w = jnp.pad(p["w"], ((0, k_pad - k), (0, 0))).astype(jnp.bfloat16)
    # NOTE: conv bias dropped — training-mode BN mean subtraction cancels it.

    y, psum = pl.pallas_call(
        _gemm_stats_kernel,
        grid=(n_tiles,),
        in_specs=[
            pl.BlockSpec((tile_m, k_pad), lambda i: (i, 0)),
            pl.BlockSpec((k_pad, cout), lambda i: (0, 0)),
        ],
        out_specs=(
            pl.BlockSpec((tile_m, cout), lambda i: (i, 0)),
            pl.BlockSpec((_STATS_ROWS, cout), lambda i: (i, 0)),
        ),
        out_shape=(
            jax.ShapeDtypeStruct((m_pad, cout), jnp.bfloat16),
            jax.ShapeDtypeStruct((n_tiles * _STATS_ROWS, cout), jnp.float32),
        ),
        compiler_params=pltpu.CompilerParams(
            dimension_semantics=("parallel",),
            vmem_limit_bytes=vmem_limit,
        ),
        cost_estimate=pl.CostEstimate(
            flops=2 * m_pad * k_pad * cout,
            transcendentals=0,
            bytes_accessed=(m_pad * k_pad * 2 + k_pad * cout * 2
                            + m_pad * cout * 2
                            + n_tiles * _STATS_ROWS * cout * 4),
        ),
    )(patches, w)

    scale, shift = _scale_shift(psum, float(m_true), p["gamma"], p["beta"])
    act = _apply_affine_relu(y, scale, shift, tile_m, vmem_limit)
    return act[:m_true].reshape(n, oh, ow, cout)


def conv3x3_bn_relu(x_nhwc, p):
    """3x3/s1/p1 conv (in-kernel shifted matmuls, no im2col) + BN + ReLU."""
    n, h, w, cin = x_nhwc.shape
    cout = p["w"].shape[1]
    hp, wp = h + 2, w + 2
    tile_max, vmem_limit = _tile_config()

    m_out = n * hp * wp                        # outputs live on the padded frame
    tile_m = min(tile_max, _round_up(m_out, 256))
    m_pad = _round_up(m_out, tile_m)
    n_tiles = m_pad // tile_m
    ext = _round_up(2 * wp + 2, 16)            # max tap offset, layout-rounded
    m_in = m_pad + ext

    xflat = jnp.pad(x_nhwc, ((0, 0), (1, 1), (1, 1), (0, 0))).reshape(m_out, cin)
    xflat = jnp.pad(xflat, ((0, m_in - m_out), (0, 0)))            # bf16, read once
    w9 = p["w"].reshape(9, cin, cout).astype(jnp.bfloat16)
    # NOTE: conv bias dropped — training-mode BN mean subtraction cancels it.

    # Static validity mask on the padded frame (compile-time constant).
    frame = np.zeros((hp, wp), np.float32)
    frame[:h, :w] = 1.0
    mask = np.pad(np.tile(frame.reshape(-1), n), (0, m_pad - m_out))
    mask = jnp.asarray(mask.reshape(m_pad, 1))

    y, psum = pl.pallas_call(
        functools.partial(_conv3x3_stats_kernel, wp=wp, ext=ext),
        grid=(n_tiles,),
        in_specs=[
            pl.BlockSpec((m_in, cin), lambda i: (0, 0)),        # resident input
            pl.BlockSpec((9, cin, cout), lambda i: (0, 0, 0)),  # resident weights
            pl.BlockSpec((tile_m, 1), lambda i: (i, 0)),
        ],
        out_specs=(
            pl.BlockSpec((tile_m, cout), lambda i: (i, 0)),
            pl.BlockSpec((_STATS_ROWS, cout), lambda i: (i, 0)),
        ),
        out_shape=(
            jax.ShapeDtypeStruct((m_pad, cout), jnp.bfloat16),
            jax.ShapeDtypeStruct((n_tiles * _STATS_ROWS, cout), jnp.float32),
        ),
        compiler_params=pltpu.CompilerParams(
            dimension_semantics=("parallel",),
            vmem_limit_bytes=vmem_limit,
        ),
        cost_estimate=pl.CostEstimate(
            flops=2 * m_pad * 9 * cin * cout,
            transcendentals=0,
            bytes_accessed=(m_in * cin * 2 + 9 * cin * cout * 2 + m_pad * 4
                            + m_pad * cout * 2
                            + n_tiles * _STATS_ROWS * cout * 4),
        ),
    )(xflat, w9, mask)

    scale, shift = _scale_shift(psum, float(n * h * w), p["gamma"], p["beta"])
    act = _apply_affine_relu(y, scale, shift, tile_m, vmem_limit)
    return act[:m_out].reshape(n, hp, wp, cout)[:, :h, :w, :]


def maxpool_3x3_s2_p1(x_nhwc):
    n, h, w, c = x_nhwc.shape
    oh = (h - 1) // 2 + 1
    ow = (w - 1) // 2 + 1
    _, vmem_limit = _tile_config()
    xp = jnp.pad(x_nhwc, ((0, 0), (1, 1), (1, 1), (0, 0)),
                 constant_values=-jnp.inf)
    # Parity split (bf16 now, halving this stage's traffic vs. the f32 version).
    xee = xp[:, 0::2, 0::2, :][:, :oh + 1, :ow + 1, :]
    xeo = xp[:, 0::2, 1::2, :][:, :oh + 1, :ow, :]
    xoe = xp[:, 1::2, 0::2, :][:, :oh, :ow + 1, :]
    xoo = xp[:, 1::2, 1::2, :][:, :oh, :ow, :]

    def bspec(shape):
        return pl.BlockSpec((1,) + tuple(shape[1:]), lambda nb: (nb, 0, 0, 0))

    return pl.pallas_call(
        _maxpool_kernel,
        grid=(n,),
        in_specs=[bspec(xee.shape), bspec(xeo.shape),
                  bspec(xoe.shape), bspec(xoo.shape)],
        out_specs=pl.BlockSpec((1, oh, ow, c), lambda nb: (nb, 0, 0, 0)),
        out_shape=jax.ShapeDtypeStruct((n, oh, ow, c), x_nhwc.dtype),
        compiler_params=pltpu.CompilerParams(
            dimension_semantics=("parallel",),
            vmem_limit_bytes=vmem_limit,
        ),
    )(xee, xeo, xoe, xoo)


def head(x_nhwc, w_fc, b_fc):
    n, h, w, c = x_nhwc.shape
    hw = h * w
    ncls = w_fc.shape[1]
    _, vmem_limit = _tile_config()
    x3 = x_nhwc.reshape(n, hw, c)                   # free reshape
    return pl.pallas_call(
        functools.partial(_head_kernel, inv_hw=1.0 / hw),
        grid=(1,),
        in_specs=[
            pl.BlockSpec((n, hw, c), lambda i: (0, 0, 0)),
            pl.BlockSpec((c, ncls), lambda i: (0, 0)),
            pl.BlockSpec((1, ncls), lambda i: (0, 0)),
        ],
        out_specs=pl.BlockSpec((n, ncls), lambda i: (0, 0)),
        out_shape=jax.ShapeDtypeStruct((n, ncls), jnp.float32),
        compiler_params=pltpu.CompilerParams(
            dimension_semantics=("arbitrary",),
            vmem_limit_bytes=vmem_limit,
        ),
    )(x3, w_fc.astype(jnp.float32), b_fc.reshape(1, ncls).astype(jnp.float32))


# ---------------------------------------------------------------------------
# Deterministic parameter init (matches PyTorch __init__ shapes; BN gamma=1, beta=0)
# ---------------------------------------------------------------------------
def _init_conv(key, kh, kw, cin, cout):
    kw_key, kb_key = jax.random.split(key)
    fan_in = kh * kw * cin
    return dict(
        w=jax.random.normal(kw_key, (fan_in, cout), jnp.float32) / np.sqrt(fan_in),
        b=0.01 * jax.random.normal(kb_key, (cout,), jnp.float32),  # cancelled by BN
        gamma=jnp.ones((cout,), jnp.float32),
        beta=jnp.zeros((cout,), jnp.float32),
    )


def init_cnn18_params(key, in_chans, num_classes):
    keys = jax.random.split(key, 11)
    params = {
        "stem": _init_conv(keys[0], 7, 7, in_chans, 64),
        "layer1": [
            [_init_conv(keys[1], 3, 3, 64, 64), _init_conv(keys[2], 3, 3, 64, 64)],
            [_init_conv(keys[3], 3, 3, 64, 64), _init_conv(keys[4], 3, 3, 64, 64)],
        ],
        "layer2": [
            [_init_conv(keys[5], 3, 3, 64, 128), _init_conv(keys[6], 3, 3, 128, 128)],
            [_init_conv(keys[7], 3, 3, 128, 128), _init_conv(keys[8], 3, 3, 128, 128)],
        ],
    }
    kfc_w, kfc_b = jax.random.split(keys[9])
    params["fc_w"] = jax.random.normal(kfc_w, (128, num_classes), jnp.float32) / np.sqrt(128)
    params["fc_b"] = 0.01 * jax.random.normal(kfc_b, (num_classes,), jnp.float32)
    return params


# ---------------------------------------------------------------------------
# Forward pass (mirrors CNN18.forward; no residual adds: skip_connections=False)
# ---------------------------------------------------------------------------
def cnn18_forward(params, x_nchw):
    x = jnp.transpose(x_nchw, (0, 2, 3, 1)).astype(jnp.bfloat16)   # NCHW -> NHWC, bf16
    x = conv7x7_bn_relu(x, params["stem"])                         # conv1+bn1+relu
    x = maxpool_3x3_s2_p1(x)                                       # maxpool 3x3/s2/p1
    for layer_name in ("layer1", "layer2"):
        for block in params[layer_name]:                           # 2 BasicBlocks each
            for conv_params in block:                              # conv-bn-relu x2
                x = conv3x3_bn_relu(x, conv_params)
    return head(x, params["fc_w"], params["fc_b"])                 # avgpool+fc+sigmoid


if __name__ == "__main__":
    key = jax.random.PRNGKey(0)
    pkey, xkey = jax.random.split(key)
    in_chans, num_classes = 4, 10
    params = init_cnn18_params(pkey, in_chans, num_classes)
    x = jax.random.normal(xkey, (2, in_chans, 16, 16), jnp.float32)  # NCHW
    out = jax.jit(cnn18_forward)(params, x)
    out = jax.block_until_ready(out)
    assert out.shape == (2, num_classes), out.shape
    assert bool(jnp.all((out >= 0.0) & (out <= 1.0))), "sigmoid range violated"
    assert bool(jnp.all(jnp.isfinite(out))), "non-finite output"
    print("KERNEL_OK")
</pallas_src>

<mosaic_0001>
module attributes {stable_mosaic.version = 11 : i64} {
  func.func @_gemm_stats_kernel(%arg0: i32, %arg1: memref<256x256xbf16, #tpu.memory_space<vmem>>, %arg2: memref<256x64xbf16, #tpu.memory_space<vmem>>, %arg3: memref<256x64xbf16, #tpu.memory_space<vmem>>, %arg4: memref<8x64xf32, #tpu.memory_space<vmem>>) attributes {dimension_semantics = [#tpu.dimension_semantics<parallel>], iteration_bounds = array<i64: 1>, scalar_prefetch = 0 : i64, scratch_operands = 0 : i64, tpu.core_type = #tpu.core_type<tc>, window_params = [{transform_indices = @transform_0, window_bounds = array<i64: 256, 256>}, {pipeline_mode = #tpu.pipeline_mode<synchronous>, transform_indices = @transform_1, window_bounds = array<i64: 256, 64>}, {transform_indices = @transform_2, window_bounds = array<i64: 256, 64>}, {transform_indices = @transform_3, window_bounds = array<i64: 8, 64>}]} {
    %c0 = arith.constant 0 : index
    %c0_0 = arith.constant 0 : index
    %0 = vector.load %arg1[%c0, %c0_0] : memref<256x256xbf16, #tpu.memory_space<vmem>>, vector<256x256xbf16>
    %c0_1 = arith.constant 0 : index
    %c0_2 = arith.constant 0 : index
    %1 = vector.load %arg2[%c0_1, %c0_2] : memref<256x64xbf16, #tpu.memory_space<vmem>>, vector<256x64xbf16>
    %cst = arith.constant dense<0.000000e+00> : vector<256x64xf32>
    %2 = tpu.matmul %0, %1, %cst {dimension_numbers = #tpu.dot_dimension_numbers<[1], [0], [0], [1], [0, 0, 1, 1], [], []>} : vector<256x256xbf16>, vector<256x64xbf16>, vector<256x64xf32> -> vector<256x64xf32>
    %cst_3 = arith.constant dense<0.000000e+00> : vector<64xf32>
    %3 = vector.multi_reduction <add>, %2, %cst_3 [0] : vector<256x64xf32> to vector<64xf32>
    %4 = vector.shape_cast %3 : vector<64xf32> to vector<1x64xf32>
    %c0_4 = arith.constant 0 : index
    %c0_5 = arith.constant 0 : index
    %5 = vector.load %arg4[%c0_4, %c0_5] : memref<8x64xf32, #tpu.memory_space<vmem>>, vector<1x64xf32>
    tpu.vector_store %arg4[%c0_4, %c0_5], %4 {strides = array<i32>} : memref<8x64xf32, #tpu.memory_space<vmem>>, vector<1x64xf32>,
    %6 = arith.mulf %2, %2 : vector<256x64xf32>
    %cst_6 = arith.constant dense<0.000000e+00> : vector<64xf32>
    %7 = vector.multi_reduction <add>, %6, %cst_6 [0] : vector<256x64xf32> to vector<64xf32>
    %8 = vector.shape_cast %7 : vector<64xf32> to vector<1x64xf32>
    %c1 = arith.constant 1 : index
    %c0_7 = arith.constant 0 : index
    %9 = vector.load %arg4[%c1, %c0_7] : memref<8x64xf32, #tpu.memory_space<vmem>>, vector<1x64xf32>
    tpu.vector_store %arg4[%c1, %c0_7], %8 {strides = array<i32>} : memref<8x64xf32, #tpu.memory_space<vmem>>, vector<1x64xf32>,
    %10 = arith.truncf %2 : vector<256x64xf32> to vector<256x64xbf16>
    %c0_8 = arith.constant 0 : index
    %c0_9 = arith.constant 0 : index
    %11 = vector.load %arg3[%c0_8, %c0_9] : memref<256x64xbf16, #tpu.memory_space<vmem>>, vector<256x64xbf16>
    tpu.vector_store %arg3[%c0_8, %c0_9], %10 {strides = array<i32>} : memref<256x64xbf16, #tpu.memory_space<vmem>>, vector<256x64xbf16>,
    return
  }
  func.func @transform_0(%arg0: i32) -> (i32, i32) {
    %c0_i32 = arith.constant 0 : i32
    %c0_i32_0 = arith.constant 0 : i32
    return %arg0, %c0_i32 : i32, i32
  }
  func.func @transform_1(%arg0: i32) -> (i32, i32) {
    %c0_i32 = arith.constant 0 : i32
    %c0_i32_0 = arith.constant 0 : i32
    %c0_i32_1 = arith.constant 0 : i32
    return %c0_i32, %c0_i32_0 : i32, i32
  }
  func.func @transform_2(%arg0: i32) -> (i32, i32) {
    %c0_i32 = arith.constant 0 : i32
    %c0_i32_0 = arith.constant 0 : i32
    return %arg0, %c0_i32 : i32, i32
  }
  func.func @transform_3(%arg0: i32) -> (i32, i32) {
    %c0_i32 = arith.constant 0 : i32
    %c0_i32_0 = arith.constant 0 : i32
    return %arg0, %c0_i32 : i32, i32
  }
}

module attributes {stable_mosaic.version = 11 : i64} {
  func.func @_affine_relu_kernel(%arg0: i32, %arg1: memref<128x128xbf16, #tpu.memory_space<vmem>>, %arg2: memref<1x128xf32, #tpu.memory_space<vmem>>, %arg3: memref<1x128xf32, #tpu.memory_space<vmem>>, %arg4: memref<128x128xbf16, #tpu.memory_space<vmem>>) attributes {dimension_semantics = [#tpu.dimension_semantics<parallel>], iteration_bounds = array<i64: 1>, scalar_prefetch = 0 : i64, scratch_operands = 0 : i64, tpu.core_type = #tpu.core_type<tc>, window_params = [{transform_indices = @transform_0, window_bounds = array<i64: 128, 128>}, {pipeline_mode = #tpu.pipeline_mode<synchronous>, transform_indices = @transform_1, window_bounds = array<i64: 1, 128>}, {pipeline_mode = #tpu.pipeline_mode<synchronous>, transform_indices = @transform_2, window_bounds = array<i64: 1, 128>}, {transform_indices = @transform_3, window_bounds = array<i64: 128, 128>}]} {
    %c0 = arith.constant 0 : index
    %c0_0 = arith.constant 0 : index
    %0 = vector.load %arg1[%c0, %c0_0] : memref<128x128xbf16, #tpu.memory_space<vmem>>, vector<128x128xbf16>
    %1 = arith.extf %0 : vector<128x128xbf16> to vector<128x128xf32>
    %c0_1 = arith.constant 0 : index
    %c0_2 = arith.constant 0 : index
    %2 = vector.load %arg2[%c0_1, %c0_2] : memref<1x128xf32, #tpu.memory_space<vmem>>, vector<1x128xf32>
    %3 = vector.broadcast %2 : vector<1x128xf32> to vector<128x128xf32>
    %4 = arith.mulf %1, %3 : vector<128x128xf32>
    %c0_3 = arith.constant 0 : index
    %c0_4 = arith.constant 0 : index
    %5 = vector.load %arg3[%c0_3, %c0_4] : memref<1x128xf32, #tpu.memory_space<vmem>>, vector<1x128xf32>
    %6 = vector.broadcast %5 : vector<1x128xf32> to vector<128x128xf32>
    %7 = arith.addf %4, %6 : vector<128x128xf32>
    %cst = arith.constant 0.000000e+00 : f32
    %8 = vector.broadcast %cst : f32 to vector<128x128xf32>
    %9 = arith.maximumf %7, %8 : vector<128x128xf32>
    %10 = arith.truncf %9 : vector<128x128xf32> to vector<128x128xbf16>
    %c0_5 = arith.constant 0 : index
    %c0_6 = arith.constant 0 : index
    %11 = vector.load %arg4[%c0_5, %c0_6] : memref<128x128xbf16, #tpu.memory_space<vmem>>, vector<128x128xbf16>
    tpu.vector_store %arg4[%c0_5, %c0_6], %10 {strides = array<i32>} : memref<128x128xbf16, #tpu.memory_space<vmem>>, vector<128x128xbf16>,
    return
  }
  func.func @transform_0(%arg0: i32) -> (i32, i32) {
    %c0_i32 = arith.constant 0 : i32
    %c0_i32_0 = arith.constant 0 : i32
    return %arg0, %c0_i32 : i32, i32
  }
  func.func @transform_1(%arg0: i32) -> (i32, i32) {
    %c0_i32 = arith.constant 0 : i32
    %c0_i32_0 = arith.constant 0 : i32
    %c0_i32_1 = arith.constant 0 : i32
    return %c0_i32, %c0_i32_0 : i32, i32
  }
  func.func @transform_2(%arg0: i32) -> (i32, i32) {
    %c0_i32 = arith.constant 0 : i32
    %c0_i32_0 = arith.constant 0 : i32
    %c0_i32_1 = arith.constant 0 : i32
    return %c0_i32, %c0_i32_0 : i32, i32
  }
  func.func @transform_3(%arg0: i32) -> (i32, i32) {
    %c0_i32 = arith.constant 0 : i32
    %c0_i32_0 = arith.constant 0 : i32
    return %arg0, %c0_i32 : i32, i32
  }
}

module attributes {stable_mosaic.version = 11 : i64} {
  func.func @_maxpool_kernel(%arg0: i32, %arg1: memref<1x5x5x64xbf16, #tpu.memory_space<vmem>>, %arg2: memref<1x5x4x64xbf16, #tpu.memory_space<vmem>>, %arg3: memref<1x4x5x64xbf16, #tpu.memory_space<vmem>>, %arg4: memref<1x4x4x64xbf16, #tpu.memory_space<vmem>>, %arg5: memref<1x4x4x64xbf16, #tpu.memory_space<vmem>>) attributes {dimension_semantics = [#tpu.dimension_semantics<parallel>], iteration_bounds = array<i64: 2>, scalar_prefetch = 0 : i64, scratch_operands = 0 : i64, tpu.core_type = #tpu.core_type<tc>, window_params = [{transform_indices = @transform_0, window_bounds = array<i64: 1, 5, 5, 64>}, {transform_indices = @transform_1, window_bounds = array<i64: 1, 5, 4, 64>}, {transform_indices = @transform_2, window_bounds = array<i64: 1, 4, 5, 64>}, {transform_indices = @transform_3, window_bounds = array<i64: 1, 4, 4, 64>}, {transform_indices = @transform_4, window_bounds = array<i64: 1, 4, 4, 64>}]} {
    %c0 = arith.constant 0 : index
    %c0_0 = arith.constant 0 : index
    %c0_1 = arith.constant 0 : index
    %c0_2 = arith.constant 0 : index
    %0 = vector.load %arg1[%c0, %c0_0, %c0_1, %c0_2] : memref<1x5x5x64xbf16, #tpu.memory_space<vmem>>, vector<1x5x5x64xbf16>
    %c0_3 = arith.constant 0 : index
    %c0_4 = arith.constant 0 : index
    %c0_5 = arith.constant 0 : index
    %c0_6 = arith.constant 0 : index
    %1 = vector.load %arg2[%c0_3, %c0_4, %c0_5, %c0_6] : memref<1x5x4x64xbf16, #tpu.memory_space<vmem>>, vector<1x5x4x64xbf16>
    %c0_7 = arith.constant 0 : index
    %c0_8 = arith.constant 0 : index
    %c0_9 = arith.constant 0 : index
    %c0_10 = arith.constant 0 : index
    %2 = vector.load %arg3[%c0_7, %c0_8, %c0_9, %c0_10] : memref<1x4x5x64xbf16, #tpu.memory_space<vmem>>, vector<1x4x5x64xbf16>
    %c0_11 = arith.constant 0 : index
    %c0_12 = arith.constant 0 : index
    %c0_13 = arith.constant 0 : index
    %c0_14 = arith.constant 0 : index
    %3 = vector.load %arg4[%c0_11, %c0_12, %c0_13, %c0_14] : memref<1x4x4x64xbf16, #tpu.memory_space<vmem>>, vector<1x4x4x64xbf16>
    %4 = vector.extract_strided_slice %0 {offsets = [0, 0, 0, 0], sizes = [1, 4, 4, 64], strides = [1, 1, 1, 1]} : vector<1x5x5x64xbf16> to vector<1x4x4x64xbf16>
    %5 = arith.maximumf %3, %4 : vector<1x4x4x64xbf16>
    %6 = vector.extract_strided_slice %0 {offsets = [0, 0, 1, 0], sizes = [1, 4, 4, 64], strides = [1, 1, 1, 1]} : vector<1x5x5x64xbf16> to vector<1x4x4x64xbf16>
    %7 = arith.maximumf %5, %6 : vector<1x4x4x64xbf16>
    %8 = vector.extract_strided_slice %0 {offsets = [0, 1, 0, 0], sizes = [1, 4, 4, 64], strides = [1, 1, 1, 1]} : vector<1x5x5x64xbf16> to vector<1x4x4x64xbf16>
    %9 = arith.maximumf %7, %8 : vector<1x4x4x64xbf16>
    %10 = vector.extract_strided_slice %0 {offsets = [0, 1, 1, 0], sizes = [1, 4, 4, 64], strides = [1, 1, 1, 1]} : vector<1x5x5x64xbf16> to vector<1x4x4x64xbf16>
    %11 = arith.maximumf %9, %10 : vector<1x4x4x64xbf16>
    %12 = vector.extract_strided_slice %1 {offsets = [0, 0, 0, 0], sizes = [1, 4, 4, 64], strides = [1, 1, 1, 1]} : vector<1x5x4x64xbf16> to vector<1x4x4x64xbf16>
    %13 = arith.maximumf %11, %12 : vector<1x4x4x64xbf16>
    %14 = vector.extract_strided_slice %1 {offsets = [0, 1, 0, 0], sizes = [1, 4, 4, 64], strides = [1, 1, 1, 1]} : vector<1x5x4x64xbf16> to vector<1x4x4x64xbf16>
    %15 = arith.maximumf %13, %14 : vector<1x4x4x64xbf16>
    %16 = vector.extract_strided_slice %2 {offsets = [0, 0, 0, 0], sizes = [1, 4, 4, 64], strides = [1, 1, 1, 1]} : vector<1x4x5x64xbf16> to vector<1x4x4x64xbf16>
    %17 = arith.maximumf %15, %16 : vector<1x4x4x64xbf16>
    %18 = vector.extract_strided_slice %2 {offsets = [0, 0, 1, 0], sizes = [1, 4, 4, 64], strides = [1, 1, 1, 1]} : vector<1x4x5x64xbf16> to vector<1x4x4x64xbf16>
    %19 = arith.maximumf %17, %18 : vector<1x4x4x64xbf16>
    %c0_15 = arith.constant 0 : index
    %c0_16 = arith.constant 0 : index
    %c0_17 = arith.constant 0 : index
    %c0_18 = arith.constant 0 : index
    %20 = vector.load %arg5[%c0_15, %c0_16, %c0_17, %c0_18] : memref<1x4x4x64xbf16, #tpu.memory_space<vmem>>, vector<1x4x4x64xbf16>
    tpu.vector_store %arg5[%c0_15, %c0_16, %c0_17, %c0_18], %19 {strides = array<i32>} : memref<1x4x4x64xbf16, #tpu.memory_space<vmem>>, vector<1x4x4x64xbf16>,
    return
  }
  func.func @transform_0(%arg0: i32) -> (i32, i32, i32, i32) {
    %c0_i32 = arith.constant 0 : i32
    %c0_i32_0 = arith.constant 0 : i32
    %c0_i32_1 = arith.constant 0 : i32
    %c0_i32_2 = arith.constant 0 : i32
    return %arg0, %c0_i32, %c0_i32_0, %c0_i32_1 : i32, i32, i32, i32
  }
  func.func @transform_1(%arg0: i32) -> (i32, i32, i32, i32) {
    %c0_i32 = arith.constant 0 : i32
    %c0_i32_0 = arith.constant 0 : i32
    %c0_i32_1 = arith.constant 0 : i32
    %c0_i32_2 = arith.constant 0 : i32
    return %arg0, %c0_i32, %c0_i32_0, %c0_i32_1 : i32, i32, i32, i32
  }
  func.func @transform_2(%arg0: i32) -> (i32, i32, i32, i32) {
    %c0_i32 = arith.constant 0 : i32
    %c0_i32_0 = arith.constant 0 : i32
    %c0_i32_1 = arith.constant 0 : i32
    %c0_i32_2 = arith.constant 0 : i32
    return %arg0, %c0_i32, %c0_i32_0, %c0_i32_1 : i32, i32, i32, i32
  }
  func.func @transform_3(%arg0: i32) -> (i32, i32, i32, i32) {
    %c0_i32 = arith.constant 0 : i32
    %c0_i32_0 = arith.constant 0 : i32
    %c0_i32_1 = arith.constant 0 : i32
    %c0_i32_2 = arith.constant 0 : i32
    return %arg0, %c0_i32, %c0_i32_0, %c0_i32_1 : i32, i32, i32, i32
  }
  func.func @transform_4(%arg0: i32) -> (i32, i32, i32, i32) {
    %c0_i32 = arith.constant 0 : i32
    %c0_i32_0 = arith.constant 0 : i32
    %c0_i32_1 = arith.constant 0 : i32
    %c0_i32_2 = arith.constant 0 : i32
    return %arg0, %c0_i32, %c0_i32_0, %c0_i32_1 : i32, i32, i32, i32
  }
}

module attributes {stable_mosaic.version = 11 : i64} {
  func.func @_conv3x3_stats_kernel(%arg0: i32, %arg1: memref<272x64xbf16, #tpu.memory_space<vmem>>, %arg2: memref<9x64x64xbf16, #tpu.memory_space<vmem>>, %arg3: memref<256x1xf32, #tpu.memory_space<vmem>>, %arg4: memref<256x64xbf16, #tpu.memory_space<vmem>>, %arg5: memref<8x64xf32, #tpu.memory_space<vmem>>) attributes {dimension_semantics = [#tpu.dimension_semantics<parallel>], iteration_bounds = array<i64: 1>, scalar_prefetch = 0 : i64, scratch_operands = 0 : i64, tpu.core_type = #tpu.core_type<tc>, window_params = [{pipeline_mode = #tpu.pipeline_mode<synchronous>, transform_indices = @transform_0, window_bounds = array<i64: 272, 64>}, {pipeline_mode = #tpu.pipeline_mode<synchronous>, transform_indices = @transform_1, window_bounds = array<i64: 9, 64, 64>}, {transform_indices = @transform_2, window_bounds = array<i64: 256, 1>}, {transform_indices = @transform_3, window_bounds = array<i64: 256, 64>}, {transform_indices = @transform_4, window_bounds = array<i64: 8, 64>}]} {
    %c256_i32 = arith.constant 256 : i32
    %0 = arith.muli %arg0, %c256_i32 : i32
    %1 = tpu.assume_multiple %0, 256 : i32
    %2 = arith.index_cast %1 : i32 to index
    %c0 = arith.constant 0 : index
    %3 = vector.load %arg1[%2, %c0] : memref<272x64xbf16, #tpu.memory_space<vmem>>, vector<272x64xbf16>
    %cst = arith.constant 0.000000e+00 : f32
    %4 = vector.broadcast %cst : f32 to vector<256x64xf32>
    %5 = vector.extract_strided_slice %3 {offsets = [0, 0], sizes = [256, 64], strides = [1, 1]} : vector<272x64xbf16> to vector<256x64xbf16>
    %c0_0 = arith.constant 0 : index
    %c0_1 = arith.constant 0 : index
    %c0_2 = arith.constant 0 : index
    %6 = vector.load %arg2[%c0_0, %c0_1, %c0_2] : memref<9x64x64xbf16, #tpu.memory_space<vmem>>, vector<1x64x64xbf16>
    %7 = vector.shape_cast %6 : vector<1x64x64xbf16> to vector<64x64xbf16>
    %cst_3 = arith.constant dense<0.000000e+00> : vector<256x64xf32>
    %8 = tpu.matmul %5, %7, %cst_3 {dimension_numbers = #tpu.dot_dimension_numbers<[1], [0], [0], [1], [0, 0, 1, 1], [], []>} : vector<256x64xbf16>, vector<64x64xbf16>, vector<256x64xf32> -> vector<256x64xf32>
    %9 = arith.addf %4, %8 : vector<256x64xf32>
    %10 = vector.extract_strided_slice %3 {offsets = [1, 0], sizes = [256, 64], strides = [1, 1]} : vector<272x64xbf16> to vector<256x64xbf16>
    %c1 = arith.constant 1 : index
    %c0_4 = arith.constant 0 : index
    %c0_5 = arith.constant 0 : index
    %11 = vector.load %arg2[%c1, %c0_4, %c0_5] : memref<9x64x64xbf16, #tpu.memory_space<vmem>>, vector<1x64x64xbf16>
    %12 = vector.shape_cast %11 : vector<1x64x64xbf16> to vector<64x64xbf16>
    %cst_6 = arith.constant dense<0.000000e+00> : vector<256x64xf32>
    %13 = tpu.matmul %10, %12, %cst_6 {dimension_numbers = #tpu.dot_dimension_numbers<[1], [0], [0], [1], [0, 0, 1, 1], [], []>} : vector<256x64xbf16>, vector<64x64xbf16>, vector<256x64xf32> -> vector<256x64xf32>
    %14 = arith.addf %9, %13 : vector<256x64xf32>
    %15 = vector.extract_strided_slice %3 {offsets = [2, 0], sizes = [256, 64], strides = [1, 1]} : vector<272x64xbf16> to vector<256x64xbf16>
    %c2 = arith.constant 2 : index
    %c0_7 = arith.constant 0 : index
    %c0_8 = arith.constant 0 : index
    %16 = vector.load %arg2[%c2, %c0_7, %c0_8] : memref<9x64x64xbf16, #tpu.memory_space<vmem>>, vector<1x64x64xbf16>
    %17 = vector.shape_cast %16 : vector<1x64x64xbf16> to vector<64x64xbf16>
    %cst_9 = arith.constant dense<0.000000e+00> : vector<256x64xf32>
    %18 = tpu.matmul %15, %17, %cst_9 {dimension_numbers = #tpu.dot_dimension_numbers<[1], [0], [0], [1], [0, 0, 1, 1], [], []>} : vector<256x64xbf16>, vector<64x64xbf16>, vector<256x64xf32> -> vector<256x64xf32>
    %19 = arith.addf %14, %18 : vector<256x64xf32>
    %20 = vector.extract_strided_slice %3 {offsets = [6, 0], sizes = [256, 64], strides = [1, 1]} : vector<272x64xbf16> to vector<256x64xbf16>
    %c3 = arith.constant 3 : index
    %c0_10 = arith.constant 0 : index
    %c0_11 = arith.constant 0 : index
    %21 = vector.load %arg2[%c3, %c0_10, %c0_11] : memref<9x64x64xbf16, #tpu.memory_space<vmem>>, vector<1x64x64xbf16>
    %22 = vector.shape_cast %21 : vector<1x64x64xbf16> to vector<64x64xbf16>
    %cst_12 = arith.constant dense<0.000000e+00> : vector<256x64xf32>
    %23 = tpu.matmul %20, %22, %cst_12 {dimension_numbers = #tpu.dot_dimension_numbers<[1], [0], [0], [1], [0, 0, 1, 1], [], []>} : vector<256x64xbf16>, vector<64x64xbf16>, vector<256x64xf32> -> vector<256x64xf32>
    %24 = arith.addf %19, %23 : vector<256x64xf32>
    %25 = vector.extract_strided_slice %3 {offsets = [7, 0], sizes = [256, 64], strides = [1, 1]} : vector<272x64xbf16> to vector<256x64xbf16>
    %c4 = arith.constant 4 : index
    %c0_13 = arith.constant 0 : index
    %c0_14 = arith.constant 0 : index
    %26 = vector.load %arg2[%c4, %c0_13, %c0_14] : memref<9x64x64xbf16, #tpu.memory_space<vmem>>, vector<1x64x64xbf16>
    %27 = vector.shape_cast %26 : vector<1x64x64xbf16> to vector<64x64xbf16>
    %cst_15 = arith.constant dense<0.000000e+00> : vector<256x64xf32>
    %28 = tpu.matmul %25, %27, %cst_15 {dimension_numbers = #tpu.dot_dimension_numbers<[1], [0], [0], [1], [0, 0, 1, 1], [], []>} : vector<256x64xbf16>, vector<64x64xbf16>, vector<256x64xf32> -> vector<256x64xf32>
    %29 = arith.addf %24, %28 : vector<256x64xf32>
    %30 = vector.extract_strided_slice %3 {offsets = [8, 0], sizes = [256, 64], strides = [1, 1]} : vector<272x64xbf16> to vector<256x64xbf16>
    %c5 = arith.constant 5 : index
    %c0_16 = arith.constant 0 : index
    %c0_17 = arith.constant 0 : index
    %31 = vector.load %arg2[%c5, %c0_16, %c0_17] : memref<9x64x64xbf16, #tpu.memory_space<vmem>>, vector<1x64x64xbf16>
    %32 = vector.shape_cast %31 : vector<1x64x64xbf16> to vector<64x64xbf16>
    %cst_18 = arith.constant dense<0.000000e+00> : vector<256x64xf32>
    %33 = tpu.matmul %30, %32, %cst_18 {dimension_numbers = #tpu.dot_dimension_numbers<[1], [0], [0], [1], [0, 0, 1, 1], [], []>} : vector<256x64xbf16>, vector<64x64xbf16>, vector<256x64xf32> -> vector<256x64xf32>
    %34 = arith.addf %29, %33 : vector<256x64xf32>
    %35 = vector.extract_strided_slice %3 {offsets = [12, 0], sizes = [256, 64], strides = [1, 1]} : vector<272x64xbf16> to vector<256x64xbf16>
    %c6 = arith.constant 6 : index
    %c0_19 = arith.constant 0 : index
    %c0_20 = arith.constant 0 : index
    %36 = vector.load %arg2[%c6, %c0_19, %c0_20] : memref<9x64x64xbf16, #tpu.memory_space<vmem>>, vector<1x64x64xbf16>
    %37 = vector.shape_cast %36 : vector<1x64x64xbf16> to vector<64x64xbf16>
    %cst_21 = arith.constant dense<0.000000e+00> : vector<256x64xf32>
    %38 = tpu.matmul %35, %37, %cst_21 {dimension_numbers = #tpu.dot_dimension_numbers<[1], [0], [0], [1], [0, 0, 1, 1], [], []>} : vector<256x64xbf16>, vector<64x64xbf16>, vector<256x64xf32> -> vector<256x64xf32>
    %39 = arith.addf %34, %38 : vector<256x64xf32>
    %40 = vector.extract_strided_slice %3 {offsets = [13, 0], sizes = [256, 64], strides = [1, 1]} : vector<272x64xbf16> to vector<256x64xbf16>
    %c7 = arith.constant 7 : index
    %c0_22 = arith.constant 0 : index
    %c0_23 = arith.constant 0 : index
    %41 = vector.load %arg2[%c7, %c0_22, %c0_23] : memref<9x64x64xbf16, #tpu.memory_space<vmem>>, vector<1x64x64xbf16>
    %42 = vector.shape_cast %41 : vector<1x64x64xbf16> to vector<64x64xbf16>
    %cst_24 = arith.constant dense<0.000000e+00> : vector<256x64xf32>
    %43 = tpu.matmul %40, %42, %cst_24 {dimension_numbers = #tpu.dot_dimension_numbers<[1], [0], [0], [1], [0, 0, 1, 1], [], []>} : vector<256x64xbf16>, vector<64x64xbf16>, vector<256x64xf32> -> vector<256x64xf32>
    %44 = arith.addf %39, %43 : vector<256x64xf32>
    %45 = vector.extract_strided_slice %3 {offsets = [14, 0], sizes = [256, 64], strides = [1, 1]} : vector<272x64xbf16> to vector<256x64xbf16>
    %c8 = arith.constant 8 : index
    %c0_25 = arith.constant 0 : index
    %c0_26 = arith.constant 0 : index
    %46 = vector.load %arg2[%c8, %c0_25, %c0_26] : memref<9x64x64xbf16, #tpu.memory_space<vmem>>, vector<1x64x64xbf16>
    %47 = vector.shape_cast %46 : vector<1x64x64xbf16> to vector<64x64xbf16>
    %cst_27 = arith.constant dense<0.000000e+00> : vector<256x64xf32>
    %48 = tpu.matmul %45, %47, %cst_27 {dimension_numbers = #tpu.dot_dimension_numbers<[1], [0], [0], [1], [0, 0, 1, 1], [], []>} : vector<256x64xbf16>, vector<64x64xbf16>, vector<256x64xf32> -> vector<256x64xf32>
    %49 = arith.addf %44, %48 : vector<256x64xf32>
    %c0_28 = arith.constant 0 : index
    %c0_29 = arith.constant 0 : index
    %50 = vector.load %arg3[%c0_28, %c0_29] : memref<256x1xf32, #tpu.memory_space<vmem>>, vector<256x1xf32>
    %51 = vector.broadcast %50 : vector<256x1xf32> to vector<256x64xf32>
    %52 = arith.mulf %49, %51 : vector<256x64xf32>
    %cst_30 = arith.constant dense<0.000000e+00> : vector<64xf32>
    %53 = vector.multi_reduction <add>, %52, %cst_30 [0] : vector<256x64xf32> to vector<64xf32>
    %54 = vector.shape_cast %53 : vector<64xf32> to vector<1x64xf32>
    %c0_31 = arith.constant 0 : index
    %c0_32 = arith.constant 0 : index
    %55 = vector.load %arg5[%c0_31, %c0_32] : memref<8x64xf32, #tpu.memory_space<vmem>>, vector<1x64xf32>
    tpu.vector_store %arg5[%c0_31, %c0_32], %54 {strides = array<i32>} : memref<8x64xf32, #tpu.memory_space<vmem>>, vector<1x64xf32>,
    %56 = arith.mulf %52, %49 : vector<256x64xf32>
    %cst_33 = arith.constant dense<0.000000e+00> : vector<64xf32>
    %57 = vector.multi_reduction <add>, %56, %cst_33 [0] : vector<256x64xf32> to vector<64xf32>
    %58 = vector.shape_cast %57 : vector<64xf32> to vector<1x64xf32>
    %c1_34 = arith.constant 1 : index
    %c0_35 = arith.constant 0 : index
    %59 = vector.load %arg5[%c1_34, %c0_35] : memref<8x64xf32, #tpu.memory_space<vmem>>, vector<1x64xf32>
    tpu.vector_store %arg5[%c1_34, %c0_35], %58 {strides = array<i32>} : memref<8x64xf32, #tpu.memory_space<vmem>>, vector<1x64xf32>,
    %60 = arith.truncf %49 : vector<256x64xf32> to vector<256x64xbf16>
    %c0_36 = arith.constant 0 : index
    %c0_37 = arith.constant 0 : index
    %61 = vector.load %arg4[%c0_36, %c0_37] : memref<256x64xbf16, #tpu.memory_space<vmem>>, vector<256x64xbf16>
    tpu.vector_store %arg4[%c0_36, %c0_37], %60 {strides = array<i32>} : memref<256x64xbf16, #tpu.memory_space<vmem>>, vector<256x64xbf16>,
    return
  }
  func.func @transform_0(%arg0: i32) -> (i32, i32) {
    %c0_i32 = arith.constant 0 : i32
    %c0_i32_0 = arith.constant 0 : i32
    %c0_i32_1 = arith.constant 0 : i32
    return %c0_i32, %c0_i32_0 : i32, i32
  }
  func.func @transform_1(%arg0: i32) -> (i32, i32, i32) {
    %c0_i32 = arith.constant 0 : i32
    %c0_i32_0 = arith.constant 0 : i32
    %c0_i32_1 = arith.constant 0 : i32
    %c0_i32_2 = arith.constant 0 : i32
    return %c0_i32, %c0_i32_0, %c0_i32_1 : i32, i32, i32
  }
  func.func @transform_2(%arg0: i32) -> (i32, i32) {
    %c0_i32 = arith.constant 0 : i32
    %c0_i32_0 = arith.constant 0 : i32
    return %arg0, %c0_i32 : i32, i32
  }
  func.func @transform_3(%arg0: i32) -> (i32, i32) {
    %c0_i32 = arith.constant 0 : i32
    %c0_i32_0 = arith.constant 0 : i32
    return %arg0, %c0_i32 : i32, i32
  }
  func.func @transform_4(%arg0: i32) -> (i32, i32) {
    %c0_i32 = arith.constant 0 : i32
    %c0_i32_0 = arith.constant 0 : i32
    return %arg0, %c0_i32 : i32, i32
  }
}

module attributes {stable_mosaic.version = 11 : i64} {
  func.func @_affine_relu_kernel(%arg0: i32, %arg1: memref<256x128xbf16, #tpu.memory_space<vmem>>, %arg2: memref<1x128xf32, #tpu.memory_space<vmem>>, %arg3: memref<1x128xf32, #tpu.memory_space<vmem>>, %arg4: memref<256x128xbf16, #tpu.memory_space<vmem>>) attributes {dimension_semantics = [#tpu.dimension_semantics<parallel>], iteration_bounds = array<i64: 1>, scalar_prefetch = 0 : i64, scratch_operands = 0 : i64, tpu.core_type = #tpu.core_type<tc>, window_params = [{transform_indices = @transform_0, window_bounds = array<i64: 256, 128>}, {pipeline_mode = #tpu.pipeline_mode<synchronous>, transform_indices = @transform_1, window_bounds = array<i64: 1, 128>}, {pipeline_mode = #tpu.pipeline_mode<synchronous>, transform_indices = @transform_2, window_bounds = array<i64: 1, 128>}, {transform_indices = @transform_3, window_bounds = array<i64: 256, 128>}]} {
    %c0 = arith.constant 0 : index
    %c0_0 = arith.constant 0 : index
    %0 = vector.load %arg1[%c0, %c0_0] : memref<256x128xbf16, #tpu.memory_space<vmem>>, vector<256x128xbf16>
    %1 = arith.extf %0 : vector<256x128xbf16> to vector<256x128xf32>
    %c0_1 = arith.constant 0 : index
    %c0_2 = arith.constant 0 : index
    %2 = vector.load %arg2[%c0_1, %c0_2] : memref<1x128xf32, #tpu.memory_space<vmem>>, vector<1x128xf32>
    %3 = vector.broadcast %2 : vector<1x128xf32> to vector<256x128xf32>
    %4 = arith.mulf %1, %3 : vector<256x128xf32>
    %c0_3 = arith.constant 0 : index
    %c0_4 = arith.constant 0 : index
    %5 = vector.load %arg3[%c0_3, %c0_4] : memref<1x128xf32, #tpu.memory_space<vmem>>, vector<1x128xf32>
    %6 = vector.broadcast %5 : vector<1x128xf32> to vector<256x128xf32>
    %7 = arith.addf %4, %6 : vector<256x128xf32>
    %cst = arith.constant 0.000000e+00 : f32
    %8 = vector.broadcast %cst : f32 to vector<256x128xf32>
    %9 = arith.maximumf %7, %8 : vector<256x128xf32>
    %10 = arith.truncf %9 : vector<256x128xf32> to vector<256x128xbf16>
    %c0_5 = arith.constant 0 : index
    %c0_6 = arith.constant 0 : index
    %11 = vector.load %arg4[%c0_5, %c0_6] : memref<256x128xbf16, #tpu.memory_space<vmem>>, vector<256x128xbf16>
    tpu.vector_store %arg4[%c0_5, %c0_6], %10 {strides = array<i32>} : memref<256x128xbf16, #tpu.memory_space<vmem>>, vector<256x128xbf16>,
    return
  }
  func.func @transform_0(%arg0: i32) -> (i32, i32) {
    %c0_i32 = arith.constant 0 : i32
    %c0_i32_0 = arith.constant 0 : i32
    return %arg0, %c0_i32 : i32, i32
  }
  func.func @transform_1(%arg0: i32) -> (i32, i32) {
    %c0_i32 = arith.constant 0 : i32
    %c0_i32_0 = arith.constant 0 : i32
    %c0_i32_1 = arith.constant 0 : i32
    return %c0_i32, %c0_i32_0 : i32, i32
  }
  func.func @transform_2(%arg0: i32) -> (i32, i32) {
    %c0_i32 = arith.constant 0 : i32
    %c0_i32_0 = arith.constant 0 : i32
    %c0_i32_1 = arith.constant 0 : i32
    return %c0_i32, %c0_i32_0 : i32, i32
  }
  func.func @transform_3(%arg0: i32) -> (i32, i32) {
    %c0_i32 = arith.constant 0 : i32
    %c0_i32_0 = arith.constant 0 : i32
    return %arg0, %c0_i32 : i32, i32
  }
}

module attributes {stable_mosaic.version = 11 : i64} {
  func.func @_conv3x3_stats_kernel(%arg0: i32, %arg1: memref<272x64xbf16, #tpu.memory_space<vmem>>, %arg2: memref<9x64x128xbf16, #tpu.memory_space<vmem>>, %arg3: memref<256x1xf32, #tpu.memory_space<vmem>>, %arg4: memref<256x128xbf16, #tpu.memory_space<vmem>>, %arg5: memref<8x128xf32, #tpu.memory_space<vmem>>) attributes {dimension_semantics = [#tpu.dimension_semantics<parallel>], iteration_bounds = array<i64: 1>, scalar_prefetch = 0 : i64, scratch_operands = 0 : i64, tpu.core_type = #tpu.core_type<tc>, window_params = [{pipeline_mode = #tpu.pipeline_mode<synchronous>, transform_indices = @transform_0, window_bounds = array<i64: 272, 64>}, {pipeline_mode = #tpu.pipeline_mode<synchronous>, transform_indices = @transform_1, window_bounds = array<i64: 9, 64, 128>}, {transform_indices = @transform_2, window_bounds = array<i64: 256, 1>}, {transform_indices = @transform_3, window_bounds = array<i64: 256, 128>}, {transform_indices = @transform_4, window_bounds = array<i64: 8, 128>}]} {
    %c256_i32 = arith.constant 256 : i32
    %0 = arith.muli %arg0, %c256_i32 : i32
    %1 = tpu.assume_multiple %0, 256 : i32
    %2 = arith.index_cast %1 : i32 to index
    %c0 = arith.constant 0 : index
    %3 = vector.load %arg1[%2, %c0] : memref<272x64xbf16, #tpu.memory_space<vmem>>, vector<272x64xbf16>
    %cst = arith.constant 0.000000e+00 : f32
    %4 = vector.broadcast %cst : f32 to vector<256x128xf32>
    %5 = vector.extract_strided_slice %3 {offsets = [0, 0], sizes = [256, 64], strides = [1, 1]} : vector<272x64xbf16> to vector<256x64xbf16>
    %c0_0 = arith.constant 0 : index
    %c0_1 = arith.constant 0 : index
    %c0_2 = arith.constant 0 : index
    %6 = vector.load %arg2[%c0_0, %c0_1, %c0_2] : memref<9x64x128xbf16, #tpu.memory_space<vmem>>, vector<1x64x128xbf16>
    %7 = vector.shape_cast %6 : vector<1x64x128xbf16> to vector<64x128xbf16>
    %cst_3 = arith.constant dense<0.000000e+00> : vector<256x128xf32>
    %8 = tpu.matmul %5, %7, %cst_3 {dimension_numbers = #tpu.dot_dimension_numbers<[1], [0], [0], [1], [0, 0, 1, 1], [], []>} : vector<256x64xbf16>, vector<64x128xbf16>, vector<256x128xf32> -> vector<256x128xf32>
    %9 = arith.addf %4, %8 : vector<256x128xf32>
    %10 = vector.extract_strided_slice %3 {offsets = [1, 0], sizes = [256, 64], strides = [1, 1]} : vector<272x64xbf16> to vector<256x64xbf16>
    %c1 = arith.constant 1 : index
    %c0_4 = arith.constant 0 : index
    %c0_5 = arith.constant 0 : index
    %11 = vector.load %arg2[%c1, %c0_4, %c0_5] : memref<9x64x128xbf16, #tpu.memory_space<vmem>>, vector<1x64x128xbf16>
    %12 = vector.shape_cast %11 : vector<1x64x128xbf16> to vector<64x128xbf16>
    %cst_6 = arith.constant dense<0.000000e+00> : vector<256x128xf32>
    %13 = tpu.matmul %10, %12, %cst_6 {dimension_numbers = #tpu.dot_dimension_numbers<[1], [0], [0], [1], [0, 0, 1, 1], [], []>} : vector<256x64xbf16>, vector<64x128xbf16>, vector<256x128xf32> -> vector<256x128xf32>
    %14 = arith.addf %9, %13 : vector<256x128xf32>
    %15 = vector.extract_strided_slice %3 {offsets = [2, 0], sizes = [256, 64], strides = [1, 1]} : vector<272x64xbf16> to vector<256x64xbf16>
    %c2 = arith.constant 2 : index
    %c0_7 = arith.constant 0 : index
    %c0_8 = arith.constant 0 : index
    %16 = vector.load %arg2[%c2, %c0_7, %c0_8] : memref<9x64x128xbf16, #tpu.memory_space<vmem>>, vector<1x64x128xbf16>
    %17 = vector.shape_cast %16 : vector<1x64x128xbf16> to vector<64x128xbf16>
    %cst_9 = arith.constant dense<0.000000e+00> : vector<256x128xf32>
    %18 = tpu.matmul %15, %17, %cst_9 {dimension_numbers = #tpu.dot_dimension_numbers<[1], [0], [0], [1], [0, 0, 1, 1], [], []>} : vector<256x64xbf16>, vector<64x128xbf16>, vector<256x128xf32> -> vector<256x128xf32>
    %19 = arith.addf %14, %18 : vector<256x128xf32>
    %20 = vector.extract_strided_slice %3 {offsets = [6, 0], sizes = [256, 64], strides = [1, 1]} : vector<272x64xbf16> to vector<256x64xbf16>
    %c3 = arith.constant 3 : index
    %c0_10 = arith.constant 0 : index
    %c0_11 = arith.constant 0 : index
    %21 = vector.load %arg2[%c3, %c0_10, %c0_11] : memref<9x64x128xbf16, #tpu.memory_space<vmem>>, vector<1x64x128xbf16>
    %22 = vector.shape_cast %21 : vector<1x64x128xbf16> to vector<64x128xbf16>
    %cst_12 = arith.constant dense<0.000000e+00> : vector<256x128xf32>
    %23 = tpu.matmul %20, %22, %cst_12 {dimension_numbers = #tpu.dot_dimension_numbers<[1], [0], [0], [1], [0, 0, 1, 1], [], []>} : vector<256x64xbf16>, vector<64x128xbf16>, vector<256x128xf32> -> vector<256x128xf32>
    %24 = arith.addf %19, %23 : vector<256x128xf32>
    %25 = vector.extract_strided_slice %3 {offsets = [7, 0], sizes = [256, 64], strides = [1, 1]} : vector<272x64xbf16> to vector<256x64xbf16>
    %c4 = arith.constant 4 : index
    %c0_13 = arith.constant 0 : index
    %c0_14 = arith.constant 0 : index
    %26 = vector.load %arg2[%c4, %c0_13, %c0_14] : memref<9x64x128xbf16, #tpu.memory_space<vmem>>, vector<1x64x128xbf16>
    %27 = vector.shape_cast %26 : vector<1x64x128xbf16> to vector<64x128xbf16>
    %cst_15 = arith.constant dense<0.000000e+00> : vector<256x128xf32>
    %28 = tpu.matmul %25, %27, %cst_15 {dimension_numbers = #tpu.dot_dimension_numbers<[1], [0], [0], [1], [0, 0, 1, 1], [], []>} : vector<256x64xbf16>, vector<64x128xbf16>, vector<256x128xf32> -> vector<256x128xf32>
    %29 = arith.addf %24, %28 : vector<256x128xf32>
    %30 = vector.extract_strided_slice %3 {offsets = [8, 0], sizes = [256, 64], strides = [1, 1]} : vector<272x64xbf16> to vector<256x64xbf16>
    %c5 = arith.constant 5 : index
    %c0_16 = arith.constant 0 : index
    %c0_17 = arith.constant 0 : index
    %31 = vector.load %arg2[%c5, %c0_16, %c0_17] : memref<9x64x128xbf16, #tpu.memory_space<vmem>>, vector<1x64x128xbf16>
    %32 = vector.shape_cast %31 : vector<1x64x128xbf16> to vector<64x128xbf16>
    %cst_18 = arith.constant dense<0.000000e+00> : vector<256x128xf32>
    %33 = tpu.matmul %30, %32, %cst_18 {dimension_numbers = #tpu.dot_dimension_numbers<[1], [0], [0], [1], [0, 0, 1, 1], [], []>} : vector<256x64xbf16>, vector<64x128xbf16>, vector<256x128xf32> -> vector<256x128xf32>
    %34 = arith.addf %29, %33 : vector<256x128xf32>
    %35 = vector.extract_strided_slice %3 {offsets = [12, 0], sizes = [256, 64], strides = [1, 1]} : vector<272x64xbf16> to vector<256x64xbf16>
    %c6 = arith.constant 6 : index
    %c0_19 = arith.constant 0 : index
    %c0_20 = arith.constant 0 : index
    %36 = vector.load %arg2[%c6, %c0_19, %c0_20] : memref<9x64x128xbf16, #tpu.memory_space<vmem>>, vector<1x64x128xbf16>
    %37 = vector.shape_cast %36 : vector<1x64x128xbf16> to vector<64x128xbf16>
    %cst_21 = arith.constant dense<0.000000e+00> : vector<256x128xf32>
    %38 = tpu.matmul %35, %37, %cst_21 {dimension_numbers = #tpu.dot_dimension_numbers<[1], [0], [0], [1], [0, 0, 1, 1], [], []>} : vector<256x64xbf16>, vector<64x128xbf16>, vector<256x128xf32> -> vector<256x128xf32>
    %39 = arith.addf %34, %38 : vector<256x128xf32>
    %40 = vector.extract_strided_slice %3 {offsets = [13, 0], sizes = [256, 64], strides = [1, 1]} : vector<272x64xbf16> to vector<256x64xbf16>
    %c7 = arith.constant 7 : index
    %c0_22 = arith.constant 0 : index
    %c0_23 = arith.constant 0 : index
    %41 = vector.load %arg2[%c7, %c0_22, %c0_23] : memref<9x64x128xbf16, #tpu.memory_space<vmem>>, vector<1x64x128xbf16>
    %42 = vector.shape_cast %41 : vector<1x64x128xbf16> to vector<64x128xbf16>
    %cst_24 = arith.constant dense<0.000000e+00> : vector<256x128xf32>
    %43 = tpu.matmul %40, %42, %cst_24 {dimension_numbers = #tpu.dot_dimension_numbers<[1], [0], [0], [1], [0, 0, 1, 1], [], []>} : vector<256x64xbf16>, vector<64x128xbf16>, vector<256x128xf32> -> vector<256x128xf32>
    %44 = arith.addf %39, %43 : vector<256x128xf32>
    %45 = vector.extract_strided_slice %3 {offsets = [14, 0], sizes = [256, 64], strides = [1, 1]} : vector<272x64xbf16> to vector<256x64xbf16>
    %c8 = arith.constant 8 : index
    %c0_25 = arith.constant 0 : index
    %c0_26 = arith.constant 0 : index
    %46 = vector.load %arg2[%c8, %c0_25, %c0_26] : memref<9x64x128xbf16, #tpu.memory_space<vmem>>, vector<1x64x128xbf16>
    %47 = vector.shape_cast %46 : vector<1x64x128xbf16> to vector<64x128xbf16>
    %cst_27 = arith.constant dense<0.000000e+00> : vector<256x128xf32>
    %48 = tpu.matmul %45, %47, %cst_27 {dimension_numbers = #tpu.dot_dimension_numbers<[1], [0], [0], [1], [0, 0, 1, 1], [], []>} : vector<256x64xbf16>, vector<64x128xbf16>, vector<256x128xf32> -> vector<256x128xf32>
    %49 = arith.addf %44, %48 : vector<256x128xf32>
    %c0_28 = arith.constant 0 : index
    %c0_29 = arith.constant 0 : index
    %50 = vector.load %arg3[%c0_28, %c0_29] : memref<256x1xf32, #tpu.memory_space<vmem>>, vector<256x1xf32>
    %51 = vector.broadcast %50 : vector<256x1xf32> to vector<256x128xf32>
    %52 = arith.mulf %49, %51 : vector<256x128xf32>
    %cst_30 = arith.constant dense<0.000000e+00> : vector<128xf32>
    %53 = vector.multi_reduction <add>, %52, %cst_30 [0] : vector<256x128xf32> to vector<128xf32>
    %54 = vector.shape_cast %53 : vector<128xf32> to vector<1x128xf32>
    %c0_31 = arith.constant 0 : index
    %c0_32 = arith.constant 0 : index
    %55 = vector.load %arg5[%c0_31, %c0_32] : memref<8x128xf32, #tpu.memory_space<vmem>>, vector<1x128xf32>
    tpu.vector_store %arg5[%c0_31, %c0_32], %54 {strides = array<i32>} : memref<8x128xf32, #tpu.memory_space<vmem>>, vector<1x128xf32>,
    %56 = arith.mulf %52, %49 : vector<256x128xf32>
    %cst_33 = arith.constant dense<0.000000e+00> : vector<128xf32>
    %57 = vector.multi_reduction <add>, %56, %cst_33 [0] : vector<256x128xf32> to vector<128xf32>
    %58 = vector.shape_cast %57 : vector<128xf32> to vector<1x128xf32>
    %c1_34 = arith.constant 1 : index
    %c0_35 = arith.constant 0 : index
    %59 = vector.load %arg5[%c1_34, %c0_35] : memref<8x128xf32, #tpu.memory_space<vmem>>, vector<1x128xf32>
    tpu.vector_store %arg5[%c1_34, %c0_35], %58 {strides = array<i32>} : memref<8x128xf32, #tpu.memory_space<vmem>>, vector<1x128xf32>,
    %60 = arith.truncf %49 : vector<256x128xf32> to vector<256x128xbf16>
    %c0_36 = arith.constant 0 : index
    %c0_37 = arith.constant 0 : index
    %61 = vector.load %arg4[%c0_36, %c0_37] : memref<256x128xbf16, #tpu.memory_space<vmem>>, vector<256x128xbf16>
    tpu.vector_store %arg4[%c0_36, %c0_37], %60 {strides = array<i32>} : memref<256x128xbf16, #tpu.memory_space<vmem>>, vector<256x128xbf16>,
    return
  }
  func.func @transform_0(%arg0: i32) -> (i32, i32) {
    %c0_i32 = arith.constant 0 : i32
    %c0_i32_0 = arith.constant 0 : i32
    %c0_i32_1 = arith.constant 0 : i32
    return %c0_i32, %c0_i32_0 : i32, i32
  }
  func.func @transform_1(%arg0: i32) -> (i32, i32, i32) {
    %c0_i32 = arith.constant 0 : i32
    %c0_i32_0 = arith.constant 0 : i32
    %c0_i32_1 = arith.constant 0 : i32
    %c0_i32_2 = arith.constant 0 : i32
    return %c0_i32, %c0_i32_0, %c0_i32_1 : i32, i32, i32
  }
  func.func @transform_2(%arg0: i32) -> (i32, i32) {
    %c0_i32 = arith.constant 0 : i32
    %c0_i32_0 = arith.constant 0 : i32
    return %arg0, %c0_i32 : i32, i32
  }
  func.func @transform_3(%arg0: i32) -> (i32, i32) {
    %c0_i32 = arith.constant 0 : i32
    %c0_i32_0 = arith.constant 0 : i32
    return %arg0, %c0_i32 : i32, i32
  }
  func.func @transform_4(%arg0: i32) -> (i32, i32) {
    %c0_i32 = arith.constant 0 : i32
    %c0_i32_0 = arith.constant 0 : i32
    return %arg0, %c0_i32 : i32, i32
  }
}

module attributes {stable_mosaic.version = 11 : i64} {
  func.func @_conv3x3_stats_kernel(%arg0: i32, %arg1: memref<272x128xbf16, #tpu.memory_space<vmem>>, %arg2: memref<9x128x128xbf16, #tpu.memory_space<vmem>>, %arg3: memref<256x1xf32, #tpu.memory_space<vmem>>, %arg4: memref<256x128xbf16, #tpu.memory_space<vmem>>, %arg5: memref<8x128xf32, #tpu.memory_space<vmem>>) attributes {dimension_semantics = [#tpu.dimension_semantics<parallel>], iteration_bounds = array<i64: 1>, scalar_prefetch = 0 : i64, scratch_operands = 0 : i64, tpu.core_type = #tpu.core_type<tc>, window_params = [{pipeline_mode = #tpu.pipeline_mode<synchronous>, transform_indices = @transform_0, window_bounds = array<i64: 272, 128>}, {pipeline_mode = #tpu.pipeline_mode<synchronous>, transform_indices = @transform_1, window_bounds = array<i64: 9, 128, 128>}, {transform_indices = @transform_2, window_bounds = array<i64: 256, 1>}, {transform_indices = @transform_3, window_bounds = array<i64: 256, 128>}, {transform_indices = @transform_4, window_bounds = array<i64: 8, 128>}]} {
    %c256_i32 = arith.constant 256 : i32
    %0 = arith.muli %arg0, %c256_i32 : i32
    %1 = tpu.assume_multiple %0, 256 : i32
    %2 = arith.index_cast %1 : i32 to index
    %c0 = arith.constant 0 : index
    %3 = vector.load %arg1[%2, %c0] : memref<272x128xbf16, #tpu.memory_space<vmem>>, vector<272x128xbf16>
    %cst = arith.constant 0.000000e+00 : f32
    %4 = vector.broadcast %cst : f32 to vector<256x128xf32>
    %5 = vector.extract_strided_slice %3 {offsets = [0, 0], sizes = [256, 128], strides = [1, 1]} : vector<272x128xbf16> to vector<256x128xbf16>
    %c0_0 = arith.constant 0 : index
    %c0_1 = arith.constant 0 : index
    %c0_2 = arith.constant 0 : index
    %6 = vector.load %arg2[%c0_0, %c0_1, %c0_2] : memref<9x128x128xbf16, #tpu.memory_space<vmem>>, vector<1x128x128xbf16>
    %7 = vector.shape_cast %6 : vector<1x128x128xbf16> to vector<128x128xbf16>
    %cst_3 = arith.constant dense<0.000000e+00> : vector<256x128xf32>
    %8 = tpu.matmul %5, %7, %cst_3 {dimension_numbers = #tpu.dot_dimension_numbers<[1], [0], [0], [1], [0, 0, 1, 1], [], []>} : vector<256x128xbf16>, vector<128x128xbf16>, vector<256x128xf32> -> vector<256x128xf32>
    %9 = arith.addf %4, %8 : vector<256x128xf32>
    %10 = vector.extract_strided_slice %3 {offsets = [1, 0], sizes = [256, 128], strides = [1, 1]} : vector<272x128xbf16> to vector<256x128xbf16>
    %c1 = arith.constant 1 : index
    %c0_4 = arith.constant 0 : index
    %c0_5 = arith.constant 0 : index
    %11 = vector.load %arg2[%c1, %c0_4, %c0_5] : memref<9x128x128xbf16, #tpu.memory_space<vmem>>, vector<1x128x128xbf16>
    %12 = vector.shape_cast %11 : vector<1x128x128xbf16> to vector<128x128xbf16>
    %cst_6 = arith.constant dense<0.000000e+00> : vector<256x128xf32>
    %13 = tpu.matmul %10, %12, %cst_6 {dimension_numbers = #tpu.dot_dimension_numbers<[1], [0], [0], [1], [0, 0, 1, 1], [], []>} : vector<256x128xbf16>, vector<128x128xbf16>, vector<256x128xf32> -> vector<256x128xf32>
    %14 = arith.addf %9, %13 : vector<256x128xf32>
    %15 = vector.extract_strided_slice %3 {offsets = [2, 0], sizes = [256, 128], strides = [1, 1]} : vector<272x128xbf16> to vector<256x128xbf16>
    %c2 = arith.constant 2 : index
    %c0_7 = arith.constant 0 : index
    %c0_8 = arith.constant 0 : index
    %16 = vector.load %arg2[%c2, %c0_7, %c0_8] : memref<9x128x128xbf16, #tpu.memory_space<vmem>>, vector<1x128x128xbf16>
    %17 = vector.shape_cast %16 : vector<1x128x128xbf16> to vector<128x128xbf16>
    %cst_9 = arith.constant dense<0.000000e+00> : vector<256x128xf32>
    %18 = tpu.matmul %15, %17, %cst_9 {dimension_numbers = #tpu.dot_dimension_numbers<[1], [0], [0], [1], [0, 0, 1, 1], [], []>} : vector<256x128xbf16>, vector<128x128xbf16>, vector<256x128xf32> -> vector<256x128xf32>
    %19 = arith.addf %14, %18 : vector<256x128xf32>
    %20 = vector.extract_strided_slice %3 {offsets = [6, 0], sizes = [256, 128], strides = [1, 1]} : vector<272x128xbf16> to vector<256x128xbf16>
    %c3 = arith.constant 3 : index
    %c0_10 = arith.constant 0 : index
    %c0_11 = arith.constant 0 : index
    %21 = vector.load %arg2[%c3, %c0_10, %c0_11] : memref<9x128x128xbf16, #tpu.memory_space<vmem>>, vector<1x128x128xbf16>
    %22 = vector.shape_cast %21 : vector<1x128x128xbf16> to vector<128x128xbf16>
    %cst_12 = arith.constant dense<0.000000e+00> : vector<256x128xf32>
    %23 = tpu.matmul %20, %22, %cst_12 {dimension_numbers = #tpu.dot_dimension_numbers<[1], [0], [0], [1], [0, 0, 1, 1], [], []>} : vector<256x128xbf16>, vector<128x128xbf16>, vector<256x128xf32> -> vector<256x128xf32>
    %24 = arith.addf %19, %23 : vector<256x128xf32>
    %25 = vector.extract_strided_slice %3 {offsets = [7, 0], sizes = [256, 128], strides = [1, 1]} : vector<272x128xbf16> to vector<256x128xbf16>
    %c4 = arith.constant 4 : index
    %c0_13 = arith.constant 0 : index
    %c0_14 = arith.constant 0 : index
    %26 = vector.load %arg2[%c4, %c0_13, %c0_14] : memref<9x128x128xbf16, #tpu.memory_space<vmem>>, vector<1x128x128xbf16>
    %27 = vector.shape_cast %26 : vector<1x128x128xbf16> to vector<128x128xbf16>
    %cst_15 = arith.constant dense<0.000000e+00> : vector<256x128xf32>
    %28 = tpu.matmul %25, %27, %cst_15 {dimension_numbers = #tpu.dot_dimension_numbers<[1], [0], [0], [1], [0, 0, 1, 1], [], []>} : vector<256x128xbf16>, vector<128x128xbf16>, vector<256x128xf32> -> vector<256x128xf32>
    %29 = arith.addf %24, %28 : vector<256x128xf32>
    %30 = vector.extract_strided_slice %3 {offsets = [8, 0], sizes = [256, 128], strides = [1, 1]} : vector<272x128xbf16> to vector<256x128xbf16>
    %c5 = arith.constant 5 : index
    %c0_16 = arith.constant 0 : index
    %c0_17 = arith.constant 0 : index
    %31 = vector.load %arg2[%c5, %c0_16, %c0_17] : memref<9x128x128xbf16, #tpu.memory_space<vmem>>, vector<1x128x128xbf16>
    %32 = vector.shape_cast %31 : vector<1x128x128xbf16> to vector<128x128xbf16>
    %cst_18 = arith.constant dense<0.000000e+00> : vector<256x128xf32>
    %33 = tpu.matmul %30, %32, %cst_18 {dimension_numbers = #tpu.dot_dimension_numbers<[1], [0], [0], [1], [0, 0, 1, 1], [], []>} : vector<256x128xbf16>, vector<128x128xbf16>, vector<256x128xf32> -> vector<256x128xf32>
    %34 = arith.addf %29, %33 : vector<256x128xf32>
    %35 = vector.extract_strided_slice %3 {offsets = [12, 0], sizes = [256, 128], strides = [1, 1]} : vector<272x128xbf16> to vector<256x128xbf16>
    %c6 = arith.constant 6 : index
    %c0_19 = arith.constant 0 : index
    %c0_20 = arith.constant 0 : index
    %36 = vector.load %arg2[%c6, %c0_19, %c0_20] : memref<9x128x128xbf16, #tpu.memory_space<vmem>>, vector<1x128x128xbf16>
    %37 = vector.shape_cast %36 : vector<1x128x128xbf16> to vector<128x128xbf16>
    %cst_21 = arith.constant dense<0.000000e+00> : vector<256x128xf32>
    %38 = tpu.matmul %35, %37, %cst_21 {dimension_numbers = #tpu.dot_dimension_numbers<[1], [0], [0], [1], [0, 0, 1, 1], [], []>} : vector<256x128xbf16>, vector<128x128xbf16>, vector<256x128xf32> -> vector<256x128xf32>
    %39 = arith.addf %34, %38 : vector<256x128xf32>
    %40 = vector.extract_strided_slice %3 {offsets = [13, 0], sizes = [256, 128], strides = [1, 1]} : vector<272x128xbf16> to vector<256x128xbf16>
    %c7 = arith.constant 7 : index
    %c0_22 = arith.constant 0 : index
    %c0_23 = arith.constant 0 : index
    %41 = vector.load %arg2[%c7, %c0_22, %c0_23] : memref<9x128x128xbf16, #tpu.memory_space<vmem>>, vector<1x128x128xbf16>
    %42 = vector.shape_cast %41 : vector<1x128x128xbf16> to vector<128x128xbf16>
    %cst_24 = arith.constant dense<0.000000e+00> : vector<256x128xf32>
    %43 = tpu.matmul %40, %42, %cst_24 {dimension_numbers = #tpu.dot_dimension_numbers<[1], [0], [0], [1], [0, 0, 1, 1], [], []>} : vector<256x128xbf16>, vector<128x128xbf16>, vector<256x128xf32> -> vector<256x128xf32>
    %44 = arith.addf %39, %43 : vector<256x128xf32>
    %45 = vector.extract_strided_slice %3 {offsets = [14, 0], sizes = [256, 128], strides = [1, 1]} : vector<272x128xbf16> to vector<256x128xbf16>
    %c8 = arith.constant 8 : index
    %c0_25 = arith.constant 0 : index
    %c0_26 = arith.constant 0 : index
    %46 = vector.load %arg2[%c8, %c0_25, %c0_26] : memref<9x128x128xbf16, #tpu.memory_space<vmem>>, vector<1x128x128xbf16>
    %47 = vector.shape_cast %46 : vector<1x128x128xbf16> to vector<128x128xbf16>
    %cst_27 = arith.constant dense<0.000000e+00> : vector<256x128xf32>
    %48 = tpu.matmul %45, %47, %cst_27 {dimension_numbers = #tpu.dot_dimension_numbers<[1], [0], [0], [1], [0, 0, 1, 1], [], []>} : vector<256x128xbf16>, vector<128x128xbf16>, vector<256x128xf32> -> vector<256x128xf32>
    %49 = arith.addf %44, %48 : vector<256x128xf32>
    %c0_28 = arith.constant 0 : index
    %c0_29 = arith.constant 0 : index
    %50 = vector.load %arg3[%c0_28, %c0_29] : memref<256x1xf32, #tpu.memory_space<vmem>>, vector<256x1xf32>
    %51 = vector.broadcast %50 : vector<256x1xf32> to vector<256x128xf32>
    %52 = arith.mulf %49, %51 : vector<256x128xf32>
    %cst_30 = arith.constant dense<0.000000e+00> : vector<128xf32>
    %53 = vector.multi_reduction <add>, %52, %cst_30 [0] : vector<256x128xf32> to vector<128xf32>
    %54 = vector.shape_cast %53 : vector<128xf32> to vector<1x128xf32>
    %c0_31 = arith.constant 0 : index
    %c0_32 = arith.constant 0 : index
    %55 = vector.load %arg5[%c0_31, %c0_32] : memref<8x128xf32, #tpu.memory_space<vmem>>, vector<1x128xf32>
    tpu.vector_store %arg5[%c0_31, %c0_32], %54 {strides = array<i32>} : memref<8x128xf32, #tpu.memory_space<vmem>>, vector<1x128xf32>,
    %56 = arith.mulf %52, %49 : vector<256x128xf32>
    %cst_33 = arith.constant dense<0.000000e+00> : vector<128xf32>
    %57 = vector.multi_reduction <add>, %56, %cst_33 [0] : vector<256x128xf32> to vector<128xf32>
    %58 = vector.shape_cast %57 : vector<128xf32> to vector<1x128xf32>
    %c1_34 = arith.constant 1 : index
    %c0_35 = arith.constant 0 : index
    %59 = vector.load %arg5[%c1_34, %c0_35] : memref<8x128xf32, #tpu.memory_space<vmem>>, vector<1x128xf32>
    tpu.vector_store %arg5[%c1_34, %c0_35], %58 {strides = array<i32>} : memref<8x128xf32, #tpu.memory_space<vmem>>, vector<1x128xf32>,
    %60 = arith.truncf %49 : vector<256x128xf32> to vector<256x128xbf16>
    %c0_36 = arith.constant 0 : index
    %c0_37 = arith.constant 0 : index
    %61 = vector.load %arg4[%c0_36, %c0_37] : memref<256x128xbf16, #tpu.memory_space<vmem>>, vector<256x128xbf16>
    tpu.vector_store %arg4[%c0_36, %c0_37], %60 {strides = array<i32>} : memref<256x128xbf16, #tpu.memory_space<vmem>>, vector<256x128xbf16>,
    return
  }
  func.func @transform_0(%arg0: i32) -> (i32, i32) {
    %c0_i32 = arith.constant 0 : i32
    %c0_i32_0 = arith.constant 0 : i32
    %c0_i32_1 = arith.constant 0 : i32
    return %c0_i32, %c0_i32_0 : i32, i32
  }
  func.func @transform_1(%arg0: i32) -> (i32, i32, i32) {
    %c0_i32 = arith.constant 0 : i32
    %c0_i32_0 = arith.constant 0 : i32
    %c0_i32_1 = arith.constant 0 : i32
    %c0_i32_2 = arith.constant 0 : i32
    return %c0_i32, %c0_i32_0, %c0_i32_1 : i32, i32, i32
  }
  func.func @transform_2(%arg0: i32) -> (i32, i32) {
    %c0_i32 = arith.constant 0 : i32
    %c0_i32_0 = arith.constant 0 : i32
    return %arg0, %c0_i32 : i32, i32
  }
  func.func @transform_3(%arg0: i32) -> (i32, i32) {
    %c0_i32 = arith.constant 0 : i32
    %c0_i32_0 = arith.constant 0 : i32
    return %arg0, %c0_i32 : i32, i32
  }
  func.func @transform_4(%arg0: i32) -> (i32, i32) {
    %c0_i32 = arith.constant 0 : i32
    %c0_i32_0 = arith.constant 0 : i32
    return %arg0, %c0_i32 : i32, i32
  }
}

module attributes {stable_mosaic.version = 11 : i64} {
  func.func @_head_kernel(%arg0: i32, %arg1: memref<2x16x128xbf16, #tpu.memory_space<vmem>>, %arg2: memref<128x10xf32, #tpu.memory_space<vmem>>, %arg3: memref<1x10xf32, #tpu.memory_space<vmem>>, %arg4: memref<2x10xf32, #tpu.memory_space<vmem>>) attributes {dimension_semantics = [#tpu.dimension_semantics<arbitrary>], iteration_bounds = array<i64: 1>, scalar_prefetch = 0 : i64, scratch_operands = 0 : i64, tpu.core_type = #tpu.core_type<tc>, window_params = [{pipeline_mode = #tpu.pipeline_mode<synchronous>, transform_indices = @transform_0, window_bounds = array<i64: 2, 16, 128>}, {pipeline_mode = #tpu.pipeline_mode<synchronous>, transform_indices = @transform_1, window_bounds = array<i64: 128, 10>}, {pipeline_mode = #tpu.pipeline_mode<synchronous>, transform_indices = @transform_2, window_bounds = array<i64: 1, 10>}, {pipeline_mode = #tpu.pipeline_mode<synchronous>, transform_indices = @transform_3, window_bounds = array<i64: 2, 10>}]} {
    %c0 = arith.constant 0 : index
    %c0_0 = arith.constant 0 : index
    %c0_1 = arith.constant 0 : index
    %0 = vector.load %arg1[%c0, %c0_0, %c0_1] : memref<2x16x128xbf16, #tpu.memory_space<vmem>>, vector<2x16x128xbf16>
    %1 = arith.extf %0 : vector<2x16x128xbf16> to vector<2x16x128xf32>
    %cst = arith.constant dense<0.000000e+00> : vector<2x128xf32>
    %2 = vector.multi_reduction <add>, %1, %cst [1] : vector<2x16x128xf32> to vector<2x128xf32>
    %cst_2 = arith.constant 6.250000e-02 : f32
    %3 = vector.broadcast %cst_2 : f32 to vector<2x128xf32>
    %4 = arith.mulf %2, %3 : vector<2x128xf32>
    %c0_3 = arith.constant 0 : index
    %c0_4 = arith.constant 0 : index
    %5 = vector.load %arg2[%c0_3, %c0_4] : memref<128x10xf32, #tpu.memory_space<vmem>>, vector<128x10xf32>
    %cst_5 = arith.constant dense<0.000000e+00> : vector<2x10xf32>
    %6 = tpu.matmul %4, %5, %cst_5 {dimension_numbers = #tpu.dot_dimension_numbers<[1], [0], [0], [1], [0, 0, 1, 1], [], []>} : vector<2x128xf32>, vector<128x10xf32>, vector<2x10xf32> -> vector<2x10xf32>
    %c0_6 = arith.constant 0 : index
    %c0_7 = arith.constant 0 : index
    %7 = vector.load %arg3[%c0_6, %c0_7] : memref<1x10xf32, #tpu.memory_space<vmem>>, vector<1x10xf32>
    %8 = vector.broadcast %7 : vector<1x10xf32> to vector<2x10xf32>
    %9 = arith.addf %6, %8 : vector<2x10xf32>
    %cst_8 = arith.constant 5.000000e-01 : f32
    %10 = vector.broadcast %cst_8 : f32 to vector<2x10xf32>
    %11 = arith.mulf %10, %9 : vector<2x10xf32>
    %12 = math.tanh %11 : vector<2x10xf32>
    %cst_9 = arith.constant 1.000000e+00 : f32
    %13 = vector.broadcast %cst_9 : f32 to vector<2x10xf32>
    %14 = arith.addf %12, %13 : vector<2x10xf32>
    %cst_10 = arith.constant 5.000000e-01 : f32
    %15 = vector.broadcast %cst_10 : f32 to vector<2x10xf32>
    %16 = arith.mulf %15, %14 : vector<2x10xf32>
    %c0_11 = arith.constant 0 : index
    %c0_12 = arith.constant 0 : index
    %17 = vector.load %arg4[%c0_11, %c0_12] : memref<2x10xf32, #tpu.memory_space<vmem>>, vector<2x10xf32>
    tpu.vector_store %arg4[%c0_11, %c0_12], %16 {strides = array<i32>} : memref<2x10xf32, #tpu.memory_space<vmem>>, vector<2x10xf32>,
    return
  }
  func.func @transform_0(%arg0: i32) -> (i32, i32, i32) {
    %c0_i32 = arith.constant 0 : i32
    %c0_i32_0 = arith.constant 0 : i32
    %c0_i32_1 = arith.constant 0 : i32
    %c0_i32_2 = arith.constant 0 : i32
    return %c0_i32, %c0_i32_0, %c0_i32_1 : i32, i32, i32
  }
  func.func @transform_1(%arg0: i32) -> (i32, i32) {
    %c0_i32 = arith.constant 0 : i32
    %c0_i32_0 = arith.constant 0 : i32
    %c0_i32_1 = arith.constant 0 : i32
    return %c0_i32, %c0_i32_0 : i32, i32
  }
  func.func @transform_2(%arg0: i32) -> (i32, i32) {
    %c0_i32 = arith.constant 0 : i32
    %c0_i32_0 = arith.constant 0 : i32
    %c0_i32_1 = arith.constant 0 : i32
    return %c0_i32, %c0_i32_0 : i32, i32
  }
  func.func @transform_3(%arg0: i32) -> (i32, i32) {
    %c0_i32 = arith.constant 0 : i32
    %c0_i32_0 = arith.constant 0 : i32
    %c0_i32_1 = arith.constant 0 : i32
    return %c0_i32, %c0_i32_0 : i32, i32
  }
}

</mosaic_0001>

<llo_original>
// kernel: cnn18_forward.21
$region0: #{cnn18_forward.21}
  #allocation0 [shape = 'u32[]', space=smem, size = 0x4, offset = 0x4, fixed_abs, tag = 'smem constant byte address 0x4 - core index']
  #allocation1 [shape = 'u32[144,128]{1,0:T(1,128)}', space=vmem, size = 0x12000, scoped, tag = 'internal scratch']
  %s0 = inlined_call_operand.vmem [shape: bf16[128,128], index: 0, kind: input, shape index: {}]
  %s1 = inlined_call_operand.vmem [shape: f32[1,128], index: 1, kind: input, shape index: {}]
  %s2 = inlined_call_operand.vmem [shape: f32[1,128], index: 2, kind: input, shape index: {}]
  %s3 = inlined_call_operand.vmem [shape: bf16[128,128], index: 3, kind: output, shape index: {}]
  %s4 = sld [smem:[#allocation0]]
  $region22: #{cnn18_forward.21} parent=0
    _
  %s6 = ssub.s32 1, %s4
  %s7 = scalar_select 0, %s6, %s4
  // Predicated region
  $region2: #{cnn18_forward.21} parent=0 // pred_check
    _
  $region3: #{cnn18_forward.21} parent=0 // pred_check_branch
    %9 = sbr.rel (0) target = $region5
  $region4: #{cnn18_forward.21} parent=0 // pred_region
    _
  $region5: #{cnn18_forward.21} parent=0 // pred_fallthru
    _
  // Predicated region
  $region6: #{cnn18_forward.21} parent=0 // pred_check
    _
  $region7: #{cnn18_forward.21} parent=0 // pred_check_branch
    %11 = sbr.rel (0) target = $region9
  $region8: #{cnn18_forward.21} parent=0 // pred_region
    _
  $region9: #{cnn18_forward.21} parent=0 // pred_fallthru
    _
  // Predicated region
  $region10: #{cnn18_forward.21} parent=0 // pred_check
    _
  $region11: #{cnn18_forward.21} parent=0 // pred_check_branch
    %13 = sbr.rel (0) target = $region13
  $region12: #{cnn18_forward.21} parent=0 // pred_region
    _
  $region13: #{cnn18_forward.21} parent=0 // pred_fallthru
    _
  %v14 = vld [vmem:[%s0] sm:$0xf]
  %v15 = vld [vmem:[%s0 + $0x4] sm:$0xf]
  %v16 = vld [vmem:[%s0 + $0x8] sm:$0xf]
  %v17 = vld [vmem:[%s0 + $0xc] sm:$0xf]
  %v18 = vld [vmem:[%s0 + $0x10] sm:$0xf]
  %v19 = vld [vmem:[%s0 + $0x14] sm:$0xf]
  %v20 = vld [vmem:[%s0 + $0x18] sm:$0xf]
  %v21 = vld [vmem:[%s0 + $0x1c] sm:$0xf]
  %v22 = vld [vmem:[%s0 + $0x20] sm:$0xf]
  %v23 = vld [vmem:[%s0 + $0x24] sm:$0xf]
  %v24 = vld [vmem:[%s0 + $0x28] sm:$0xf]
  %v25 = vld [vmem:[%s0 + $0x2c] sm:$0xf]
  %v26 = vld [vmem:[%s0 + $0x30] sm:$0xf]
  %v27 = vld [vmem:[%s0 + $0x34] sm:$0xf]
  %v28 = vld [vmem:[%s0 + $0x38] sm:$0xf]
  %v29 = vld [vmem:[%s0 + $0x3c] sm:$0xf]
  %v30 = vunpack.c.l.bf16 %v14
  %v31 = vunpack.c.l.bf16 %v15
  %v32 = vunpack.c.l.bf16 %v16
  %v33 = vunpack.c.l.bf16 %v17
  %v34 = vunpack.c.l.bf16 %v18
  %v35 = vunpack.c.l.bf16 %v19
  %v36 = vunpack.c.l.bf16 %v20
  %v37 = vunpack.c.l.bf16 %v21
  %v38 = vunpack.c.l.bf16 %v22
  %v39 = vunpack.c.l.bf16 %v23
  %v40 = vunpack.c.l.bf16 %v24
  %v41 = vunpack.c.l.bf16 %v25
  %v42 = vunpack.c.l.bf16 %v26
  %v43 = vunpack.c.l.bf16 %v27
  %v44 = vunpack.c.l.bf16 %v28
  %v45 = vunpack.c.l.bf16 %v29
  %v46 = vld [vmem:[%s1] sm:$0x1]
  %v48 = vlaneseq
  %v49 = vshrl.u32 %v48, 7
  %v50 = vsub.s32 0, %v49
  %v51 = vrot.slane %v46, %v50
  %v53 = vmul.f32 %v30, %v51
  %v54 = vmul.f32 %v31, %v51
  %v55 = vmul.f32 %v32, %v51
  %v56 = vmul.f32 %v33, %v51
  %v57 = vmul.f32 %v34, %v51
  %v58 = vmul.f32 %v35, %v51
  %v59 = vmul.f32 %v36, %v51
  %v60 = vmul.f32 %v37, %v51
  %v61 = vmul.f32 %v38, %v51
  %v62 = vmul.f32 %v39, %v51
  %v63 = vmul.f32 %v40, %v51
  %v64 = vmul.f32 %v41, %v51
  %v65 = vmul.f32 %v42, %v51
  %v66 = vmul.f32 %v43, %v51
  %v67 = vmul.f32 %v44, %v51
  %v68 = vmul.f32 %v45, %v51
  %v69 = vld [vmem:[%s2] sm:$0x1]
  %v71 = vlaneseq
  %v72 = vshrl.u32 %v71, 7
  %v73 = vsub.s32 0, %v72
  %v74 = vrot.slane %v69, %v73
  %v76 = vadd.f32 %v53, %v74
  %v77 = vadd.f32 %v54, %v74
  %v78 = vadd.f32 %v55, %v74
  %v79 = vadd.f32 %v56, %v74
  %v80 = vadd.f32 %v57, %v74
  %v81 = vadd.f32 %v58, %v74
  %v82 = vadd.f32 %v59, %v74
  %v83 = vadd.f32 %v60, %v74
  %v84 = vadd.f32 %v61, %v74
  %v85 = vadd.f32 %v62, %v74
  %v86 = vadd.f32 %v63, %v74
  %v87 = vadd.f32 %v64, %v74
  %v88 = vadd.f32 %v65, %v74
  %v89 = vadd.f32 %v66, %v74
  %v90 = vadd.f32 %v67, %v74
  %v91 = vadd.f32 %v68, %v74
  %v92 = vmax.f32 %v76, 0.0
  %v93 = vmax.f32 %v77, 0.0
  %v94 = vmax.f32 %v78, 0.0
  %v95 = vmax.f32 %v79, 0.0
  %v96 = vmax.f32 %v80, 0.0
  %v97 = vmax.f32 %v81, 0.0
  %v98 = vmax.f32 %v82, 0.0
  %v99 = vmax.f32 %v83, 0.0
  %v100 = vmax.f32 %v84, 0.0
  %v101 = vmax.f32 %v85, 0.0
  %v102 = vmax.f32 %v86, 0.0
  %v103 = vmax.f32 %v87, 0.0
  %v104 = vmax.f32 %v88, 0.0
  %v105 = vmax.f32 %v89, 0.0
  %v106 = vmax.f32 %v90, 0.0
  %v107 = vmax.f32 %v91, 0.0
  %v108 = vpack.c.bf16 %v93, %v92
  %v109 = vpack.c.bf16 %v95, %v94
  %v110 = vpack.c.bf16 %v97, %v96
  %v111 = vpack.c.bf16 %v99, %v98
  %v112 = vpack.c.bf16 %v101, %v100
  %v113 = vpack.c.bf16 %v103, %v102
  %v114 = vpack.c.bf16 %v105, %v104
  %v115 = vpack.c.bf16 %v107, %v106
  %v124 = vunpack.c.l.b16 %v108
  %v125 = vunpack.c.h.b16 %v108
  %v126 = vunpack.c.l.b16 %v109
  %v127 = vunpack.c.h.b16 %v109
  %v128 = vunpack.c.l.b16 %v110
  %v129 = vunpack.c.h.b16 %v110
  %v130 = vunpack.c.l.b16 %v111
  %v131 = vunpack.c.h.b16 %v111
  %v132 = vunpack.c.l.b16 %v112
  %v133 = vunpack.c.h.b16 %v112
  %v134 = vunpack.c.l.b16 %v113
  %v135 = vunpack.c.h.b16 %v113
  %v136 = vunpack.c.l.b16 %v114
  %v137 = vunpack.c.h.b16 %v114
  %v138 = vunpack.c.l.b16 %v115
  %v139 = vunpack.c.h.b16 %v115
  %v140 = vpack.c.b16 %v124, %v124
  %v141 = vpack.c.b16 %v125, %v125
  %v142 = vpack.c.b16 %v126, %v126
  %v143 = vpack.c.b16 %v127, %v127
  %v144 = vpack.c.b16 %v128, %v128
  %v145 = vpack.c.b16 %v129, %v129
  %v146 = vpack.c.b16 %v130, %v130
  %v147 = vpack.c.b16 %v131, %v131
  %v148 = vpack.c.b16 %v132, %v132
  %v149 = vpack.c.b16 %v133, %v133
  %v150 = vpack.c.b16 %v134, %v134
  %v151 = vpack.c.b16 %v135, %v135
  %v152 = vpack.c.b16 %v136, %v136
  %v153 = vpack.c.b16 %v137, %v137
  %v154 = vpack.c.b16 %v138, %v138
  %v155 = vpack.c.b16 %v139, %v139
  %172 = vst [vmem:[%s3] sm:$0xf] %v140
  %173 = vst [vmem:[%s3 + $0x4] sm:$0xf] %v141
  %174 = vst [vmem:[%s3 + $0x8] sm:$0xf] %v142
  %175 = vst [vmem:[%s3 + $0xc] sm:$0xf] %v143
  %176 = vst [vmem:[%s3 + $0x10] sm:$0xf] %v144
  %177 = vst [vmem:[%s3 + $0x14] sm:$0xf] %v145
  %178 = vst [vmem:[%s3 + $0x18] sm:$0xf] %v146
  %179 = vst [vmem:[%s3 + $0x1c] sm:$0xf] %v147
  %180 = vst [vmem:[%s3 + $0x20] sm:$0xf] %v148
  %181 = vst [vmem:[%s3 + $0x24] sm:$0xf] %v149
  %182 = vst [vmem:[%s3 + $0x28] sm:$0xf] %v150
  %183 = vst [vmem:[%s3 + $0x2c] sm:$0xf] %v151
  %184 = vst [vmem:[%s3 + $0x30] sm:$0xf] %v152
  %185 = vst [vmem:[%s3 + $0x34] sm:$0xf] %v153
  %186 = vst [vmem:[%s3 + $0x38] sm:$0xf] %v154
  %187 = vst [vmem:[%s3 + $0x3c] sm:$0xf] %v155
  // Predicated region
  $region14: #{cnn18_forward.21} parent=0 // pred_check
    _
  $region15: #{cnn18_forward.21} parent=0 // pred_check_branch
    %189 = sbr.rel (0) target = $region17
  $region16: #{cnn18_forward.21} parent=0 // pred_region
    _
  $region17: #{cnn18_forward.21} parent=0 // pred_fallthru
    _
  // Predicated region
  $region18: #{cnn18_forward.21} parent=0 // pred_check
    _
  $region19: #{cnn18_forward.21} parent=0 // pred_check_branch
    %191 = sbr.rel (0) target = $region21
  $region20: #{cnn18_forward.21} parent=0 // pred_region
    _
  $region21: #{cnn18_forward.21} parent=0 // pred_fallthru
    _

// kernel: cnn18_forward.20
$region0: #{cnn18_forward.20}
  #allocation0 [shape = 'u32[]', space=smem, size = 0x4, offset = 0x4, fixed_abs, tag = 'smem constant byte address 0x4 - core index']
  #allocation1 [shape = 'u32[144,128]{1,0:T(1,128)}', space=vmem, size = 0x12000, scoped, tag = 'internal scratch']
  %s0 = inlined_call_operand.vmem [shape: bf16[256,256], index: 0, kind: input, shape index: {}]
  %s1 = inlined_call_operand.vmem [shape: bf16[256,64], index: 1, kind: input, shape index: {}]
  %s2 = inlined_call_operand.vmem [shape: bf16[256,64], index: 2, kind: output, shape index: {0}]
  %s3 = inlined_call_operand.vmem [shape: f32[8,64], index: 3, kind: output, shape index: {1}]
  %4 = xla_tuple %s2, %s3
  %s5 = sld [smem:[#allocation0]]
  $region26: #{cnn18_forward.20} parent=0
    _
  %s7 = ssub.s32 1, %s5
  %s8 = scalar_select 0, %s7, %s5
  // Predicated region
  $region2: #{cnn18_forward.20} parent=0 // pred_check
    _
  $region3: #{cnn18_forward.20} parent=0 // pred_check_branch
    %10 = sbr.rel (0) target = $region5
  $region4: #{cnn18_forward.20} parent=0 // pred_region
    _
  $region5: #{cnn18_forward.20} parent=0 // pred_fallthru
    _
  // Predicated region
  $region6: #{cnn18_forward.20} parent=0 // pred_check
    _
  $region7: #{cnn18_forward.20} parent=0 // pred_check_branch
    %12 = sbr.rel (0) target = $region9
  $region8: #{cnn18_forward.20} parent=0 // pred_region
    _
  $region9: #{cnn18_forward.20} parent=0 // pred_fallthru
    _
  %v14 = vld [vmem:[%s0] sm:$0xff]
  %v15 = vld [vmem:[%s0 + $0x8] sm:$0xff]
  %v16 = vld [vmem:[%s0 + $0x10] sm:$0xff]
  %v17 = vld [vmem:[%s0 + $0x18] sm:$0xff]
  %v18 = vld [vmem:[%s0 + $0x20] sm:$0xff]
  %v19 = vld [vmem:[%s0 + $0x28] sm:$0xff]
  %v20 = vld [vmem:[%s0 + $0x30] sm:$0xff]
  %v21 = vld [vmem:[%s0 + $0x38] sm:$0xff]
  %v22 = vld [vmem:[%s0 + $0x40] sm:$0xff]
  %v23 = vld [vmem:[%s0 + $0x48] sm:$0xff]
  %v24 = vld [vmem:[%s0 + $0x50] sm:$0xff]
  %v25 = vld [vmem:[%s0 + $0x58] sm:$0xff]
  %v26 = vld [vmem:[%s0 + $0x60] sm:$0xff]
  %v27 = vld [vmem:[%s0 + $0x68] sm:$0xff]
  %v28 = vld [vmem:[%s0 + $0x70] sm:$0xff]
  %v29 = vld [vmem:[%s0 + $0x78] sm:$0xff]
  %v30 = vld [vmem:[%s0 + $0x80] sm:$0xff]
  %v31 = vld [vmem:[%s0 + $0x88] sm:$0xff]
  %v32 = vld [vmem:[%s0 + $0x90] sm:$0xff]
  %v33 = vld [vmem:[%s0 + $0x98] sm:$0xff]
  %v34 = vld [vmem:[%s0 + $0xa0] sm:$0xff]
  %v35 = vld [vmem:[%s0 + $0xa8] sm:$0xff]
  %v36 = vld [vmem:[%s0 + $0xb0] sm:$0xff]
  %v37 = vld [vmem:[%s0 + $0xb8] sm:$0xff]
  %v38 = vld [vmem:[%s0 + $0xc0] sm:$0xff]
  %v39 = vld [vmem:[%s0 + $0xc8] sm:$0xff]
  %v40 = vld [vmem:[%s0 + $0xd0] sm:$0xff]
  %v41 = vld [vmem:[%s0 + $0xd8] sm:$0xff]
  %v42 = vld [vmem:[%s0 + $0xe0] sm:$0xff]
  %v43 = vld [vmem:[%s0 + $0xe8] sm:$0xff]
  %v44 = vld [vmem:[%s0 + $0xf0] sm:$0xff]
  %v45 = vld [vmem:[%s0 + $0xf8] sm:$0xff]
  %v46 = vld [vmem:[%s1] sm:$0xf]
  %v47 = vld [vmem:[%s1 + $0x4] sm:$0xf]
  %v48 = vld [vmem:[%s1 + $0x8] sm:$0xf]
  %v49 = vld [vmem:[%s1 + $0xc] sm:$0xf]
  %v50 = vld [vmem:[%s1 + $0x10] sm:$0xf]
  %v51 = vld [vmem:[%s1 + $0x14] sm:$0xf]
  %v52 = vld [vmem:[%s1 + $0x18] sm:$0xf]
  %v53 = vld [vmem:[%s1 + $0x1c] sm:$0xf]
  %v54 = vld [vmem:[%s1 + $0x20] sm:$0xf]
  %v55 = vld [vmem:[%s1 + $0x24] sm:$0xf]
  %v56 = vld [vmem:[%s1 + $0x28] sm:$0xf]
  %v57 = vld [vmem:[%s1 + $0x2c] sm:$0xf]
  %v58 = vld [vmem:[%s1 + $0x30] sm:$0xf]
  %v59 = vld [vmem:[%s1 + $0x34] sm:$0xf]
  %v60 = vld [vmem:[%s1 + $0x38] sm:$0xf]
  %v61 = vld [vmem:[%s1 + $0x3c] sm:$0xf]
  %v62 = vld [vmem:[%s1 + $0x40] sm:$0xf]
  %v63 = vld [vmem:[%s1 + $0x44] sm:$0xf]
  %v64 = vld [vmem:[%s1 + $0x48] sm:$0xf]
  %v65 = vld [vmem:[%s1 + $0x4c] sm:$0xf]
  %v66 = vld [vmem:[%s1 + $0x50] sm:$0xf]
  %v67 = vld [vmem:[%s1 + $0x54] sm:$0xf]
  %v68 = vld [vmem:[%s1 + $0x58] sm:$0xf]
  %v69 = vld [vmem:[%s1 + $0x5c] sm:$0xf]
  %v70 = vld [vmem:[%s1 + $0x60] sm:$0xf]
  %v71 = vld [vmem:[%s1 + $0x64] sm:$0xf]
  %v72 = vld [vmem:[%s1 + $0x68] sm:$0xf]
  %v73 = vld [vmem:[%s1 + $0x6c] sm:$0xf]
  %v74 = vld [vmem:[%s1 + $0x70] sm:$0xf]
  %v75 = vld [vmem:[%s1 + $0x74] sm:$0xf]
  %v76 = vld [vmem:[%s1 + $0x78] sm:$0xf]
  %v77 = vld [vmem:[%s1 + $0x7c] sm:$0xf]
  %v110 = vunpack.c.l.b16 %v14
  %v111 = vunpack.c.h.b16 %v14
  %v112 = vunpack.c.l.b16 %v15
  %v113 = vunpack.c.h.b16 %v15
  %v114 = vunpack.c.l.b16 %v16
  %v115 = vunpack.c.h.b16 %v16
  %v116 = vunpack.c.l.b16 %v17
  %v117 = vunpack.c.h.b16 %v17
  %v118 = vunpack.c.l.b16 %v18
  %v119 = vunpack.c.h.b16 %v18
  %v120 = vunpack.c.l.b16 %v19
  %v121 = vunpack.c.h.b16 %v19
  %v122 = vunpack.c.l.b16 %v20
  %v123 = vunpack.c.h.b16 %v20
  %v124 = vunpack.c.l.b16 %v21
  %v125 = vunpack.c.h.b16 %v21
  %v126 = vunpack.c.l.b16 %v22
  %v127 = vunpack.c.h.b16 %v22
  %v128 = vunpack.c.l.b16 %v23
  %v129 = vunpack.c.h.b16 %v23
  %v130 = vunpack.c.l.b16 %v24
  %v131 = vunpack.c.h.b16 %v24
  %v132 = vunpack.c.l.b16 %v25
  %v133 = vunpack.c.h.b16 %v25
  %v134 = vunpack.c.l.b16 %v26
  %v135 = vunpack.c.h.b16 %v26
  %v136 = vunpack.c.l.b16 %v27
  %v137 = vunpack.c.h.b16 %v27
  %v138 = vunpack.c.l.b16 %v28
  %v139 = vunpack.c.h.b16 %v28
  %v140 = vunpack.c.l.b16 %v29
  %v141 = vunpack.c.h.b16 %v29
  %v142 = vunpack.c.l.b16 %v30
  %v143 = vunpack.c.h.b16 %v30
  %v144 = vunpack.c.l.b16 %v31
  %v145 = vunpack.c.h.b16 %v31
  %v146 = vunpack.c.l.b16 %v32
  %v147 = vunpack.c.h.b16 %v32
  %v148 = vunpack.c.l.b16 %v33
  %v149 = vunpack.c.h.b16 %v33
  %v150 = vunpack.c.l.b16 %v34
  %v151 = vunpack.c.h.b16 %v34
  %v152 = vunpack.c.l.b16 %v35
  %v153 = vunpack.c.h.b16 %v35
  %v154 = vunpack.c.l.b16 %v36
  %v155 = vunpack.c.h.b16 %v36
  %v156 = vunpack.c.l.b16 %v37
  %v157 = vunpack.c.h.b16 %v37
  %v158 = vunpack.c.l.b16 %v38
  %v159 = vunpack.c.h.b16 %v38
  %v160 = vunpack.c.l.b16 %v39
  %v161 = vunpack.c.h.b16 %v39
  %v162 = vunpack.c.l.b16 %v40
  %v163 = vunpack.c.h.b16 %v40
  %v164 = vunpack.c.l.b16 %v41
  %v165 = vunpack.c.h.b16 %v41
  %v166 = vunpack.c.l.b16 %v42
  %v167 = vunpack.c.h.b16 %v42
  %v168 = vunpack.c.l.b16 %v43
  %v169 = vunpack.c.h.b16 %v43
  %v170 = vunpack.c.l.b16 %v44
  %v171 = vunpack.c.h.b16 %v44
  %v172 = vunpack.c.l.b16 %v45
  %v173 = vunpack.c.h.b16 %v45
  %v174 = vpack.c.b16 %v112, %v110
  %v175 = vpack.c.b16 %v113, %v111
  %v176 = vpack.c.b16 %v116, %v114
  %v177 = vpack.c.b16 %v117, %v115
  %v178 = vpack.c.b16 %v120, %v118
  %v179 = vpack.c.b16 %v121, %v119
  %v180 = vpack.c.b16 %v124, %v122
  %v181 = vpack.c.b16 %v125, %v123
  %v182 = vpack.c.b16 %v128, %v126
  %v183 = vpack.c.b16 %v129, %v127
  %v184 = vpack.c.b16 %v132, %v130
  %v185 = vpack.c.b16 %v133, %v131
  %v186 = vpack.c.b16 %v136, %v134
  %v187 = vpack.c.b16 %v137, %v135
  %v188 = vpack.c.b16 %v140, %v138
  %v189 = vpack.c.b16 %v141, %v139
  %v190 = vpack.c.b16 %v144, %v142
  %v191 = vpack.c.b16 %v145, %v143
  %v192 = vpack.c.b16 %v148, %v146
  %v193 = vpack.c.b16 %v149, %v147
  %v194 = vpack.c.b16 %v152, %v150
  %v195 = vpack.c.b16 %v153, %v151
  %v196 = vpack.c.b16 %v156, %v154
  %v197 = vpack.c.b16 %v157, %v155
  %v198 = vpack.c.b16 %v160, %v158
  %v199 = vpack.c.b16 %v161, %v159
  %v200 = vpack.c.b16 %v164, %v162
  %v201 = vpack.c.b16 %v165, %v163
  %v202 = vpack.c.b16 %v168, %v166
  %v203 = vpack.c.b16 %v169, %v167
  %v204 = vpack.c.b16 %v172, %v170
  %v205 = vpack.c.b16 %v173, %v171
  %v270 = vunpack.c.l.b16 %v46
  %v271 = vunpack.c.l.b16 %v47
  %v272 = vunpack.c.l.b16 %v48
  %v273 = vunpack.c.l.b16 %v49
  %v274 = vunpack.c.l.b16 %v50
  %v275 = vunpack.c.l.b16 %v51
  %v276 = vunpack.c.l.b16 %v52
  %v277 = vunpack.c.l.b16 %v53
  %v278 = vunpack.c.l.b16 %v54
  %v279 = vunpack.c.l.b16 %v55
  %v280 = vunpack.c.l.b16 %v56
  %v281 = vunpack.c.l.b16 %v57
  %v282 = vunpack.c.l.b16 %v58
  %v283 = vunpack.c.l.b16 %v59
  %v284 = vunpack.c.l.b16 %v60
  %v285 = vunpack.c.l.b16 %v61
  %v286 = vunpack.c.l.b16 %v62
  %v287 = vunpack.c.l.b16 %v63
  %v288 = vunpack.c.l.b16 %v64
  %v289 = vunpack.c.l.b16 %v65
  %v290 = vunpack.c.l.b16 %v66
  %v291 = vunpack.c.l.b16 %v67
  %v292 = vunpack.c.l.b16 %v68
  %v293 = vunpack.c.l.b16 %v69
  %v294 = vunpack.c.l.b16 %v70
  %v295 = vunpack.c.l.b16 %v71
  %v296 = vunpack.c.l.b16 %v72
  %v297 = vunpack.c.l.b16 %v73
  %v298 = vunpack.c.l.b16 %v74
  %v299 = vunpack.c.l.b16 %v75
  %v300 = vunpack.c.l.b16 %v76
  %v301 = vunpack.c.l.b16 %v77
  %v302 = vpack.c.b16 %v271, %v270
  %v303 = vpack.c.b16 %v273, %v272
  %v304 = vpack.c.b16 %v275, %v274
  %v305 = vpack.c.b16 %v277, %v276
  %v306 = vpack.c.b16 %v279, %v278
  %v307 = vpack.c.b16 %v281, %v280
  %v308 = vpack.c.b16 %v283, %v282
  %v309 = vpack.c.b16 %v285, %v284
  %v310 = vpack.c.b16 %v287, %v286
  %v311 = vpack.c.b16 %v289, %v288
  %v312 = vpack.c.b16 %v291, %v290
  %v313 = vpack.c.b16 %v293, %v292
  %v314 = vpack.c.b16 %v295, %v294
  %v315 = vpack.c.b16 %v297, %v296
  %v316 = vpack.c.b16 %v299, %v298
  %v317 = vpack.c.b16 %v301, %v300
  %334 = vmatprep.subr.bf16.mxu0 0
  %335 = vmatpush1.bf16.msra.mxu0 %v302
  %336 = vmatprep.subr.bf16.mxu0 0
  %337 = vmatpush1.bf16.msra.mxu0 %v303
  %338 = vmatprep.subr.bf16.mxu0 0
  %339 = vmatpush1.bf16.msra.mxu0 %v304
  %340 = vmatprep.subr.bf16.mxu0 0
  %341 = vmatpush1.bf16.msra.mxu0 %v305
  %342 = vmatprep.subr.bf16.mxu0 0
  %343 = vmatpush1.bf16.msra.mxu0 %v306
  %344 = vmatprep.subr.bf16.mxu0 0
  %345 = vmatpush1.bf16.msra.mxu0 %v307
  %346 = vmatprep.subr.bf16.mxu0 0
  %347 = vmatpush1.bf16.msra.mxu0 %v308
  %348 = vmatprep.subr.bf16.mxu0 0
  %349 = vmatpush1.bf16.msra.mxu0 %v309
  %350 = vmatprep.subr.bf16.mxu0 0
  %351 = vmatpush1.bf16.msra.mxu0 %v310
  %352 = vmatprep.subr.bf16.mxu0 0
  %353 = vmatpush1.bf16.msra.mxu0 %v311
  %354 = vmatprep.subr.bf16.mxu0 0
  %355 = vmatpush1.bf16.msra.mxu0 %v312
  %356 = vmatprep.subr.bf16.mxu0 0
  %357 = vmatpush1.bf16.msra.mxu0 %v313
  %358 = vmatprep.subr.bf16.mxu0 0
  %359 = vmatpush1.bf16.msra.mxu0 %v314
  %360 = vmatprep.subr.bf16.mxu0 0
  %361 = vmatpush1.bf16.msra.mxu0 %v315
  %362 = vmatprep.subr.bf16.mxu0 0
  %363 = vmatpush1.bf16.msra.mxu0 %v316
  %364 = vmatprep.subr.bf16.mxu0 0
  %365 = vmatpush1.bf16.msra.mxu0 %v317
  %366 = vmatprep.mubr.bf16.mxu0 %v175
  %367 = vmatmul.mubr.bf16.gmra.mrb[0].mxu0 %v174
  %v368 = vpop.f32.mrb[0].mxu0
  %v369 = vadd.f32 0.0, %v368
  %v370 = vpop.f32.mrb[0].mxu0
  %v371 = vpop.f32.mrb[0].mxu0
  %v372 = vadd.f32 0.0, %v371
  %v373 = vpop.f32.mrb[0].mxu0
  %374 = vmatprep.mubr.bf16.mxu0 %v177
  %375 = vmatmul.mubr.bf16.gmra.mrb[0].mxu0 %v176
  %v376 = vpop.f32.mrb[0].mxu0
  %v377 = vadd.f32 0.0, %v376
  %v378 = vpop.f32.mrb[0].mxu0
  %v379 = vpop.f32.mrb[0].mxu0
  %v380 = vadd.f32 0.0, %v379
  %v381 = vpop.f32.mrb[0].mxu0
  %382 = vmatprep.mubr.bf16.mxu0 %v179
  %383 = vmatmul.mubr.bf16.gmra.mrb[0].mxu0 %v178
  %v384 = vpop.f32.mrb[0].mxu0
  %v385 = vadd.f32 0.0, %v384
  %v386 = vpop.f32.mrb[0].mxu0
  %v387 = vpop.f32.mrb[0].mxu0
  %v388 = vadd.f32 0.0, %v387
  %v389 = vpop.f32.mrb[0].mxu0
  %390 = vmatprep.mubr.bf16.mxu0 %v181
  %391 = vmatmul.mubr.bf16.gmra.mrb[0].mxu0 %v180
  %v392 = vpop.f32.mrb[0].mxu0
  %v393 = vadd.f32 0.0, %v392
  %v394 = vpop.f32.mrb[0].mxu0
  %v395 = vpop.f32.mrb[0].mxu0
  %v396 = vadd.f32 0.0, %v395
  %v397 = vpop.f32.mrb[0].mxu0
  %398 = vmatprep.mubr.bf16.mxu0 %v183
  %399 = vmatmul.mubr.bf16.gmra.mrb[0].mxu0 %v182
  %v400 = vpop.f32.mrb[0].mxu0
  %v401 = vadd.f32 0.0, %v400
  %v402 = vpop.f32.mrb[0].mxu0
  %v403 = vpop.f32.mrb[0].mxu0
  %v404 = vadd.f32 0.0, %v403
  %v405 = vpop.f32.mrb[0].mxu0
  %406 = vmatprep.mubr.bf16.mxu0 %v185
  %407 = vmatmul.mubr.bf16.gmra.mrb[0].mxu0 %v184
  %v408 = vpop.f32.mrb[0].mxu0
  %v409 = vadd.f32 0.0, %v408
  %v410 = vpop.f32.mrb[0].mxu0
  %v411 = vpop.f32.mrb[0].mxu0
  %v412 = vadd.f32 0.0, %v411
  %v413 = vpop.f32.mrb[0].mxu0
  %414 = vmatprep.mubr.bf16.mxu0 %v187
  %415 = vmatmul.mubr.bf16.gmra.mrb[0].mxu0 %v186
  %v416 = vpop.f32.mrb[0].mxu0
  %v417 = vadd.f32 0.0, %v416
  %v418 = vpop.f32.mrb[0].mxu0
  %v419 = vpop.f32.mrb[0].mxu0
  %v420 = vadd.f32 0.0, %v419
  %v421 = vpop.f32.mrb[0].mxu0
  %422 = vmatprep.mubr.bf16.mxu0 %v189
  %423 = vmatmul.mubr.bf16.gmra.mrb[0].mxu0 %v188
  %v424 = vpop.f32.mrb[0].mxu0
  %v425 = vadd.f32 0.0, %v424
  %v426 = vpop.f32.mrb[0].mxu0
  %v427 = vpop.f32.mrb[0].mxu0
  %v428 = vadd.f32 0.0, %v427
  %v429 = vpop.f32.mrb[0].mxu0
  %430 = vmatprep.mubr.bf16.mxu0 %v191
  %431 = vmatmul.mubr.bf16.gmra.mrb[0].mxu0 %v190
  %v432 = vpop.f32.mrb[0].mxu0
  %v433 = vadd.f32 0.0, %v432
  %v434 = vpop.f32.mrb[0].mxu0
  %v435 = vpop.f32.mrb[0].mxu0
  %v436 = vadd.f32 0.0, %v435
  %v437 = vpop.f32.mrb[0].mxu0
  %438 = vmatprep.mubr.bf16.mxu0 %v193
  %439 = vmatmul.mubr.bf16.gmra.mrb[0].mxu0 %v192
  %v440 = vpop.f32.mrb[0].mxu0
  %v441 = vadd.f32 0.0, %v440
  %v442 = vpop.f32.mrb[0].mxu0
  %v443 = vpop.f32.mrb[0].mxu0
  %v444 = vadd.f32 0.0, %v443
  %v445 = vpop.f32.mrb[0].mxu0
  %446 = vmatprep.mubr.bf16.mxu0 %v195
  %447 = vmatmul.mubr.bf16.gmra.mrb[0].mxu0 %v194
  %v448 = vpop.f32.mrb[0].mxu0
  %v449 = vadd.f32 0.0, %v448
  %v450 = vpop.f32.mrb[0].mxu0
  %v451 = vpop.f32.mrb[0].mxu0
  %v452 = vadd.f32 0.0, %v451
  %v453 = vpop.f32.mrb[0].mxu0
  %454 = vmatprep.mubr.bf16.mxu0 %v197
  %455 = vmatmul.mubr.bf16.gmra.mrb[0].mxu0 %v196
  %v456 = vpop.f32.mrb[0].mxu0
  %v457 = vadd.f32 0.0, %v456
  %v458 = vpop.f32.mrb[0].mxu0
  %v459 = vpop.f32.mrb[0].mxu0
  %v460 = vadd.f32 0.0, %v459
  %v461 = vpop.f32.mrb[0].mxu0
  %462 = vmatprep.mubr.bf16.mxu0 %v199
  %463 = vmatmul.mubr.bf16.gmra.mrb[0].mxu0 %v198
  %v464 = vpop.f32.mrb[0].mxu0
  %v465 = vadd.f32 0.0, %v464
  %v466 = vpop.f32.mrb[0].mxu0
  %v467 = vpop.f32.mrb[0].mxu0
  %v468 = vadd.f32 0.0, %v467
  %v469 = vpop.f32.mrb[0].mxu0
  %470 = vmatprep.mubr.bf16.mxu0 %v201
  %471 = vmatmul.mubr.bf16.gmra.mrb[0].mxu0 %v200
  %v472 = vpop.f32.mrb[0].mxu0
  %v473 = vadd.f32 0.0, %v472
  %v474 = vpop.f32.mrb[0].mxu0
  %v475 = vpop.f32.mrb[0].mxu0
  %v476 = vadd.f32 0.0, %v475
  %v477 = vpop.f32.mrb[0].mxu0
  %478 = vmatprep.mubr.bf16.mxu0 %v203
  %479 = vmatmul.mubr.bf16.gmra.mrb[0].mxu0 %v202
  %v480 = vpop.f32.mrb[0].mxu0
  %v481 = vadd.f32 0.0, %v480
  %v482 = vpop.f32.mrb[0].mxu0
  %v483 = vpop.f32.mrb[0].mxu0
  %v484 = vadd.f32 0.0, %v483
  %v485 = vpop.f32.mrb[0].mxu0
  %486 = vmatprep.mubr.bf16.mxu0 %v205
  %487 = vmatmul.mubr.bf16.gmra.mrb[0].mxu0 %v204
  %v488 = vpop.f32.mrb[0].mxu0
  %v489 = vadd.f32 0.0, %v488
  %v490 = vpop.f32.mrb[0].mxu0
  %v491 = vpop.f32.mrb[0].mxu0
  %v492 = vadd.f32 0.0, %v491
  %v493 = vpop.f32.mrb[0].mxu0
  %494 = vdwg.mxu0
  %vm495 = vcmask 523264
  %v496 = vsel %vm495, %v369, 0.0
  %v497 = vsel %vm495, %v372, 0.0
  %v498 = vadd.f32 %v496, %v497
  %v499 = vsel %vm495, %v377, 0.0
  %v500 = vadd.f32 %v498, %v499
  %v501 = vsel %vm495, %v380, 0.0
  %v502 = vadd.f32 %v500, %v501
  %v503 = vsel %vm495, %v385, 0.0
  %v504 = vadd.f32 %v502, %v503
  %v505 = vsel %vm495, %v388, 0.0
  %v506 = vadd.f32 %v504, %v505
  %v507 = vsel %vm495, %v393, 0.0
  %v508 = vadd.f32 %v506, %v507
  %v509 = vsel %vm495, %v396, 0.0
  %v510 = vadd.f32 %v508, %v509
  %v511 = vsel %vm495, %v401, 0.0
  %v512 = vadd.f32 %v510, %v511
  %v513 = vsel %vm495, %v404, 0.0
  %v514 = vadd.f32 %v512, %v513
  %v515 = vsel %vm495, %v409, 0.0
  %v516 = vadd.f32 %v514, %v515
  %v517 = vsel %vm495, %v412, 0.0
  %v518 = vadd.f32 %v516, %v517
  %v519 = vsel %vm495, %v417, 0.0
  %v520 = vadd.f32 %v518, %v519
  %v521 = vsel %vm495, %v420, 0.0
  %v522 = vadd.f32 %v520, %v521
  %v523 = vsel %vm495, %v425, 0.0
  %v524 = vadd.f32 %v522, %v523
  %v525 = vsel %vm495, %v428, 0.0
  %v526 = vadd.f32 %v524, %v525
  %v527 = vsel %vm495, %v433, 0.0
  %v528 = vadd.f32 %v526, %v527
  %v529 = vsel %vm495, %v436, 0.0
  %v530 = vadd.f32 %v528, %v529
  %v531 = vsel %vm495, %v441, 0.0
  %v532 = vadd.f32 %v530, %v531
  %v533 = vsel %vm495, %v444, 0.0
  %v534 = vadd.f32 %v532, %v533
  %v535 = vsel %vm495, %v449, 0.0
  %v536 = vadd.f32 %v534, %v535
  %v537 = vsel %vm495, %v452, 0.0
  %v538 = vadd.f32 %v536, %v537
  %v539 = vsel %vm495, %v457, 0.0
  %v540 = vadd.f32 %v538, %v539
  %v541 = vsel %vm495, %v460, 0.0
  %v542 = vadd.f32 %v540, %v541
  %v543 = vsel %vm495, %v465, 0.0
  %v544 = vadd.f32 %v542, %v543
  %v545 = vsel %vm495, %v468, 0.0
  %v546 = vadd.f32 %v544, %v545
  %v547 = vsel %vm495, %v473, 0.0
  %v548 = vadd.f32 %v546, %v547
  %v549 = vsel %vm495, %v476, 0.0
  %v550 = vadd.f32 %v548, %v549
  %v551 = vsel %vm495, %v481, 0.0
  %v552 = vadd.f32 %v550, %v551
  %v553 = vsel %vm495, %v484, 0.0
  %v554 = vadd.f32 %v552, %v553
  %v555 = vsel %vm495, %v489, 0.0
  %v556 = vadd.f32 %v554, %v555
  %v557 = vsel %vm495, %v492, 0.0
  %v558 = vadd.f32 %v556, %v557
  %v559 = vrot.slane %v558, 4
  %v560 = vadd.f32 %v558, %v559
  %v561 = vrot.slane %v560, 2
  %v562 = vadd.f32 %v560, %v561
  %v563 = vrot.slane %v562, 1
  %v564 = vadd.f32 %v562, %v563
  %vm565 = vcmask 516096
  %566 = vst.msk [vmem:[%s3] sm:$0x1] %vm565, %v564
  %v567 = vmul.f32 %v369, %v369
  %v568 = vmul.f32 %v372, %v372
  %v569 = vmul.f32 %v377, %v377
  %v570 = vmul.f32 %v380, %v380
  %v571 = vmul.f32 %v385, %v385
  %v572 = vmul.f32 %v388, %v388
  %v573 = vmul.f32 %v393, %v393
  %v574 = vmul.f32 %v396, %v396
  %v575 = vmul.f32 %v401, %v401
  %v576 = vmul.f32 %v404, %v404
  %v577 = vmul.f32 %v409, %v409
  %v578 = vmul.f32 %v412, %v412
  %v579 = vmul.f32 %v417, %v417
  %v580 = vmul.f32 %v420, %v420
  %v581 = vmul.f32 %v425, %v425
  %v582 = vmul.f32 %v428, %v428
  %v583 = vmul.f32 %v433, %v433
  %v584 = vmul.f32 %v436, %v436
  %v585 = vmul.f32 %v441, %v441
  %v586 = vmul.f32 %v444, %v444
  %v587 = vmul.f32 %v449, %v449
  %v588 = vmul.f32 %v452, %v452
  %v589 = vmul.f32 %v457, %v457
  %v590 = vmul.f32 %v460, %v460
  %v591 = vmul.f32 %v465, %v465
  %v592 = vmul.f32 %v468, %v468
  %v593 = vmul.f32 %v473, %v473
  %v594 = vmul.f32 %v476, %v476
  %v595 = vmul.f32 %v481, %v481
  %v596 = vmul.f32 %v484, %v484
  %v597 = vmul.f32 %v489, %v489
  %v598 = vmul.f32 %v492, %v492
  %v599 = vsel %vm495, %v567, 0.0
  %v600 = vsel %vm495, %v568, 0.0
  %v601 = vadd.f32 %v599, %v600
  %v602 = vsel %vm495, %v569, 0.0
  %v603 = vadd.f32 %v601, %v602
  %v604 = vsel %vm495, %v570, 0.0
  %v605 = vadd.f32 %v603, %v604
  %v606 = vsel %vm495, %v571, 0.0
  %v607 = vadd.f32 %v605, %v606
  %v608 = vsel %vm495, %v572, 0.0
  %v609 = vadd.f32 %v607, %v608
  %v610 = vsel %vm495, %v573, 0.0
  %v611 = vadd.f32 %v609, %v610
  %v612 = vsel %vm495, %v574, 0.0
  %v613 = vadd.f32 %v611, %v612
  %v614 = vsel %vm495, %v575, 0.0
  %v615 = vadd.f32 %v613, %v614
  %v616 = vsel %vm495, %v576, 0.0
  %v617 = vadd.f32 %v615, %v616
  %v618 = vsel %vm495, %v577, 0.0
  %v619 = vadd.f32 %v617, %v618
  %v620 = vsel %vm495, %v578, 0.0
  %v621 = vadd.f32 %v619, %v620
  %v622 = vsel %vm495, %v579, 0.0
  %v623 = vadd.f32 %v621, %v622
  %v624 = vsel %vm495, %v580, 0.0
  %v625 = vadd.f32 %v623, %v624
  %v626 = vsel %vm495, %v581, 0.0
  %v627 = vadd.f32 %v625, %v626
  %v628 = vsel %vm495, %v582, 0.0
  %v629 = vadd.f32 %v627, %v628
  %v630 = vsel %vm495, %v583, 0.0
  %v631 = vadd.f32 %v629, %v630
  %v632 = vsel %vm495, %v584, 0.0
  %v633 = vadd.f32 %v631, %v632
  %v634 = vsel %vm495, %v585, 0.0
  %v635 = vadd.f32 %v633, %v634
  %v636 = vsel %vm495, %v586, 0.0
  %v637 = vadd.f32 %v635, %v636
  %v638 = vsel %vm495, %v587, 0.0
  %v639 = vadd.f32 %v637, %v638
  %v640 = vsel %vm495, %v588, 0.0
  %v641 = vadd.f32 %v639, %v640
  %v642 = vsel %vm495, %v589, 0.0
  %v643 = vadd.f32 %v641, %v642
  %v644 = vsel %vm495, %v590, 0.0
  %v645 = vadd.f32 %v643, %v644
  %v646 = vsel %vm495, %v591, 0.0
  %v647 = vadd.f32 %v645, %v646
  %v648 = vsel %vm495, %v592, 0.0
  %v649 = vadd.f32 %v647, %v648
  %v650 = vsel %vm495, %v593, 0.0
  %v651 = vadd.f32 %v649, %v650
  %v652 = vsel %vm495, %v594, 0.0
  %v653 = vadd.f32 %v651, %v652
  %v654 = vsel %vm495, %v595, 0.0
  %v655 = vadd.f32 %v653, %v654
  %v656 = vsel %vm495, %v596, 0.0
  %v657 = vadd.f32 %v655, %v656
  %v658 = vsel %vm495, %v597, 0.0
  %v659 = vadd.f32 %v657, %v658
  %v660 = vsel %vm495, %v598, 0.0
  %v661 = vadd.f32 %v659, %v660
  %v662 = vrot.slane %v661, 4
  %v663 = vadd.f32 %v661, %v662
  %v664 = vrot.slane %v663, 2
  %v665 = vadd.f32 %v663, %v664
  %v666 = vrot.slane %v665, 1
  %v667 = vadd.f32 %v665, %v666
  %668 = vst.msk [vmem:[%s3 + $0x1] sm:$0x1] %vm565, %v667
  %v669 = vpack.c.bf16 %v372, %v369
  %v670 = vpack.c.bf16 %v380, %v377
  %v671 = vpack.c.bf16 %v388, %v385
  %v672 = vpack.c.bf16 %v396, %v393
  %v673 = vpack.c.bf16 %v404, %v401
  %v674 = vpack.c.bf16 %v412, %v409
  %v675 = vpack.c.bf16 %v420, %v417
  %v676 = vpack.c.bf16 %v428, %v425
  %v677 = vpack.c.bf16 %v436, %v433
  %v678 = vpack.c.bf16 %v444, %v441
  %v679 = vpack.c.bf16 %v452, %v449
  %v680 = vpack.c.bf16 %v460, %v457
  %v681 = vpack.c.bf16 %v468, %v465
  %v682 = vpack.c.bf16 %v476, %v473
  %v683 = vpack.c.bf16 %v484, %v481
  %v684 = vpack.c.bf16 %v492, %v489
  %v701 = vunpack.c.l.b16 %v669
  %v702 = vunpack.c.h.b16 %v669
  %v703 = vunpack.c.l.b16 %v670
  %v704 = vunpack.c.h.b16 %v670
  %v705 = vunpack.c.l.b16 %v671
  %v706 = vunpack.c.h.b16 %v671
  %v707 = vunpack.c.l.b16 %v672
  %v708 = vunpack.c.h.b16 %v672
  %v709 = vunpack.c.l.b16 %v673
  %v710 = vunpack.c.h.b16 %v673
  %v711 = vunpack.c.l.b16 %v674
  %v712 = vunpack.c.h.b16 %v674
  %v713 = vunpack.c.l.b16 %v675
  %v714 = vunpack.c.h.b16 %v675
  %v715 = vunpack.c.l.b16 %v676
  %v716 = vunpack.c.h.b16 %v676
  %v717 = vunpack.c.l.b16 %v677
  %v718 = vunpack.c.h.b16 %v677
  %v719 = vunpack.c.l.b16 %v678
  %v720 = vunpack.c.h.b16 %v678
  %v721 = vunpack.c.l.b16 %v679
  %v722 = vunpack.c.h.b16 %v679
  %v723 = vunpack.c.l.b16 %v680
  %v724 = vunpack.c.h.b16 %v680
  %v725 = vunpack.c.l.b16 %v681
  %v726 = vunpack.c.h.b16 %v681
  %v727 = vunpack.c.l.b16 %v682
  %v728 = vunpack.c.h.b16 %v682
  %v729 = vunpack.c.l.b16 %v683
  %v730 = vunpack.c.h.b16 %v683
  %v731 = vunpack.c.l.b16 %v684
  %v732 = vunpack.c.h.b16 %v684
  %v733 = vpack.c.b16 %v701, %v701
  %v734 = vpack.c.b16 %v702, %v702
  %v735 = vpack.c.b16 %v703, %v703
  %v736 = vpack.c.b16 %v704, %v704
  %v737 = vpack.c.b16 %v705, %v705
  %v738 = vpack.c.b16 %v706, %v706
  %v739 = vpack.c.b16 %v707, %v707
  %v740 = vpack.c.b16 %v708, %v708
  %v741 = vpack.c.b16 %v709, %v709
  %v742 = vpack.c.b16 %v710, %v710
  %v743 = vpack.c.b16 %v711, %v711
  %v744 = vpack.c.b16 %v712, %v712
  %v745 = vpack.c.b16 %v713, %v713
  %v746 = vpack.c.b16 %v714, %v714
  %v747 = vpack.c.b16 %v715, %v715
  %v748 = vpack.c.b16 %v716, %v716
  %v749 = vpack.c.b16 %v717, %v717
  %v750 = vpack.c.b16 %v718, %v718
  %v751 = vpack.c.b16 %v719, %v719
  %v752 = vpack.c.b16 %v720, %v720
  %v753 = vpack.c.b16 %v721, %v721
  %v754 = vpack.c.b16 %v722, %v722
  %v755 = vpack.c.b16 %v723, %v723
  %v756 = vpack.c.b16 %v724, %v724
  %v757 = vpack.c.b16 %v725, %v725
  %v758 = vpack.c.b16 %v726, %v726
  %v759 = vpack.c.b16 %v727, %v727
  %v760 = vpack.c.b16 %v728, %v728
  %v761 = vpack.c.b16 %v729, %v729
  %v762 = vpack.c.b16 %v730, %v730
  %v763 = vpack.c.b16 %v731, %v731
  %v764 = vpack.c.b16 %v732, %v732
  %vm797 = vcmask 519168
  %798 = vst.msk [vmem:[%s2] sm:$0xf] %vm797, %v733
  %799 = vst.msk [vmem:[%s2 + $0x4] sm:$0xf] %vm797, %v734
  %800 = vst.msk [vmem:[%s2 + $0x8] sm:$0xf] %vm797, %v735
  %801 = vst.msk [vmem:[%s2 + $0xc] sm:$0xf] %vm797, %v736
  %802 = vst.msk [vmem:[%s2 + $0x10] sm:$0xf] %vm797, %v737
  %803 = vst.msk [vmem:[%s2 + $0x14] sm:$0xf] %vm797, %v738
  %804 = vst.msk [vmem:[%s2 + $0x18] sm:$0xf] %vm797, %v739
  %805 = vst.msk [vmem:[%s2 + $0x1c] sm:$0xf] %vm797, %v740
  %806 = vst.msk [vmem:[%s2 + $0x20] sm:$0xf] %vm797, %v741
  %807 = vst.msk [vmem:[%s2 + $0x24] sm:$0xf] %vm797, %v742
  %808 = vst.msk [vmem:[%s2 + $0x28] sm:$0xf] %vm797, %v743
  %809 = vst.msk [vmem:[%s2 + $0x2c] sm:$0xf] %vm797, %v744
  %810 = vst.msk [vmem:[%s2 + $0x30] sm:$0xf] %vm797, %v745
  %811 = vst.msk [vmem:[%s2 + $0x34] sm:$0xf] %vm797, %v746
  %812 = vst.msk [vmem:[%s2 + $0x38] sm:$0xf] %vm797, %v747
  %813 = vst.msk [vmem:[%s2 + $0x3c] sm:$0xf] %vm797, %v748
  %814 = vst.msk [vmem:[%s2 + $0x40] sm:$0xf] %vm797, %v749
  %815 = vst.msk [vmem:[%s2 + $0x44] sm:$0xf] %vm797, %v750
  %816 = vst.msk [vmem:[%s2 + $0x48] sm:$0xf] %vm797, %v751
  %817 = vst.msk [vmem:[%s2 + $0x4c] sm:$0xf] %vm797, %v752
  %818 = vst.msk [vmem:[%s2 + $0x50] sm:$0xf] %vm797, %v753
  %819 = vst.msk [vmem:[%s2 + $0x54] sm:$0xf] %vm797, %v754
  %820 = vst.msk [vmem:[%s2 + $0x58] sm:$0xf] %vm797, %v755
  %821 = vst.msk [vmem:[%s2 + $0x5c] sm:$0xf] %vm797, %v756
  %822 = vst.msk [vmem:[%s2 + $0x60] sm:$0xf] %vm797, %v757
  %823 = vst.msk [vmem:[%s2 + $0x64] sm:$0xf] %vm797, %v758
  %824 = vst.msk [vmem:[%s2 + $0x68] sm:$0xf] %vm797, %v759
  %825 = vst.msk [vmem:[%s2 + $0x6c] sm:$0xf] %vm797, %v760
  %826 = vst.msk [vmem:[%s2 + $0x70] sm:$0xf] %vm797, %v761
  %827 = vst.msk [vmem:[%s2 + $0x74] sm:$0xf] %vm797, %v762
  %828 = vst.msk [vmem:[%s2 + $0x78] sm:$0xf] %vm797, %v763
  %829 = vst.msk [vmem:[%s2 + $0x7c] sm:$0xf] %vm797, %v764
  // Predicated region
  $region10: #{cnn18_forward.20} parent=0 // pred_check
    _
  $region11: #{cnn18_forward.20} parent=0 // pred_check_branch
    %831 = sbr.rel (0) target = $region13
  $region12: #{cnn18_forward.20} parent=0 // pred_region
    _
  $region13: #{cnn18_forward.20} parent=0 // pred_fallthru
    _
  // Predicated region
  $region14: #{cnn18_forward.20} parent=0 // pred_check
    _
  $region15: #{cnn18_forward.20} parent=0 // pred_check_branch
    %833 = sbr.rel (0) target = $region17
  $region16: #{cnn18_forward.20} parent=0 // pred_region
    _
  $region17: #{cnn18_forward.20} parent=0 // pred_fallthru
    _
  // Predicated region
  $region18: #{cnn18_forward.20} parent=0 // pred_check
    _
  $region19: #{cnn18_forward.20} parent=0 // pred_check_branch
    %835 = sbr.rel (0) target = $region21
  $region20: #{cnn18_forward.20} parent=0 // pred_region
    _
  $region21: #{cnn18_forward.20} parent=0 // pred_fallthru
    _
  // Predicated region
  $region22: #{cnn18_forward.20} parent=0 // pred_check
    _
  $region23: #{cnn18_forward.20} parent=0 // pred_check_branch
    %837 = sbr.rel (0) target = $region25
  $region24: #{cnn18_forward.20} parent=0 // pred_region
    _
  $region25: #{cnn18_forward.20} parent=0 // pred_fallthru
    _

// kernel: cnn18_forward.22
$region0: #{cnn18_forward.22}
  #allocation0 [shape = 'u32[]', space=smem, size = 0x4, offset = 0x4, fixed_abs, tag = 'smem constant byte address 0x4 - core index']
  #allocation1 [shape = 'u32[144,128]{1,0:T(1,128)}', space=vmem, size = 0x12000, scoped, tag = 'internal scratch']
  %s0 = inlined_call_operand.vmem [shape: bf16[2,5,5,64], index: 0, kind: input, shape index: {}]
  %s1 = inlined_call_operand.vmem [shape: bf16[2,5,4,64], index: 1, kind: input, shape index: {}]
  %s2 = inlined_call_operand.vmem [shape: bf16[2,4,5,64], index: 2, kind: input, shape index: {}]
  %s3 = inlined_call_operand.vmem [shape: bf16[2,4,4,64], index: 3, kind: input, shape index: {}]
  %s4 = inlined_call_operand.vmem [shape: bf16[2,4,4,64], index: 4, kind: output, shape index: {}]
  %s5 = sld [smem:[#allocation0]]
  $region49: #{cnn18_forward.22} parent=0
    _
  %s7 = ssub.s32 1, %s5
  %s8 = scalar_select 0, %s7, %s5
  loop: start=0, step=1, limit=4
  $region2: #{cnn18_forward.22} parent=0 // loop_pre_header
    _
  $region3: #{cnn18_forward.22} parent=0 // loop_header
    %s10 = sphi 0, %s14
    %p11 = scmp.ge.s32.totalorder %s10, 4
    %s20 = sphi 0, %s22
    %s23 = sphi 0, %s20
    %s24 = sphi 0, %s23
    %s40 = sphi 0, %s24
    %s46 = sphi 0, %s48
    %s49 = sphi 0, %s46
    %s50 = sphi 0, %s49
    %s66 = sphi 0, %s50
    %s72 = sphi 0, %s74
    %s75 = sphi 0, %s72
    %s76 = sphi 0, %s75
    %s92 = sphi 0, %s76
    %s98 = sphi 0, %s100
    %s101 = sphi 0, %s98
    %s102 = sphi 0, %s101
    %s118 = sphi 0, %s102
    %s124 = sphi 0, %s126
    %s127 = sphi 0, %s124
    %s128 = sphi 0, %s127
    %s144 = sphi 0, %s128
  $region4: #{cnn18_forward.22} parent=0 // loop_header_branch
    %13 = sbr.rel (%p11) target = $region8
  $region5: #{cnn18_forward.22} parent=0 // loop_body
    %s15 = ssub.s32 %s10, 1
    %s16 = ssub.s32 %s10, 2
    %s17 = sadd.s32 %s10, 1
    %s18 = ssub.s32 %s10, %s17
    %p19 = scmp.eq.s32.totalorder %s18, 0
    %s21 = sadd.s32 %s20, 1
    %s22 = scalar_select %p19, %s20, %s21
    %p25 = pneg %p19
    %p26 = scmp.eq.s32.totalorder %s10, 1
    %p27 = por %p25, %p26
    %p28 = scmp.ne.s32.totalorder %s20, %s23
    %p29 = scmp.eq.s32.totalorder %s10, 0
    %p30 = por %p28, %p29
    %p31 = scmp.ne.s32.totalorder %s20, %s23
    %p32 = scmp.eq.s32.totalorder %s15, 1
    %p33 = por %p31, %p32
    %p34 = scmp.ne.s32.totalorder %s23, %s24
    %p35 = scmp.eq.s32.totalorder %s15, 0
    %p36 = por %p34, %p35
    %p37 = scmp.ne.s32.totalorder %s23, %s24
    %p38 = scmp.eq.s32.totalorder %s16, 1
    %p39 = por %p37, %p38
    %p41 = scmp.ne.s32.totalorder %s24, %s40
    %p42 = scmp.eq.s32.totalorder %s16, 0
    %p43 = por %p41, %p42
    %s44 = ssub.s32 %s10, %s17
    %p45 = scmp.eq.s32.totalorder %s44, 0
    %s47 = sadd.s32 %s46, 1
    %s48 = scalar_select %p45, %s46, %s47
    %p51 = pneg %p45
    %p52 = scmp.eq.s32.totalorder %s10, 1
    %p53 = por %p51, %p52
    %p54 = scmp.ne.s32.totalorder %s46, %s49
    %p55 = scmp.eq.s32.totalorder %s10, 0
    %p56 = por %p54, %p55
    %p57 = scmp.ne.s32.totalorder %s46, %s49
    %p58 = scmp.eq.s32.totalorder %s15, 1
    %p59 = por %p57, %p58
    %p60 = scmp.ne.s32.totalorder %s49, %s50
    %p61 = scmp.eq.s32.totalorder %s15, 0
    %p62 = por %p60, %p61
    %p63 = scmp.ne.s32.totalorder %s49, %s50
    %p64 = scmp.eq.s32.totalorder %s16, 1
    %p65 = por %p63, %p64
    %p67 = scmp.ne.s32.totalorder %s50, %s66
    %p68 = scmp.eq.s32.totalorder %s16, 0
    %p69 = por %p67, %p68
    %s70 = ssub.s32 %s10, %s17
    %p71 = scmp.eq.s32.totalorder %s70, 0
    %s73 = sadd.s32 %s72, 1
    %s74 = scalar_select %p71, %s72, %s73
    %p77 = pneg %p71
    %p78 = scmp.eq.s32.totalorder %s10, 1
    %p79 = por %p77, %p78
    %p80 = scmp.ne.s32.totalorder %s72, %s75
    %p81 = scmp.eq.s32.totalorder %s10, 0
    %p82 = por %p80, %p81
    %p83 = scmp.ne.s32.totalorder %s72, %s75
    %p84 = scmp.eq.s32.totalorder %s15, 1
    %p85 = por %p83, %p84
    %p86 = scmp.ne.s32.totalorder %s75, %s76
    %p87 = scmp.eq.s32.totalorder %s15, 0
    %p88 = por %p86, %p87
    %p89 = scmp.ne.s32.totalorder %s75, %s76
    %p90 = scmp.eq.s32.totalorder %s16, 1
    %p91 = por %p89, %p90
    %p93 = scmp.ne.s32.totalorder %s76, %s92
    %p94 = scmp.eq.s32.totalorder %s16, 0
    %p95 = por %p93, %p94
    %s96 = ssub.s32 %s10, %s17
    %p97 = scmp.eq.s32.totalorder %s96, 0
    %s99 = sadd.s32 %s98, 1
    %s100 = scalar_select %p97, %s98, %s99
    %p103 = pneg %p97
    %p104 = scmp.eq.s32.totalorder %s10, 1
    %p105 = por %p103, %p104
    %p106 = scmp.ne.s32.totalorder %s98, %s101
    %p107 = scmp.eq.s32.totalorder %s10, 0
    %p108 = por %p106, %p107
    %p109 = scmp.ne.s32.totalorder %s98, %s101
    %p110 = scmp.eq.s32.totalorder %s15, 1
    %p111 = por %p109, %p110
    %p112 = scmp.ne.s32.totalorder %s101, %s102
    %p113 = scmp.eq.s32.totalorder %s15, 0
    %p114 = por %p112, %p113
    %p115 = scmp.ne.s32.totalorder %s101, %s102
    %p116 = scmp.eq.s32.totalorder %s16, 1
    %p117 = por %p115, %p116
    %p119 = scmp.ne.s32.totalorder %s102, %s118
    %p120 = scmp.eq.s32.totalorder %s16, 0
    %p121 = por %p119, %p120
    %s122 = ssub.s32 %s10, %s17
    %p123 = scmp.eq.s32.totalorder %s122, 0
    %s125 = sadd.s32 %s124, 1
    %s126 = scalar_select %p123, %s124, %s125
    %p129 = pneg %p123
    %p130 = scmp.eq.s32.totalorder %s10, 1
    %p131 = por %p129, %p130
    %p132 = scmp.ne.s32.totalorder %s124, %s127
    %p133 = scmp.eq.s32.totalorder %s10, 0
    %p134 = por %p132, %p133
    %p135 = scmp.ne.s32.totalorder %s124, %s127
    %p136 = scmp.eq.s32.totalorder %s15, 1
    %p137 = por %p135, %p136
    %p138 = scmp.ne.s32.totalorder %s127, %s128
    %p139 = scmp.eq.s32.totalorder %s15, 0
    %p140 = por %p138, %p139
    %p141 = scmp.ne.s32.totalorder %s127, %s128
    %p142 = scmp.eq.s32.totalorder %s16, 1
    %p143 = por %p141, %p142
    %p145 = scmp.ne.s32.totalorder %s128, %s144
    %p146 = scmp.eq.s32.totalorder %s16, 0
    %p147 = por %p145, %p146
    %p148 = scmp.le.s32.totalorder 1, %s10
    %p149 = scmp.lt.s32.totalorder %s10, 3
    %p150 = pnand %p148, %p149
    %p151 = pneg %p150
    // Predicated region
    $region9: #{cnn18_forward.22} parent=5 // pred_check
      _
    $region10: #{cnn18_forward.22} parent=5 // pred_check_branch
      %153 = sbr.rel (%p150) target = $region12
    $region11: #{cnn18_forward.22} parent=5 // pred_region
      %s154 = ssub.s32 %s10, 1
    $region12: #{cnn18_forward.22} parent=5 // pred_fallthru
      _
    %p155 = scmp.lt.s32.totalorder %s10, 2
    // Predicated region
    $region13: #{cnn18_forward.22} parent=5 // pred_check
      %p156 = pneg %p155
    $region14: #{cnn18_forward.22} parent=5 // pred_check_branch
      %158 = sbr.rel (%p156) target = $region16
    $region15: #{cnn18_forward.22} parent=5 // pred_region
      // Predicated region
      $region17: #{cnn18_forward.22} parent=15 // pred_check
        %p159 = pneg %p30
      $region18: #{cnn18_forward.22} parent=15 // pred_check_branch
        %161 = sbr.rel (%p159) target = $region20
      $region19: #{cnn18_forward.22} parent=15 // pred_region
        %p162 = scmp.lt.s32.totalorder %s10, 1
        %s163 = scalar_select %p162, %s10, 1
        %s164 = smul.addr %s163, 5
        %s165 = smul.addr %s164, 4
        %s166 = scalar_lea.vmem %s0, %s165
      $region20: #{cnn18_forward.22} parent=15 // pred_fallthru
        _
      // Predicated region
      $region21: #{cnn18_forward.22} parent=15 // pred_check
        %p167 = pneg %p56
      $region22: #{cnn18_forward.22} parent=15 // pred_check_branch
        %169 = sbr.rel (%p167) target = $region24
      $region23: #{cnn18_forward.22} parent=15 // pred_region
        %p170 = scmp.lt.s32.totalorder %s10, 1
        %s171 = scalar_select %p170, %s10, 1
        %s172 = smul.addr %s171, 5
        %s173 = smul.addr %s172, 2
        %s174 = scalar_lea.vmem %s1, %s173
      $region24: #{cnn18_forward.22} parent=15 // pred_fallthru
        _
      // Predicated region
      $region25: #{cnn18_forward.22} parent=15 // pred_check
        %p175 = pneg %p82
      $region26: #{cnn18_forward.22} parent=15 // pred_check_branch
        %177 = sbr.rel (%p175) target = $region28
      $region27: #{cnn18_forward.22} parent=15 // pred_region
        %p178 = scmp.lt.s32.totalorder %s10, 1
        %s179 = scalar_select %p178, %s10, 1
        %s180 = smul.addr %s179, 4
        %s181 = smul.addr %s180, 4
        %s182 = scalar_lea.vmem %s2, %s181
      $region28: #{cnn18_forward.22} parent=15 // pred_fallthru
        _
      // Predicated region
      $region29: #{cnn18_forward.22} parent=15 // pred_check
        %p183 = pneg %p108
      $region30: #{cnn18_forward.22} parent=15 // pred_check_branch
        %185 = sbr.rel (%p183) target = $region32
      $region31: #{cnn18_forward.22} parent=15 // pred_region
        %p186 = scmp.lt.s32.totalorder %s10, 1
        %s187 = scalar_select %p186, %s10, 1
        %s188 = smul.addr %s187, 4
        %s189 = smul.addr %s188, 2
        %s190 = scalar_lea.vmem %s3, %s189
      $region32: #{cnn18_forward.22} parent=15 // pred_fallthru
        _
    $region16: #{cnn18_forward.22} parent=5 // pred_fallthru
      _
    %p191 = scmp.le.s32.totalorder 1, %s10
    %p192 = scmp.lt.s32.totalorder %s10, 3
    %p193 = pnand %p191, %p192
    %p194 = pneg %p193
    // Predicated region
    $region33: #{cnn18_forward.22} parent=5 // pred_check
      _
    $region34: #{cnn18_forward.22} parent=5 // pred_check_branch
      %196 = sbr.rel (%p193) target = $region36
    $region35: #{cnn18_forward.22} parent=5 // pred_region
      %s197 = ssub.s32 %s10, 1
      %p198 = scmp.lt.s32.totalorder %s15, 1
      %s199 = scalar_select %p198, %s15, 1
      %s200 = smul.addr %s199, 5
      %s201 = smul.addr %s200, 4
      %s202 = scalar_lea.vmem %s0, %s201
      %p203 = pneg %p36
      %p204 = pneg %p33
      %p205 = scmp.lt.s32.totalorder %s15, 1
      %s206 = scalar_select %p205, %s15, 1
      %s207 = smul.addr %s206, 5
      %s208 = smul.addr %s207, 2
      %s209 = scalar_lea.vmem %s1, %s208
      %p210 = pneg %p62
      %p211 = pneg %p59
      %p212 = scmp.lt.s32.totalorder %s15, 1
      %s213 = scalar_select %p212, %s15, 1
      %s214 = smul.addr %s213, 4
      %s215 = smul.addr %s214, 4
      %s216 = scalar_lea.vmem %s2, %s215
      %p217 = pneg %p88
      %p218 = pneg %p85
      %p219 = scmp.lt.s32.totalorder %s15, 1
      %s220 = scalar_select %p219, %s15, 1
      %s221 = smul.addr %s220, 4
      %s222 = smul.addr %s221, 2
      %s223 = scalar_lea.vmem %s3, %s222
      %p224 = pneg %p114
      %p225 = pneg %p111
      %p226 = pneg %p140
      %p227 = pneg %p137
      %p228 = scmp.lt.s32.totalorder %s15, 1
      %s229 = scalar_select %p228, %s15, 1
      %s230 = smul.addr %s229, 4
      %s231 = smul.addr %s230, 2
      %s232 = scalar_lea.vmem %s4, %s231
      %p233 = scmp.lt.s32.totalorder %s15, 1
      %s234 = scalar_select %p233, %s15, 1
      %s235 = smul.addr %s234, 5
      %s236 = smul.addr %s235, 4
      %s237 = scalar_lea.vmem %s0, %s236
      %p238 = scmp.lt.s32.totalorder %s15, 1
      %s239 = scalar_select %p238, %s15, 1
      %s240 = smul.addr %s239, 5
      %s241 = smul.addr %s240, 2
      %s242 = scalar_lea.vmem %s1, %s241
      %p243 = scmp.lt.s32.totalorder %s15, 1
      %s244 = scalar_select %p243, %s15, 1
      %s245 = smul.addr %s244, 4
      %s246 = smul.addr %s245, 4
      %s247 = scalar_lea.vmem %s2, %s246
      %p248 = scmp.lt.s32.totalorder %s15, 1
      %s249 = scalar_select %p248, %s15, 1
      %s250 = smul.addr %s249, 4
      %s251 = smul.addr %s250, 2
      %s252 = scalar_lea.vmem %s3, %s251
      %p253 = scmp.lt.s32.totalorder %s15, 1
      %s254 = scalar_select %p253, %s15, 1
      %s255 = smul.addr %s254, 4
      %s256 = smul.addr %s255, 2
      %s257 = scalar_lea.vmem %s4, %s256
      %v258 = vld [vmem:[%s237] sm:$0x7]
      %v259 = vld [vmem:[%s237 + $0x4] sm:$0x7]
      %v260 = vld [vmem:[%s237 + $0x8] sm:$0x7]
      %v261 = vld [vmem:[%s237 + $0xc] sm:$0x7]
      %v262 = vld [vmem:[%s237 + $0x10] sm:$0x7]
      %v263 = vld [vmem:[%s242] sm:$0x3]
      %v264 = vld [vmem:[%s242 + $0x2] sm:$0x3]
      %v265 = vld [vmem:[%s242 + $0x4] sm:$0x3]
      %v266 = vld [vmem:[%s242 + $0x6] sm:$0x3]
      %v267 = vld [vmem:[%s242 + $0x8] sm:$0x3]
      %v268 = vld [vmem:[%s247] sm:$0x7]
      %v269 = vld [vmem:[%s247 + $0x4] sm:$0x7]
      %v270 = vld [vmem:[%s247 + $0x8] sm:$0x7]
      %v271 = vld [vmem:[%s247 + $0xc] sm:$0x7]
      %v272 = vld [vmem:[%s252] sm:$0x3]
      %v273 = vld [vmem:[%s252 + $0x2] sm:$0x3]
      %v274 = vld [vmem:[%s252 + $0x4] sm:$0x3]
      %v275 = vld [vmem:[%s252 + $0x6] sm:$0x3]
      %v276 = vmax.bf16 %v272, %v258
      %v277 = vmax.bf16 %v273, %v259
      %v278 = vmax.bf16 %v274, %v260
      %v279 = vmax.bf16 %v275, %v261
      %v285 = vunpack.c.l.s4 1983009808
      %v286 = vunpack.c.0.s8 %v285
      %v287 = vlaneseq
      %v288 = vshrl.u32 %v287, 7
      %v289 = vsub.s32 %v286, %v288
      %v290 = vrot.slane %v258, %v289
      %v291 = vcombine.high %v290, %v290
      %v293 = vunpack.c.l.s4 1983009808
      %v294 = vunpack.c.0.s8 %v293
      %v295 = vlaneseq
      %v296 = vshrl.u32 %v295, 7
      %v297 = vsub.s32 %v294, %v296
      %v298 = vrot.slane %v259, %v297
      %v299 = vcombine.high %v298, %v298
      %v301 = vunpack.c.l.s4 1983009808
      %v302 = vunpack.c.0.s8 %v301
      %v303 = vlaneseq
      %v304 = vshrl.u32 %v303, 7
      %v305 = vsub.s32 %v302, %v304
      %v306 = vrot.slane %v260, %v305
      %v307 = vcombine.high %v306, %v306
      %v309 = vunpack.c.l.s4 1983009808
      %v310 = vunpack.c.0.s8 %v309
      %v311 = vlaneseq
      %v312 = vshrl.u32 %v311, 7
      %v313 = vsub.s32 %v310, %v312
      %v314 = vrot.slane %v261, %v313
      %v315 = vcombine.high %v314, %v314
      %vm316 = vsmask.f32 1280
      %vm317 = vsmask.f32 3336
      %vm318 = vmor %vm316, %vm317
      %vm319 = vsmask.f32 5392
      %vm320 = vmor %vm318, %vm319
      %vm321 = vsmask.f32 7448
      %vm322 = vmor %vm320, %vm321
      %v324 = vshrl.u32 %v290, 16
      %v326 = vrot.slane %v324, 6
      %v327 = vshll.u32 %v290, 16
      %v329 = vrot.slane %v327, 7
      %v330 = vor.u32 %v326, %v329
      %v331 = vrot.slane %v330, 2
      %v333 = vshll.u32 %v291, 16
      %v335 = vrot.slane %v333, 7
      %v336 = vsel %vm322, %v331, %v335
      %v338 = vshrl.u32 %v298, 16
      %v340 = vrot.slane %v338, 6
      %v341 = vshll.u32 %v298, 16
      %v343 = vrot.slane %v341, 7
      %v344 = vor.u32 %v340, %v343
      %v345 = vrot.slane %v344, 2
      %v347 = vshll.u32 %v299, 16
      %v349 = vrot.slane %v347, 7
      %v350 = vsel %vm322, %v345, %v349
      %v352 = vshrl.u32 %v306, 16
      %v354 = vrot.slane %v352, 6
      %v355 = vshll.u32 %v306, 16
      %v357 = vrot.slane %v355, 7
      %v358 = vor.u32 %v354, %v357
      %v359 = vrot.slane %v358, 2
      %v361 = vshll.u32 %v307, 16
      %v363 = vrot.slane %v361, 7
      %v364 = vsel %vm322, %v359, %v363
      %v366 = vshrl.u32 %v314, 16
      %v368 = vrot.slane %v366, 6
      %v369 = vshll.u32 %v314, 16
      %v371 = vrot.slane %v369, 7
      %v372 = vor.u32 %v368, %v371
      %v373 = vrot.slane %v372, 2
      %v375 = vshll.u32 %v315, 16
      %v377 = vrot.slane %v375, 7
      %v378 = vsel %vm322, %v373, %v377
      %v383 = vmax.bf16 %v276, %v336
      %v384 = vmax.bf16 %v277, %v350
      %v385 = vmax.bf16 %v278, %v364
      %v386 = vmax.bf16 %v279, %v378
      %v387 = vmax.bf16 %v383, %v259
      %v388 = vmax.bf16 %v384, %v260
      %v389 = vmax.bf16 %v385, %v261
      %v390 = vmax.bf16 %v386, %v262
      %v393 = vunpack.c.l.s4 1983009808
      %v394 = vunpack.c.0.s8 %v393
      %v395 = vlaneseq
      %v396 = vshrl.u32 %v395, 7
      %v397 = vsub.s32 %v394, %v396
      %v398 = vrot.slane %v262, %v397
      %v399 = vcombine.high %v398, %v398
      %v401 = vshrl.u32 %v398, 16
      %v403 = vrot.slane %v401, 6
      %v404 = vshll.u32 %v398, 16
      %v406 = vrot.slane %v404, 7
      %v407 = vor.u32 %v403, %v406
      %v408 = vrot.slane %v407, 2
      %v410 = vshll.u32 %v399, 16
      %v412 = vrot.slane %v410, 7
      %v413 = vsel %vm322, %v408, %v412
      %v415 = vmax.bf16 %v387, %v350
      %v416 = vmax.bf16 %v388, %v364
      %v417 = vmax.bf16 %v389, %v378
      %v418 = vmax.bf16 %v390, %v413
      %v419 = vmax.bf16 %v415, %v263
      %v420 = vmax.bf16 %v416, %v264
      %v421 = vmax.bf16 %v417, %v265
      %v422 = vmax.bf16 %v418, %v266
      %v423 = vmax.bf16 %v419, %v264
      %v424 = vmax.bf16 %v420, %v265
      %v425 = vmax.bf16 %v421, %v266
      %v426 = vmax.bf16 %v422, %v267
      %v427 = vmax.bf16 %v423, %v268
      %v428 = vmax.bf16 %v424, %v269
      %v429 = vmax.bf16 %v425, %v270
      %v430 = vmax.bf16 %v426, %v271
      %v436 = vunpack.c.l.s4 1983009808
      %v437 = vunpack.c.0.s8 %v436
      %v438 = vlaneseq
      %v439 = vshrl.u32 %v438, 7
      %v440 = vsub.s32 %v437, %v439
      %v441 = vrot.slane %v268, %v440
      %v442 = vcombine.high %v441, %v441
      %v444 = vunpack.c.l.s4 1983009808
      %v445 = vunpack.c.0.s8 %v444
      %v446 = vlaneseq
      %v447 = vshrl.u32 %v446, 7
      %v448 = vsub.s32 %v445, %v447
      %v449 = vrot.slane %v269, %v448
      %v450 = vcombine.high %v449, %v449
      %v452 = vunpack.c.l.s4 1983009808
      %v453 = vunpack.c.0.s8 %v452
      %v454 = vlaneseq
      %v455 = vshrl.u32 %v454, 7
      %v456 = vsub.s32 %v453, %v455
      %v457 = vrot.slane %v270, %v456
      %v458 = vcombine.high %v457, %v457
      %v460 = vunpack.c.l.s4 1983009808
      %v461 = vunpack.c.0.s8 %v460
      %v462 = vlaneseq
      %v463 = vshrl.u32 %v462, 7
      %v464 = vsub.s32 %v461, %v463
      %v465 = vrot.slane %v271, %v464
      %v466 = vcombine.high %v465, %v465
      %v468 = vshrl.u32 %v441, 16
      %v470 = vrot.slane %v468, 6
      %v471 = vshll.u32 %v441, 16
      %v473 = vrot.slane %v471, 7
      %v474 = vor.u32 %v470, %v473
      %v475 = vrot.slane %v474, 2
      %v477 = vshll.u32 %v442, 16
      %v479 = vrot.slane %v477, 7
      %v480 = vsel %vm322, %v475, %v479
      %v482 = vshrl.u32 %v449, 16
      %v484 = vrot.slane %v482, 6
      %v485 = vshll.u32 %v449, 16
      %v487 = vrot.slane %v485, 7
      %v488 = vor.u32 %v484, %v487
      %v489 = vrot.slane %v488, 2
      %v491 = vshll.u32 %v450, 16
      %v493 = vrot.slane %v491, 7
      %v494 = vsel %vm322, %v489, %v493
      %v496 = vshrl.u32 %v457, 16
      %v498 = vrot.slane %v496, 6
      %v499 = vshll.u32 %v457, 16
      %v501 = vrot.slane %v499, 7
      %v502 = vor.u32 %v498, %v501
      %v503 = vrot.slane %v502, 2
      %v505 = vshll.u32 %v458, 16
      %v507 = vrot.slane %v505, 7
      %v508 = vsel %vm322, %v503, %v507
      %v510 = vshrl.u32 %v465, 16
      %v512 = vrot.slane %v510, 6
      %v513 = vshll.u32 %v465, 16
      %v515 = vrot.slane %v513, 7
      %v516 = vor.u32 %v512, %v515
      %v517 = vrot.slane %v516, 2
      %v519 = vshll.u32 %v466, 16
      %v521 = vrot.slane %v519, 7
      %v522 = vsel %vm322, %v517, %v521
      %v527 = vmax.bf16 %v427, %v480
      %v528 = vmax.bf16 %v428, %v494
      %v529 = vmax.bf16 %v429, %v508
      %v530 = vmax.bf16 %v430, %v522
      %vm531 = vcmask 517120
      %532 = vst.msk [vmem:[%s257] sm:$0x3] %vm531, %v527
      %533 = vst.msk [vmem:[%s257 + $0x2] sm:$0x3] %vm531, %v528
      %534 = vst.msk [vmem:[%s257 + $0x4] sm:$0x3] %vm531, %v529
      %535 = vst.msk [vmem:[%s257 + $0x6] sm:$0x3] %vm531, %v530
      %p536 = scmp.lt.s32.totalorder %s15, 1
      %s537 = scalar_select %p536, %s15, 1
      %s538 = smul.addr %s537, 4
      %s539 = smul.addr %s538, 2
      %s540 = scalar_lea.vmem %s4, %s539
      // Predicated region
      $region37: #{cnn18_forward.22} parent=35 // pred_check
        %p541 = pneg %p137
      $region38: #{cnn18_forward.22} parent=35 // pred_check_branch
        %543 = sbr.rel (%p541) target = $region40
      $region39: #{cnn18_forward.22} parent=35 // pred_region
        _
      $region40: #{cnn18_forward.22} parent=35 // pred_fallthru
        _
    $region36: #{cnn18_forward.22} parent=5 // pred_fallthru
      _
    %p544 = scmp.le.s32.totalorder 2, %s10
    // Predicated region
    $region41: #{cnn18_forward.22} parent=5 // pred_check
      %p545 = pneg %p544
    $region42: #{cnn18_forward.22} parent=5 // pred_check_branch
      %547 = sbr.rel (%p545) target = $region44
    $region43: #{cnn18_forward.22} parent=5 // pred_region
      %s548 = ssub.s32 %s10, 2
      // Predicated region
      $region45: #{cnn18_forward.22} parent=43 // pred_check
        %p549 = pneg %p143
      $region46: #{cnn18_forward.22} parent=43 // pred_check_branch
        %551 = sbr.rel (%p549) target = $region48
      $region47: #{cnn18_forward.22} parent=43 // pred_region
        %p552 = scmp.lt.s32.totalorder %s16, 1
        %s553 = scalar_select %p552, %s16, 1
        %s554 = smul.addr %s553, 4
        %s555 = smul.addr %s554, 2
        %s556 = scalar_lea.vmem %s4, %s555
      $region48: #{cnn18_forward.22} parent=43 // pred_fallthru
        _
    $region44: #{cnn18_forward.22} parent=5 // pred_fallthru
      _
  $region6: #{cnn18_forward.22} parent=0 // loop_footer
    %s14 = sadd.s32 1, %s10
  $region7: #{cnn18_forward.22} parent=0 // loop_footer_branch
    %9 = sbr.rel target = $region3
  $region8: #{cnn18_forward.22} parent=0 // loop_exit
    _

// kernel: cnn18_forward.32
$region0: #{cnn18_forward.32}
  #allocation0 [shape = 'u32[]', space=smem, size = 0x4, offset = 0x4, fixed_abs, tag = 'smem constant byte address 0x4 - core index']
  #allocation1 [shape = 'u32[144,128]{1,0:T(1,128)}', space=vmem, size = 0x12000, scoped, tag = 'internal scratch']
  %s0 = inlined_call_operand.vmem [shape: bf16[256,128], index: 0, kind: input, shape index: {}]
  %s1 = inlined_call_operand.vmem [shape: f32[1,128], index: 1, kind: input, shape index: {}]
  %s2 = inlined_call_operand.vmem [shape: f32[1,128], index: 2, kind: input, shape index: {}]
  %s3 = inlined_call_operand.vmem [shape: bf16[256,128], index: 3, kind: output, shape index: {}]
  %s4 = sld [smem:[#allocation0]]
  $region22: #{cnn18_forward.32} parent=0
    _
  %s6 = ssub.s32 1, %s4
  %s7 = scalar_select 0, %s6, %s4
  // Predicated region
  $region2: #{cnn18_forward.32} parent=0 // pred_check
    _
  $region3: #{cnn18_forward.32} parent=0 // pred_check_branch
    %9 = sbr.rel (0) target = $region5
  $region4: #{cnn18_forward.32} parent=0 // pred_region
    _
  $region5: #{cnn18_forward.32} parent=0 // pred_fallthru
    _
  // Predicated region
  $region6: #{cnn18_forward.32} parent=0 // pred_check
    _
  $region7: #{cnn18_forward.32} parent=0 // pred_check_branch
    %11 = sbr.rel (0) target = $region9
  $region8: #{cnn18_forward.32} parent=0 // pred_region
    _
  $region9: #{cnn18_forward.32} parent=0 // pred_fallthru
    _
  // Predicated region
  $region10: #{cnn18_forward.32} parent=0 // pred_check
    _
  $region11: #{cnn18_forward.32} parent=0 // pred_check_branch
    %13 = sbr.rel (0) target = $region13
  $region12: #{cnn18_forward.32} parent=0 // pred_region
    _
  $region13: #{cnn18_forward.32} parent=0 // pred_fallthru
    _
  %v14 = vld [vmem:[%s0] sm:$0xf]
  %v15 = vld [vmem:[%s0 + $0x4] sm:$0xf]
  %v16 = vld [vmem:[%s0 + $0x8] sm:$0xf]
  %v17 = vld [vmem:[%s0 + $0xc] sm:$0xf]
  %v18 = vld [vmem:[%s0 + $0x10] sm:$0xf]
  %v19 = vld [vmem:[%s0 + $0x14] sm:$0xf]
  %v20 = vld [vmem:[%s0 + $0x18] sm:$0xf]
  %v21 = vld [vmem:[%s0 + $0x1c] sm:$0xf]
  %v22 = vld [vmem:[%s0 + $0x20] sm:$0xf]
  %v23 = vld [vmem:[%s0 + $0x24] sm:$0xf]
  %v24 = vld [vmem:[%s0 + $0x28] sm:$0xf]
  %v25 = vld [vmem:[%s0 + $0x2c] sm:$0xf]
  %v26 = vld [vmem:[%s0 + $0x30] sm:$0xf]
  %v27 = vld [vmem:[%s0 + $0x34] sm:$0xf]
  %v28 = vld [vmem:[%s0 + $0x38] sm:$0xf]
  %v29 = vld [vmem:[%s0 + $0x3c] sm:$0xf]
  %v30 = vld [vmem:[%s0 + $0x40] sm:$0xf]
  %v31 = vld [vmem:[%s0 + $0x44] sm:$0xf]
  %v32 = vld [vmem:[%s0 + $0x48] sm:$0xf]
  %v33 = vld [vmem:[%s0 + $0x4c] sm:$0xf]
  %v34 = vld [vmem:[%s0 + $0x50] sm:$0xf]
  %v35 = vld [vmem:[%s0 + $0x54] sm:$0xf]
  %v36 = vld [vmem:[%s0 + $0x58] sm:$0xf]
  %v37 = vld [vmem:[%s0 + $0x5c] sm:$0xf]
  %v38 = vld [vmem:[%s0 + $0x60] sm:$0xf]
  %v39 = vld [vmem:[%s0 + $0x64] sm:$0xf]
  %v40 = vld [vmem:[%s0 + $0x68] sm:$0xf]
  %v41 = vld [vmem:[%s0 + $0x6c] sm:$0xf]
  %v42 = vld [vmem:[%s0 + $0x70] sm:$0xf]
  %v43 = vld [vmem:[%s0 + $0x74] sm:$0xf]
  %v44 = vld [vmem:[%s0 + $0x78] sm:$0xf]
  %v45 = vld [vmem:[%s0 + $0x7c] sm:$0xf]
  %v46 = vunpack.c.l.bf16 %v14
  %v47 = vunpack.c.l.bf16 %v15
  %v48 = vunpack.c.l.bf16 %v16
  %v49 = vunpack.c.l.bf16 %v17
  %v50 = vunpack.c.l.bf16 %v18
  %v51 = vunpack.c.l.bf16 %v19
  %v52 = vunpack.c.l.bf16 %v20
  %v53 = vunpack.c.l.bf16 %v21
  %v54 = vunpack.c.l.bf16 %v22
  %v55 = vunpack.c.l.bf16 %v23
  %v56 = vunpack.c.l.bf16 %v24
  %v57 = vunpack.c.l.bf16 %v25
  %v58 = vunpack.c.l.bf16 %v26
  %v59 = vunpack.c.l.bf16 %v27
  %v60 = vunpack.c.l.bf16 %v28
  %v61 = vunpack.c.l.bf16 %v29
  %v62 = vunpack.c.l.bf16 %v30
  %v63 = vunpack.c.l.bf16 %v31
  %v64 = vunpack.c.l.bf16 %v32
  %v65 = vunpack.c.l.bf16 %v33
  %v66 = vunpack.c.l.bf16 %v34
  %v67 = vunpack.c.l.bf16 %v35
  %v68 = vunpack.c.l.bf16 %v36
  %v69 = vunpack.c.l.bf16 %v37
  %v70 = vunpack.c.l.bf16 %v38
  %v71 = vunpack.c.l.bf16 %v39
  %v72 = vunpack.c.l.bf16 %v40
  %v73 = vunpack.c.l.bf16 %v41
  %v74 = vunpack.c.l.bf16 %v42
  %v75 = vunpack.c.l.bf16 %v43
  %v76 = vunpack.c.l.bf16 %v44
  %v77 = vunpack.c.l.bf16 %v45
  %v78 = vld [vmem:[%s1] sm:$0x1]
  %v80 = vlaneseq
  %v81 = vshrl.u32 %v80, 7
  %v82 = vsub.s32 0, %v81
  %v83 = vrot.slane %v78, %v82
  %v85 = vmul.f32 %v46, %v83
  %v86 = vmul.f32 %v47, %v83
  %v87 = vmul.f32 %v48, %v83
  %v88 = vmul.f32 %v49, %v83
  %v89 = vmul.f32 %v50, %v83
  %v90 = vmul.f32 %v51, %v83
  %v91 = vmul.f32 %v52, %v83
  %v92 = vmul.f32 %v53, %v83
  %v93 = vmul.f32 %v54, %v83
  %v94 = vmul.f32 %v55, %v83
  %v95 = vmul.f32 %v56, %v83
  %v96 = vmul.f32 %v57, %v83
  %v97 = vmul.f32 %v58, %v83
  %v98 = vmul.f32 %v59, %v83
  %v99 = vmul.f32 %v60, %v83
  %v100 = vmul.f32 %v61, %v83
  %v101 = vmul.f32 %v62, %v83
  %v102 = vmul.f32 %v63, %v83
  %v103 = vmul.f32 %v64, %v83
  %v104 = vmul.f32 %v65, %v83
  %v105 = vmul.f32 %v66, %v83
  %v106 = vmul.f32 %v67, %v83
  %v107 = vmul.f32 %v68, %v83
  %v108 = vmul.f32 %v69, %v83
  %v109 = vmul.f32 %v70, %v83
  %v110 = vmul.f32 %v71, %v83
  %v111 = vmul.f32 %v72, %v83
  %v112 = vmul.f32 %v73, %v83
  %v113 = vmul.f32 %v74, %v83
  %v114 = vmul.f32 %v75, %v83
  %v115 = vmul.f32 %v76, %v83
  %v116 = vmul.f32 %v77, %v83
  %v117 = vld [vmem:[%s2] sm:$0x1]
  %v119 = vlaneseq
  %v120 = vshrl.u32 %v119, 7
  %v121 = vsub.s32 0, %v120
  %v122 = vrot.slane %v117, %v121
  %v124 = vadd.f32 %v85, %v122
  %v125 = vadd.f32 %v86, %v122
  %v126 = vadd.f32 %v87, %v122
  %v127 = vadd.f32 %v88, %v122
  %v128 = vadd.f32 %v89, %v122
  %v129 = vadd.f32 %v90, %v122
  %v130 = vadd.f32 %v91, %v122
  %v131 = vadd.f32 %v92, %v122
  %v132 = vadd.f32 %v93, %v122
  %v133 = vadd.f32 %v94, %v122
  %v134 = vadd.f32 %v95, %v122
  %v135 = vadd.f32 %v96, %v122
  %v136 = vadd.f32 %v97, %v122
  %v137 = vadd.f32 %v98, %v122
  %v138 = vadd.f32 %v99, %v122
  %v139 = vadd.f32 %v100, %v122
  %v140 = vadd.f32 %v101, %v122
  %v141 = vadd.f32 %v102, %v122
  %v142 = vadd.f32 %v103, %v122
  %v143 = vadd.f32 %v104, %v122
  %v144 = vadd.f32 %v105, %v122
  %v145 = vadd.f32 %v106, %v122
  %v146 = vadd.f32 %v107, %v122
  %v147 = vadd.f32 %v108, %v122
  %v148 = vadd.f32 %v109, %v122
  %v149 = vadd.f32 %v110, %v122
  %v150 = vadd.f32 %v111, %v122
  %v151 = vadd.f32 %v112, %v122
  %v152 = vadd.f32 %v113, %v122
  %v153 = vadd.f32 %v114, %v122
  %v154 = vadd.f32 %v115, %v122
  %v155 = vadd.f32 %v116, %v122
  %v156 = vmax.f32 %v124, 0.0
  %v157 = vmax.f32 %v125, 0.0
  %v158 = vmax.f32 %v126, 0.0
  %v159 = vmax.f32 %v127, 0.0
  %v160 = vmax.f32 %v128, 0.0
  %v161 = vmax.f32 %v129, 0.0
  %v162 = vmax.f32 %v130, 0.0
  %v163 = vmax.f32 %v131, 0.0
  %v164 = vmax.f32 %v132, 0.0
  %v165 = vmax.f32 %v133, 0.0
  %v166 = vmax.f32 %v134, 0.0
  %v167 = vmax.f32 %v135, 0.0
  %v168 = vmax.f32 %v136, 0.0
  %v169 = vmax.f32 %v137, 0.0
  %v170 = vmax.f32 %v138, 0.0
  %v171 = vmax.f32 %v139, 0.0
  %v172 = vmax.f32 %v140, 0.0
  %v173 = vmax.f32 %v141, 0.0
  %v174 = vmax.f32 %v142, 0.0
  %v175 = vmax.f32 %v143, 0.0
  %v176 = vmax.f32 %v144, 0.0
  %v177 = vmax.f32 %v145, 0.0
  %v178 = vmax.f32 %v146, 0.0
  %v179 = vmax.f32 %v147, 0.0
  %v180 = vmax.f32 %v148, 0.0
  %v181 = vmax.f32 %v149, 0.0
  %v182 = vmax.f32 %v150, 0.0
  %v183 = vmax.f32 %v151, 0.0
  %v184 = vmax.f32 %v152, 0.0
  %v185 = vmax.f32 %v153, 0.0
  %v186 = vmax.f32 %v154, 0.0
  %v187 = vmax.f32 %v155, 0.0
  %v188 = vpack.c.bf16 %v157, %v156
  %v189 = vpack.c.bf16 %v159, %v158
  %v190 = vpack.c.bf16 %v161, %v160
  %v191 = vpack.c.bf16 %v163, %v162
  %v192 = vpack.c.bf16 %v165, %v164
  %v193 = vpack.c.bf16 %v167, %v166
  %v194 = vpack.c.bf16 %v169, %v168
  %v195 = vpack.c.bf16 %v171, %v170
  %v196 = vpack.c.bf16 %v173, %v172
  %v197 = vpack.c.bf16 %v175, %v174
  %v198 = vpack.c.bf16 %v177, %v176
  %v199 = vpack.c.bf16 %v179, %v178
  %v200 = vpack.c.bf16 %v181, %v180
  %v201 = vpack.c.bf16 %v183, %v182
  %v202 = vpack.c.bf16 %v185, %v184
  %v203 = vpack.c.bf16 %v187, %v186
  %v220 = vunpack.c.l.b16 %v188
  %v221 = vunpack.c.h.b16 %v188
  %v222 = vunpack.c.l.b16 %v189
  %v223 = vunpack.c.h.b16 %v189
  %v224 = vunpack.c.l.b16 %v190
  %v225 = vunpack.c.h.b16 %v190
  %v226 = vunpack.c.l.b16 %v191
  %v227 = vunpack.c.h.b16 %v191
  %v228 = vunpack.c.l.b16 %v192
  %v229 = vunpack.c.h.b16 %v192
  %v230 = vunpack.c.l.b16 %v193
  %v231 = vunpack.c.h.b16 %v193
  %v232 = vunpack.c.l.b16 %v194
  %v233 = vunpack.c.h.b16 %v194
  %v234 = vunpack.c.l.b16 %v195
  %v235 = vunpack.c.h.b16 %v195
  %v236 = vunpack.c.l.b16 %v196
  %v237 = vunpack.c.h.b16 %v196
  %v238 = vunpack.c.l.b16 %v197
  %v239 = vunpack.c.h.b16 %v197
  %v240 = vunpack.c.l.b16 %v198
  %v241 = vunpack.c.h.b16 %v198
  %v242 = vunpack.c.l.b16 %v199
  %v243 = vunpack.c.h.b16 %v199
  %v244 = vunpack.c.l.b16 %v200
  %v245 = vunpack.c.h.b16 %v200
  %v246 = vunpack.c.l.b16 %v201
  %v247 = vunpack.c.h.b16 %v201
  %v248 = vunpack.c.l.b16 %v202
  %v249 = vunpack.c.h.b16 %v202
  %v250 = vunpack.c.l.b16 %v203
  %v251 = vunpack.c.h.b16 %v203
  %v252 = vpack.c.b16 %v220, %v220
  %v253 = vpack.c.b16 %v221, %v221
  %v254 = vpack.c.b16 %v222, %v222
  %v255 = vpack.c.b16 %v223, %v223
  %v256 = vpack.c.b16 %v224, %v224
  %v257 = vpack.c.b16 %v225, %v225
  %v258 = vpack.c.b16 %v226, %v226
  %v259 = vpack.c.b16 %v227, %v227
  %v260 = vpack.c.b16 %v228, %v228
  %v261 = vpack.c.b16 %v229, %v229
  %v262 = vpack.c.b16 %v230, %v230
  %v263 = vpack.c.b16 %v231, %v231
  %v264 = vpack.c.b16 %v232, %v232
  %v265 = vpack.c.b16 %v233, %v233
  %v266 = vpack.c.b16 %v234, %v234
  %v267 = vpack.c.b16 %v235, %v235
  %v268 = vpack.c.b16 %v236, %v236
  %v269 = vpack.c.b16 %v237, %v237
  %v270 = vpack.c.b16 %v238, %v238
  %v271 = vpack.c.b16 %v239, %v239
  %v272 = vpack.c.b16 %v240, %v240
  %v273 = vpack.c.b16 %v241, %v241
  %v274 = vpack.c.b16 %v242, %v242
  %v275 = vpack.c.b16 %v243, %v243
  %v276 = vpack.c.b16 %v244, %v244
  %v277 = vpack.c.b16 %v245, %v245
  %v278 = vpack.c.b16 %v246, %v246
  %v279 = vpack.c.b16 %v247, %v247
  %v280 = vpack.c.b16 %v248, %v248
  %v281 = vpack.c.b16 %v249, %v249
  %v282 = vpack.c.b16 %v250, %v250
  %v283 = vpack.c.b16 %v251, %v251
  %316 = vst [vmem:[%s3] sm:$0xf] %v252
  %317 = vst [vmem:[%s3 + $0x4] sm:$0xf] %v253
  %318 = vst [vmem:[%s3 + $0x8] sm:$0xf] %v254
  %319 = vst [vmem:[%s3 + $0xc] sm:$0xf] %v255
  %320 = vst [vmem:[%s3 + $0x10] sm:$0xf] %v256
  %321 = vst [vmem:[%s3 + $0x14] sm:$0xf] %v257
  %322 = vst [vmem:[%s3 + $0x18] sm:$0xf] %v258
  %323 = vst [vmem:[%s3 + $0x1c] sm:$0xf] %v259
  %324 = vst [vmem:[%s3 + $0x20] sm:$0xf] %v260
  %325 = vst [vmem:[%s3 + $0x24] sm:$0xf] %v261
  %326 = vst [vmem:[%s3 + $0x28] sm:$0xf] %v262
  %327 = vst [vmem:[%s3 + $0x2c] sm:$0xf] %v263
  %328 = vst [vmem:[%s3 + $0x30] sm:$0xf] %v264
  %329 = vst [vmem:[%s3 + $0x34] sm:$0xf] %v265
  %330 = vst [vmem:[%s3 + $0x38] sm:$0xf] %v266
  %331 = vst [vmem:[%s3 + $0x3c] sm:$0xf] %v267
  %332 = vst [vmem:[%s3 + $0x40] sm:$0xf] %v268
  %333 = vst [vmem:[%s3 + $0x44] sm:$0xf] %v269
  %334 = vst [vmem:[%s3 + $0x48] sm:$0xf] %v270
  %335 = vst [vmem:[%s3 + $0x4c] sm:$0xf] %v271
  %336 = vst [vmem:[%s3 + $0x50] sm:$0xf] %v272
  %337 = vst [vmem:[%s3 + $0x54] sm:$0xf] %v273
  %338 = vst [vmem:[%s3 + $0x58] sm:$0xf] %v274
  %339 = vst [vmem:[%s3 + $0x5c] sm:$0xf] %v275
  %340 = vst [vmem:[%s3 + $0x60] sm:$0xf] %v276
  %341 = vst [vmem:[%s3 + $0x64] sm:$0xf] %v277
  %342 = vst [vmem:[%s3 + $0x68] sm:$0xf] %v278
  %343 = vst [vmem:[%s3 + $0x6c] sm:$0xf] %v279
  %344 = vst [vmem:[%s3 + $0x70] sm:$0xf] %v280
  %345 = vst [vmem:[%s3 + $0x74] sm:$0xf] %v281
  %346 = vst [vmem:[%s3 + $0x78] sm:$0xf] %v282
  %347 = vst [vmem:[%s3 + $0x7c] sm:$0xf] %v283
  // Predicated region
  $region14: #{cnn18_forward.32} parent=0 // pred_check
    _
  $region15: #{cnn18_forward.32} parent=0 // pred_check_branch
    %349 = sbr.rel (0) target = $region17
  $region16: #{cnn18_forward.32} parent=0 // pred_region
    _
  $region17: #{cnn18_forward.32} parent=0 // pred_fallthru
    _
  // Predicated region
  $region18: #{cnn18_forward.32} parent=0 // pred_check
    _
  $region19: #{cnn18_forward.32} parent=0 // pred_check_branch
    %351 = sbr.rel (0) target = $region21
  $region20: #{cnn18_forward.32} parent=0 // pred_region
    _
  $region21: #{cnn18_forward.32} parent=0 // pred_fallthru
    _

// kernel: cnn18_forward.39
$region0: #{cnn18_forward.39}
  #allocation0 [shape = 'u32[]', space=smem, size = 0x4, offset = 0x4, fixed_abs, tag = 'smem constant byte address 0x4 - core index']
  #allocation1 [shape = 'u32[144,128]{1,0:T(1,128)}', space=vmem, size = 0x12000, scoped, tag = 'internal scratch']
  %s0 = inlined_call_operand.vmem [shape: bf16[2,16,128], index: 0, kind: input, shape index: {}]
  %s1 = inlined_call_operand.vmem [shape: f32[128,10], index: 1, kind: input, shape index: {}]
  %s2 = inlined_call_operand.vmem [shape: f32[1,10], index: 2, kind: input, shape index: {}]
  %s3 = inlined_call_operand.hbm [shape: f32[2,10], index: 3, kind: output, shape index: {}]
  %s4 = sld [smem:[#allocation0]]
  $region22: #{cnn18_forward.39} parent=0
    _
  %s6 = ssub.s32 1, %s4
  %s7 = scalar_select 0, %s6, %s4
  $region1: #{cnn18_forward.39} parent=0
    #allocation2 [shape = 'u8[1024]{0}', space=vmem, size = 0x400, scoped, tag = 'output window, operand 0, single buffered']
    #allocation3 [shape = 's32[1]{0}', space=sflag, size = 0x4, scoped, tag = 'scoped memory for cnn18_forward.39']
    %8 = vsyncpa [#allocation3], 0
    // Predicated region
    $region2: #{cnn18_forward.39} parent=1 // pred_check
      _
    $region3: #{cnn18_forward.39} parent=1 // pred_check_branch
      %10 = sbr.rel (0) target = $region5
    $region4: #{cnn18_forward.39} parent=1 // pred_region
      _
    $region5: #{cnn18_forward.39} parent=1 // pred_fallthru
      _
    // Predicated region
    $region6: #{cnn18_forward.39} parent=1 // pred_check
      _
    $region7: #{cnn18_forward.39} parent=1 // pred_check_branch
      %12 = sbr.rel (0) target = $region9
    $region8: #{cnn18_forward.39} parent=1 // pred_region
      _
    $region9: #{cnn18_forward.39} parent=1 // pred_fallthru
      _
    // Predicated region
    $region10: #{cnn18_forward.39} parent=1 // pred_check
      _
    $region11: #{cnn18_forward.39} parent=1 // pred_check_branch
      %14 = sbr.rel (0) target = $region13
    $region12: #{cnn18_forward.39} parent=1 // pred_region
      _
    $region13: #{cnn18_forward.39} parent=1 // pred_fallthru
      _
    %v15 = vld [vmem:[%s0] sm:$0xf]
    %v16 = vld [vmem:[%s0 + $0x4] sm:$0xf]
    %v17 = vld [vmem:[%s0 + $0x8] sm:$0xf]
    %v18 = vld [vmem:[%s0 + $0xc] sm:$0xf]
    %v19 = vunpack.c.l.bf16 %v15
    %v20 = vunpack.c.l.bf16 %v16
    %v21 = vunpack.c.l.bf16 %v17
    %v22 = vunpack.c.l.bf16 %v18
    %v23 = vadd.f32 %v19, %v20
    %v24 = vrot.slane %v23, 4
    %v25 = vadd.f32 %v23, %v24
    %v26 = vrot.slane %v25, 2
    %v27 = vadd.f32 %v25, %v26
    %v28 = vrot.slane %v27, 1
    %v29 = vadd.f32 %v27, %v28
    %v30 = vadd.f32 %v21, %v22
    %v31 = vrot.slane %v30, 4
    %v32 = vadd.f32 %v30, %v31
    %v33 = vrot.slane %v32, 2
    %v34 = vadd.f32 %v32, %v33
    %v35 = vrot.slane %v34, 1
    %v36 = vadd.f32 %v34, %v35
    %v37 = vmul.f32 %v29, 0.0625
    %v38 = vmul.f32 %v36, 0.0625
    %v39 = vld [vmem:[%s1] sm:$0xff]
    %v40 = vld [vmem:[%s1 + $0x8] sm:$0xff]
    %v41 = vld [vmem:[%s1 + $0x10] sm:$0xff]
    %v42 = vld [vmem:[%s1 + $0x18] sm:$0xff]
    %v43 = vld [vmem:[%s1 + $0x20] sm:$0xff]
    %v44 = vld [vmem:[%s1 + $0x28] sm:$0xff]
    %v45 = vld [vmem:[%s1 + $0x30] sm:$0xff]
    %v46 = vld [vmem:[%s1 + $0x38] sm:$0xff]
    %v47 = vld [vmem:[%s1 + $0x40] sm:$0xff]
    %v48 = vld [vmem:[%s1 + $0x48] sm:$0xff]
    %v49 = vld [vmem:[%s1 + $0x50] sm:$0xff]
    %v50 = vld [vmem:[%s1 + $0x58] sm:$0xff]
    %v51 = vld [vmem:[%s1 + $0x60] sm:$0xff]
    %v52 = vld [vmem:[%s1 + $0x68] sm:$0xff]
    %v53 = vld [vmem:[%s1 + $0x70] sm:$0xff]
    %v54 = vld [vmem:[%s1 + $0x78] sm:$0xff]
    %v55 = vld [vmem:[%s2] sm:$0x1]
    %v57 = vlaneseq
    %v58 = vshrl.u32 %v57, 7
    %v59 = vsub.s32 0, %v58
    %v60 = vrot.slane %v55, %v59
    %vm64 = vcmask 1041409
    %v65 = vsel %vm64, %v38, %v37
    %67 = vmatprep.subr.mxu0 0.0
    %68 = vmatpush1.msra.mxu0 %v39
    %69 = vmatprep.subr.mxu0 0.0
    %70 = vmatpush1.msra.mxu0 %v40
    %71 = vmatprep.subr.mxu0 0.0
    %72 = vmatpush1.msra.mxu0 %v41
    %73 = vmatprep.subr.mxu0 0.0
    %74 = vmatpush1.msra.mxu0 %v42
    %75 = vmatprep.subr.mxu0 0.0
    %76 = vmatpush1.msra.mxu0 %v43
    %77 = vmatprep.subr.mxu0 0.0
    %78 = vmatpush1.msra.mxu0 %v44
    %79 = vmatprep.subr.mxu0 0.0
    %80 = vmatpush1.msra.mxu0 %v45
    %81 = vmatprep.subr.mxu0 0.0
    %82 = vmatpush1.msra.mxu0 %v46
    %83 = vmatprep.subr.mxu0 0.0
    %84 = vmatpush1.msra.mxu0 %v47
    %85 = vmatprep.subr.mxu0 0.0
    %86 = vmatpush1.msra.mxu0 %v48
    %87 = vmatprep.subr.mxu0 0.0
    %88 = vmatpush1.msra.mxu0 %v49
    %89 = vmatprep.subr.mxu0 0.0
    %90 = vmatpush1.msra.mxu0 %v50
    %91 = vmatprep.subr.mxu0 0.0
    %92 = vmatpush1.msra.mxu0 %v51
    %93 = vmatprep.subr.mxu0 0.0
    %94 = vmatpush1.msra.mxu0 %v52
    %95 = vmatprep.subr.mxu0 0.0
    %96 = vmatpush1.msra.mxu0 %v53
    %97 = vmatprep.subr.mxu0 0.0
    %98 = vmatpush1.msra.mxu0 %v54
    %99 = vmatprep.subr.mxu0 0.0
    %100 = vmatpush1.msra.mxu0 0.0
    %101 = vmatprep.subr.mxu0 0.0
    %102 = vmatpush1.msra.mxu0 0.0
    %103 = vmatprep.subr.mxu0 0.0
    %104 = vmatpush1.msra.mxu0 0.0
    %105 = vmatprep.subr.mxu0 0.0
    %106 = vmatpush1.msra.mxu0 0.0
    %107 = vmatprep.subr.mxu0 0.0
    %108 = vmatpush1.msra.mxu0 0.0
    %109 = vmatprep.subr.mxu0 0.0
    %110 = vmatpush1.msra.mxu0 0.0
    %111 = vmatprep.subr.mxu0 0.0
    %112 = vmatpush1.msra.mxu0 0.0
    %113 = vmatprep.subr.mxu0 0.0
    %114 = vmatpush1.msra.mxu0 0.0
    %115 = vmatprep.subr.mxu0 0.0
    %116 = vmatpush1.msra.mxu0 0.0
    %117 = vmatprep.subr.mxu0 0.0
    %118 = vmatpush1.msra.mxu0 0.0
    %119 = vmatprep.subr.mxu0 0.0
    %120 = vmatpush1.msra.mxu0 0.0
    %121 = vmatprep.subr.mxu0 0.0
    %122 = vmatpush1.msra.mxu0 0.0
    %123 = vmatprep.subr.mxu0 0.0
    %124 = vmatpush1.msra.mxu0 0.0
    %125 = vmatprep.subr.mxu0 0.0
    %126 = vmatpush1.msra.mxu0 0.0
    %127 = vmatprep.subr.mxu0 0.0
    %128 = vmatpush1.msra.mxu0 0.0
    %129 = vmatprep.subr.mxu0 0.0
    %130 = vmatpush1.msra.mxu0 0.0
    %131 = vmatprep.mubr.f32.mxu0 0.0
    %132 = vmatmul.mubr.f32.gmra.mrb[0].mxu0 %v65
    %v133 = vpop.f32.mrb[0].mxu0
    %v134 = vadd.f32 %v60, %v133
    %v135 = vpop.f32.mrb[0].mxu0
    %136 = vdwg.mxu0
    %v137 = vmul.f32 %v134, 0.5
    %v138 = vtanh.pop %v137
    %v139 = vadd.f32 %v138, 1.0
    %v140 = vmul.f32 %v139, 0.5
    %vm141 = vcmask 74752
    %142 = vst.msk [vmem:[#allocation2] sm:$0x3] %vm141, %v140
    // Predicated region
    $region14: #{cnn18_forward.39} parent=1 // pred_check
      _
    $region15: #{cnn18_forward.39} parent=1 // pred_check_branch
      %144 = sbr.rel (0) target = $region17
    $region16: #{cnn18_forward.39} parent=1 // pred_region
      %s146 = ssub.s32 32, 32
      %147 = vsyncadd [#allocation3], %s146
      %s149 = sshll.u32 [#allocation2], 4
      %s150 = int_to_ptr.vmem [resolvable:$true] %s149
      %152 = dma.vmem_to_hbm [thread:$0]  %s150, 32, %s3, [#allocation3]
    $region17: #{cnn18_forward.39} parent=1 // pred_fallthru
      _
    // Predicated region
    $region18: #{cnn18_forward.39} parent=1 // pred_check
      _
    $region19: #{cnn18_forward.39} parent=1 // pred_check_branch
      %154 = sbr.rel (0) target = $region21
    $region20: #{cnn18_forward.39} parent=1 // pred_region
      %155 = dma.done [#allocation3], 32
    $region21: #{cnn18_forward.39} parent=1 // pred_fallthru
      _
    %156 = vsyncpa [#allocation3], 1

// kernel: cnn18_forward.23
$region0: #{cnn18_forward.23}
  #allocation0 [shape = 'u32[]', space=smem, size = 0x4, offset = 0x4, fixed_abs, tag = 'smem constant byte address 0x4 - core index']
  #allocation1 [shape = 'u32[144,128]{1,0:T(1,128)}', space=vmem, size = 0x12000, scoped, tag = 'internal scratch']
  %s0 = inlined_call_operand.vmem [shape: bf16[272,64], index: 0, kind: input, shape index: {}]
  %s1 = inlined_call_operand.vmem [shape: bf16[9,64,64], index: 1, kind: input, shape index: {}]
  %s2 = inlined_call_operand.vmem [shape: f32[256,1], index: 2, kind: input, shape index: {}]
  %s3 = inlined_call_operand.vmem [shape: bf16[256,64], index: 3, kind: output, shape index: {0}]
  %s4 = inlined_call_operand.vmem [shape: f32[8,64], index: 4, kind: output, shape index: {1}]
  %5 = xla_tuple %s3, %s4
  %s6 = sld [smem:[#allocation0]]
  $region30: #{cnn18_forward.23} parent=0
    _
  %s8 = ssub.s32 1, %s6
  %s9 = scalar_select 0, %s8, %s6
  // Predicated region
  $region2: #{cnn18_forward.23} parent=0 // pred_check
    _
  $region3: #{cnn18_forward.23} parent=0 // pred_check_branch
    %11 = sbr.rel (0) target = $region5
  $region4: #{cnn18_forward.23} parent=0 // pred_region
    _
  $region5: #{cnn18_forward.23} parent=0 // pred_fallthru
    _
  // Predicated region
  $region6: #{cnn18_forward.23} parent=0 // pred_check
    _
  $region7: #{cnn18_forward.23} parent=0 // pred_check_branch
    %13 = sbr.rel (0) target = $region9
  $region8: #{cnn18_forward.23} parent=0 // pred_region
    _
  $region9: #{cnn18_forward.23} parent=0 // pred_fallthru
    _
  // Predicated region
  $region10: #{cnn18_forward.23} parent=0 // pred_check
    _
  $region11: #{cnn18_forward.23} parent=0 // pred_check_branch
    %15 = sbr.rel (0) target = $region13
  $region12: #{cnn18_forward.23} parent=0 // pred_region
    _
  $region13: #{cnn18_forward.23} parent=0 // pred_fallthru
    _
  %s17 = smul.u32 0, 256
  %s18 = sshra.s32 %s17, 3
  %s19 = sand.u32 %s17, 7
  %s20 = smul.addr %s18, 4
  %s21 = scalar_lea.vmem %s0, %s20
  %v22 = vld [vmem:[%s21] sm:$0xf]
  %v23 = vld [vmem:[%s21 + $0x4] sm:$0xf]
  %v24 = vld [vmem:[%s21 + $0x8] sm:$0xf]
  %v25 = vld [vmem:[%s21 + $0xc] sm:$0xf]
  %v26 = vld [vmem:[%s21 + $0x10] sm:$0xf]
  %v27 = vld [vmem:[%s21 + $0x14] sm:$0xf]
  %v28 = vld [vmem:[%s21 + $0x18] sm:$0xf]
  %v29 = vld [vmem:[%s21 + $0x1c] sm:$0xf]
  %v30 = vld [vmem:[%s21 + $0x20] sm:$0xf]
  %v31 = vld [vmem:[%s21 + $0x24] sm:$0xf]
  %v32 = vld [vmem:[%s21 + $0x28] sm:$0xf]
  %v33 = vld [vmem:[%s21 + $0x2c] sm:$0xf]
  %v34 = vld [vmem:[%s21 + $0x30] sm:$0xf]
  %v35 = vld [vmem:[%s21 + $0x34] sm:$0xf]
  %v36 = vld [vmem:[%s21 + $0x38] sm:$0xf]
  %v37 = vld [vmem:[%s21 + $0x3c] sm:$0xf]
  %v38 = vld [vmem:[%s21 + $0x40] sm:$0xf]
  %v39 = vld [vmem:[%s21 + $0x44] sm:$0xf]
  %v40 = vld [vmem:[%s21 + $0x48] sm:$0xf]
  %v41 = vld [vmem:[%s21 + $0x4c] sm:$0xf]
  %v42 = vld [vmem:[%s21 + $0x50] sm:$0xf]
  %v43 = vld [vmem:[%s21 + $0x54] sm:$0xf]
  %v44 = vld [vmem:[%s21 + $0x58] sm:$0xf]
  %v45 = vld [vmem:[%s21 + $0x5c] sm:$0xf]
  %v46 = vld [vmem:[%s21 + $0x60] sm:$0xf]
  %v47 = vld [vmem:[%s21 + $0x64] sm:$0xf]
  %v48 = vld [vmem:[%s21 + $0x68] sm:$0xf]
  %v49 = vld [vmem:[%s21 + $0x6c] sm:$0xf]
  %v50 = vld [vmem:[%s21 + $0x70] sm:$0xf]
  %v51 = vld [vmem:[%s21 + $0x74] sm:$0xf]
  %v52 = vld [vmem:[%s21 + $0x78] sm:$0xf]
  %v53 = vld [vmem:[%s21 + $0x7c] sm:$0xf]
  %v54 = vld [vmem:[%s21 + $0x80] sm:$0xf]
  %v55 = vld [vmem:[%s21 + $0x84] sm:$0xf]
  %v56 = vld [vmem:[%s1] sm:$0xf]
  %v57 = vld [vmem:[%s1 + $0x4] sm:$0xf]
  %v58 = vld [vmem:[%s1 + $0x8] sm:$0xf]
  %v59 = vld [vmem:[%s1 + $0xc] sm:$0xf]
  %v60 = vld [vmem:[%s1 + $0x10] sm:$0xf]
  %v61 = vld [vmem:[%s1 + $0x14] sm:$0xf]
  %v62 = vld [vmem:[%s1 + $0x18] sm:$0xf]
  %v63 = vld [vmem:[%s1 + $0x1c] sm:$0xf]
  %s64 = scalar_lea.vmem %s1, 32
  %v65 = vld [vmem:[%s64] sm:$0xf]
  %v66 = vld [vmem:[%s64 + $0x4] sm:$0xf]
  %v67 = vld [vmem:[%s64 + $0x8] sm:$0xf]
  %v68 = vld [vmem:[%s64 + $0xc] sm:$0xf]
  %v69 = vld [vmem:[%s64 + $0x10] sm:$0xf]
  %v70 = vld [vmem:[%s64 + $0x14] sm:$0xf]
  %v71 = vld [vmem:[%s64 + $0x18] sm:$0xf]
  %v72 = vld [vmem:[%s64 + $0x1c] sm:$0xf]
  %v106 = vunpack.c.l.b16 %v22
  %v107 = vunpack.c.l.b16 %v23
  %v108 = vunpack.c.l.b16 %v24
  %v109 = vunpack.c.l.b16 %v25
  %v110 = vunpack.c.l.b16 %v26
  %v111 = vunpack.c.l.b16 %v27
  %v112 = vunpack.c.l.b16 %v28
  %v113 = vunpack.c.l.b16 %v29
  %v114 = vunpack.c.l.b16 %v30
  %v115 = vunpack.c.l.b16 %v31
  %v116 = vunpack.c.l.b16 %v32
  %v117 = vunpack.c.l.b16 %v33
  %v118 = vunpack.c.l.b16 %v34
  %v119 = vunpack.c.l.b16 %v35
  %v120 = vunpack.c.l.b16 %v36
  %v121 = vunpack.c.l.b16 %v37
  %v122 = vunpack.c.l.b16 %v38
  %v123 = vunpack.c.l.b16 %v39
  %v124 = vunpack.c.l.b16 %v40
  %v125 = vunpack.c.l.b16 %v41
  %v126 = vunpack.c.l.b16 %v42
  %v127 = vunpack.c.l.b16 %v43
  %v128 = vunpack.c.l.b16 %v44
  %v129 = vunpack.c.l.b16 %v45
  %v130 = vunpack.c.l.b16 %v46
  %v131 = vunpack.c.l.b16 %v47
  %v132 = vunpack.c.l.b16 %v48
  %v133 = vunpack.c.l.b16 %v49
  %v134 = vunpack.c.l.b16 %v50
  %v135 = vunpack.c.l.b16 %v51
  %v136 = vunpack.c.l.b16 %v52
  %v137 = vunpack.c.l.b16 %v53
  %v138 = vunpack.c.l.b16 %v54
  %v139 = vpack.c.b16 %v107, %v106
  %v140 = vpack.c.b16 %v109, %v108
  %v141 = vpack.c.b16 %v111, %v110
  %v142 = vpack.c.b16 %v113, %v112
  %v143 = vpack.c.b16 %v115, %v114
  %v144 = vpack.c.b16 %v117, %v116
  %v145 = vpack.c.b16 %v119, %v118
  %v146 = vpack.c.b16 %v121, %v120
  %v147 = vpack.c.b16 %v123, %v122
  %v148 = vpack.c.b16 %v125, %v124
  %v149 = vpack.c.b16 %v127, %v126
  %v150 = vpack.c.b16 %v129, %v128
  %v151 = vpack.c.b16 %v131, %v130
  %v152 = vpack.c.b16 %v133, %v132
  %v153 = vpack.c.b16 %v135, %v134
  %v154 = vpack.c.b16 %v137, %v136
  %v155 = vpack.c.b16 %v138, %v138
  %vm156 = vsmask.f32 7424
  %v158 = vshrl.u32 %v139, 16
  %v160 = vshll.u32 %v139, 16
  %v162 = vrot.slane %v160, 1
  %v163 = vor.u32 %v158, %v162
  %v165 = vshll.u32 %v140, 16
  %v167 = vrot.slane %v165, 1
  %v168 = vsel %vm156, %v163, %v167
  %v169 = vshrl.u32 %v140, 16
  %v171 = vor.u32 %v169, %v167
  %v173 = vshll.u32 %v141, 16
  %v175 = vrot.slane %v173, 1
  %v176 = vsel %vm156, %v171, %v175
  %v177 = vshrl.u32 %v141, 16
  %v179 = vor.u32 %v177, %v175
  %v181 = vshll.u32 %v142, 16
  %v183 = vrot.slane %v181, 1
  %v184 = vsel %vm156, %v179, %v183
  %v185 = vshrl.u32 %v142, 16
  %v187 = vor.u32 %v185, %v183
  %v189 = vshll.u32 %v143, 16
  %v191 = vrot.slane %v189, 1
  %v192 = vsel %vm156, %v187, %v191
  %v193 = vshrl.u32 %v143, 16
  %v195 = vor.u32 %v193, %v191
  %v197 = vshll.u32 %v144, 16
  %v199 = vrot.slane %v197, 1
  %v200 = vsel %vm156, %v195, %v199
  %v201 = vshrl.u32 %v144, 16
  %v203 = vor.u32 %v201, %v199
  %v205 = vshll.u32 %v145, 16
  %v207 = vrot.slane %v205, 1
  %v208 = vsel %vm156, %v203, %v207
  %v209 = vshrl.u32 %v145, 16
  %v211 = vor.u32 %v209, %v207
  %v213 = vshll.u32 %v146, 16
  %v215 = vrot.slane %v213, 1
  %v216 = vsel %vm156, %v211, %v215
  %v217 = vshrl.u32 %v146, 16
  %v219 = vor.u32 %v217, %v215
  %v221 = vshll.u32 %v147, 16
  %v223 = vrot.slane %v221, 1
  %v224 = vsel %vm156, %v219, %v223
  %v225 = vshrl.u32 %v147, 16
  %v227 = vor.u32 %v225, %v223
  %v229 = vshll.u32 %v148, 16
  %v231 = vrot.slane %v229, 1
  %v232 = vsel %vm156, %v227, %v231
  %v233 = vshrl.u32 %v148, 16
  %v235 = vor.u32 %v233, %v231
  %v237 = vshll.u32 %v149, 16
  %v239 = vrot.slane %v237, 1
  %v240 = vsel %vm156, %v235, %v239
  %v241 = vshrl.u32 %v149, 16
  %v243 = vor.u32 %v241, %v239
  %v245 = vshll.u32 %v150, 16
  %v247 = vrot.slane %v245, 1
  %v248 = vsel %vm156, %v243, %v247
  %v249 = vshrl.u32 %v150, 16
  %v251 = vor.u32 %v249, %v247
  %v253 = vshll.u32 %v151, 16
  %v255 = vrot.slane %v253, 1
  %v256 = vsel %vm156, %v251, %v255
  %v257 = vshrl.u32 %v151, 16
  %v259 = vor.u32 %v257, %v255
  %v261 = vshll.u32 %v152, 16
  %v263 = vrot.slane %v261, 1
  %v264 = vsel %vm156, %v259, %v263
  %v265 = vshrl.u32 %v152, 16
  %v267 = vor.u32 %v265, %v263
  %v269 = vshll.u32 %v153, 16
  %v271 = vrot.slane %v269, 1
  %v272 = vsel %vm156, %v267, %v271
  %v273 = vshrl.u32 %v153, 16
  %v275 = vor.u32 %v273, %v271
  %v277 = vshll.u32 %v154, 16
  %v279 = vrot.slane %v277, 1
  %v280 = vsel %vm156, %v275, %v279
  %v281 = vshrl.u32 %v154, 16
  %v283 = vor.u32 %v281, %v279
  %v285 = vshll.u32 %v155, 16
  %v287 = vrot.slane %v285, 1
  %v288 = vsel %vm156, %v283, %v287
  %v297 = vunpack.c.l.b16 %v65
  %v298 = vunpack.c.l.b16 %v66
  %v299 = vunpack.c.l.b16 %v67
  %v300 = vunpack.c.l.b16 %v68
  %v301 = vunpack.c.l.b16 %v69
  %v302 = vunpack.c.l.b16 %v70
  %v303 = vunpack.c.l.b16 %v71
  %v304 = vunpack.c.l.b16 %v72
  %v305 = vpack.c.b16 %v298, %v297
  %v306 = vpack.c.b16 %v300, %v299
  %v307 = vpack.c.b16 %v302, %v301
  %v308 = vpack.c.b16 %v304, %v303
  %vm313 = vcmask 523264
  %v315 = vsel %vm313, %v168, 0
  %v318 = vsel %vm313, %v176, 0
  %v321 = vsel %vm313, %v184, 0
  %v324 = vsel %vm313, %v192, 0
  %v327 = vsel %vm313, %v200, 0
  %v330 = vsel %vm313, %v208, 0
  %v333 = vsel %vm313, %v216, 0
  %v336 = vsel %vm313, %v224, 0
  %v339 = vsel %vm313, %v232, 0
  %v342 = vsel %vm313, %v240, 0
  %v345 = vsel %vm313, %v248, 0
  %v348 = vsel %vm313, %v256, 0
  %v351 = vsel %vm313, %v264, 0
  %v354 = vsel %vm313, %v272, 0
  %v357 = vsel %vm313, %v280, 0
  %v360 = vsel %vm313, %v288, 0
  %362 = vmatprep.subr.bf16.mxu0 0
  %363 = vmatpush1.bf16.msra.mxu0 %v305
  %364 = vmatprep.subr.bf16.mxu0 0
  %365 = vmatpush1.bf16.msra.mxu0 %v306
  %366 = vmatprep.subr.bf16.mxu0 0
  %367 = vmatpush1.bf16.msra.mxu0 %v307
  %368 = vmatprep.subr.bf16.mxu0 0
  %369 = vmatpush1.bf16.msra.mxu0 %v308
  %370 = vmatprep.subr.bf16.mxu0 0
  %371 = vmatpush1.bf16.msra.mxu0 0
  %372 = vmatprep.subr.bf16.mxu0 0
  %373 = vmatpush1.bf16.msra.mxu0 0
  %374 = vmatprep.subr.bf16.mxu0 0
  %375 = vmatpush1.bf16.msra.mxu0 0
  %376 = vmatprep.subr.bf16.mxu0 0
  %377 = vmatpush1.bf16.msra.mxu0 0
  %378 = vmatprep.subr.bf16.mxu0 0
  %379 = vmatpush1.bf16.msra.mxu0 0
  %380 = vmatprep.subr.bf16.mxu0 0
  %381 = vmatpush1.bf16.msra.mxu0 0
  %382 = vmatprep.subr.bf16.mxu0 0
  %383 = vmatpush1.bf16.msra.mxu0 0
  %384 = vmatprep.subr.bf16.mxu0 0
  %385 = vmatpush1.bf16.msra.mxu0 0
  %386 = vmatprep.subr.bf16.mxu0 0
  %387 = vmatpush1.bf16.msra.mxu0 0
  %388 = vmatprep.subr.bf16.mxu0 0
  %389 = vmatpush1.bf16.msra.mxu0 0
  %390 = vmatprep.subr.bf16.mxu0 0
  %391 = vmatpush1.bf16.msra.mxu0 0
  %392 = vmatprep.subr.bf16.mxu0 0
  %393 = vmatpush1.bf16.msra.mxu0 0
  %394 = vmatprep.mubr.bf16.mxu0 0
  %395 = vmatmul.mubr.bf16.gmra.mrb[0].mxu0 %v315
  %v396 = vpop.f32.mrb[0].mxu0
  %v397 = vadd.f32 0.0, %v396
  %v398 = vpop.f32.mrb[0].mxu0
  %v399 = vpop.f32.mrb[0].mxu0
  %v400 = vadd.f32 0.0, %v399
  %v401 = vpop.f32.mrb[0].mxu0
  %402 = vmatprep.mubr.bf16.mxu0 0
  %403 = vmatmul.mubr.bf16.gmra.mrb[0].mxu0 %v318
  %v404 = vpop.f32.mrb[0].mxu0
  %v405 = vadd.f32 0.0, %v404
  %v406 = vpop.f32.mrb[0].mxu0
  %v407 = vpop.f32.mrb[0].mxu0
  %v408 = vadd.f32 0.0, %v407
  %v409 = vpop.f32.mrb[0].mxu0
  %410 = vmatprep.mubr.bf16.mxu0 0
  %411 = vmatmul.mubr.bf16.gmra.mrb[0].mxu0 %v321
  %v412 = vpop.f32.mrb[0].mxu0
  %v413 = vadd.f32 0.0, %v412
  %v414 = vpop.f32.mrb[0].mxu0
  %v415 = vpop.f32.mrb[0].mxu0
  %v416 = vadd.f32 0.0, %v415
  %v417 = vpop.f32.mrb[0].mxu0
  %418 = vmatprep.mubr.bf16.mxu0 0
  %419 = vmatmul.mubr.bf16.gmra.mrb[0].mxu0 %v324
  %v420 = vpop.f32.mrb[0].mxu0
  %v421 = vadd.f32 0.0, %v420
  %v422 = vpop.f32.mrb[0].mxu0
  %v423 = vpop.f32.mrb[0].mxu0
  %v424 = vadd.f32 0.0, %v423
  %v425 = vpop.f32.mrb[0].mxu0
  %426 = vmatprep.mubr.bf16.mxu0 0
  %427 = vmatmul.mubr.bf16.gmra.mrb[0].mxu0 %v327
  %v428 = vpop.f32.mrb[0].mxu0
  %v429 = vadd.f32 0.0, %v428
  %v430 = vpop.f32.mrb[0].mxu0
  %v431 = vpop.f32.mrb[0].mxu0
  %v432 = vadd.f32 0.0, %v431
  %v433 = vpop.f32.mrb[0].mxu0
  %434 = vmatprep.mubr.bf16.mxu0 0
  %435 = vmatmul.mubr.bf16.gmra.mrb[0].mxu0 %v330
  %v436 = vpop.f32.mrb[0].mxu0
  %v437 = vadd.f32 0.0, %v436
  %v438 = vpop.f32.mrb[0].mxu0
  %v439 = vpop.f32.mrb[0].mxu0
  %v440 = vadd.f32 0.0, %v439
  %v441 = vpop.f32.mrb[0].mxu0
  %442 = vmatprep.mubr.bf16.mxu0 0
  %443 = vmatmul.mubr.bf16.gmra.mrb[0].mxu0 %v333
  %v444 = vpop.f32.mrb[0].mxu0
  %v445 = vadd.f32 0.0, %v444
  %v446 = vpop.f32.mrb[0].mxu0
  %v447 = vpop.f32.mrb[0].mxu0
  %v448 = vadd.f32 0.0, %v447
  %v449 = vpop.f32.mrb[0].mxu0
  %450 = vmatprep.mubr.bf16.mxu0 0
  %451 = vmatmul.mubr.bf16.gmra.mrb[0].mxu0 %v336
  %v452 = vpop.f32.mrb[0].mxu0
  %v453 = vadd.f32 0.0, %v452
  %v454 = vpop.f32.mrb[0].mxu0
  %v455 = vpop.f32.mrb[0].mxu0
  %v456 = vadd.f32 0.0, %v455
  %v457 = vpop.f32.mrb[0].mxu0
  %458 = vmatprep.mubr.bf16.mxu0 0
  %459 = vmatmul.mubr.bf16.gmra.mrb[0].mxu0 %v339
  %v460 = vpop.f32.mrb[0].mxu0
  %v461 = vadd.f32 0.0, %v460
  %v462 = vpop.f32.mrb[0].mxu0
  %v463 = vpop.f32.mrb[0].mxu0
  %v464 = vadd.f32 0.0, %v463
  %v465 = vpop.f32.mrb[0].mxu0
  %466 = vmatprep.mubr.bf16.mxu0 0
  %467 = vmatmul.mubr.bf16.gmra.mrb[0].mxu0 %v342
  %v468 = vpop.f32.mrb[0].mxu0
  %v469 = vadd.f32 0.0, %v468
  %v470 = vpop.f32.mrb[0].mxu0
  %v471 = vpop.f32.mrb[0].mxu0
  %v472 = vadd.f32 0.0, %v471
  %v473 = vpop.f32.mrb[0].mxu0
  %474 = vmatprep.mubr.bf16.mxu0 0
  %475 = vmatmul.mubr.bf16.gmra.mrb[0].mxu0 %v345
  %v476 = vpop.f32.mrb[0].mxu0
  %v477 = vadd.f32 0.0, %v476
  %v478 = vpop.f32.mrb[0].mxu0
  %v479 = vpop.f32.mrb[0].mxu0
  %v480 = vadd.f32 0.0, %v479
  %v481 = vpop.f32.mrb[0].mxu0
  %482 = vmatprep.mubr.bf16.mxu0 0
  %483 = vmatmul.mubr.bf16.gmra.mrb[0].mxu0 %v348
  %v484 = vpop.f32.mrb[0].mxu0
  %v485 = vadd.f32 0.0, %v484
  %v486 = vpop.f32.mrb[0].mxu0
  %v487 = vpop.f32.mrb[0].mxu0
  %v488 = vadd.f32 0.0, %v487
  %v489 = vpop.f32.mrb[0].mxu0
  %490 = vmatprep.mubr.bf16.mxu0 0
  %491 = vmatmul.mubr.bf16.gmra.mrb[0].mxu0 %v351
  %v492 = vpop.f32.mrb[0].mxu0
  %v493 = vadd.f32 0.0, %v492
  %v494 = vpop.f32.mrb[0].mxu0
  %v495 = vpop.f32.mrb[0].mxu0
  %v496 = vadd.f32 0.0, %v495
  %v497 = vpop.f32.mrb[0].mxu0
  %498 = vmatprep.mubr.bf16.mxu0 0
  %499 = vmatmul.mubr.bf16.gmra.mrb[0].mxu0 %v354
  %v500 = vpop.f32.mrb[0].mxu0
  %v501 = vadd.f32 0.0, %v500
  %v502 = vpop.f32.mrb[0].mxu0
  %v503 = vpop.f32.mrb[0].mxu0
  %v504 = vadd.f32 0.0, %v503
  %v505 = vpop.f32.mrb[0].mxu0
  %506 = vmatprep.mubr.bf16.mxu0 0
  %507 = vmatmul.mubr.bf16.gmra.mrb[0].mxu0 %v357
  %v508 = vpop.f32.mrb[0].mxu0
  %v509 = vadd.f32 0.0, %v508
  %v510 = vpop.f32.mrb[0].mxu0
  %v511 = vpop.f32.mrb[0].mxu0
  %v512 = vadd.f32 0.0, %v511
  %v513 = vpop.f32.mrb[0].mxu0
  %514 = vmatprep.mubr.bf16.mxu0 0
  %515 = vmatmul.mubr.bf16.gmra.mrb[0].mxu0 %v360
  %v516 = vpop.f32.mrb[0].mxu0
  %v517 = vadd.f32 0.0, %v516
  %v518 = vpop.f32.mrb[0].mxu0
  %v519 = vpop.f32.mrb[0].mxu0
  %v520 = vadd.f32 0.0, %v519
  %v521 = vpop.f32.mrb[0].mxu0
  %522 = vdwg.mxu0
  %v531 = vunpack.c.l.b16 %v56
  %v532 = vunpack.c.l.b16 %v57
  %v533 = vunpack.c.l.b16 %v58
  %v534 = vunpack.c.l.b16 %v59
  %v535 = vunpack.c.l.b16 %v60
  %v536 = vunpack.c.l.b16 %v61
  %v537 = vunpack.c.l.b16 %v62
  %v538 = vunpack.c.l.b16 %v63
  %v539 = vpack.c.b16 %v532, %v531
  %v540 = vpack.c.b16 %v534, %v533
  %v541 = vpack.c.b16 %v536, %v535
  %v542 = vpack.c.b16 %v538, %v537
  %v547 = vsel %vm313, %v139, 0
  %v549 = vsel %vm313, %v140, 0
  %v551 = vsel %vm313, %v141, 0
  %v553 = vsel %vm313, %v142, 0
  %v555 = vsel %vm313, %v143, 0
  %v557 = vsel %vm313, %v144, 0
  %v559 = vsel %vm313, %v145, 0
  %v561 = vsel %vm313, %v146, 0
  %v563 = vsel %vm313, %v147, 0
  %v565 = vsel %vm313, %v148, 0
  %v567 = vsel %vm313, %v149, 0
  %v569 = vsel %vm313, %v150, 0
  %v571 = vsel %vm313, %v151, 0
  %v573 = vsel %vm313, %v152, 0
  %v575 = vsel %vm313, %v153, 0
  %v577 = vsel %vm313, %v154, 0
  %579 = vmatprep.subr.bf16.mxu0 0
  %580 = vmatpush1.bf16.msra.mxu0 %v539
  %581 = vmatprep.subr.bf16.mxu0 0
  %582 = vmatpush1.bf16.msra.mxu0 %v540
  %583 = vmatprep.subr.bf16.mxu0 0
  %584 = vmatpush1.bf16.msra.mxu0 %v541
  %585 = vmatprep.subr.bf16.mxu0 0
  %586 = vmatpush1.bf16.msra.mxu0 %v542
  %587 = vmatprep.subr.bf16.mxu0 0
  %588 = vmatpush1.bf16.msra.mxu0 0
  %589 = vmatprep.subr.bf16.mxu0 0
  %590 = vmatpush1.bf16.msra.mxu0 0
  %591 = vmatprep.subr.bf16.mxu0 0
  %592 = vmatpush1.bf16.msra.mxu0 0
  %593 = vmatprep.subr.bf16.mxu0 0
  %594 = vmatpush1.bf16.msra.mxu0 0
  %595 = vmatprep.subr.bf16.mxu0 0
  %596 = vmatpush1.bf16.msra.mxu0 0
  %597 = vmatprep.subr.bf16.mxu0 0
  %598 = vmatpush1.bf16.msra.mxu0 0
  %599 = vmatprep.subr.bf16.mxu0 0
  %600 = vmatpush1.bf16.msra.mxu0 0
  %601 = vmatprep.subr.bf16.mxu0 0
  %602 = vmatpush1.bf16.msra.mxu0 0
  %603 = vmatprep.subr.bf16.mxu0 0
  %604 = vmatpush1.bf16.msra.mxu0 0
  %605 = vmatprep.subr.bf16.mxu0 0
  %606 = vmatpush1.bf16.msra.mxu0 0
  %607 = vmatprep.subr.bf16.mxu0 0
  %608 = vmatpush1.bf16.msra.mxu0 0
  %609 = vmatprep.subr.bf16.mxu0 0
  %610 = vmatpush1.bf16.msra.mxu0 0
  %611 = vmatprep.mubr.bf16.mxu0 0
  %612 = vmatmul.mubr.bf16.gmra.mrb[0].mxu0 %v547
  %v613 = vpop.f32.mrb[0].mxu0
  %v614 = vadd.f32 %v397, %v613
  %v615 = vpop.f32.mrb[0].mxu0
  %v616 = vpop.f32.mrb[0].mxu0
  %v617 = vadd.f32 %v400, %v616
  %v618 = vpop.f32.mrb[0].mxu0
  %619 = vmatprep.mubr.bf16.mxu0 0
  %620 = vmatmul.mubr.bf16.gmra.mrb[0].mxu0 %v549
  %v621 = vpop.f32.mrb[0].mxu0
  %v622 = vadd.f32 %v405, %v621
  %v623 = vpop.f32.mrb[0].mxu0
  %v624 = vpop.f32.mrb[0].mxu0
  %v625 = vadd.f32 %v408, %v624
  %v626 = vpop.f32.mrb[0].mxu0
  %627 = vmatprep.mubr.bf16.mxu0 0
  %628 = vmatmul.mubr.bf16.gmra.mrb[0].mxu0 %v551
  %v629 = vpop.f32.mrb[0].mxu0
  %v630 = vadd.f32 %v413, %v629
  %v631 = vpop.f32.mrb[0].mxu0
  %v632 = vpop.f32.mrb[0].mxu0
  %v633 = vadd.f32 %v416, %v632
  %v634 = vpop.f32.mrb[0].mxu0
  %635 = vmatprep.mubr.bf16.mxu0 0
  %636 = vmatmul.mubr.bf16.gmra.mrb[0].mxu0 %v553
  %v637 = vpop.f32.mrb[0].mxu0
  %v638 = vadd.f32 %v421, %v637
  %v639 = vpop.f32.mrb[0].mxu0
  %v640 = vpop.f32.mrb[0].mxu0
  %v641 = vadd.f32 %v424, %v640
  %v642 = vpop.f32.mrb[0].mxu0
  %643 = vmatprep.mubr.bf16.mxu0 0
  %644 = vmatmul.mubr.bf16.gmra.mrb[0].mxu0 %v555
  %v645 = vpop.f32.mrb[0].mxu0
  %v646 = vadd.f32 %v429, %v645
  %v647 = vpop.f32.mrb[0].mxu0
  %v648 = vpop.f32.mrb[0].mxu0
  %v649 = vadd.f32 %v432, %v648
  %v650 = vpop.f32.mrb[0].mxu0
  %651 = vmatprep.mubr.bf16.mxu0 0
  %652 = vmatmul.mubr.bf16.gmra.mrb[0].mxu0 %v557
  %v653 = vpop.f32.mrb[0].mxu0
  %v654 = vadd.f32 %v437, %v653
  %v655 = vpop.f32.mrb[0].mxu0
  %v656 = vpop.f32.mrb[0].mxu0
  %v657 = vadd.f32 %v440, %v656
  %v658 = vpop.f32.mrb[0].mxu0
  %659 = vmatprep.mubr.bf16.mxu0 0
  %660 = vmatmul.mubr.bf16.gmra.mrb[0].mxu0 %v559
  %v661 = vpop.f32.mrb[0].mxu0
  %v662 = vadd.f32 %v445, %v661
  %v663 = vpop.f32.mrb[0].mxu0
  %v664 = vpop.f32.mrb[0].mxu0
  %v665 = vadd.f32 %v448, %v664
  %v666 = vpop.f32.mrb[0].mxu0
  %667 = vmatprep.mubr.bf16.mxu0 0
  %668 = vmatmul.mubr.bf16.gmra.mrb[0].mxu0 %v561
  %v669 = vpop.f32.mrb[0].mxu0
  %v670 = vadd.f32 %v453, %v669
  %v671 = vpop.f32.mrb[0].mxu0
  %v672 = vpop.f32.mrb[0].mxu0
  %v673 = vadd.f32 %v456, %v672
  %v674 = vpop.f32.mrb[0].mxu0
  %675 = vmatprep.mubr.bf16.mxu0 0
  %676 = vmatmul.mubr.bf16.gmra.mrb[0].mxu0 %v563
  %v677 = vpop.f32.mrb[0].mxu0
  %v678 = vadd.f32 %v461, %v677
  %v679 = vpop.f32.mrb[0].mxu0
  %v680 = vpop.f32.mrb[0].mxu0
  %v681 = vadd.f32 %v464, %v680
  %v682 = vpop.f32.mrb[0].mxu0
  %683 = vmatprep.mubr.bf16.mxu0 0
  %684 = vmatmul.mubr.bf16.gmra.mrb[0].mxu0 %v565
  %v685 = vpop.f32.mrb[0].mxu0
  %v686 = vadd.f32 %v469, %v685
  %v687 = vpop.f32.mrb[0].mxu0
  %v688 = vpop.f32.mrb[0].mxu0
  %v689 = vadd.f32 %v472, %v688
  %v690 = vpop.f32.mrb[0].mxu0
  %691 = vmatprep.mubr.bf16.mxu0 0
  %692 = vmatmul.mubr.bf16.gmra.mrb[0].mxu0 %v567
  %v693 = vpop.f32.mrb[0].mxu0
  %v694 = vadd.f32 %v477, %v693
  %v695 = vpop.f32.mrb[0].mxu0
  %v696 = vpop.f32.mrb[0].mxu0
  %v697 = vadd.f32 %v480, %v696
  %v698 = vpop.f32.mrb[0].mxu0
  %699 = vmatprep.mubr.bf16.mxu0 0
  %700 = vmatmul.mubr.bf16.gmra.mrb[0].mxu0 %v569
  %v701 = vpop.f32.mrb[0].mxu0
  %v702 = vadd.f32 %v485, %v701
  %v703 = vpop.f32.mrb[0].mxu0
  %v704 = vpop.f32.mrb[0].mxu0
  %v705 = vadd.f32 %v488, %v704
  %v706 = vpop.f32.mrb[0].mxu0
  %707 = vmatprep.mubr.bf16.mxu0 0
  %708 = vmatmul.mubr.bf16.gmra.mrb[0].mxu0 %v571
  %v709 = vpop.f32.mrb[0].mxu0
  %v710 = vadd.f32 %v493, %v709
  %v711 = vpop.f32.mrb[0].mxu0
  %v712 = vpop.f32.mrb[0].mxu0
  %v713 = vadd.f32 %v496, %v712
  %v714 = vpop.f32.mrb[0].mxu0
  %715 = vmatprep.mubr.bf16.mxu0 0
  %716 = vmatmul.mubr.bf16.gmra.mrb[0].mxu0 %v573
  %v717 = vpop.f32.mrb[0].mxu0
  %v718 = vadd.f32 %v501, %v717
  %v719 = vpop.f32.mrb[0].mxu0
  %v720 = vpop.f32.mrb[0].mxu0
  %v721 = vadd.f32 %v504, %v720
  %v722 = vpop.f32.mrb[0].mxu0
  %723 = vmatprep.mubr.bf16.mxu0 0
  %724 = vmatmul.mubr.bf16.gmra.mrb[0].mxu0 %v575
  %v725 = vpop.f32.mrb[0].mxu0
  %v726 = vadd.f32 %v509, %v725
  %v727 = vpop.f32.mrb[0].mxu0
  %v728 = vpop.f32.mrb[0].mxu0
  %v729 = vadd.f32 %v512, %v728
  %v730 = vpop.f32.mrb[0].mxu0
  %731 = vmatprep.mubr.bf16.mxu0 0
  %732 = vmatmul.mubr.bf16.gmra.mrb[0].mxu0 %v577
  %v733 = vpop.f32.mrb[0].mxu0
  %v734 = vadd.f32 %v517, %v733
  %v735 = vpop.f32.mrb[0].mxu0
  %v736 = vpop.f32.mrb[0].mxu0
  %v737 = vadd.f32 %v520, %v736
  %v738 = vpop.f32.mrb[0].mxu0
  %739 = vdwg.mxu0
  %s740 = scalar_lea.vmem %s1, 64
  %v741 = vld [vmem:[%s740] sm:$0xf]
  %v742 = vld [vmem:[%s740 + $0x4] sm:$0xf]
  %v743 = vld [vmem:[%s740 + $0x8] sm:$0xf]
  %v744 = vld [vmem:[%s740 + $0xc] sm:$0xf]
  %v745 = vld [vmem:[%s740 + $0x10] sm:$0xf]
  %v746 = vld [vmem:[%s740 + $0x14] sm:$0xf]
  %v747 = vld [vmem:[%s740 + $0x18] sm:$0xf]
  %v748 = vld [vmem:[%s740 + $0x1c] sm:$0xf]
  %vm749 = vcmask 1046528
  %v750 = vrot.slane %v139, 1
  %v751 = vrot.slane %v140, 1
  %v752 = vsel %vm749, %v750, %v751
  %v753 = vrot.slane %v141, 1
  %v754 = vsel %vm749, %v751, %v753
  %v755 = vrot.slane %v142, 1
  %v756 = vsel %vm749, %v753, %v755
  %v757 = vrot.slane %v143, 1
  %v758 = vsel %vm749, %v755, %v757
  %v759 = vrot.slane %v144, 1
  %v760 = vsel %vm749, %v757, %v759
  %v761 = vrot.slane %v145, 1
  %v762 = vsel %vm749, %v759, %v761
  %v763 = vrot.slane %v146, 1
  %v764 = vsel %vm749, %v761, %v763
  %v765 = vrot.slane %v147, 1
  %v766 = vsel %vm749, %v763, %v765
  %v767 = vrot.slane %v148, 1
  %v768 = vsel %vm749, %v765, %v767
  %v769 = vrot.slane %v149, 1
  %v770 = vsel %vm749, %v767, %v769
  %v771 = vrot.slane %v150, 1
  %v772 = vsel %vm749, %v769, %v771
  %v773 = vrot.slane %v151, 1
  %v774 = vsel %vm749, %v771, %v773
  %v775 = vrot.slane %v152, 1
  %v776 = vsel %vm749, %v773, %v775
  %v777 = vrot.slane %v153, 1
  %v778 = vsel %vm749, %v775, %v777
  %v779 = vrot.slane %v154, 1
  %v780 = vsel %vm749, %v777, %v779
  %v781 = vrot.slane %v155, 1
  %v782 = vsel %vm749, %v779, %v781
  %v791 = vunpack.c.l.b16 %v741
  %v792 = vunpack.c.l.b16 %v742
  %v793 = vunpack.c.l.b16 %v743
  %v794 = vunpack.c.l.b16 %v744
  %v795 = vunpack.c.l.b16 %v745
  %v796 = vunpack.c.l.b16 %v746
  %v797 = vunpack.c.l.b16 %v747
  %v798 = vunpack.c.l.b16 %v748
  %v799 = vpack.c.b16 %v792, %v791
  %v800 = vpack.c.b16 %v794, %v793
  %v801 = vpack.c.b16 %v796, %v795
  %v802 = vpack.c.b16 %v798, %v797
  %v808 = vsel %vm313, %v752, 0
  %v811 = vsel %vm313, %v754, 0
  %v814 = vsel %vm313, %v756, 0
  %v817 = vsel %vm313, %v758, 0
  %v820 = vsel %vm313, %v760, 0
  %v823 = vsel %vm313, %v762, 0
  %v826 = vsel %vm313, %v764, 0
  %v829 = vsel %vm313, %v766, 0
  %v832 = vsel %vm313, %v768, 0
  %v835 = vsel %vm313, %v770, 0
  %v838 = vsel %vm313, %v772, 0
  %v841 = vsel %vm313, %v774, 0
  %v844 = vsel %vm313, %v776, 0
  %v847 = vsel %vm313, %v778, 0
  %v850 = vsel %vm313, %v780, 0
  %v853 = vsel %vm313, %v782, 0
  %855 = vmatprep.subr.bf16.mxu0 0
  %856 = vmatpush1.bf16.msra.mxu0 %v799
  %857 = vmatprep.subr.bf16.mxu0 0
  %858 = vmatpush1.bf16.msra.mxu0 %v800
  %859 = vmatprep.subr.bf16.mxu0 0
  %860 = vmatpush1.bf16.msra.mxu0 %v801
  %861 = vmatprep.subr.bf16.mxu0 0
  %862 = vmatpush1.bf16.msra.mxu0 %v802
  %863 = vmatprep.subr.bf16.mxu0 0
  %864 = vmatpush1.bf16.msra.mxu0 0
  %865 = vmatprep.subr.bf16.mxu0 0
  %866 = vmatpush1.bf16.msra.mxu0 0
  %867 = vmatprep.subr.bf16.mxu0 0
  %868 = vmatpush1.bf16.msra.mxu0 0
  %869 = vmatprep.subr.bf16.mxu0 0
  %870 = vmatpush1.bf16.msra.mxu0 0
  %871 = vmatprep.subr.bf16.mxu0 0
  %872 = vmatpush1.bf16.msra.mxu0 0
  %873 = vmatprep.subr.bf16.mxu0 0
  %874 = vmatpush1.bf16.msra.mxu0 0
  %875 = vmatprep.subr.bf16.mxu0 0
  %876 = vmatpush1.bf16.msra.mxu0 0
  %877 = vmatprep.subr.bf16.mxu0 0
  %878 = vmatpush1.bf16.msra.mxu0 0
  %879 = vmatprep.subr.bf16.mxu0 0
  %880 = vmatpush1.bf16.msra.mxu0 0
  %881 = vmatprep.subr.bf16.mxu0 0
  %882 = vmatpush1.bf16.msra.mxu0 0
  %883 = vmatprep.subr.bf16.mxu0 0
  %884 = vmatpush1.bf16.msra.mxu0 0
  %885 = vmatprep.subr.bf16.mxu0 0
  %886 = vmatpush1.bf16.msra.mxu0 0
  %887 = vmatprep.mubr.bf16.mxu0 0
  %888 = vmatmul.mubr.bf16.gmra.mrb[0].mxu0 %v808
  %v889 = vpop.f32.mrb[0].mxu0
  %v890 = vadd.f32 0.0, %v889
  %v891 = vpop.f32.mrb[0].mxu0
  %v892 = vpop.f32.mrb[0].mxu0
  %v893 = vadd.f32 0.0, %v892
  %v894 = vpop.f32.mrb[0].mxu0
  %895 = vmatprep.mubr.bf16.mxu0 0
  %896 = vmatmul.mubr.bf16.gmra.mrb[0].mxu0 %v811
  %v897 = vpop.f32.mrb[0].mxu0
  %v898 = vadd.f32 0.0, %v897
  %v899 = vpop.f32.mrb[0].mxu0
  %v900 = vpop.f32.mrb[0].mxu0
  %v901 = vadd.f32 0.0, %v900
  %v902 = vpop.f32.mrb[0].mxu0
  %903 = vmatprep.mubr.bf16.mxu0 0
  %904 = vmatmul.mubr.bf16.gmra.mrb[0].mxu0 %v814
  %v905 = vpop.f32.mrb[0].mxu0
  %v906 = vadd.f32 0.0, %v905
  %v907 = vpop.f32.mrb[0].mxu0
  %v908 = vpop.f32.mrb[0].mxu0
  %v909 = vadd.f32 0.0, %v908
  %v910 = vpop.f32.mrb[0].mxu0
  %911 = vmatprep.mubr.bf16.mxu0 0
  %912 = vmatmul.mubr.bf16.gmra.mrb[0].mxu0 %v817
  %v913 = vpop.f32.mrb[0].mxu0
  %v914 = vadd.f32 0.0, %v913
  %v915 = vpop.f32.mrb[0].mxu0
  %v916 = vpop.f32.mrb[0].mxu0
  %v917 = vadd.f32 0.0, %v916
  %v918 = vpop.f32.mrb[0].mxu0
  %919 = vmatprep.mubr.bf16.mxu0 0
  %920 = vmatmul.mubr.bf16.gmra.mrb[0].mxu0 %v820
  %v921 = vpop.f32.mrb[0].mxu0
  %v922 = vadd.f32 0.0, %v921
  %v923 = vpop.f32.mrb[0].mxu0
  %v924 = vpop.f32.mrb[0].mxu0
  %v925 = vadd.f32 0.0, %v924
  %v926 = vpop.f32.mrb[0].mxu0
  %927 = vmatprep.mubr.bf16.mxu0 0
  %928 = vmatmul.mubr.bf16.gmra.mrb[0].mxu0 %v823
  %v929 = vpop.f32.mrb[0].mxu0
  %v930 = vadd.f32 0.0, %v929
  %v931 = vpop.f32.mrb[0].mxu0
  %v932 = vpop.f32.mrb[0].mxu0
  %v933 = vadd.f32 0.0, %v932
  %v934 = vpop.f32.mrb[0].mxu0
  %935 = vmatprep.mubr.bf16.mxu0 0
  %936 = vmatmul.mubr.bf16.gmra.mrb[0].mxu0 %v826
  %v937 = vpop.f32.mrb[0].mxu0
  %v938 = vadd.f32 0.0, %v937
  %v939 = vpop.f32.mrb[0].mxu0
  %v940 = vpop.f32.mrb[0].mxu0
  %v941 = vadd.f32 0.0, %v940
  %v942 = vpop.f32.mrb[0].mxu0
  %943 = vmatprep.mubr.bf16.mxu0 0
  %944 = vmatmul.mubr.bf16.gmra.mrb[0].mxu0 %v829
  %v945 = vpop.f32.mrb[0].mxu0
  %v946 = vadd.f32 0.0, %v945
  %v947 = vpop.f32.mrb[0].mxu0
  %v948 = vpop.f32.mrb[0].mxu0
  %v949 = vadd.f32 0.0, %v948
  %v950 = vpop.f32.mrb[0].mxu0
  %951 = vmatprep.mubr.bf16.mxu0 0
  %952 = vmatmul.mubr.bf16.gmra.mrb[0].mxu0 %v832
  %v953 = vpop.f32.mrb[0].mxu0
  %v954 = vadd.f32 0.0, %v953
  %v955 = vpop.f32.mrb[0].mxu0
  %v956 = vpop.f32.mrb[0].mxu0
  %v957 = vadd.f32 0.0, %v956
  %v958 = vpop.f32.mrb[0].mxu0
  %959 = vmatprep.mubr.bf16.mxu0 0
  %960 = vmatmul.mubr.bf16.gmra.mrb[0].mxu0 %v835
  %v961 = vpop.f32.mrb[0].mxu0
  %v962 = vadd.f32 0.0, %v961
  %v963 = vpop.f32.mrb[0].mxu0
  %v964 = vpop.f32.mrb[0].mxu0
  %v965 = vadd.f32 0.0, %v964
  %v966 = vpop.f32.mrb[0].mxu0
  %967 = vmatprep.mubr.bf16.mxu0 0
  %968 = vmatmul.mubr.bf16.gmra.mrb[0].mxu0 %v838
  %v969 = vpop.f32.mrb[0].mxu0
  %v970 = vadd.f32 0.0, %v969
  %v971 = vpop.f32.mrb[0].mxu0
  %v972 = vpop.f32.mrb[0].mxu0
  %v973 = vadd.f32 0.0, %v972
  %v974 = vpop.f32.mrb[0].mxu0
  %975 = vmatprep.mubr.bf16.mxu0 0
  %976 = vmatmul.mubr.bf16.gmra.mrb[0].mxu0 %v841
  %v977 = vpop.f32.mrb[0].mxu0
  %v978 = vadd.f32 0.0, %v977
  %v979 = vpop.f32.mrb[0].mxu0
  %v980 = vpop.f32.mrb[0].mxu0
  %v981 = vadd.f32 0.0, %v980
  %v982 = vpop.f32.mrb[0].mxu0
  %983 = vmatprep.mubr.bf16.mxu0 0
  %984 = vmatmul.mubr.bf16.gmra.mrb[0].mxu0 %v844
  %v985 = vpop.f32.mrb[0].mxu0
  %v986 = vadd.f32 0.0, %v985
  %v987 = vpop.f32.mrb[0].mxu0
  %v988 = vpop.f32.mrb[0].mxu0
  %v989 = vadd.f32 0.0, %v988
  %v990 = vpop.f32.mrb[0].mxu0
  %991 = vmatprep.mubr.bf16.mxu0 0
  %992 = vmatmul.mubr.bf16.gmra.mrb[0].mxu0 %v847
  %v993 = vpop.f32.mrb[0].mxu0
  %v994 = vadd.f32 0.0, %v993
  %v995 = vpop.f32.mrb[0].mxu0
  %v996 = vpop.f32.mrb[0].mxu0
  %v997 = vadd.f32 0.0, %v996
  %v998 = vpop.f32.mrb[0].mxu0
  %999 = vmatprep.mubr.bf16.mxu0 0
  %1000 = vmatmul.mubr.bf16.gmra.mrb[0].mxu0 %v850
  %v1001 = vpop.f32.mrb[0].mxu0
  %v1002 = vadd.f32 0.0, %v1001
  %v1003 = vpop.f32.mrb[0].mxu0
  %v1004 = vpop.f32.mrb[0].mxu0
  %v1005 = vadd.f32 0.0, %v1004
  %v1006 = vpop.f32.mrb[0].mxu0
  %1007 = vmatprep.mubr.bf16.mxu0 0
  %1008 = vmatmul.mubr.bf16.gmra.mrb[0].mxu0 %v853
  %v1009 = vpop.f32.mrb[0].mxu0
  %v1010 = vadd.f32 0.0, %v1009
  %v1011 = vpop.f32.mrb[0].mxu0
  %v1012 = vpop.f32.mrb[0].mxu0
  %v1013 = vadd.f32 0.0, %v1012
  %v1014 = vpop.f32.mrb[0].mxu0
  %1015 = vdwg.mxu0
  %v1016 = vadd.f32 %v614, %v890
  %v1017 = vadd.f32 %v617, %v893
  %v1018 = vadd.f32 %v622, %v898
  %v1019 = vadd.f32 %v625, %v901
  %v1020 = vadd.f32 %v630, %v906
  %v1021 = vadd.f32 %v633, %v909
  %v1022 = vadd.f32 %v638, %v914
  %v1023 = vadd.f32 %v641, %v917
  %v1024 = vadd.f32 %v646, %v922
  %v1025 = vadd.f32 %v649, %v925
  %v1026 = vadd.f32 %v654, %v930
  %v1027 = vadd.f32 %v657, %v933
  %v1028 = vadd.f32 %v662, %v938
  %v1029 = vadd.f32 %v665, %v941
  %v1030 = vadd.f32 %v670, %v946
  %v1031 = vadd.f32 %v673, %v949
  %v1032 = vadd.f32 %v678, %v954
  %v1033 = vadd.f32 %v681, %v957
  %v1034 = vadd.f32 %v686, %v962
  %v1035 = vadd.f32 %v689, %v965
  %v1036 = vadd.f32 %v694, %v970
  %v1037 = vadd.f32 %v697, %v973
  %v1038 = vadd.f32 %v702, %v978
  %v1039 = vadd.f32 %v705, %v981
  %v1040 = vadd.f32 %v710, %v986
  %v1041 = vadd.f32 %v713, %v989
  %v1042 = vadd.f32 %v718, %v994
  %v1043 = vadd.f32 %v721, %v997
  %v1044 = vadd.f32 %v726, %v1002
  %v1045 = vadd.f32 %v729, %v1005
  %v1046 = vadd.f32 %v734, %v1010
  %v1047 = vadd.f32 %v737, %v1013
  %s1048 = scalar_lea.vmem %s1, 96
  %v1049 = vld [vmem:[%s1048] sm:$0xf]
  %v1050 = vld [vmem:[%s1048 + $0x4] sm:$0xf]
  %v1051 = vld [vmem:[%s1048 + $0x8] sm:$0xf]
  %v1052 = vld [vmem:[%s1048 + $0xc] sm:$0xf]
  %v1053 = vld [vmem:[%s1048 + $0x10] sm:$0xf]
  %v1054 = vld [vmem:[%s1048 + $0x14] sm:$0xf]
  %v1055 = vld [vmem:[%s1048 + $0x18] sm:$0xf]
  %v1056 = vld [vmem:[%s1048 + $0x1c] sm:$0xf]
  %vm1057 = vcmask 1044480
  %v1058 = vrot.slane %v139, 3
  %v1059 = vrot.slane %v140, 3
  %v1060 = vsel %vm1057, %v1058, %v1059
  %v1061 = vrot.slane %v141, 3
  %v1062 = vsel %vm1057, %v1059, %v1061
  %v1063 = vrot.slane %v142, 3
  %v1064 = vsel %vm1057, %v1061, %v1063
  %v1065 = vrot.slane %v143, 3
  %v1066 = vsel %vm1057, %v1063, %v1065
  %v1067 = vrot.slane %v144, 3
  %v1068 = vsel %vm1057, %v1065, %v1067
  %v1069 = vrot.slane %v145, 3
  %v1070 = vsel %vm1057, %v1067, %v1069
  %v1071 = vrot.slane %v146, 3
  %v1072 = vsel %vm1057, %v1069, %v1071
  %v1073 = vrot.slane %v147, 3
  %v1074 = vsel %vm1057, %v1071, %v1073
  %v1075 = vrot.slane %v148, 3
  %v1076 = vsel %vm1057, %v1073, %v1075
  %v1077 = vrot.slane %v149, 3
  %v1078 = vsel %vm1057, %v1075, %v1077
  %v1079 = vrot.slane %v150, 3
  %v1080 = vsel %vm1057, %v1077, %v1079
  %v1081 = vrot.slane %v151, 3
  %v1082 = vsel %vm1057, %v1079, %v1081
  %v1083 = vrot.slane %v152, 3
  %v1084 = vsel %vm1057, %v1081, %v1083
  %v1085 = vrot.slane %v153, 3
  %v1086 = vsel %vm1057, %v1083, %v1085
  %v1087 = vrot.slane %v154, 3
  %v1088 = vsel %vm1057, %v1085, %v1087
  %v1089 = vrot.slane %v155, 3
  %v1090 = vsel %vm1057, %v1087, %v1089
  %v1099 = vunpack.c.l.b16 %v1049
  %v1100 = vunpack.c.l.b16 %v1050
  %v1101 = vunpack.c.l.b16 %v1051
  %v1102 = vunpack.c.l.b16 %v1052
  %v1103 = vunpack.c.l.b16 %v1053
  %v1104 = vunpack.c.l.b16 %v1054
  %v1105 = vunpack.c.l.b16 %v1055
  %v1106 = vunpack.c.l.b16 %v1056
  %v1107 = vpack.c.b16 %v1100, %v1099
  %v1108 = vpack.c.b16 %v1102, %v1101
  %v1109 = vpack.c.b16 %v1104, %v1103
  %v1110 = vpack.c.b16 %v1106, %v1105
  %v1116 = vsel %vm313, %v1060, 0
  %v1119 = vsel %vm313, %v1062, 0
  %v1122 = vsel %vm313, %v1064, 0
  %v1125 = vsel %vm313, %v1066, 0
  %v1128 = vsel %vm313, %v1068, 0
  %v1131 = vsel %vm313, %v1070, 0
  %v1134 = vsel %vm313, %v1072, 0
  %v1137 = vsel %vm313, %v1074, 0
  %v1140 = vsel %vm313, %v1076, 0
  %v1143 = vsel %vm313, %v1078, 0
  %v1146 = vsel %vm313, %v1080, 0
  %v1149 = vsel %vm313, %v1082, 0
  %v1152 = vsel %vm313, %v1084, 0
  %v1155 = vsel %vm313, %v1086, 0
  %v1158 = vsel %vm313, %v1088, 0
  %v1161 = vsel %vm313, %v1090, 0
  %1163 = vmatprep.subr.bf16.mxu0 0
  %1164 = vmatpush1.bf16.msra.mxu0 %v1107
  %1165 = vmatprep.subr.bf16.mxu0 0
  %1166 = vmatpush1.bf16.msra.mxu0 %v1108
  %1167 = vmatprep.subr.bf16.mxu0 0
  %1168 = vmatpush1.bf16.msra.mxu0 %v1109
  %1169 = vmatprep.subr.bf16.mxu0 0
  %1170 = vmatpush1.bf16.msra.mxu0 %v1110
  %1171 = vmatprep.subr.bf16.mxu0 0
  %1172 = vmatpush1.bf16.msra.mxu0 0
  %1173 = vmatprep.subr.bf16.mxu0 0
  %1174 = vmatpush1.bf16.msra.mxu0 0
  %1175 = vmatprep.subr.bf16.mxu0 0
  %1176 = vmatpush1.bf16.msra.mxu0 0
  %1177 = vmatprep.subr.bf16.mxu0 0
  %1178 = vmatpush1.bf16.msra.mxu0 0
  %1179 = vmatprep.subr.bf16.mxu0 0
  %1180 = vmatpush1.bf16.msra.mxu0 0
  %1181 = vmatprep.subr.bf16.mxu0 0
  %1182 = vmatpush1.bf16.msra.mxu0 0
  %1183 = vmatprep.subr.bf16.mxu0 0
  %1184 = vmatpush1.bf16.msra.mxu0 0
  %1185 = vmatprep.subr.bf16.mxu0 0
  %1186 = vmatpush1.bf16.msra.mxu0 0
  %1187 = vmatprep.subr.bf16.mxu0 0
  %1188 = vmatpush1.bf16.msra.mxu0 0
  %1189 = vmatprep.subr.bf16.mxu0 0
  %1190 = vmatpush1.bf16.msra.mxu0 0
  %1191 = vmatprep.subr.bf16.mxu0 0
  %1192 = vmatpush1.bf16.msra.mxu0 0
  %1193 = vmatprep.subr.bf16.mxu0 0
  %1194 = vmatpush1.bf16.msra.mxu0 0
  %1195 = vmatprep.mubr.bf16.mxu0 0
  %1196 = vmatmul.mubr.bf16.gmra.mrb[0].mxu0 %v1116
  %v1197 = vpop.f32.mrb[0].mxu0
  %v1198 = vadd.f32 0.0, %v1197
  %v1199 = vpop.f32.mrb[0].mxu0
  %v1200 = vpop.f32.mrb[0].mxu0
  %v1201 = vadd.f32 0.0, %v1200
  %v1202 = vpop.f32.mrb[0].mxu0
  %1203 = vmatprep.mubr.bf16.mxu0 0
  %1204 = vmatmul.mubr.bf16.gmra.mrb[0].mxu0 %v1119
  %v1205 = vpop.f32.mrb[0].mxu0
  %v1206 = vadd.f32 0.0, %v1205
  %v1207 = vpop.f32.mrb[0].mxu0
  %v1208 = vpop.f32.mrb[0].mxu0
  %v1209 = vadd.f32 0.0, %v1208
  %v1210 = vpop.f32.mrb[0].mxu0
  %1211 = vmatprep.mubr.bf16.mxu0 0
  %1212 = vmatmul.mubr.bf16.gmra.mrb[0].mxu0 %v1122
  %v1213 = vpop.f32.mrb[0].mxu0
  %v1214 = vadd.f32 0.0, %v1213
  %v1215 = vpop.f32.mrb[0].mxu0
  %v1216 = vpop.f32.mrb[0].mxu0
  %v1217 = vadd.f32 0.0, %v1216
  %v1218 = vpop.f32.mrb[0].mxu0
  %1219 = vmatprep.mubr.bf16.mxu0 0
  %1220 = vmatmul.mubr.bf16.gmra.mrb[0].mxu0 %v1125
  %v1221 = vpop.f32.mrb[0].mxu0
  %v1222 = vadd.f32 0.0, %v1221
  %v1223 = vpop.f32.mrb[0].mxu0
  %v1224 = vpop.f32.mrb[0].mxu0
  %v1225 = vadd.f32 0.0, %v1224
  %v1226 = vpop.f32.mrb[0].mxu0
  %1227 = vmatprep.mubr.bf16.mxu0 0
  %1228 = vmatmul.mubr.bf16.gmra.mrb[0].mxu0 %v1128
  %v1229 = vpop.f32.mrb[0].mxu0
  %v1230 = vadd.f32 0.0, %v1229
  %v1231 = vpop.f32.mrb[0].mxu0
  %v1232 = vpop.f32.mrb[0].mxu0
  %v1233 = vadd.f32 0.0, %v1232
  %v1234 = vpop.f32.mrb[0].mxu0
  %1235 = vmatprep.mubr.bf16.mxu0 0
  %1236 = vmatmul.mubr.bf16.gmra.mrb[0].mxu0 %v1131
  %v1237 = vpop.f32.mrb[0].mxu0
  %v1238 = vadd.f32 0.0, %v1237
  %v1239 = vpop.f32.mrb[0].mxu0
  %v1240 = vpop.f32.mrb[0].mxu0
  %v1241 = vadd.f32 0.0, %v1240
  %v1242 = vpop.f32.mrb[0].mxu0
  %1243 = vmatprep.mubr.bf16.mxu0 0
  %1244 = vmatmul.mubr.bf16.gmra.mrb[0].mxu0 %v1134
  %v1245 = vpop.f32.mrb[0].mxu0
  %v1246 = vadd.f32 0.0, %v1245
  %v1247 = vpop.f32.mrb[0].mxu0
  %v1248 = vpop.f32.mrb[0].mxu0
  %v1249 = vadd.f32 0.0, %v1248
  %v1250 = vpop.f32.mrb[0].mxu0
  %1251 = vmatprep.mubr.bf16.mxu0 0
  %1252 = vmatmul.mubr.bf16.gmra.mrb[0].mxu0 %v1137
  %v1253 = vpop.f32.mrb[0].mxu0
  %v1254 = vadd.f32 0.0, %v1253
  %v1255 = vpop.f32.mrb[0].mxu0
  %v1256 = vpop.f32.mrb[0].mxu0
  %v1257 = vadd.f32 0.0, %v1256
  %v1258 = vpop.f32.mrb[0].mxu0
  %1259 = vmatprep.mubr.bf16.mxu0 0
  %1260 = vmatmul.mubr.bf16.gmra.mrb[0].mxu0 %v1140
  %v1261 = vpop.f32.mrb[0].mxu0
  %v1262 = vadd.f32 0.0, %v1261
  %v1263 = vpop.f32.mrb[0].mxu0
  %v1264 = vpop.f32.mrb[0].mxu0
  %v1265 = vadd.f32 0.0, %v1264
  %v1266 = vpop.f32.mrb[0].mxu0
  %1267 = vmatprep.mubr.bf16.mxu0 0
  %1268 = vmatmul.mubr.bf16.gmra.mrb[0].mxu0 %v1143
  %v1269 = vpop.f32.mrb[0].mxu0
  %v1270 = vadd.f32 0.0, %v1269
  %v1271 = vpop.f32.mrb[0].mxu0
  %v1272 = vpop.f32.mrb[0].mxu0
  %v1273 = vadd.f32 0.0, %v1272
  %v1274 = vpop.f32.mrb[0].mxu0
  %1275 = vmatprep.mubr.bf16.mxu0 0
  %1276 = vmatmul.mubr.bf16.gmra.mrb[0].mxu0 %v1146
  %v1277 = vpop.f32.mrb[0].mxu0
  %v1278 = vadd.f32 0.0, %v1277
  %v1279 = vpop.f32.mrb[0].mxu0
  %v1280 = vpop.f32.mrb[0].mxu0
  %v1281 = vadd.f32 0.0, %v1280
  %v1282 = vpop.f32.mrb[0].mxu0
  %1283 = vmatprep.mubr.bf16.mxu0 0
  %1284 = vmatmul.mubr.bf16.gmra.mrb[0].mxu0 %v1149
  %v1285 = vpop.f32.mrb[0].mxu0
  %v1286 = vadd.f32 0.0, %v1285
  %v1287 = vpop.f32.mrb[0].mxu0
  %v1288 = vpop.f32.mrb[0].mxu0
  %v1289 = vadd.f32 0.0, %v1288
  %v1290 = vpop.f32.mrb[0].mxu0
  %1291 = vmatprep.mubr.bf16.mxu0 0
  %1292 = vmatmul.mubr.bf16.gmra.mrb[0].mxu0 %v1152
  %v1293 = vpop.f32.mrb[0].mxu0
  %v1294 = vadd.f32 0.0, %v1293
  %v1295 = vpop.f32.mrb[0].mxu0
  %v1296 = vpop.f32.mrb[0].mxu0
  %v1297 = vadd.f32 0.0, %v1296
  %v1298 = vpop.f32.mrb[0].mxu0
  %1299 = vmatprep.mubr.bf16.mxu0 0
  %1300 = vmatmul.mubr.bf16.gmra.mrb[0].mxu0 %v1155
  %v1301 = vpop.f32.mrb[0].mxu0
  %v1302 = vadd.f32 0.0, %v1301
  %v1303 = vpop.f32.mrb[0].mxu0
  %v1304 = vpop.f32.mrb[0].mxu0
  %v1305 = vadd.f32 0.0, %v1304
  %v1306 = vpop.f32.mrb[0].mxu0
  %1307 = vmatprep.mubr.bf16.mxu0 0
  %1308 = vmatmul.mubr.bf16.gmra.mrb[0].mxu0 %v1158
  %v1309 = vpop.f32.mrb[0].mxu0
  %v1310 = vadd.f32 0.0, %v1309
  %v1311 = vpop.f32.mrb[0].mxu0
  %v1312 = vpop.f32.mrb[0].mxu0
  %v1313 = vadd.f32 0.0, %v1312
  %v1314 = vpop.f32.mrb[0].mxu0
  %1315 = vmatprep.mubr.bf16.mxu0 0
  %1316 = vmatmul.mubr.bf16.gmra.mrb[0].mxu0 %v1161
  %v1317 = vpop.f32.mrb[0].mxu0
  %v1318 = vadd.f32 0.0, %v1317
  %v1319 = vpop.f32.mrb[0].mxu0
  %v1320 = vpop.f32.mrb[0].mxu0
  %v1321 = vadd.f32 0.0, %v1320
  %v1322 = vpop.f32.mrb[0].mxu0
  %1323 = vdwg.mxu0
  %v1324 = vadd.f32 %v1016, %v1198
  %v1325 = vadd.f32 %v1017, %v1201
  %v1326 = vadd.f32 %v1018, %v1206
  %v1327 = vadd.f32 %v1019, %v1209
  %v1328 = vadd.f32 %v1020, %v1214
  %v1329 = vadd.f32 %v1021, %v1217
  %v1330 = vadd.f32 %v1022, %v1222
  %v1331 = vadd.f32 %v1023, %v1225
  %v1332 = vadd.f32 %v1024, %v1230
  %v1333 = vadd.f32 %v1025, %v1233
  %v1334 = vadd.f32 %v1026, %v1238
  %v1335 = vadd.f32 %v1027, %v1241
  %v1336 = vadd.f32 %v1028, %v1246
  %v1337 = vadd.f32 %v1029, %v1249
  %v1338 = vadd.f32 %v1030, %v1254
  %v1339 = vadd.f32 %v1031, %v1257
  %v1340 = vadd.f32 %v1032, %v1262
  %v1341 = vadd.f32 %v1033, %v1265
  %v1342 = vadd.f32 %v1034, %v1270
  %v1343 = vadd.f32 %v1035, %v1273
  %v1344 = vadd.f32 %v1036, %v1278
  %v1345 = vadd.f32 %v1037, %v1281
  %v1346 = vadd.f32 %v1038, %v1286
  %v1347 = vadd.f32 %v1039, %v1289
  %v1348 = vadd.f32 %v1040, %v1294
  %v1349 = vadd.f32 %v1041, %v1297
  %v1350 = vadd.f32 %v1042, %v1302
  %v1351 = vadd.f32 %v1043, %v1305
  %v1352 = vadd.f32 %v1044, %v1310
  %v1353 = vadd.f32 %v1045, %v1313
  %v1354 = vadd.f32 %v1046, %v1318
  %v1355 = vadd.f32 %v1047, %v1321
  %s1356 = scalar_lea.vmem %s1, 128
  %v1357 = vld [vmem:[%s1356] sm:$0xf]
  %v1358 = vld [vmem:[%s1356 + $0x4] sm:$0xf]
  %v1359 = vld [vmem:[%s1356 + $0x8] sm:$0xf]
  %v1360 = vld [vmem:[%s1356 + $0xc] sm:$0xf]
  %v1361 = vld [vmem:[%s1356 + $0x10] sm:$0xf]
  %v1362 = vld [vmem:[%s1356 + $0x14] sm:$0xf]
  %v1363 = vld [vmem:[%s1356 + $0x18] sm:$0xf]
  %v1364 = vld [vmem:[%s1356 + $0x1c] sm:$0xf]
  %vm1365 = vsmask.f32 4352
  %v1366 = vrot.slane %v158, 3
  %v1367 = vrot.slane %v160, 4
  %v1368 = vor.u32 %v1366, %v1367
  %v1369 = vrot.slane %v169, 3
  %v1370 = vrot.slane %v165, 4
  %v1371 = vor.u32 %v1369, %v1370
  %v1372 = vsel %vm1365, %v1368, %v1371
  %v1373 = vrot.slane %v177, 3
  %v1374 = vrot.slane %v173, 4
  %v1375 = vor.u32 %v1373, %v1374
  %v1376 = vsel %vm1365, %v1371, %v1375
  %v1377 = vrot.slane %v185, 3
  %v1378 = vrot.slane %v181, 4
  %v1379 = vor.u32 %v1377, %v1378
  %v1380 = vsel %vm1365, %v1375, %v1379
  %v1381 = vrot.slane %v193, 3
  %v1382 = vrot.slane %v189, 4
  %v1383 = vor.u32 %v1381, %v1382
  %v1384 = vsel %vm1365, %v1379, %v1383
  %v1385 = vrot.slane %v201, 3
  %v1386 = vrot.slane %v197, 4
  %v1387 = vor.u32 %v1385, %v1386
  %v1388 = vsel %vm1365, %v1383, %v1387
  %v1389 = vrot.slane %v209, 3
  %v1390 = vrot.slane %v205, 4
  %v1391 = vor.u32 %v1389, %v1390
  %v1392 = vsel %vm1365, %v1387, %v1391
  %v1393 = vrot.slane %v217, 3
  %v1394 = vrot.slane %v213, 4
  %v1395 = vor.u32 %v1393, %v1394
  %v1396 = vsel %vm1365, %v1391, %v1395
  %v1397 = vrot.slane %v225, 3
  %v1398 = vrot.slane %v221, 4
  %v1399 = vor.u32 %v1397, %v1398
  %v1400 = vsel %vm1365, %v1395, %v1399
  %v1401 = vrot.slane %v233, 3
  %v1402 = vrot.slane %v229, 4
  %v1403 = vor.u32 %v1401, %v1402
  %v1404 = vsel %vm1365, %v1399, %v1403
  %v1405 = vrot.slane %v241, 3
  %v1406 = vrot.slane %v237, 4
  %v1407 = vor.u32 %v1405, %v1406
  %v1408 = vsel %vm1365, %v1403, %v1407
  %v1409 = vrot.slane %v249, 3
  %v1410 = vrot.slane %v245, 4
  %v1411 = vor.u32 %v1409, %v1410
  %v1412 = vsel %vm1365, %v1407, %v1411
  %v1413 = vrot.slane %v257, 3
  %v1414 = vrot.slane %v253, 4
  %v1415 = vor.u32 %v1413, %v1414
  %v1416 = vsel %vm1365, %v1411, %v1415
  %v1417 = vrot.slane %v265, 3
  %v1418 = vrot.slane %v261, 4
  %v1419 = vor.u32 %v1417, %v1418
  %v1420 = vsel %vm1365, %v1415, %v1419
  %v1421 = vrot.slane %v273, 3
  %v1422 = vrot.slane %v269, 4
  %v1423 = vor.u32 %v1421, %v1422
  %v1424 = vsel %vm1365, %v1419, %v1423
  %v1425 = vrot.slane %v281, 3
  %v1426 = vrot.slane %v277, 4
  %v1427 = vor.u32 %v1425, %v1426
  %v1428 = vsel %vm1365, %v1423, %v1427
  %v1429 = vshrl.u32 %v155, 16
  %v1431 = vrot.slane %v1429, 3
  %v1432 = vrot.slane %v285, 4
  %v1433 = vor.u32 %v1431, %v1432
  %v1434 = vsel %vm1365, %v1427, %v1433
  %v1443 = vunpack.c.l.b16 %v1357
  %v1444 = vunpack.c.l.b16 %v1358
  %v1445 = vunpack.c.l.b16 %v1359
  %v1446 = vunpack.c.l.b16 %v1360
  %v1447 = vunpack.c.l.b16 %v1361
  %v1448 = vunpack.c.l.b16 %v1362
  %v1449 = vunpack.c.l.b16 %v1363
  %v1450 = vunpack.c.l.b16 %v1364
  %v1451 = vpack.c.b16 %v1444, %v1443
  %v1452 = vpack.c.b16 %v1446, %v1445
  %v1453 = vpack.c.b16 %v1448, %v1447
  %v1454 = vpack.c.b16 %v1450, %v1449
  %v1460 = vsel %vm313, %v1372, 0
  %v1463 = vsel %vm313, %v1376, 0
  %v1466 = vsel %vm313, %v1380, 0
  %v1469 = vsel %vm313, %v1384, 0
  %v1472 = vsel %vm313, %v1388, 0
  %v1475 = vsel %vm313, %v1392, 0
  %v1478 = vsel %vm313, %v1396, 0
  %v1481 = vsel %vm313, %v1400, 0
  %v1484 = vsel %vm313, %v1404, 0
  %v1487 = vsel %vm313, %v1408, 0
  %v1490 = vsel %vm313, %v1412, 0
  %v1493 = vsel %vm313, %v1416, 0
  %v1496 = vsel %vm313, %v1420, 0
  %v1499 = vsel %vm313, %v1424, 0
  %v1502 = vsel %vm313, %v1428, 0
  %v1505 = vsel %vm313, %v1434, 0
  %1507 = vmatprep.subr.bf16.mxu0 0
  %1508 = vmatpush1.bf16.msra.mxu0 %v1451
  %1509 = vmatprep.subr.bf16.mxu0 0
  %1510 = vmatpush1.bf16.msra.mxu0 %v1452
  %1511 = vmatprep.subr.bf16.mxu0 0
  %1512 = vmatpush1.bf16.msra.mxu0 %v1453
  %1513 = vmatprep.subr.bf16.mxu0 0
  %1514 = vmatpush1.bf16.msra.mxu0 %v1454
  %1515 = vmatprep.subr.bf16.mxu0 0
  %1516 = vmatpush1.bf16.msra.mxu0 0
  %1517 = vmatprep.subr.bf16.mxu0 0
  %1518 = vmatpush1.bf16.msra.mxu0 0
  %1519 = vmatprep.subr.bf16.mxu0 0
  %1520 = vmatpush1.bf16.msra.mxu0 0
  %1521 = vmatprep.subr.bf16.mxu0 0
  %1522 = vmatpush1.bf16.msra.mxu0 0
  %1523 = vmatprep.subr.bf16.mxu0 0
  %1524 = vmatpush1.bf16.msra.mxu0 0
  %1525 = vmatprep.subr.bf16.mxu0 0
  %1526 = vmatpush1.bf16.msra.mxu0 0
  %1527 = vmatprep.subr.bf16.mxu0 0
  %1528 = vmatpush1.bf16.msra.mxu0 0
  %1529 = vmatprep.subr.bf16.mxu0 0
  %1530 = vmatpush1.bf16.msra.mxu0 0
  %1531 = vmatprep.subr.bf16.mxu0 0
  %1532 = vmatpush1.bf16.msra.mxu0 0
  %1533 = vmatprep.subr.bf16.mxu0 0
  %1534 = vmatpush1.bf16.msra.mxu0 0
  %1535 = vmatprep.subr.bf16.mxu0 0
  %1536 = vmatpush1.bf16.msra.mxu0 0
  %1537 = vmatprep.subr.bf16.mxu0 0
  %1538 = vmatpush1.bf16.msra.mxu0 0
  %1539 = vmatprep.mubr.bf16.mxu0 0
  %1540 = vmatmul.mubr.bf16.gmra.mrb[0].mxu0 %v1460
  %v1541 = vpop.f32.mrb[0].mxu0
  %v1542 = vadd.f32 0.0, %v1541
  %v1543 = vpop.f32.mrb[0].mxu0
  %v1544 = vpop.f32.mrb[0].mxu0
  %v1545 = vadd.f32 0.0, %v1544
  %v1546 = vpop.f32.mrb[0].mxu0
  %1547 = vmatprep.mubr.bf16.mxu0 0
  %1548 = vmatmul.mubr.bf16.gmra.mrb[0].mxu0 %v1463
  %v1549 = vpop.f32.mrb[0].mxu0
  %v1550 = vadd.f32 0.0, %v1549
  %v1551 = vpop.f32.mrb[0].mxu0
  %v1552 = vpop.f32.mrb[0].mxu0
  %v1553 = vadd.f32 0.0, %v1552
  %v1554 = vpop.f32.mrb[0].mxu0
  %1555 = vmatprep.mubr.bf16.mxu0 0
  %1556 = vmatmul.mubr.bf16.gmra.mrb[0].mxu0 %v1466
  %v1557 = vpop.f32.mrb[0].mxu0
  %v1558 = vadd.f32 0.0, %v1557
  %v1559 = vpop.f32.mrb[0].mxu0
  %v1560 = vpop.f32.mrb[0].mxu0
  %v1561 = vadd.f32 0.0, %v1560
  %v1562 = vpop.f32.mrb[0].mxu0
  %1563 = vmatprep.mubr.bf16.mxu0 0
  %1564 = vmatmul.mubr.bf16.gmra.mrb[0].mxu0 %v1469
  %v1565 = vpop.f32.mrb[0].mxu0
  %v1566 = vadd.f32 0.0, %v1565
  %v1567 = vpop.f32.mrb[0].mxu0
  %v1568 = vpop.f32.mrb[0].mxu0
  %v1569 = vadd.f32 0.0, %v1568
  %v1570 = vpop.f32.mrb[0].mxu0
  %1571 = vmatprep.mubr.bf16.mxu0 0
  %1572 = vmatmul.mubr.bf16.gmra.mrb[0].mxu0 %v1472
  %v1573 = vpop.f32.mrb[0].mxu0
  %v1574 = vadd.f32 0.0, %v1573
  %v1575 = vpop.f32.mrb[0].mxu0
  %v1576 = vpop.f32.mrb[0].mxu0
  %v1577 = vadd.f32 0.0, %v1576
  %v1578 = vpop.f32.mrb[0].mxu0
  %1579 = vmatprep.mubr.bf16.mxu0 0
  %1580 = vmatmul.mubr.bf16.gmra.mrb[0].mxu0 %v1475
  %v1581 = vpop.f32.mrb[0].mxu0
  %v1582 = vadd.f32 0.0, %v1581
  %v1583 = vpop.f32.mrb[0].mxu0
  %v1584 = vpop.f32.mrb[0].mxu0
  %v1585 = vadd.f32 0.0, %v1584
  %v1586 = vpop.f32.mrb[0].mxu0
  %1587 = vmatprep.mubr.bf16.mxu0 0
  %1588 = vmatmul.mubr.bf16.gmra.mrb[0].mxu0 %v1478
  %v1589 = vpop.f32.mrb[0].mxu0
  %v1590 = vadd.f32 0.0, %v1589
  %v1591 = vpop.f32.mrb[0].mxu0
  %v1592 = vpop.f32.mrb[0].mxu0
  %v1593 = vadd.f32 0.0, %v1592
  %v1594 = vpop.f32.mrb[0].mxu0
  %1595 = vmatprep.mubr.bf16.mxu0 0
  %1596 = vmatmul.mubr.bf16.gmra.mrb[0].mxu0 %v1481
  %v1597 = vpop.f32.mrb[0].mxu0
  %v1598 = vadd.f32 0.0, %v1597
  %v1599 = vpop.f32.mrb[0].mxu0
  %v1600 = vpop.f32.mrb[0].mxu0
  %v1601 = vadd.f32 0.0, %v1600
  %v1602 = vpop.f32.mrb[0].mxu0
  %1603 = vmatprep.mubr.bf16.mxu0 0
  %1604 = vmatmul.mubr.bf16.gmra.mrb[0].mxu0 %v1484
  %v1605 = vpop.f32.mrb[0].mxu0
  %v1606 = vadd.f32 0.0, %v1605
  %v1607 = vpop.f32.mrb[0].mxu0
  %v1608 = vpop.f32.mrb[0].mxu0
  %v1609 = vadd.f32 0.0, %v1608
  %v1610 = vpop.f32.mrb[0].mxu0
  %1611 = vmatprep.mubr.bf16.mxu0 0
  %1612 = vmatmul.mubr.bf16.gmra.mrb[0].mxu0 %v1487
  %v1613 = vpop.f32.mrb[0].mxu0
  %v1614 = vadd.f32 0.0, %v1613
  %v1615 = vpop.f32.mrb[0].mxu0
  %v1616 = vpop.f32.mrb[0].mxu0
  %v1617 = vadd.f32 0.0, %v1616
  %v1618 = vpop.f32.mrb[0].mxu0
  %1619 = vmatprep.mubr.bf16.mxu0 0
  %1620 = vmatmul.mubr.bf16.gmra.mrb[0].mxu0 %v1490
  %v1621 = vpop.f32.mrb[0].mxu0
  %v1622 = vadd.f32 0.0, %v1621
  %v1623 = vpop.f32.mrb[0].mxu0
  %v1624 = vpop.f32.mrb[0].mxu0
  %v1625 = vadd.f32 0.0, %v1624
  %v1626 = vpop.f32.mrb[0].mxu0
  %1627 = vmatprep.mubr.bf16.mxu0 0
  %1628 = vmatmul.mubr.bf16.gmra.mrb[0].mxu0 %v1493
  %v1629 = vpop.f32.mrb[0].mxu0
  %v1630 = vadd.f32 0.0, %v1629
  %v1631 = vpop.f32.mrb[0].mxu0
  %v1632 = vpop.f32.mrb[0].mxu0
  %v1633 = vadd.f32 0.0, %v1632
  %v1634 = vpop.f32.mrb[0].mxu0
  %1635 = vmatprep.mubr.bf16.mxu0 0
  %1636 = vmatmul.mubr.bf16.gmra.mrb[0].mxu0 %v1496
  %v1637 = vpop.f32.mrb[0].mxu0
  %v1638 = vadd.f32 0.0, %v1637
  %v1639 = vpop.f32.mrb[0].mxu0
  %v1640 = vpop.f32.mrb[0].mxu0
  %v1641 = vadd.f32 0.0, %v1640
  %v1642 = vpop.f32.mrb[0].mxu0
  %1643 = vmatprep.mubr.bf16.mxu0 0
  %1644 = vmatmul.mubr.bf16.gmra.mrb[0].mxu0 %v1499
  %v1645 = vpop.f32.mrb[0].mxu0
  %v1646 = vadd.f32 0.0, %v1645
  %v1647 = vpop.f32.mrb[0].mxu0
  %v1648 = vpop.f32.mrb[0].mxu0
  %v1649 = vadd.f32 0.0, %v1648
  %v1650 = vpop.f32.mrb[0].mxu0
  %1651 = vmatprep.mubr.bf16.mxu0 0
  %1652 = vmatmul.mubr.bf16.gmra.mrb[0].mxu0 %v1502
  %v1653 = vpop.f32.mrb[0].mxu0
  %v1654 = vadd.f32 0.0, %v1653
  %v1655 = vpop.f32.mrb[0].mxu0
  %v1656 = vpop.f32.mrb[0].mxu0
  %v1657 = vadd.f32 0.0, %v1656
  %v1658 = vpop.f32.mrb[0].mxu0
  %1659 = vmatprep.mubr.bf16.mxu0 0
  %1660 = vmatmul.mubr.bf16.gmra.mrb[0].mxu0 %v1505
  %v1661 = vpop.f32.mrb[0].mxu0
  %v1662 = vadd.f32 0.0, %v1661
  %v1663 = vpop.f32.mrb[0].mxu0
  %v1664 = vpop.f32.mrb[0].mxu0
  %v1665 = vadd.f32 0.0, %v1664
  %v1666 = vpop.f32.mrb[0].mxu0
  %1667 = vdwg.mxu0
  %v1668 = vadd.f32 %v1324, %v1542
  %v1669 = vadd.f32 %v1325, %v1545
  %v1670 = vadd.f32 %v1326, %v1550
  %v1671 = vadd.f32 %v1327, %v1553
  %v1672 = vadd.f32 %v1328, %v1558
  %v1673 = vadd.f32 %v1329, %v1561
  %v1674 = vadd.f32 %v1330, %v1566
  %v1675 = vadd.f32 %v1331, %v1569
  %v1676 = vadd.f32 %v1332, %v1574
  %v1677 = vadd.f32 %v1333, %v1577
  %v1678 = vadd.f32 %v1334, %v1582
  %v1679 = vadd.f32 %v1335, %v1585
  %v1680 = vadd.f32 %v1336, %v1590
  %v1681 = vadd.f32 %v1337, %v1593
  %v1682 = vadd.f32 %v1338, %v1598
  %v1683 = vadd.f32 %v1339, %v1601
  %v1684 = vadd.f32 %v1340, %v1606
  %v1685 = vadd.f32 %v1341, %v1609
  %v1686 = vadd.f32 %v1342, %v1614
  %v1687 = vadd.f32 %v1343, %v1617
  %v1688 = vadd.f32 %v1344, %v1622
  %v1689 = vadd.f32 %v1345, %v1625
  %v1690 = vadd.f32 %v1346, %v1630
  %v1691 = vadd.f32 %v1347, %v1633
  %v1692 = vadd.f32 %v1348, %v1638
  %v1693 = vadd.f32 %v1349, %v1641
  %v1694 = vadd.f32 %v1350, %v1646
  %v1695 = vadd.f32 %v1351, %v1649
  %v1696 = vadd.f32 %v1352, %v1654
  %v1697 = vadd.f32 %v1353, %v1657
  %v1698 = vadd.f32 %v1354, %v1662
  %v1699 = vadd.f32 %v1355, %v1665
  %s1700 = scalar_lea.vmem %s1, 160
  %v1701 = vld [vmem:[%s1700] sm:$0xf]
  %v1702 = vld [vmem:[%s1700 + $0x4] sm:$0xf]
  %v1703 = vld [vmem:[%s1700 + $0x8] sm:$0xf]
  %v1704 = vld [vmem:[%s1700 + $0xc] sm:$0xf]
  %v1705 = vld [vmem:[%s1700 + $0x10] sm:$0xf]
  %v1706 = vld [vmem:[%s1700 + $0x14] sm:$0xf]
  %v1707 = vld [vmem:[%s1700 + $0x18] sm:$0xf]
  %v1708 = vld [vmem:[%s1700 + $0x1c] sm:$0xf]
  %v1709 = vpack.c.b16 %v108, %v107
  %v1710 = vpack.c.b16 %v110, %v109
  %v1711 = vpack.c.b16 %v112, %v111
  %v1712 = vpack.c.b16 %v114, %v113
  %v1713 = vpack.c.b16 %v116, %v115
  %v1714 = vpack.c.b16 %v118, %v117
  %v1715 = vpack.c.b16 %v120, %v119
  %v1716 = vpack.c.b16 %v122, %v121
  %v1717 = vpack.c.b16 %v124, %v123
  %v1718 = vpack.c.b16 %v126, %v125
  %v1719 = vpack.c.b16 %v128, %v127
  %v1720 = vpack.c.b16 %v130, %v129
  %v1721 = vpack.c.b16 %v132, %v131
  %v1722 = vpack.c.b16 %v134, %v133
  %v1723 = vpack.c.b16 %v136, %v135
  %v1724 = vpack.c.b16 %v138, %v137
  %v1733 = vunpack.c.l.b16 %v1701
  %v1734 = vunpack.c.l.b16 %v1702
  %v1735 = vunpack.c.l.b16 %v1703
  %v1736 = vunpack.c.l.b16 %v1704
  %v1737 = vunpack.c.l.b16 %v1705
  %v1738 = vunpack.c.l.b16 %v1706
  %v1739 = vunpack.c.l.b16 %v1707
  %v1740 = vunpack.c.l.b16 %v1708
  %v1741 = vpack.c.b16 %v1734, %v1733
  %v1742 = vpack.c.b16 %v1736, %v1735
  %v1743 = vpack.c.b16 %v1738, %v1737
  %v1744 = vpack.c.b16 %v1740, %v1739
  %v1750 = vsel %vm313, %v1709, 0
  %v1753 = vsel %vm313, %v1710, 0
  %v1756 = vsel %vm313, %v1711, 0
  %v1759 = vsel %vm313, %v1712, 0
  %v1762 = vsel %vm313, %v1713, 0
  %v1765 = vsel %vm313, %v1714, 0
  %v1768 = vsel %vm313, %v1715, 0
  %v1771 = vsel %vm313, %v1716, 0
  %v1774 = vsel %vm313, %v1717, 0
  %v1777 = vsel %vm313, %v1718, 0
  %v1780 = vsel %vm313, %v1719, 0
  %v1783 = vsel %vm313, %v1720, 0
  %v1786 = vsel %vm313, %v1721, 0
  %v1789 = vsel %vm313, %v1722, 0
  %v1792 = vsel %vm313, %v1723, 0
  %v1795 = vsel %vm313, %v1724, 0
  %1797 = vmatprep.subr.bf16.mxu0 0
  %1798 = vmatpush1.bf16.msra.mxu0 %v1741
  %1799 = vmatprep.subr.bf16.mxu0 0
  %1800 = vmatpush1.bf16.msra.mxu0 %v1742
  %1801 = vmatprep.subr.bf16.mxu0 0
  %1802 = vmatpush1.bf16.msra.mxu0 %v1743
  %1803 = vmatprep.subr.bf16.mxu0 0
  %1804 = vmatpush1.bf16.msra.mxu0 %v1744
  %1805 = vmatprep.subr.bf16.mxu0 0
  %1806 = vmatpush1.bf16.msra.mxu0 0
  %1807 = vmatprep.subr.bf16.mxu0 0
  %1808 = vmatpush1.bf16.msra.mxu0 0
  %1809 = vmatprep.subr.bf16.mxu0 0
  %1810 = vmatpush1.bf16.msra.mxu0 0
  %1811 = vmatprep.subr.bf16.mxu0 0
  %1812 = vmatpush1.bf16.msra.mxu0 0
  %1813 = vmatprep.subr.bf16.mxu0 0
  %1814 = vmatpush1.bf16.msra.mxu0 0
  %1815 = vmatprep.subr.bf16.mxu0 0
  %1816 = vmatpush1.bf16.msra.mxu0 0
  %1817 = vmatprep.subr.bf16.mxu0 0
  %1818 = vmatpush1.bf16.msra.mxu0 0
  %1819 = vmatprep.subr.bf16.mxu0 0
  %1820 = vmatpush1.bf16.msra.mxu0 0
  %1821 = vmatprep.subr.bf16.mxu0 0
  %1822 = vmatpush1.bf16.msra.mxu0 0
  %1823 = vmatprep.subr.bf16.mxu0 0
  %1824 = vmatpush1.bf16.msra.mxu0 0
  %1825 = vmatprep.subr.bf16.mxu0 0
  %1826 = vmatpush1.bf16.msra.mxu0 0
  %1827 = vmatprep.subr.bf16.mxu0 0
  %1828 = vmatpush1.bf16.msra.mxu0 0
  %1829 = vmatprep.mubr.bf16.mxu0 0
  %1830 = vmatmul.mubr.bf16.gmra.mrb[0].mxu0 %v1750
  %v1831 = vpop.f32.mrb[0].mxu0
  %v1832 = vadd.f32 0.0, %v1831
  %v1833 = vpop.f32.mrb[0].mxu0
  %v1834 = vpop.f32.mrb[0].mxu0
  %v1835 = vadd.f32 0.0, %v1834
  %v1836 = vpop.f32.mrb[0].mxu0
  %1837 = vmatprep.mubr.bf16.mxu0 0
  %1838 = vmatmul.mubr.bf16.gmra.mrb[0].mxu0 %v1753
  %v1839 = vpop.f32.mrb[0].mxu0
  %v1840 = vadd.f32 0.0, %v1839
  %v1841 = vpop.f32.mrb[0].mxu0
  %v1842 = vpop.f32.mrb[0].mxu0
  %v1843 = vadd.f32 0.0, %v1842
  %v1844 = vpop.f32.mrb[0].mxu0
  %1845 = vmatprep.mubr.bf16.mxu0 0
  %1846 = vmatmul.mubr.bf16.gmra.mrb[0].mxu0 %v1756
  %v1847 = vpop.f32.mrb[0].mxu0
  %v1848 = vadd.f32 0.0, %v1847
  %v1849 = vpop.f32.mrb[0].mxu0
  %v1850 = vpop.f32.mrb[0].mxu0
  %v1851 = vadd.f32 0.0, %v1850
  %v1852 = vpop.f32.mrb[0].mxu0
  %1853 = vmatprep.mubr.bf16.mxu0 0
  %1854 = vmatmul.mubr.bf16.gmra.mrb[0].mxu0 %v1759
  %v1855 = vpop.f32.mrb[0].mxu0
  %v1856 = vadd.f32 0.0, %v1855
  %v1857 = vpop.f32.mrb[0].mxu0
  %v1858 = vpop.f32.mrb[0].mxu0
  %v1859 = vadd.f32 0.0, %v1858
  %v1860 = vpop.f32.mrb[0].mxu0
  %1861 = vmatprep.mubr.bf16.mxu0 0
  %1862 = vmatmul.mubr.bf16.gmra.mrb[0].mxu0 %v1762
  %v1863 = vpop.f32.mrb[0].mxu0
  %v1864 = vadd.f32 0.0, %v1863
  %v1865 = vpop.f32.mrb[0].mxu0
  %v1866 = vpop.f32.mrb[0].mxu0
  %v1867 = vadd.f32 0.0, %v1866
  %v1868 = vpop.f32.mrb[0].mxu0
  %1869 = vmatprep.mubr.bf16.mxu0 0
  %1870 = vmatmul.mubr.bf16.gmra.mrb[0].mxu0 %v1765
  %v1871 = vpop.f32.mrb[0].mxu0
  %v1872 = vadd.f32 0.0, %v1871
  %v1873 = vpop.f32.mrb[0].mxu0
  %v1874 = vpop.f32.mrb[0].mxu0
  %v1875 = vadd.f32 0.0, %v1874
  %v1876 = vpop.f32.mrb[0].mxu0
  %1877 = vmatprep.mubr.bf16.mxu0 0
  %1878 = vmatmul.mubr.bf16.gmra.mrb[0].mxu0 %v1768
  %v1879 = vpop.f32.mrb[0].mxu0
  %v1880 = vadd.f32 0.0, %v1879
  %v1881 = vpop.f32.mrb[0].mxu0
  %v1882 = vpop.f32.mrb[0].mxu0
  %v1883 = vadd.f32 0.0, %v1882
  %v1884 = vpop.f32.mrb[0].mxu0
  %1885 = vmatprep.mubr.bf16.mxu0 0
  %1886 = vmatmul.mubr.bf16.gmra.mrb[0].mxu0 %v1771
  %v1887 = vpop.f32.mrb[0].mxu0
  %v1888 = vadd.f32 0.0, %v1887
  %v1889 = vpop.f32.mrb[0].mxu0
  %v1890 = vpop.f32.mrb[0].mxu0
  %v1891 = vadd.f32 0.0, %v1890
  %v1892 = vpop.f32.mrb[0].mxu0
  %1893 = vmatprep.mubr.bf16.mxu0 0
  %1894 = vmatmul.mubr.bf16.gmra.mrb[0].mxu0 %v1774
  %v1895 = vpop.f32.mrb[0].mxu0
  %v1896 = vadd.f32 0.0, %v1895
  %v1897 = vpop.f32.mrb[0].mxu0
  %v1898 = vpop.f32.mrb[0].mxu0
  %v1899 = vadd.f32 0.0, %v1898
  %v1900 = vpop.f32.mrb[0].mxu0
  %1901 = vmatprep.mubr.bf16.mxu0 0
  %1902 = vmatmul.mubr.bf16.gmra.mrb[0].mxu0 %v1777
  %v1903 = vpop.f32.mrb[0].mxu0
  %v1904 = vadd.f32 0.0, %v1903
  %v1905 = vpop.f32.mrb[0].mxu0
  %v1906 = vpop.f32.mrb[0].mxu0
  %v1907 = vadd.f32 0.0, %v1906
  %v1908 = vpop.f32.mrb[0].mxu0
  %1909 = vmatprep.mubr.bf16.mxu0 0
  %1910 = vmatmul.mubr.bf16.gmra.mrb[0].mxu0 %v1780
  %v1911 = vpop.f32.mrb[0].mxu0
  %v1912 = vadd.f32 0.0, %v1911
  %v1913 = vpop.f32.mrb[0].mxu0
  %v1914 = vpop.f32.mrb[0].mxu0
  %v1915 = vadd.f32 0.0, %v1914
  %v1916 = vpop.f32.mrb[0].mxu0
  %1917 = vmatprep.mubr.bf16.mxu0 0
  %1918 = vmatmul.mubr.bf16.gmra.mrb[0].mxu0 %v1783
  %v1919 = vpop.f32.mrb[0].mxu0
  %v1920 = vadd.f32 0.0, %v1919
  %v1921 = vpop.f32.mrb[0].mxu0
  %v1922 = vpop.f32.mrb[0].mxu0
  %v1923 = vadd.f32 0.0, %v1922
  %v1924 = vpop.f32.mrb[0].mxu0
  %1925 = vmatprep.mubr.bf16.mxu0 0
  %1926 = vmatmul.mubr.bf16.gmra.mrb[0].mxu0 %v1786
  %v1927 = vpop.f32.mrb[0].mxu0
  %v1928 = vadd.f32 0.0, %v1927
  %v1929 = vpop.f32.mrb[0].mxu0
  %v1930 = vpop.f32.mrb[0].mxu0
  %v1931 = vadd.f32 0.0, %v1930
  %v1932 = vpop.f32.mrb[0].mxu0
  %1933 = vmatprep.mubr.bf16.mxu0 0
  %1934 = vmatmul.mubr.bf16.gmra.mrb[0].mxu0 %v1789
  %v1935 = vpop.f32.mrb[0].mxu0
  %v1936 = vadd.f32 0.0, %v1935
  %v1937 = vpop.f32.mrb[0].mxu0
  %v1938 = vpop.f32.mrb[0].mxu0
  %v1939 = vadd.f32 0.0, %v1938
  %v1940 = vpop.f32.mrb[0].mxu0
  %1941 = vmatprep.mubr.bf16.mxu0 0
  %1942 = vmatmul.mubr.bf16.gmra.mrb[0].mxu0 %v1792
  %v1943 = vpop.f32.mrb[0].mxu0
  %v1944 = vadd.f32 0.0, %v1943
  %v1945 = vpop.f32.mrb[0].mxu0
  %v1946 = vpop.f32.mrb[0].mxu0
  %v1947 = vadd.f32 0.0, %v1946
  %v1948 = vpop.f32.mrb[0].mxu0
  %1949 = vmatprep.mubr.bf16.mxu0 0
  %1950 = vmatmul.mubr.bf16.gmra.mrb[0].mxu0 %v1795
  %v1951 = vpop.f32.mrb[0].mxu0
  %v1952 = vadd.f32 0.0, %v1951
  %v1953 = vpop.f32.mrb[0].mxu0
  %v1954 = vpop.f32.mrb[0].mxu0
  %v1955 = vadd.f32 0.0, %v1954
  %v1956 = vpop.f32.mrb[0].mxu0
  %1957 = vdwg.mxu0
  %v1958 = vadd.f32 %v1668, %v1832
  %v1959 = vadd.f32 %v1669, %v1835
  %v1960 = vadd.f32 %v1670, %v1840
  %v1961 = vadd.f32 %v1671, %v1843
  %v1962 = vadd.f32 %v1672, %v1848
  %v1963 = vadd.f32 %v1673, %v1851
  %v1964 = vadd.f32 %v1674, %v1856
  %v1965 = vadd.f32 %v1675, %v1859
  %v1966 = vadd.f32 %v1676, %v1864
  %v1967 = vadd.f32 %v1677, %v1867
  %v1968 = vadd.f32 %v1678, %v1872
  %v1969 = vadd.f32 %v1679, %v1875
  %v1970 = vadd.f32 %v1680, %v1880
  %v1971 = vadd.f32 %v1681, %v1883
  %v1972 = vadd.f32 %v1682, %v1888
  %v1973 = vadd.f32 %v1683, %v1891
  %v1974 = vadd.f32 %v1684, %v1896
  %v1975 = vadd.f32 %v1685, %v1899
  %v1976 = vadd.f32 %v1686, %v1904
  %v1977 = vadd.f32 %v1687, %v1907
  %v1978 = vadd.f32 %v1688, %v1912
  %v1979 = vadd.f32 %v1689, %v1915
  %v1980 = vadd.f32 %v1690, %v1920
  %v1981 = vadd.f32 %v1691, %v1923
  %v1982 = vadd.f32 %v1692, %v1928
  %v1983 = vadd.f32 %v1693, %v1931
  %v1984 = vadd.f32 %v1694, %v1936
  %v1985 = vadd.f32 %v1695, %v1939
  %v1986 = vadd.f32 %v1696, %v1944
  %v1987 = vadd.f32 %v1697, %v1947
  %v1988 = vadd.f32 %v1698, %v1952
  %v1989 = vadd.f32 %v1699, %v1955
  %s1990 = scalar_lea.vmem %s1, 192
  %v1991 = vld [vmem:[%s1990] sm:$0xf]
  %v1992 = vld [vmem:[%s1990 + $0x4] sm:$0xf]
  %v1993 = vld [vmem:[%s1990 + $0x8] sm:$0xf]
  %v1994 = vld [vmem:[%s1990 + $0xc] sm:$0xf]
  %v1995 = vld [vmem:[%s1990 + $0x10] sm:$0xf]
  %v1996 = vld [vmem:[%s1990 + $0x14] sm:$0xf]
  %v1997 = vld [vmem:[%s1990 + $0x18] sm:$0xf]
  %v1998 = vld [vmem:[%s1990 + $0x1c] sm:$0xf]
  %v2000 = vunpack.c.l.b16 %v55
  %v2001 = vpack.c.b16 %v2000, %v2000
  %vm2002 = vcmask 1045504
  %v2003 = vrot.slane %v1709, 2
  %v2004 = vrot.slane %v1710, 2
  %v2005 = vsel %vm2002, %v2003, %v2004
  %v2006 = vrot.slane %v1711, 2
  %v2007 = vsel %vm2002, %v2004, %v2006
  %v2008 = vrot.slane %v1712, 2
  %v2009 = vsel %vm2002, %v2006, %v2008
  %v2010 = vrot.slane %v1713, 2
  %v2011 = vsel %vm2002, %v2008, %v2010
  %v2012 = vrot.slane %v1714, 2
  %v2013 = vsel %vm2002, %v2010, %v2012
  %v2014 = vrot.slane %v1715, 2
  %v2015 = vsel %vm2002, %v2012, %v2014
  %v2016 = vrot.slane %v1716, 2
  %v2017 = vsel %vm2002, %v2014, %v2016
  %v2018 = vrot.slane %v1717, 2
  %v2019 = vsel %vm2002, %v2016, %v2018
  %v2020 = vrot.slane %v1718, 2
  %v2021 = vsel %vm2002, %v2018, %v2020
  %v2022 = vrot.slane %v1719, 2
  %v2023 = vsel %vm2002, %v2020, %v2022
  %v2024 = vrot.slane %v1720, 2
  %v2025 = vsel %vm2002, %v2022, %v2024
  %v2026 = vrot.slane %v1721, 2
  %v2027 = vsel %vm2002, %v2024, %v2026
  %v2028 = vrot.slane %v1722, 2
  %v2029 = vsel %vm2002, %v2026, %v2028
  %v2030 = vrot.slane %v1723, 2
  %v2031 = vsel %vm2002, %v2028, %v2030
  %v2032 = vrot.slane %v1724, 2
  %v2033 = vsel %vm2002, %v2030, %v2032
  %v2034 = vrot.slane %v2001, 2
  %v2035 = vsel %vm2002, %v2032, %v2034
  %v2044 = vunpack.c.l.b16 %v1991
  %v2045 = vunpack.c.l.b16 %v1992
  %v2046 = vunpack.c.l.b16 %v1993
  %v2047 = vunpack.c.l.b16 %v1994
  %v2048 = vunpack.c.l.b16 %v1995
  %v2049 = vunpack.c.l.b16 %v1996
  %v2050 = vunpack.c.l.b16 %v1997
  %v2051 = vunpack.c.l.b16 %v1998
  %v2052 = vpack.c.b16 %v2045, %v2044
  %v2053 = vpack.c.b16 %v2047, %v2046
  %v2054 = vpack.c.b16 %v2049, %v2048
  %v2055 = vpack.c.b16 %v2051, %v2050
  %v2061 = vsel %vm313, %v2005, 0
  %v2064 = vsel %vm313, %v2007, 0
  %v2067 = vsel %vm313, %v2009, 0
  %v2070 = vsel %vm313, %v2011, 0
  %v2073 = vsel %vm313, %v2013, 0
  %v2076 = vsel %vm313, %v2015, 0
  %v2079 = vsel %vm313, %v2017, 0
  %v2082 = vsel %vm313, %v2019, 0
  %v2085 = vsel %vm313, %v2021, 0
  %v2088 = vsel %vm313, %v2023, 0
  %v2091 = vsel %vm313, %v2025, 0
  %v2094 = vsel %vm313, %v2027, 0
  %v2097 = vsel %vm313, %v2029, 0
  %v2100 = vsel %vm313, %v2031, 0
  %v2103 = vsel %vm313, %v2033, 0
  %v2106 = vsel %vm313, %v2035, 0
  %2108 = vmatprep.subr.bf16.mxu0 0
  %2109 = vmatpush1.bf16.msra.mxu0 %v2052
  %2110 = vmatprep.subr.bf16.mxu0 0
  %2111 = vmatpush1.bf16.msra.mxu0 %v2053
  %2112 = vmatprep.subr.bf16.mxu0 0
  %2113 = vmatpush1.bf16.msra.mxu0 %v2054
  %2114 = vmatprep.subr.bf16.mxu0 0
  %2115 = vmatpush1.bf16.msra.mxu0 %v2055
  %2116 = vmatprep.subr.bf16.mxu0 0
  %2117 = vmatpush1.bf16.msra.mxu0 0
  %2118 = vmatprep.subr.bf16.mxu0 0
  %2119 = vmatpush1.bf16.msra.mxu0 0
  %2120 = vmatprep.subr.bf16.mxu0 0
  %2121 = vmatpush1.bf16.msra.mxu0 0
  %2122 = vmatprep.subr.bf16.mxu0 0
  %2123 = vmatpush1.bf16.msra.mxu0 0
  %2124 = vmatprep.subr.bf16.mxu0 0
  %2125 = vmatpush1.bf16.msra.mxu0 0
  %2126 = vmatprep.subr.bf16.mxu0 0
  %2127 = vmatpush1.bf16.msra.mxu0 0
  %2128 = vmatprep.subr.bf16.mxu0 0
  %2129 = vmatpush1.bf16.msra.mxu0 0
  %2130 = vmatprep.subr.bf16.mxu0 0
  %2131 = vmatpush1.bf16.msra.mxu0 0
  %2132 = vmatprep.subr.bf16.mxu0 0
  %2133 = vmatpush1.bf16.msra.mxu0 0
  %2134 = vmatprep.subr.bf16.mxu0 0
  %2135 = vmatpush1.bf16.msra.mxu0 0
  %2136 = vmatprep.subr.bf16.mxu0 0
  %2137 = vmatpush1.bf16.msra.mxu0 0
  %2138 = vmatprep.subr.bf16.mxu0 0
  %2139 = vmatpush1.bf16.msra.mxu0 0
  %2140 = vmatprep.mubr.bf16.mxu0 0
  %2141 = vmatmul.mubr.bf16.gmra.mrb[0].mxu0 %v2061
  %v2142 = vpop.f32.mrb[0].mxu0
  %v2143 = vadd.f32 0.0, %v2142
  %v2144 = vpop.f32.mrb[0].mxu0
  %v2145 = vpop.f32.mrb[0].mxu0
  %v2146 = vadd.f32 0.0, %v2145
  %v2147 = vpop.f32.mrb[0].mxu0
  %2148 = vmatprep.mubr.bf16.mxu0 0
  %2149 = vmatmul.mubr.bf16.gmra.mrb[0].mxu0 %v2064
  %v2150 = vpop.f32.mrb[0].mxu0
  %v2151 = vadd.f32 0.0, %v2150
  %v2152 = vpop.f32.mrb[0].mxu0
  %v2153 = vpop.f32.mrb[0].mxu0
  %v2154 = vadd.f32 0.0, %v2153
  %v2155 = vpop.f32.mrb[0].mxu0
  %2156 = vmatprep.mubr.bf16.mxu0 0
  %2157 = vmatmul.mubr.bf16.gmra.mrb[0].mxu0 %v2067
  %v2158 = vpop.f32.mrb[0].mxu0
  %v2159 = vadd.f32 0.0, %v2158
  %v2160 = vpop.f32.mrb[0].mxu0
  %v2161 = vpop.f32.mrb[0].mxu0
  %v2162 = vadd.f32 0.0, %v2161
  %v2163 = vpop.f32.mrb[0].mxu0
  %2164 = vmatprep.mubr.bf16.mxu0 0
  %2165 = vmatmul.mubr.bf16.gmra.mrb[0].mxu0 %v2070
  %v2166 = vpop.f32.mrb[0].mxu0
  %v2167 = vadd.f32 0.0, %v2166
  %v2168 = vpop.f32.mrb[0].mxu0
  %v2169 = vpop.f32.mrb[0].mxu0
  %v2170 = vadd.f32 0.0, %v2169
  %v2171 = vpop.f32.mrb[0].mxu0
  %2172 = vmatprep.mubr.bf16.mxu0 0
  %2173 = vmatmul.mubr.bf16.gmra.mrb[0].mxu0 %v2073
  %v2174 = vpop.f32.mrb[0].mxu0
  %v2175 = vadd.f32 0.0, %v2174
  %v2176 = vpop.f32.mrb[0].mxu0
  %v2177 = vpop.f32.mrb[0].mxu0
  %v2178 = vadd.f32 0.0, %v2177
  %v2179 = vpop.f32.mrb[0].mxu0
  %2180 = vmatprep.mubr.bf16.mxu0 0
  %2181 = vmatmul.mubr.bf16.gmra.mrb[0].mxu0 %v2076
  %v2182 = vpop.f32.mrb[0].mxu0
  %v2183 = vadd.f32 0.0, %v2182
  %v2184 = vpop.f32.mrb[0].mxu0
  %v2185 = vpop.f32.mrb[0].mxu0
  %v2186 = vadd.f32 0.0, %v2185
  %v2187 = vpop.f32.mrb[0].mxu0
  %2188 = vmatprep.mubr.bf16.mxu0 0
  %2189 = vmatmul.mubr.bf16.gmra.mrb[0].mxu0 %v2079
  %v2190 = vpop.f32.mrb[0].mxu0
  %v2191 = vadd.f32 0.0, %v2190
  %v2192 = vpop.f32.mrb[0].mxu0
  %v2193 = vpop.f32.mrb[0].mxu0
  %v2194 = vadd.f32 0.0, %v2193
  %v2195 = vpop.f32.mrb[0].mxu0
  %2196 = vmatprep.mubr.bf16.mxu0 0
  %2197 = vmatmul.mubr.bf16.gmra.mrb[0].mxu0 %v2082
  %v2198 = vpop.f32.mrb[0].mxu0
  %v2199 = vadd.f32 0.0, %v2198
  %v2200 = vpop.f32.mrb[0].mxu0
  %v2201 = vpop.f32.mrb[0].mxu0
  %v2202 = vadd.f32 0.0, %v2201
  %v2203 = vpop.f32.mrb[0].mxu0
  %2204 = vmatprep.mubr.bf16.mxu0 0
  %2205 = vmatmul.mubr.bf16.gmra.mrb[0].mxu0 %v2085
  %v2206 = vpop.f32.mrb[0].mxu0
  %v2207 = vadd.f32 0.0, %v2206
  %v2208 = vpop.f32.mrb[0].mxu0
  %v2209 = vpop.f32.mrb[0].mxu0
  %v2210 = vadd.f32 0.0, %v2209
  %v2211 = vpop.f32.mrb[0].mxu0
  %2212 = vmatprep.mubr.bf16.mxu0 0
  %2213 = vmatmul.mubr.bf16.gmra.mrb[0].mxu0 %v2088
  %v2214 = vpop.f32.mrb[0].mxu0
  %v2215 = vadd.f32 0.0, %v2214
  %v2216 = vpop.f32.mrb[0].mxu0
  %v2217 = vpop.f32.mrb[0].mxu0
  %v2218 = vadd.f32 0.0, %v2217
  %v2219 = vpop.f32.mrb[0].mxu0
  %2220 = vmatprep.mubr.bf16.mxu0 0
  %2221 = vmatmul.mubr.bf16.gmra.mrb[0].mxu0 %v2091
  %v2222 = vpop.f32.mrb[0].mxu0
  %v2223 = vadd.f32 0.0, %v2222
  %v2224 = vpop.f32.mrb[0].mxu0
  %v2225 = vpop.f32.mrb[0].mxu0
  %v2226 = vadd.f32 0.0, %v2225
  %v2227 = vpop.f32.mrb[0].mxu0
  %2228 = vmatprep.mubr.bf16.mxu0 0
  %2229 = vmatmul.mubr.bf16.gmra.mrb[0].mxu0 %v2094
  %v2230 = vpop.f32.mrb[0].mxu0
  %v2231 = vadd.f32 0.0, %v2230
  %v2232 = vpop.f32.mrb[0].mxu0
  %v2233 = vpop.f32.mrb[0].mxu0
  %v2234 = vadd.f32 0.0, %v2233
  %v2235 = vpop.f32.mrb[0].mxu0
  %2236 = vmatprep.mubr.bf16.mxu0 0
  %2237 = vmatmul.mubr.bf16.gmra.mrb[0].mxu0 %v2097
  %v2238 = vpop.f32.mrb[0].mxu0
  %v2239 = vadd.f32 0.0, %v2238
  %v2240 = vpop.f32.mrb[0].mxu0
  %v2241 = vpop.f32.mrb[0].mxu0
  %v2242 = vadd.f32 0.0, %v2241
  %v2243 = vpop.f32.mrb[0].mxu0
  %2244 = vmatprep.mubr.bf16.mxu0 0
  %2245 = vmatmul.mubr.bf16.gmra.mrb[0].mxu0 %v2100
  %v2246 = vpop.f32.mrb[0].mxu0
  %v2247 = vadd.f32 0.0, %v2246
  %v2248 = vpop.f32.mrb[0].mxu0
  %v2249 = vpop.f32.mrb[0].mxu0
  %v2250 = vadd.f32 0.0, %v2249
  %v2251 = vpop.f32.mrb[0].mxu0
  %2252 = vmatprep.mubr.bf16.mxu0 0
  %2253 = vmatmul.mubr.bf16.gmra.mrb[0].mxu0 %v2103
  %v2254 = vpop.f32.mrb[0].mxu0
  %v2255 = vadd.f32 0.0, %v2254
  %v2256 = vpop.f32.mrb[0].mxu0
  %v2257 = vpop.f32.mrb[0].mxu0
  %v2258 = vadd.f32 0.0, %v2257
  %v2259 = vpop.f32.mrb[0].mxu0
  %2260 = vmatprep.mubr.bf16.mxu0 0
  %2261 = vmatmul.mubr.bf16.gmra.mrb[0].mxu0 %v2106
  %v2262 = vpop.f32.mrb[0].mxu0
  %v2263 = vadd.f32 0.0, %v2262
  %v2264 = vpop.f32.mrb[0].mxu0
  %v2265 = vpop.f32.mrb[0].mxu0
  %v2266 = vadd.f32 0.0, %v2265
  %v2267 = vpop.f32.mrb[0].mxu0
  %2268 = vdwg.mxu0
  %v2269 = vadd.f32 %v1958, %v2143
  %v2270 = vadd.f32 %v1959, %v2146
  %v2271 = vadd.f32 %v1960, %v2151
  %v2272 = vadd.f32 %v1961, %v2154
  %v2273 = vadd.f32 %v1962, %v2159
  %v2274 = vadd.f32 %v1963, %v2162
  %v2275 = vadd.f32 %v1964, %v2167
  %v2276 = vadd.f32 %v1965, %v2170
  %v2277 = vadd.f32 %v1966, %v2175
  %v2278 = vadd.f32 %v1967, %v2178
  %v2279 = vadd.f32 %v1968, %v2183
  %v2280 = vadd.f32 %v1969, %v2186
  %v2281 = vadd.f32 %v1970, %v2191
  %v2282 = vadd.f32 %v1971, %v2194
  %v2283 = vadd.f32 %v1972, %v2199
  %v2284 = vadd.f32 %v1973, %v2202
  %v2285 = vadd.f32 %v1974, %v2207
  %v2286 = vadd.f32 %v1975, %v2210
  %v2287 = vadd.f32 %v1976, %v2215
  %v2288 = vadd.f32 %v1977, %v2218
  %v2289 = vadd.f32 %v1978, %v2223
  %v2290 = vadd.f32 %v1979, %v2226
  %v2291 = vadd.f32 %v1980, %v2231
  %v2292 = vadd.f32 %v1981, %v2234
  %v2293 = vadd.f32 %v1982, %v2239
  %v2294 = vadd.f32 %v1983, %v2242
  %v2295 = vadd.f32 %v1984, %v2247
  %v2296 = vadd.f32 %v1985, %v2250
  %v2297 = vadd.f32 %v1986, %v2255
  %v2298 = vadd.f32 %v1987, %v2258
  %v2299 = vadd.f32 %v1988, %v2263
  %v2300 = vadd.f32 %v1989, %v2266
  %s2301 = scalar_lea.vmem %s1, 224
  %v2302 = vld [vmem:[%s2301] sm:$0xf]
  %v2303 = vld [vmem:[%s2301 + $0x4] sm:$0xf]
  %v2304 = vld [vmem:[%s2301 + $0x8] sm:$0xf]
  %v2305 = vld [vmem:[%s2301 + $0xc] sm:$0xf]
  %v2306 = vld [vmem:[%s2301 + $0x10] sm:$0xf]
  %v2307 = vld [vmem:[%s2301 + $0x14] sm:$0xf]
  %v2308 = vld [vmem:[%s2301 + $0x18] sm:$0xf]
  %v2309 = vld [vmem:[%s2301 + $0x1c] sm:$0xf]
  %vm2310 = vsmask.f32 5376
  %v2311 = vshrl.u32 %v1709, 16
  %v2313 = vrot.slane %v2311, 2
  %v2314 = vshll.u32 %v1709, 16
  %v2316 = vrot.slane %v2314, 3
  %v2317 = vor.u32 %v2313, %v2316
  %v2318 = vshrl.u32 %v1710, 16
  %v2320 = vrot.slane %v2318, 2
  %v2321 = vshll.u32 %v1710, 16
  %v2323 = vrot.slane %v2321, 3
  %v2324 = vor.u32 %v2320, %v2323
  %v2325 = vsel %vm2310, %v2317, %v2324
  %v2326 = vshrl.u32 %v1711, 16
  %v2328 = vrot.slane %v2326, 2
  %v2329 = vshll.u32 %v1711, 16
  %v2331 = vrot.slane %v2329, 3
  %v2332 = vor.u32 %v2328, %v2331
  %v2333 = vsel %vm2310, %v2324, %v2332
  %v2334 = vshrl.u32 %v1712, 16
  %v2336 = vrot.slane %v2334, 2
  %v2337 = vshll.u32 %v1712, 16
  %v2339 = vrot.slane %v2337, 3
  %v2340 = vor.u32 %v2336, %v2339
  %v2341 = vsel %vm2310, %v2332, %v2340
  %v2342 = vshrl.u32 %v1713, 16
  %v2344 = vrot.slane %v2342, 2
  %v2345 = vshll.u32 %v1713, 16
  %v2347 = vrot.slane %v2345, 3
  %v2348 = vor.u32 %v2344, %v2347
  %v2349 = vsel %vm2310, %v2340, %v2348
  %v2350 = vshrl.u32 %v1714, 16
  %v2352 = vrot.slane %v2350, 2
  %v2353 = vshll.u32 %v1714, 16
  %v2355 = vrot.slane %v2353, 3
  %v2356 = vor.u32 %v2352, %v2355
  %v2357 = vsel %vm2310, %v2348, %v2356
  %v2358 = vshrl.u32 %v1715, 16
  %v2360 = vrot.slane %v2358, 2
  %v2361 = vshll.u32 %v1715, 16
  %v2363 = vrot.slane %v2361, 3
  %v2364 = vor.u32 %v2360, %v2363
  %v2365 = vsel %vm2310, %v2356, %v2364
  %v2366 = vshrl.u32 %v1716, 16
  %v2368 = vrot.slane %v2366, 2
  %v2369 = vshll.u32 %v1716, 16
  %v2371 = vrot.slane %v2369, 3
  %v2372 = vor.u32 %v2368, %v2371
  %v2373 = vsel %vm2310, %v2364, %v2372
  %v2374 = vshrl.u32 %v1717, 16
  %v2376 = vrot.slane %v2374, 2
  %v2377 = vshll.u32 %v1717, 16
  %v2379 = vrot.slane %v2377, 3
  %v2380 = vor.u32 %v2376, %v2379
  %v2381 = vsel %vm2310, %v2372, %v2380
  %v2382 = vshrl.u32 %v1718, 16
  %v2384 = vrot.slane %v2382, 2
  %v2385 = vshll.u32 %v1718, 16
  %v2387 = vrot.slane %v2385, 3
  %v2388 = vor.u32 %v2384, %v2387
  %v2389 = vsel %vm2310, %v2380, %v2388
  %v2390 = vshrl.u32 %v1719, 16
  %v2392 = vrot.slane %v2390, 2
  %v2393 = vshll.u32 %v1719, 16
  %v2395 = vrot.slane %v2393, 3
  %v2396 = vor.u32 %v2392, %v2395
  %v2397 = vsel %vm2310, %v2388, %v2396
  %v2398 = vshrl.u32 %v1720, 16
  %v2400 = vrot.slane %v2398, 2
  %v2401 = vshll.u32 %v1720, 16
  %v2403 = vrot.slane %v2401, 3
  %v2404 = vor.u32 %v2400, %v2403
  %v2405 = vsel %vm2310, %v2396, %v2404
  %v2406 = vshrl.u32 %v1721, 16
  %v2408 = vrot.slane %v2406, 2
  %v2409 = vshll.u32 %v1721, 16
  %v2411 = vrot.slane %v2409, 3
  %v2412 = vor.u32 %v2408, %v2411
  %v2413 = vsel %vm2310, %v2404, %v2412
  %v2414 = vshrl.u32 %v1722, 16
  %v2416 = vrot.slane %v2414, 2
  %v2417 = vshll.u32 %v1722, 16
  %v2419 = vrot.slane %v2417, 3
  %v2420 = vor.u32 %v2416, %v2419
  %v2421 = vsel %vm2310, %v2412, %v2420
  %v2422 = vshrl.u32 %v1723, 16
  %v2424 = vrot.slane %v2422, 2
  %v2425 = vshll.u32 %v1723, 16
  %v2427 = vrot.slane %v2425, 3
  %v2428 = vor.u32 %v2424, %v2427
  %v2429 = vsel %vm2310, %v2420, %v2428
  %v2430 = vshrl.u32 %v1724, 16
  %v2432 = vrot.slane %v2430, 2
  %v2433 = vshll.u32 %v1724, 16
  %v2435 = vrot.slane %v2433, 3
  %v2436 = vor.u32 %v2432, %v2435
  %v2437 = vsel %vm2310, %v2428, %v2436
  %v2439 = vshrl.u32 %v2001, 16
  %v2441 = vrot.slane %v2439, 2
  %v2442 = vshll.u32 %v2001, 16
  %v2444 = vrot.slane %v2442, 3
  %v2445 = vor.u32 %v2441, %v2444
  %v2446 = vsel %vm2310, %v2436, %v2445
  %v2455 = vunpack.c.l.b16 %v2302
  %v2456 = vunpack.c.l.b16 %v2303
  %v2457 = vunpack.c.l.b16 %v2304
  %v2458 = vunpack.c.l.b16 %v2305
  %v2459 = vunpack.c.l.b16 %v2306
  %v2460 = vunpack.c.l.b16 %v2307
  %v2461 = vunpack.c.l.b16 %v2308
  %v2462 = vunpack.c.l.b16 %v2309
  %v2463 = vpack.c.b16 %v2456, %v2455
  %v2464 = vpack.c.b16 %v2458, %v2457
  %v2465 = vpack.c.b16 %v2460, %v2459
  %v2466 = vpack.c.b16 %v2462, %v2461
  %v2472 = vsel %vm313, %v2325, 0
  %v2475 = vsel %vm313, %v2333, 0
  %v2478 = vsel %vm313, %v2341, 0
  %v2481 = vsel %vm313, %v2349, 0
  %v2484 = vsel %vm313, %v2357, 0
  %v2487 = vsel %vm313, %v2365, 0
  %v2490 = vsel %vm313, %v2373, 0
  %v2493 = vsel %vm313, %v2381, 0
  %v2496 = vsel %vm313, %v2389, 0
  %v2499 = vsel %vm313, %v2397, 0
  %v2502 = vsel %vm313, %v2405, 0
  %v2505 = vsel %vm313, %v2413, 0
  %v2508 = vsel %vm313, %v2421, 0
  %v2511 = vsel %vm313, %v2429, 0
  %v2514 = vsel %vm313, %v2437, 0
  %v2517 = vsel %vm313, %v2446, 0
  %2519 = vmatprep.subr.bf16.mxu0 0
  %2520 = vmatpush1.bf16.msra.mxu0 %v2463
  %2521 = vmatprep.subr.bf16.mxu0 0
  %2522 = vmatpush1.bf16.msra.mxu0 %v2464
  %2523 = vmatprep.subr.bf16.mxu0 0
  %2524 = vmatpush1.bf16.msra.mxu0 %v2465
  %2525 = vmatprep.subr.bf16.mxu0 0
  %2526 = vmatpush1.bf16.msra.mxu0 %v2466
  %2527 = vmatprep.subr.bf16.mxu0 0
  %2528 = vmatpush1.bf16.msra.mxu0 0
  %2529 = vmatprep.subr.bf16.mxu0 0
  %2530 = vmatpush1.bf16.msra.mxu0 0
  %2531 = vmatprep.subr.bf16.mxu0 0
  %2532 = vmatpush1.bf16.msra.mxu0 0
  %2533 = vmatprep.subr.bf16.mxu0 0
  %2534 = vmatpush1.bf16.msra.mxu0 0
  %2535 = vmatprep.subr.bf16.mxu0 0
  %2536 = vmatpush1.bf16.msra.mxu0 0
  %2537 = vmatprep.subr.bf16.mxu0 0
  %2538 = vmatpush1.bf16.msra.mxu0 0
  %2539 = vmatprep.subr.bf16.mxu0 0
  %2540 = vmatpush1.bf16.msra.mxu0 0
  %2541 = vmatprep.subr.bf16.mxu0 0
  %2542 = vmatpush1.bf16.msra.mxu0 0
  %2543 = vmatprep.subr.bf16.mxu0 0
  %2544 = vmatpush1.bf16.msra.mxu0 0
  %2545 = vmatprep.subr.bf16.mxu0 0
  %2546 = vmatpush1.bf16.msra.mxu0 0
  %2547 = vmatprep.subr.bf16.mxu0 0
  %2548 = vmatpush1.bf16.msra.mxu0 0
  %2549 = vmatprep.subr.bf16.mxu0 0
  %2550 = vmatpush1.bf16.msra.mxu0 0
  %2551 = vmatprep.mubr.bf16.mxu0 0
  %2552 = vmatmul.mubr.bf16.gmra.mrb[0].mxu0 %v2472
  %v2553 = vpop.f32.mrb[0].mxu0
  %v2554 = vadd.f32 0.0, %v2553
  %v2555 = vpop.f32.mrb[0].mxu0
  %v2556 = vpop.f32.mrb[0].mxu0
  %v2557 = vadd.f32 0.0, %v2556
  %v2558 = vpop.f32.mrb[0].mxu0
  %2559 = vmatprep.mubr.bf16.mxu0 0
  %2560 = vmatmul.mubr.bf16.gmra.mrb[0].mxu0 %v2475
  %v2561 = vpop.f32.mrb[0].mxu0
  %v2562 = vadd.f32 0.0, %v2561
  %v2563 = vpop.f32.mrb[0].mxu0
  %v2564 = vpop.f32.mrb[0].mxu0
  %v2565 = vadd.f32 0.0, %v2564
  %v2566 = vpop.f32.mrb[0].mxu0
  %2567 = vmatprep.mubr.bf16.mxu0 0
  %2568 = vmatmul.mubr.bf16.gmra.mrb[0].mxu0 %v2478
  %v2569 = vpop.f32.mrb[0].mxu0
  %v2570 = vadd.f32 0.0, %v2569
  %v2571 = vpop.f32.mrb[0].mxu0
  %v2572 = vpop.f32.mrb[0].mxu0
  %v2573 = vadd.f32 0.0, %v2572
  %v2574 = vpop.f32.mrb[0].mxu0
  %2575 = vmatprep.mubr.bf16.mxu0 0
  %2576 = vmatmul.mubr.bf16.gmra.mrb[0].mxu0 %v2481
  %v2577 = vpop.f32.mrb[0].mxu0
  %v2578 = vadd.f32 0.0, %v2577
  %v2579 = vpop.f32.mrb[0].mxu0
  %v2580 = vpop.f32.mrb[0].mxu0
  %v2581 = vadd.f32 0.0, %v2580
  %v2582 = vpop.f32.mrb[0].mxu0
  %2583 = vmatprep.mubr.bf16.mxu0 0
  %2584 = vmatmul.mubr.bf16.gmra.mrb[0].mxu0 %v2484
  %v2585 = vpop.f32.mrb[0].mxu0
  %v2586 = vadd.f32 0.0, %v2585
  %v2587 = vpop.f32.mrb[0].mxu0
  %v2588 = vpop.f32.mrb[0].mxu0
  %v2589 = vadd.f32 0.0, %v2588
  %v2590 = vpop.f32.mrb[0].mxu0
  %2591 = vmatprep.mubr.bf16.mxu0 0
  %2592 = vmatmul.mubr.bf16.gmra.mrb[0].mxu0 %v2487
  %v2593 = vpop.f32.mrb[0].mxu0
  %v2594 = vadd.f32 0.0, %v2593
  %v2595 = vpop.f32.mrb[0].mxu0
  %v2596 = vpop.f32.mrb[0].mxu0
  %v2597 = vadd.f32 0.0, %v2596
  %v2598 = vpop.f32.mrb[0].mxu0
  %2599 = vmatprep.mubr.bf16.mxu0 0
  %2600 = vmatmul.mubr.bf16.gmra.mrb[0].mxu0 %v2490
  %v2601 = vpop.f32.mrb[0].mxu0
  %v2602 = vadd.f32 0.0, %v2601
  %v2603 = vpop.f32.mrb[0].mxu0
  %v2604 = vpop.f32.mrb[0].mxu0
  %v2605 = vadd.f32 0.0, %v2604
  %v2606 = vpop.f32.mrb[0].mxu0
  %2607 = vmatprep.mubr.bf16.mxu0 0
  %2608 = vmatmul.mubr.bf16.gmra.mrb[0].mxu0 %v2493
  %v2609 = vpop.f32.mrb[0].mxu0
  %v2610 = vadd.f32 0.0, %v2609
  %v2611 = vpop.f32.mrb[0].mxu0
  %v2612 = vpop.f32.mrb[0].mxu0
  %v2613 = vadd.f32 0.0, %v2612
  %v2614 = vpop.f32.mrb[0].mxu0
  %2615 = vmatprep.mubr.bf16.mxu0 0
  %2616 = vmatmul.mubr.bf16.gmra.mrb[0].mxu0 %v2496
  %v2617 = vpop.f32.mrb[0].mxu0
  %v2618 = vadd.f32 0.0, %v2617
  %v2619 = vpop.f32.mrb[0].mxu0
  %v2620 = vpop.f32.mrb[0].mxu0
  %v2621 = vadd.f32 0.0, %v2620
  %v2622 = vpop.f32.mrb[0].mxu0
  %2623 = vmatprep.mubr.bf16.mxu0 0
  %2624 = vmatmul.mubr.bf16.gmra.mrb[0].mxu0 %v2499
  %v2625 = vpop.f32.mrb[0].mxu0
  %v2626 = vadd.f32 0.0, %v2625
  %v2627 = vpop.f32.mrb[0].mxu0
  %v2628 = vpop.f32.mrb[0].mxu0
  %v2629 = vadd.f32 0.0, %v2628
  %v2630 = vpop.f32.mrb[0].mxu0
  %2631 = vmatprep.mubr.bf16.mxu0 0
  %2632 = vmatmul.mubr.bf16.gmra.mrb[0].mxu0 %v2502
  %v2633 = vpop.f32.mrb[0].mxu0
  %v2634 = vadd.f32 0.0, %v2633
  %v2635 = vpop.f32.mrb[0].mxu0
  %v2636 = vpop.f32.mrb[0].mxu0
  %v2637 = vadd.f32 0.0, %v2636
  %v2638 = vpop.f32.mrb[0].mxu0
  %2639 = vmatprep.mubr.bf16.mxu0 0
  %2640 = vmatmul.mubr.bf16.gmra.mrb[0].mxu0 %v2505
  %v2641 = vpop.f32.mrb[0].mxu0
  %v2642 = vadd.f32 0.0, %v2641
  %v2643 = vpop.f32.mrb[0].mxu0
  %v2644 = vpop.f32.mrb[0].mxu0
  %v2645 = vadd.f32 0.0, %v2644
  %v2646 = vpop.f32.mrb[0].mxu0
  %2647 = vmatprep.mubr.bf16.mxu0 0
  %2648 = vmatmul.mubr.bf16.gmra.mrb[0].mxu0 %v2508
  %v2649 = vpop.f32.mrb[0].mxu0
  %v2650 = vadd.f32 0.0, %v2649
  %v2651 = vpop.f32.mrb[0].mxu0
  %v2652 = vpop.f32.mrb[0].mxu0
  %v2653 = vadd.f32 0.0, %v2652
  %v2654 = vpop.f32.mrb[0].mxu0
  %2655 = vmatprep.mubr.bf16.mxu0 0
  %2656 = vmatmul.mubr.bf16.gmra.mrb[0].mxu0 %v2511
  %v2657 = vpop.f32.mrb[0].mxu0
  %v2658 = vadd.f32 0.0, %v2657
  %v2659 = vpop.f32.mrb[0].mxu0
  %v2660 = vpop.f32.mrb[0].mxu0
  %v2661 = vadd.f32 0.0, %v2660
  %v2662 = vpop.f32.mrb[0].mxu0
  %2663 = vmatprep.mubr.bf16.mxu0 0
  %2664 = vmatmul.mubr.bf16.gmra.mrb[0].mxu0 %v2514
  %v2665 = vpop.f32.mrb[0].mxu0
  %v2666 = vadd.f32 0.0, %v2665
  %v2667 = vpop.f32.mrb[0].mxu0
  %v2668 = vpop.f32.mrb[0].mxu0
  %v2669 = vadd.f32 0.0, %v2668
  %v2670 = vpop.f32.mrb[0].mxu0
  %2671 = vmatprep.mubr.bf16.mxu0 0
  %2672 = vmatmul.mubr.bf16.gmra.mrb[0].mxu0 %v2517
  %v2673 = vpop.f32.mrb[0].mxu0
  %v2674 = vadd.f32 0.0, %v2673
  %v2675 = vpop.f32.mrb[0].mxu0
  %v2676 = vpop.f32.mrb[0].mxu0
  %v2677 = vadd.f32 0.0, %v2676
  %v2678 = vpop.f32.mrb[0].mxu0
  %2679 = vdwg.mxu0
  %v2680 = vadd.f32 %v2269, %v2554
  %v2681 = vadd.f32 %v2270, %v2557
  %v2682 = vadd.f32 %v2271, %v2562
  %v2683 = vadd.f32 %v2272, %v2565
  %v2684 = vadd.f32 %v2273, %v2570
  %v2685 = vadd.f32 %v2274, %v2573
  %v2686 = vadd.f32 %v2275, %v2578
  %v2687 = vadd.f32 %v2276, %v2581
  %v2688 = vadd.f32 %v2277, %v2586
  %v2689 = vadd.f32 %v2278, %v2589
  %v2690 = vadd.f32 %v2279, %v2594
  %v2691 = vadd.f32 %v2280, %v2597
  %v2692 = vadd.f32 %v2281, %v2602
  %v2693 = vadd.f32 %v2282, %v2605
  %v2694 = vadd.f32 %v2283, %v2610
  %v2695 = vadd.f32 %v2284, %v2613
  %v2696 = vadd.f32 %v2285, %v2618
  %v2697 = vadd.f32 %v2286, %v2621
  %v2698 = vadd.f32 %v2287, %v2626
  %v2699 = vadd.f32 %v2288, %v2629
  %v2700 = vadd.f32 %v2289, %v2634
  %v2701 = vadd.f32 %v2290, %v2637
  %v2702 = vadd.f32 %v2291, %v2642
  %v2703 = vadd.f32 %v2292, %v2645
  %v2704 = vadd.f32 %v2293, %v2650
  %v2705 = vadd.f32 %v2294, %v2653
  %v2706 = vadd.f32 %v2295, %v2658
  %v2707 = vadd.f32 %v2296, %v2661
  %v2708 = vadd.f32 %v2297, %v2666
  %v2709 = vadd.f32 %v2298, %v2669
  %v2710 = vadd.f32 %v2299, %v2674
  %v2711 = vadd.f32 %v2300, %v2677
  %s2712 = scalar_lea.vmem %s1, 256
  %v2713 = vld [vmem:[%s2712] sm:$0xf]
  %v2714 = vld [vmem:[%s2712 + $0x4] sm:$0xf]
  %v2715 = vld [vmem:[%s2712 + $0x8] sm:$0xf]
  %v2716 = vld [vmem:[%s2712 + $0xc] sm:$0xf]
  %v2717 = vld [vmem:[%s2712 + $0x10] sm:$0xf]
  %v2718 = vld [vmem:[%s2712 + $0x14] sm:$0xf]
  %v2719 = vld [vmem:[%s2712 + $0x18] sm:$0xf]
  %v2720 = vld [vmem:[%s2712 + $0x1c] sm:$0xf]
  %v2721 = vrot.slane %v1709, 3
  %v2722 = vrot.slane %v1710, 3
  %v2723 = vsel %vm1057, %v2721, %v2722
  %v2724 = vrot.slane %v1711, 3
  %v2725 = vsel %vm1057, %v2722, %v2724
  %v2726 = vrot.slane %v1712, 3
  %v2727 = vsel %vm1057, %v2724, %v2726
  %v2728 = vrot.slane %v1713, 3
  %v2729 = vsel %vm1057, %v2726, %v2728
  %v2730 = vrot.slane %v1714, 3
  %v2731 = vsel %vm1057, %v2728, %v2730
  %v2732 = vrot.slane %v1715, 3
  %v2733 = vsel %vm1057, %v2730, %v2732
  %v2734 = vrot.slane %v1716, 3
  %v2735 = vsel %vm1057, %v2732, %v2734
  %v2736 = vrot.slane %v1717, 3
  %v2737 = vsel %vm1057, %v2734, %v2736
  %v2738 = vrot.slane %v1718, 3
  %v2739 = vsel %vm1057, %v2736, %v2738
  %v2740 = vrot.slane %v1719, 3
  %v2741 = vsel %vm1057, %v2738, %v2740
  %v2742 = vrot.slane %v1720, 3
  %v2743 = vsel %vm1057, %v2740, %v2742
  %v2744 = vrot.slane %v1721, 3
  %v2745 = vsel %vm1057, %v2742, %v2744
  %v2746 = vrot.slane %v1722, 3
  %v2747 = vsel %vm1057, %v2744, %v2746
  %v2748 = vrot.slane %v1723, 3
  %v2749 = vsel %vm1057, %v2746, %v2748
  %v2750 = vrot.slane %v1724, 3
  %v2751 = vsel %vm1057, %v2748, %v2750
  %v2752 = vrot.slane %v2001, 3
  %v2753 = vsel %vm1057, %v2750, %v2752
  %v2762 = vunpack.c.l.b16 %v2713
  %v2763 = vunpack.c.l.b16 %v2714
  %v2764 = vunpack.c.l.b16 %v2715
  %v2765 = vunpack.c.l.b16 %v2716
  %v2766 = vunpack.c.l.b16 %v2717
  %v2767 = vunpack.c.l.b16 %v2718
  %v2768 = vunpack.c.l.b16 %v2719
  %v2769 = vunpack.c.l.b16 %v2720
  %v2770 = vpack.c.b16 %v2763, %v2762
  %v2771 = vpack.c.b16 %v2765, %v2764
  %v2772 = vpack.c.b16 %v2767, %v2766
  %v2773 = vpack.c.b16 %v2769, %v2768
  %v2779 = vsel %vm313, %v2723, 0
  %v2782 = vsel %vm313, %v2725, 0
  %v2785 = vsel %vm313, %v2727, 0
  %v2788 = vsel %vm313, %v2729, 0
  %v2791 = vsel %vm313, %v2731, 0
  %v2794 = vsel %vm313, %v2733, 0
  %v2797 = vsel %vm313, %v2735, 0
  %v2800 = vsel %vm313, %v2737, 0
  %v2803 = vsel %vm313, %v2739, 0
  %v2806 = vsel %vm313, %v2741, 0
  %v2809 = vsel %vm313, %v2743, 0
  %v2812 = vsel %vm313, %v2745, 0
  %v2815 = vsel %vm313, %v2747, 0
  %v2818 = vsel %vm313, %v2749, 0
  %v2821 = vsel %vm313, %v2751, 0
  %v2824 = vsel %vm313, %v2753, 0
  %2826 = vmatprep.subr.bf16.mxu0 0
  %2827 = vmatpush1.bf16.msra.mxu0 %v2770
  %2828 = vmatprep.subr.bf16.mxu0 0
  %2829 = vmatpush1.bf16.msra.mxu0 %v2771
  %2830 = vmatprep.subr.bf16.mxu0 0
  %2831 = vmatpush1.bf16.msra.mxu0 %v2772
  %2832 = vmatprep.subr.bf16.mxu0 0
  %2833 = vmatpush1.bf16.msra.mxu0 %v2773
  %2834 = vmatprep.subr.bf16.mxu0 0
  %2835 = vmatpush1.bf16.msra.mxu0 0
  %2836 = vmatprep.subr.bf16.mxu0 0
  %2837 = vmatpush1.bf16.msra.mxu0 0
  %2838 = vmatprep.subr.bf16.mxu0 0
  %2839 = vmatpush1.bf16.msra.mxu0 0
  %2840 = vmatprep.subr.bf16.mxu0 0
  %2841 = vmatpush1.bf16.msra.mxu0 0
  %2842 = vmatprep.subr.bf16.mxu0 0
  %2843 = vmatpush1.bf16.msra.mxu0 0
  %2844 = vmatprep.subr.bf16.mxu0 0
  %2845 = vmatpush1.bf16.msra.mxu0 0
  %2846 = vmatprep.subr.bf16.mxu0 0
  %2847 = vmatpush1.bf16.msra.mxu0 0
  %2848 = vmatprep.subr.bf16.mxu0 0
  %2849 = vmatpush1.bf16.msra.mxu0 0
  %2850 = vmatprep.subr.bf16.mxu0 0
  %2851 = vmatpush1.bf16.msra.mxu0 0
  %2852 = vmatprep.subr.bf16.mxu0 0
  %2853 = vmatpush1.bf16.msra.mxu0 0
  %2854 = vmatprep.subr.bf16.mxu0 0
  %2855 = vmatpush1.bf16.msra.mxu0 0
  %2856 = vmatprep.subr.bf16.mxu0 0
  %2857 = vmatpush1.bf16.msra.mxu0 0
  %2858 = vmatprep.mubr.bf16.mxu0 0
  %2859 = vmatmul.mubr.bf16.gmra.mrb[0].mxu0 %v2779
  %v2860 = vpop.f32.mrb[0].mxu0
  %v2861 = vadd.f32 0.0, %v2860
  %v2862 = vpop.f32.mrb[0].mxu0
  %v2863 = vpop.f32.mrb[0].mxu0
  %v2864 = vadd.f32 0.0, %v2863
  %v2865 = vpop.f32.mrb[0].mxu0
  %2866 = vmatprep.mubr.bf16.mxu0 0
  %2867 = vmatmul.mubr.bf16.gmra.mrb[0].mxu0 %v2782
  %v2868 = vpop.f32.mrb[0].mxu0
  %v2869 = vadd.f32 0.0, %v2868
  %v2870 = vpop.f32.mrb[0].mxu0
  %v2871 = vpop.f32.mrb[0].mxu0
  %v2872 = vadd.f32 0.0, %v2871
  %v2873 = vpop.f32.mrb[0].mxu0
  %2874 = vmatprep.mubr.bf16.mxu0 0
  %2875 = vmatmul.mubr.bf16.gmra.mrb[0].mxu0 %v2785
  %v2876 = vpop.f32.mrb[0].mxu0
  %v2877 = vadd.f32 0.0, %v2876
  %v2878 = vpop.f32.mrb[0].mxu0
  %v2879 = vpop.f32.mrb[0].mxu0
  %v2880 = vadd.f32 0.0, %v2879
  %v2881 = vpop.f32.mrb[0].mxu0
  %2882 = vmatprep.mubr.bf16.mxu0 0
  %2883 = vmatmul.mubr.bf16.gmra.mrb[0].mxu0 %v2788
  %v2884 = vpop.f32.mrb[0].mxu0
  %v2885 = vadd.f32 0.0, %v2884
  %v2886 = vpop.f32.mrb[0].mxu0
  %v2887 = vpop.f32.mrb[0].mxu0
  %v2888 = vadd.f32 0.0, %v2887
  %v2889 = vpop.f32.mrb[0].mxu0
  %2890 = vmatprep.mubr.bf16.mxu0 0
  %2891 = vmatmul.mubr.bf16.gmra.mrb[0].mxu0 %v2791
  %v2892 = vpop.f32.mrb[0].mxu0
  %v2893 = vadd.f32 0.0, %v2892
  %v2894 = vpop.f32.mrb[0].mxu0
  %v2895 = vpop.f32.mrb[0].mxu0
  %v2896 = vadd.f32 0.0, %v2895
  %v2897 = vpop.f32.mrb[0].mxu0
  %2898 = vmatprep.mubr.bf16.mxu0 0
  %2899 = vmatmul.mubr.bf16.gmra.mrb[0].mxu0 %v2794
  %v2900 = vpop.f32.mrb[0].mxu0
  %v2901 = vadd.f32 0.0, %v2900
  %v2902 = vpop.f32.mrb[0].mxu0
  %v2903 = vpop.f32.mrb[0].mxu0
  %v2904 = vadd.f32 0.0, %v2903
  %v2905 = vpop.f32.mrb[0].mxu0
  %2906 = vmatprep.mubr.bf16.mxu0 0
  %2907 = vmatmul.mubr.bf16.gmra.mrb[0].mxu0 %v2797
  %v2908 = vpop.f32.mrb[0].mxu0
  %v2909 = vadd.f32 0.0, %v2908
  %v2910 = vpop.f32.mrb[0].mxu0
  %v2911 = vpop.f32.mrb[0].mxu0
  %v2912 = vadd.f32 0.0, %v2911
  %v2913 = vpop.f32.mrb[0].mxu0
  %2914 = vmatprep.mubr.bf16.mxu0 0
  %2915 = vmatmul.mubr.bf16.gmra.mrb[0].mxu0 %v2800
  %v2916 = vpop.f32.mrb[0].mxu0
  %v2917 = vadd.f32 0.0, %v2916
  %v2918 = vpop.f32.mrb[0].mxu0
  %v2919 = vpop.f32.mrb[0].mxu0
  %v2920 = vadd.f32 0.0, %v2919
  %v2921 = vpop.f32.mrb[0].mxu0
  %2922 = vmatprep.mubr.bf16.mxu0 0
  %2923 = vmatmul.mubr.bf16.gmra.mrb[0].mxu0 %v2803
  %v2924 = vpop.f32.mrb[0].mxu0
  %v2925 = vadd.f32 0.0, %v2924
  %v2926 = vpop.f32.mrb[0].mxu0
  %v2927 = vpop.f32.mrb[0].mxu0
  %v2928 = vadd.f32 0.0, %v2927
  %v2929 = vpop.f32.mrb[0].mxu0
  %2930 = vmatprep.mubr.bf16.mxu0 0
  %2931 = vmatmul.mubr.bf16.gmra.mrb[0].mxu0 %v2806
  %v2932 = vpop.f32.mrb[0].mxu0
  %v2933 = vadd.f32 0.0, %v2932
  %v2934 = vpop.f32.mrb[0].mxu0
  %v2935 = vpop.f32.mrb[0].mxu0
  %v2936 = vadd.f32 0.0, %v2935
  %v2937 = vpop.f32.mrb[0].mxu0
  %2938 = vmatprep.mubr.bf16.mxu0 0
  %2939 = vmatmul.mubr.bf16.gmra.mrb[0].mxu0 %v2809
  %v2940 = vpop.f32.mrb[0].mxu0
  %v2941 = vadd.f32 0.0, %v2940
  %v2942 = vpop.f32.mrb[0].mxu0
  %v2943 = vpop.f32.mrb[0].mxu0
  %v2944 = vadd.f32 0.0, %v2943
  %v2945 = vpop.f32.mrb[0].mxu0
  %2946 = vmatprep.mubr.bf16.mxu0 0
  %2947 = vmatmul.mubr.bf16.gmra.mrb[0].mxu0 %v2812
  %v2948 = vpop.f32.mrb[0].mxu0
  %v2949 = vadd.f32 0.0, %v2948
  %v2950 = vpop.f32.mrb[0].mxu0
  %v2951 = vpop.f32.mrb[0].mxu0
  %v2952 = vadd.f32 0.0, %v2951
  %v2953 = vpop.f32.mrb[0].mxu0
  %2954 = vmatprep.mubr.bf16.mxu0 0
  %2955 = vmatmul.mubr.bf16.gmra.mrb[0].mxu0 %v2815
  %v2956 = vpop.f32.mrb[0].mxu0
  %v2957 = vadd.f32 0.0, %v2956
  %v2958 = vpop.f32.mrb[0].mxu0
  %v2959 = vpop.f32.mrb[0].mxu0
  %v2960 = vadd.f32 0.0, %v2959
  %v2961 = vpop.f32.mrb[0].mxu0
  %2962 = vmatprep.mubr.bf16.mxu0 0
  %2963 = vmatmul.mubr.bf16.gmra.mrb[0].mxu0 %v2818
  %v2964 = vpop.f32.mrb[0].mxu0
  %v2965 = vadd.f32 0.0, %v2964
  %v2966 = vpop.f32.mrb[0].mxu0
  %v2967 = vpop.f32.mrb[0].mxu0
  %v2968 = vadd.f32 0.0, %v2967
  %v2969 = vpop.f32.mrb[0].mxu0
  %2970 = vmatprep.mubr.bf16.mxu0 0
  %2971 = vmatmul.mubr.bf16.gmra.mrb[0].mxu0 %v2821
  %v2972 = vpop.f32.mrb[0].mxu0
  %v2973 = vadd.f32 0.0, %v2972
  %v2974 = vpop.f32.mrb[0].mxu0
  %v2975 = vpop.f32.mrb[0].mxu0
  %v2976 = vadd.f32 0.0, %v2975
  %v2977 = vpop.f32.mrb[0].mxu0
  %2978 = vmatprep.mubr.bf16.mxu0 0
  %2979 = vmatmul.mubr.bf16.gmra.mrb[0].mxu0 %v2824
  %v2980 = vpop.f32.mrb[0].mxu0
  %v2981 = vadd.f32 0.0, %v2980
  %v2982 = vpop.f32.mrb[0].mxu0
  %v2983 = vpop.f32.mrb[0].mxu0
  %v2984 = vadd.f32 0.0, %v2983
  %v2985 = vpop.f32.mrb[0].mxu0
  %2986 = vdwg.mxu0
  %v2987 = vadd.f32 %v2680, %v2861
  %v2988 = vadd.f32 %v2681, %v2864
  %v2989 = vadd.f32 %v2682, %v2869
  %v2990 = vadd.f32 %v2683, %v2872
  %v2991 = vadd.f32 %v2684, %v2877
  %v2992 = vadd.f32 %v2685, %v2880
  %v2993 = vadd.f32 %v2686, %v2885
  %v2994 = vadd.f32 %v2687, %v2888
  %v2995 = vadd.f32 %v2688, %v2893
  %v2996 = vadd.f32 %v2689, %v2896
  %v2997 = vadd.f32 %v2690, %v2901
  %v2998 = vadd.f32 %v2691, %v2904
  %v2999 = vadd.f32 %v2692, %v2909
  %v3000 = vadd.f32 %v2693, %v2912
  %v3001 = vadd.f32 %v2694, %v2917
  %v3002 = vadd.f32 %v2695, %v2920
  %v3003 = vadd.f32 %v2696, %v2925
  %v3004 = vadd.f32 %v2697, %v2928
  %v3005 = vadd.f32 %v2698, %v2933
  %v3006 = vadd.f32 %v2699, %v2936
  %v3007 = vadd.f32 %v2700, %v2941
  %v3008 = vadd.f32 %v2701, %v2944
  %v3009 = vadd.f32 %v2702, %v2949
  %v3010 = vadd.f32 %v2703, %v2952
  %v3011 = vadd.f32 %v2704, %v2957
  %v3012 = vadd.f32 %v2705, %v2960
  %v3013 = vadd.f32 %v2706, %v2965
  %v3014 = vadd.f32 %v2707, %v2968
  %v3015 = vadd.f32 %v2708, %v2973
  %v3016 = vadd.f32 %v2709, %v2976
  %v3017 = vadd.f32 %v2710, %v2981
  %v3018 = vadd.f32 %v2711, %v2984
  %v3019 = vld [vmem:[%s2] sm:$0xff]
  %v3020 = vld [vmem:[%s2 + $0x8] sm:$0xff]
  %v3021 = vld [vmem:[%s2 + $0x10] sm:$0xff]
  %v3022 = vld [vmem:[%s2 + $0x18] sm:$0xff]
  %v3023 = vld [vmem:[%s2 + $0x20] sm:$0xff]
  %v3024 = vld [vmem:[%s2 + $0x28] sm:$0xff]
  %v3025 = vld [vmem:[%s2 + $0x30] sm:$0xff]
  %v3026 = vld [vmem:[%s2 + $0x38] sm:$0xff]
  %v3027 = vld [vmem:[%s2 + $0x40] sm:$0xff]
  %v3028 = vld [vmem:[%s2 + $0x48] sm:$0xff]
  %v3029 = vld [vmem:[%s2 + $0x50] sm:$0xff]
  %v3030 = vld [vmem:[%s2 + $0x58] sm:$0xff]
  %v3031 = vld [vmem:[%s2 + $0x60] sm:$0xff]
  %v3032 = vld [vmem:[%s2 + $0x68] sm:$0xff]
  %v3033 = vld [vmem:[%s2 + $0x70] sm:$0xff]
  %v3034 = vld [vmem:[%s2 + $0x78] sm:$0xff]
  %v3035 = vld [vmem:[%s2 + $0x80] sm:$0xff]
  %v3036 = vld [vmem:[%s2 + $0x88] sm:$0xff]
  %v3037 = vld [vmem:[%s2 + $0x90] sm:$0xff]
  %v3038 = vld [vmem:[%s2 + $0x98] sm:$0xff]
  %v3039 = vld [vmem:[%s2 + $0xa0] sm:$0xff]
  %v3040 = vld [vmem:[%s2 + $0xa8] sm:$0xff]
  %v3041 = vld [vmem:[%s2 + $0xb0] sm:$0xff]
  %v3042 = vld [vmem:[%s2 + $0xb8] sm:$0xff]
  %v3043 = vld [vmem:[%s2 + $0xc0] sm:$0xff]
  %v3044 = vld [vmem:[%s2 + $0xc8] sm:$0xff]
  %v3045 = vld [vmem:[%s2 + $0xd0] sm:$0xff]
  %v3046 = vld [vmem:[%s2 + $0xd8] sm:$0xff]
  %v3047 = vld [vmem:[%s2 + $0xe0] sm:$0xff]
  %v3048 = vld [vmem:[%s2 + $0xe8] sm:$0xff]
  %v3049 = vld [vmem:[%s2 + $0xf0] sm:$0xff]
  %v3050 = vld [vmem:[%s2 + $0xf8] sm:$0xff]
  %3052 = vset.pattern.permute.xlu0 0
  %3053 = vperm.xlu0 %3052, %v3019
  %v3054 = vpop.permute.xlu0 %3053
  %3057 = vset.pattern.permute.xlu0 0
  %3058 = vperm.xlu0 %3057, %v3020
  %v3059 = vpop.permute.xlu0 %3058
  %3062 = vset.pattern.permute.xlu0 0
  %3063 = vperm.xlu0 %3062, %v3021
  %v3064 = vpop.permute.xlu0 %3063
  %3067 = vset.pattern.permute.xlu0 0
  %3068 = vperm.xlu0 %3067, %v3022
  %v3069 = vpop.permute.xlu0 %3068
  %3072 = vset.pattern.permute.xlu0 0
  %3073 = vperm.xlu0 %3072, %v3023
  %v3074 = vpop.permute.xlu0 %3073
  %3077 = vset.pattern.permute.xlu0 0
  %3078 = vperm.xlu0 %3077, %v3024
  %v3079 = vpop.permute.xlu0 %3078
  %3082 = vset.pattern.permute.xlu0 0
  %3083 = vperm.xlu0 %3082, %v3025
  %v3084 = vpop.permute.xlu0 %3083
  %3087 = vset.pattern.permute.xlu0 0
  %3088 = vperm.xlu0 %3087, %v3026
  %v3089 = vpop.permute.xlu0 %3088
  %3092 = vset.pattern.permute.xlu0 0
  %3093 = vperm.xlu0 %3092, %v3027
  %v3094 = vpop.permute.xlu0 %3093
  %3097 = vset.pattern.permute.xlu0 0
  %3098 = vperm.xlu0 %3097, %v3028
  %v3099 = vpop.permute.xlu0 %3098
  %3102 = vset.pattern.permute.xlu0 0
  %3103 = vperm.xlu0 %3102, %v3029
  %v3104 = vpop.permute.xlu0 %3103
  %3107 = vset.pattern.permute.xlu0 0
  %3108 = vperm.xlu0 %3107, %v3030
  %v3109 = vpop.permute.xlu0 %3108
  %3112 = vset.pattern.permute.xlu0 0
  %3113 = vperm.xlu0 %3112, %v3031
  %v3114 = vpop.permute.xlu0 %3113
  %3117 = vset.pattern.permute.xlu0 0
  %3118 = vperm.xlu0 %3117, %v3032
  %v3119 = vpop.permute.xlu0 %3118
  %3122 = vset.pattern.permute.xlu0 0
  %3123 = vperm.xlu0 %3122, %v3033
  %v3124 = vpop.permute.xlu0 %3123
  %3127 = vset.pattern.permute.xlu0 0
  %3128 = vperm.xlu0 %3127, %v3034
  %v3129 = vpop.permute.xlu0 %3128
  %3132 = vset.pattern.permute.xlu0 0
  %3133 = vperm.xlu0 %3132, %v3035
  %v3134 = vpop.permute.xlu0 %3133
  %3137 = vset.pattern.permute.xlu0 0
  %3138 = vperm.xlu0 %3137, %v3036
  %v3139 = vpop.permute.xlu0 %3138
  %3142 = vset.pattern.permute.xlu0 0
  %3143 = vperm.xlu0 %3142, %v3037
  %v3144 = vpop.permute.xlu0 %3143
  %3147 = vset.pattern.permute.xlu0 0
  %3148 = vperm.xlu0 %3147, %v3038
  %v3149 = vpop.permute.xlu0 %3148
  %3152 = vset.pattern.permute.xlu0 0
  %3153 = vperm.xlu0 %3152, %v3039
  %v3154 = vpop.permute.xlu0 %3153
  %3157 = vset.pattern.permute.xlu0 0
  %3158 = vperm.xlu0 %3157, %v3040
  %v3159 = vpop.permute.xlu0 %3158
  %3162 = vset.pattern.permute.xlu0 0
  %3163 = vperm.xlu0 %3162, %v3041
  %v3164 = vpop.permute.xlu0 %3163
  %3167 = vset.pattern.permute.xlu0 0
  %3168 = vperm.xlu0 %3167, %v3042
  %v3169 = vpop.permute.xlu0 %3168
  %3172 = vset.pattern.permute.xlu0 0
  %3173 = vperm.xlu0 %3172, %v3043
  %v3174 = vpop.permute.xlu0 %3173
  %3177 = vset.pattern.permute.xlu0 0
  %3178 = vperm.xlu0 %3177, %v3044
  %v3179 = vpop.permute.xlu0 %3178
  %3182 = vset.pattern.permute.xlu0 0
  %3183 = vperm.xlu0 %3182, %v3045
  %v3184 = vpop.permute.xlu0 %3183
  %3187 = vset.pattern.permute.xlu0 0
  %3188 = vperm.xlu0 %3187, %v3046
  %v3189 = vpop.permute.xlu0 %3188
  %3192 = vset.pattern.permute.xlu0 0
  %3193 = vperm.xlu0 %3192, %v3047
  %v3194 = vpop.permute.xlu0 %3193
  %3197 = vset.pattern.permute.xlu0 0
  %3198 = vperm.xlu0 %3197, %v3048
  %v3199 = vpop.permute.xlu0 %3198
  %3202 = vset.pattern.permute.xlu0 0
  %3203 = vperm.xlu0 %3202, %v3049
  %v3204 = vpop.permute.xlu0 %3203
  %3207 = vset.pattern.permute.xlu0 0
  %3208 = vperm.xlu0 %3207, %v3050
  %v3209 = vpop.permute.xlu0 %3208
  %v3211 = vmul.f32 %v2987, %v3054
  %v3212 = vmul.f32 %v2988, %v3059
  %v3213 = vmul.f32 %v2989, %v3064
  %v3214 = vmul.f32 %v2990, %v3069
  %v3215 = vmul.f32 %v2991, %v3074
  %v3216 = vmul.f32 %v2992, %v3079
  %v3217 = vmul.f32 %v2993, %v3084
  %v3218 = vmul.f32 %v2994, %v3089
  %v3219 = vmul.f32 %v2995, %v3094
  %v3220 = vmul.f32 %v2996, %v3099
  %v3221 = vmul.f32 %v2997, %v3104
  %v3222 = vmul.f32 %v2998, %v3109
  %v3223 = vmul.f32 %v2999, %v3114
  %v3224 = vmul.f32 %v3000, %v3119
  %v3225 = vmul.f32 %v3001, %v3124
  %v3226 = vmul.f32 %v3002, %v3129
  %v3227 = vmul.f32 %v3003, %v3134
  %v3228 = vmul.f32 %v3004, %v3139
  %v3229 = vmul.f32 %v3005, %v3144
  %v3230 = vmul.f32 %v3006, %v3149
  %v3231 = vmul.f32 %v3007, %v3154
  %v3232 = vmul.f32 %v3008, %v3159
  %v3233 = vmul.f32 %v3009, %v3164
  %v3234 = vmul.f32 %v3010, %v3169
  %v3235 = vmul.f32 %v3011, %v3174
  %v3236 = vmul.f32 %v3012, %v3179
  %v3237 = vmul.f32 %v3013, %v3184
  %v3238 = vmul.f32 %v3014, %v3189
  %v3239 = vmul.f32 %v3015, %v3194
  %v3240 = vmul.f32 %v3016, %v3199
  %v3241 = vmul.f32 %v3017, %v3204
  %v3242 = vmul.f32 %v3018, %v3209
  %v3243 = vsel %vm313, %v3211, 0.0
  %v3244 = vsel %vm313, %v3212, 0.0
  %v3245 = vadd.f32 %v3243, %v3244
  %v3246 = vsel %vm313, %v3213, 0.0
  %v3247 = vadd.f32 %v3245, %v3246
  %v3248 = vsel %vm313, %v3214, 0.0
  %v3249 = vadd.f32 %v3247, %v3248
  %v3250 = vsel %vm313, %v3215, 0.0
  %v3251 = vadd.f32 %v3249, %v3250
  %v3252 = vsel %vm313, %v3216, 0.0
  %v3253 = vadd.f32 %v3251, %v3252
  %v3254 = vsel %vm313, %v3217, 0.0
  %v3255 = vadd.f32 %v3253, %v3254
  %v3256 = vsel %vm313, %v3218, 0.0
  %v3257 = vadd.f32 %v3255, %v3256
  %v3258 = vsel %vm313, %v3219, 0.0
  %v3259 = vadd.f32 %v3257, %v3258
  %v3260 = vsel %vm313, %v3220, 0.0
  %v3261 = vadd.f32 %v3259, %v3260
  %v3262 = vsel %vm313, %v3221, 0.0
  %v3263 = vadd.f32 %v3261, %v3262
  %v3264 = vsel %vm313, %v3222, 0.0
  %v3265 = vadd.f32 %v3263, %v3264
  %v3266 = vsel %vm313, %v3223, 0.0
  %v3267 = vadd.f32 %v3265, %v3266
  %v3268 = vsel %vm313, %v3224, 0.0
  %v3269 = vadd.f32 %v3267, %v3268
  %v3270 = vsel %vm313, %v3225, 0.0
  %v3271 = vadd.f32 %v3269, %v3270
  %v3272 = vsel %vm313, %v3226, 0.0
  %v3273 = vadd.f32 %v3271, %v3272
  %v3274 = vsel %vm313, %v3227, 0.0
  %v3275 = vadd.f32 %v3273, %v3274
  %v3276 = vsel %vm313, %v3228, 0.0
  %v3277 = vadd.f32 %v3275, %v3276
  %v3278 = vsel %vm313, %v3229, 0.0
  %v3279 = vadd.f32 %v3277, %v3278
  %v3280 = vsel %vm313, %v3230, 0.0
  %v3281 = vadd.f32 %v3279, %v3280
  %v3282 = vsel %vm313, %v3231, 0.0
  %v3283 = vadd.f32 %v3281, %v3282
  %v3284 = vsel %vm313, %v3232, 0.0
  %v3285 = vadd.f32 %v3283, %v3284
  %v3286 = vsel %vm313, %v3233, 0.0
  %v3287 = vadd.f32 %v3285, %v3286
  %v3288 = vsel %vm313, %v3234, 0.0
  %v3289 = vadd.f32 %v3287, %v3288
  %v3290 = vsel %vm313, %v3235, 0.0
  %v3291 = vadd.f32 %v3289, %v3290
  %v3292 = vsel %vm313, %v3236, 0.0
  %v3293 = vadd.f32 %v3291, %v3292
  %v3294 = vsel %vm313, %v3237, 0.0
  %v3295 = vadd.f32 %v3293, %v3294
  %v3296 = vsel %vm313, %v3238, 0.0
  %v3297 = vadd.f32 %v3295, %v3296
  %v3298 = vsel %vm313, %v3239, 0.0
  %v3299 = vadd.f32 %v3297, %v3298
  %v3300 = vsel %vm313, %v3240, 0.0
  %v3301 = vadd.f32 %v3299, %v3300
  %v3302 = vsel %vm313, %v3241, 0.0
  %v3303 = vadd.f32 %v3301, %v3302
  %v3304 = vsel %vm313, %v3242, 0.0
  %v3305 = vadd.f32 %v3303, %v3304
  %v3306 = vrot.slane %v3305, 4
  %v3307 = vadd.f32 %v3305, %v3306
  %v3308 = vrot.slane %v3307, 2
  %v3309 = vadd.f32 %v3307, %v3308
  %v3310 = vrot.slane %v3309, 1
  %v3311 = vadd.f32 %v3309, %v3310
  %vm3312 = vcmask 516096
  %3313 = vst.msk [vmem:[%s4] sm:$0x1] %vm3312, %v3311
  %v3314 = vmul.f32 %v3211, %v2987
  %v3315 = vmul.f32 %v3212, %v2988
  %v3316 = vmul.f32 %v3213, %v2989
  %v3317 = vmul.f32 %v3214, %v2990
  %v3318 = vmul.f32 %v3215, %v2991
  %v3319 = vmul.f32 %v3216, %v2992
  %v3320 = vmul.f32 %v3217, %v2993
  %v3321 = vmul.f32 %v3218, %v2994
  %v3322 = vmul.f32 %v3219, %v2995
  %v3323 = vmul.f32 %v3220, %v2996
  %v3324 = vmul.f32 %v3221, %v2997
  %v3325 = vmul.f32 %v3222, %v2998
  %v3326 = vmul.f32 %v3223, %v2999
  %v3327 = vmul.f32 %v3224, %v3000
  %v3328 = vmul.f32 %v3225, %v3001
  %v3329 = vmul.f32 %v3226, %v3002
  %v3330 = vmul.f32 %v3227, %v3003
  %v3331 = vmul.f32 %v3228, %v3004
  %v3332 = vmul.f32 %v3229, %v3005
  %v3333 = vmul.f32 %v3230, %v3006
  %v3334 = vmul.f32 %v3231, %v3007
  %v3335 = vmul.f32 %v3232, %v3008
  %v3336 = vmul.f32 %v3233, %v3009
  %v3337 = vmul.f32 %v3234, %v3010
  %v3338 = vmul.f32 %v3235, %v3011
  %v3339 = vmul.f32 %v3236, %v3012
  %v3340 = vmul.f32 %v3237, %v3013
  %v3341 = vmul.f32 %v3238, %v3014
  %v3342 = vmul.f32 %v3239, %v3015
  %v3343 = vmul.f32 %v3240, %v3016
  %v3344 = vmul.f32 %v3241, %v3017
  %v3345 = vmul.f32 %v3242, %v3018
  %v3346 = vsel %vm313, %v3314, 0.0
  %v3347 = vsel %vm313, %v3315, 0.0
  %v3348 = vadd.f32 %v3346, %v3347
  %v3349 = vsel %vm313, %v3316, 0.0
  %v3350 = vadd.f32 %v3348, %v3349
  %v3351 = vsel %vm313, %v3317, 0.0
  %v3352 = vadd.f32 %v3350, %v3351
  %v3353 = vsel %vm313, %v3318, 0.0
  %v3354 = vadd.f32 %v3352, %v3353
  %v3355 = vsel %vm313, %v3319, 0.0
  %v3356 = vadd.f32 %v3354, %v3355
  %v3357 = vsel %vm313, %v3320, 0.0
  %v3358 = vadd.f32 %v3356, %v3357
  %v3359 = vsel %vm313, %v3321, 0.0
  %v3360 = vadd.f32 %v3358, %v3359
  %v3361 = vsel %vm313, %v3322, 0.0
  %v3362 = vadd.f32 %v3360, %v3361
  %v3363 = vsel %vm313, %v3323, 0.0
  %v3364 = vadd.f32 %v3362, %v3363
  %v3365 = vsel %vm313, %v3324, 0.0
  %v3366 = vadd.f32 %v3364, %v3365
  %v3367 = vsel %vm313, %v3325, 0.0
  %v3368 = vadd.f32 %v3366, %v3367
  %v3369 = vsel %vm313, %v3326, 0.0
  %v3370 = vadd.f32 %v3368, %v3369
  %v3371 = vsel %vm313, %v3327, 0.0
  %v3372 = vadd.f32 %v3370, %v3371
  %v3373 = vsel %vm313, %v3328, 0.0
  %v3374 = vadd.f32 %v3372, %v3373
  %v3375 = vsel %vm313, %v3329, 0.0
  %v3376 = vadd.f32 %v3374, %v3375
  %v3377 = vsel %vm313, %v3330, 0.0
  %v3378 = vadd.f32 %v3376, %v3377
  %v3379 = vsel %vm313, %v3331, 0.0
  %v3380 = vadd.f32 %v3378, %v3379
  %v3381 = vsel %vm313, %v3332, 0.0
  %v3382 = vadd.f32 %v3380, %v3381
  %v3383 = vsel %vm313, %v3333, 0.0
  %v3384 = vadd.f32 %v3382, %v3383
  %v3385 = vsel %vm313, %v3334, 0.0
  %v3386 = vadd.f32 %v3384, %v3385
  %v3387 = vsel %vm313, %v3335, 0.0
  %v3388 = vadd.f32 %v3386, %v3387
  %v3389 = vsel %vm313, %v3336, 0.0
  %v3390 = vadd.f32 %v3388, %v3389
  %v3391 = vsel %vm313, %v3337, 0.0
  %v3392 = vadd.f32 %v3390, %v3391
  %v3393 = vsel %vm313, %v3338, 0.0
  %v3394 = vadd.f32 %v3392, %v3393
  %v3395 = vsel %vm313, %v3339, 0.0
  %v3396 = vadd.f32 %v3394, %v3395
  %v3397 = vsel %vm313, %v3340, 0.0
  %v3398 = vadd.f32 %v3396, %v3397
  %v3399 = vsel %vm313, %v3341, 0.0
  %v3400 = vadd.f32 %v3398, %v3399
  %v3401 = vsel %vm313, %v3342, 0.0
  %v3402 = vadd.f32 %v3400, %v3401
  %v3403 = vsel %vm313, %v3343, 0.0
  %v3404 = vadd.f32 %v3402, %v3403
  %v3405 = vsel %vm313, %v3344, 0.0
  %v3406 = vadd.f32 %v3404, %v3405
  %v3407 = vsel %vm313, %v3345, 0.0
  %v3408 = vadd.f32 %v3406, %v3407
  %v3409 = vrot.slane %v3408, 4
  %v3410 = vadd.f32 %v3408, %v3409
  %v3411 = vrot.slane %v3410, 2
  %v3412 = vadd.f32 %v3410, %v3411
  %v3413 = vrot.slane %v3412, 1
  %v3414 = vadd.f32 %v3412, %v3413
  %3415 = vst.msk [vmem:[%s4 + $0x1] sm:$0x1] %vm3312, %v3414
  %v3416 = vpack.c.bf16 %v2988, %v2987
  %v3417 = vpack.c.bf16 %v2990, %v2989
  %v3418 = vpack.c.bf16 %v2992, %v2991
  %v3419 = vpack.c.bf16 %v2994, %v2993
  %v3420 = vpack.c.bf16 %v2996, %v2995
  %v3421 = vpack.c.bf16 %v2998, %v2997
  %v3422 = vpack.c.bf16 %v3000, %v2999
  %v3423 = vpack.c.bf16 %v3002, %v3001
  %v3424 = vpack.c.bf16 %v3004, %v3003
  %v3425 = vpack.c.bf16 %v3006, %v3005
  %v3426 = vpack.c.bf16 %v3008, %v3007
  %v3427 = vpack.c.bf16 %v3010, %v3009
  %v3428 = vpack.c.bf16 %v3012, %v3011
  %v3429 = vpack.c.bf16 %v3014, %v3013
  %v3430 = vpack.c.bf16 %v3016, %v3015
  %v3431 = vpack.c.bf16 %v3018, %v3017
  %v3448 = vunpack.c.l.b16 %v3416
  %v3449 = vunpack.c.h.b16 %v3416
  %v3450 = vunpack.c.l.b16 %v3417
  %v3451 = vunpack.c.h.b16 %v3417
  %v3452 = vunpack.c.l.b16 %v3418
  %v3453 = vunpack.c.h.b16 %v3418
  %v3454 = vunpack.c.l.b16 %v3419
  %v3455 = vunpack.c.h.b16 %v3419
  %v3456 = vunpack.c.l.b16 %v3420
  %v3457 = vunpack.c.h.b16 %v3420
  %v3458 = vunpack.c.l.b16 %v3421
  %v3459 = vunpack.c.h.b16 %v3421
  %v3460 = vunpack.c.l.b16 %v3422
  %v3461 = vunpack.c.h.b16 %v3422
  %v3462 = vunpack.c.l.b16 %v3423
  %v3463 = vunpack.c.h.b16 %v3423
  %v3464 = vunpack.c.l.b16 %v3424
  %v3465 = vunpack.c.h.b16 %v3424
  %v3466 = vunpack.c.l.b16 %v3425
  %v3467 = vunpack.c.h.b16 %v3425
  %v3468 = vunpack.c.l.b16 %v3426
  %v3469 = vunpack.c.h.b16 %v3426
  %v3470 = vunpack.c.l.b16 %v3427
  %v3471 = vunpack.c.h.b16 %v3427
  %v3472 = vunpack.c.l.b16 %v3428
  %v3473 = vunpack.c.h.b16 %v3428
  %v3474 = vunpack.c.l.b16 %v3429
  %v3475 = vunpack.c.h.b16 %v3429
  %v3476 = vunpack.c.l.b16 %v3430
  %v3477 = vunpack.c.h.b16 %v3430
  %v3478 = vunpack.c.l.b16 %v3431
  %v3479 = vunpack.c.h.b16 %v3431
  %v3480 = vpack.c.b16 %v3448, %v3448
  %v3481 = vpack.c.b16 %v3449, %v3449
  %v3482 = vpack.c.b16 %v3450, %v3450
  %v3483 = vpack.c.b16 %v3451, %v3451
  %v3484 = vpack.c.b16 %v3452, %v3452
  %v3485 = vpack.c.b16 %v3453, %v3453
  %v3486 = vpack.c.b16 %v3454, %v3454
  %v3487 = vpack.c.b16 %v3455, %v3455
  %v3488 = vpack.c.b16 %v3456, %v3456
  %v3489 = vpack.c.b16 %v3457, %v3457
  %v3490 = vpack.c.b16 %v3458, %v3458
  %v3491 = vpack.c.b16 %v3459, %v3459
  %v3492 = vpack.c.b16 %v3460, %v3460
  %v3493 = vpack.c.b16 %v3461, %v3461
  %v3494 = vpack.c.b16 %v3462, %v3462
  %v3495 = vpack.c.b16 %v3463, %v3463
  %v3496 = vpack.c.b16 %v3464, %v3464
  %v3497 = vpack.c.b16 %v3465, %v3465
  %v3498 = vpack.c.b16 %v3466, %v3466
  %v3499 = vpack.c.b16 %v3467, %v3467
  %v3500 = vpack.c.b16 %v3468, %v3468
  %v3501 = vpack.c.b16 %v3469, %v3469
  %v3502 = vpack.c.b16 %v3470, %v3470
  %v3503 = vpack.c.b16 %v3471, %v3471
  %v3504 = vpack.c.b16 %v3472, %v3472
  %v3505 = vpack.c.b16 %v3473, %v3473
  %v3506 = vpack.c.b16 %v3474, %v3474
  %v3507 = vpack.c.b16 %v3475, %v3475
  %v3508 = vpack.c.b16 %v3476, %v3476
  %v3509 = vpack.c.b16 %v3477, %v3477
  %v3510 = vpack.c.b16 %v3478, %v3478
  %v3511 = vpack.c.b16 %v3479, %v3479
  %vm3544 = vcmask 519168
  %3545 = vst.msk [vmem:[%s3] sm:$0xf] %vm3544, %v3480
  %3546 = vst.msk [vmem:[%s3 + $0x4] sm:$0xf] %vm3544, %v3481
  %3547 = vst.msk [vmem:[%s3 + $0x8] sm:$0xf] %vm3544, %v3482
  %3548 = vst.msk [vmem:[%s3 + $0xc] sm:$0xf] %vm3544, %v3483
  %3549 = vst.msk [vmem:[%s3 + $0x10] sm:$0xf] %vm3544, %v3484
  %3550 = vst.msk [vmem:[%s3 + $0x14] sm:$0xf] %vm3544, %v3485
  %3551 = vst.msk [vmem:[%s3 + $0x18] sm:$0xf] %vm3544, %v3486
  %3552 = vst.msk [vmem:[%s3 + $0x1c] sm:$0xf] %vm3544, %v3487
  %3553 = vst.msk [vmem:[%s3 + $0x20] sm:$0xf] %vm3544, %v3488
  %3554 = vst.msk [vmem:[%s3 + $0x24] sm:$0xf] %vm3544, %v3489
  %3555 = vst.msk [vmem:[%s3 + $0x28] sm:$0xf] %vm3544, %v3490
  %3556 = vst.msk [vmem:[%s3 + $0x2c] sm:$0xf] %vm3544, %v3491
  %3557 = vst.msk [vmem:[%s3 + $0x30] sm:$0xf] %vm3544, %v3492
  %3558 = vst.msk [vmem:[%s3 + $0x34] sm:$0xf] %vm3544, %v3493
  %3559 = vst.msk [vmem:[%s3 + $0x38] sm:$0xf] %vm3544, %v3494
  %3560 = vst.msk [vmem:[%s3 + $0x3c] sm:$0xf] %vm3544, %v3495
  %3561 = vst.msk [vmem:[%s3 + $0x40] sm:$0xf] %vm3544, %v3496
  %3562 = vst.msk [vmem:[%s3 + $0x44] sm:$0xf] %vm3544, %v3497
  %3563 = vst.msk [vmem:[%s3 + $0x48] sm:$0xf] %vm3544, %v3498
  %3564 = vst.msk [vmem:[%s3 + $0x4c] sm:$0xf] %vm3544, %v3499
  %3565 = vst.msk [vmem:[%s3 + $0x50] sm:$0xf] %vm3544, %v3500
  %3566 = vst.msk [vmem:[%s3 + $0x54] sm:$0xf] %vm3544, %v3501
  %3567 = vst.msk [vmem:[%s3 + $0x58] sm:$0xf] %vm3544, %v3502
  %3568 = vst.msk [vmem:[%s3 + $0x5c] sm:$0xf] %vm3544, %v3503
  %3569 = vst.msk [vmem:[%s3 + $0x60] sm:$0xf] %vm3544, %v3504
  %3570 = vst.msk [vmem:[%s3 + $0x64] sm:$0xf] %vm3544, %v3505
  %3571 = vst.msk [vmem:[%s3 + $0x68] sm:$0xf] %vm3544, %v3506
  %3572 = vst.msk [vmem:[%s3 + $0x6c] sm:$0xf] %vm3544, %v3507
  %3573 = vst.msk [vmem:[%s3 + $0x70] sm:$0xf] %vm3544, %v3508
  %3574 = vst.msk [vmem:[%s3 + $0x74] sm:$0xf] %vm3544, %v3509
  %3575 = vst.msk [vmem:[%s3 + $0x78] sm:$0xf] %vm3544, %v3510
  %3576 = vst.msk [vmem:[%s3 + $0x7c] sm:$0xf] %vm3544, %v3511
  // Predicated region
  $region14: #{cnn18_forward.23} parent=0 // pred_check
    _
  $region15: #{cnn18_forward.23} parent=0 // pred_check_branch
    %3578 = sbr.rel (0) target = $region17
  $region16: #{cnn18_forward.23} parent=0 // pred_region
    _
  $region17: #{cnn18_forward.23} parent=0 // pred_fallthru
    _
  // Predicated region
  $region18: #{cnn18_forward.23} parent=0 // pred_check
    _
  $region19: #{cnn18_forward.23} parent=0 // pred_check_branch
    %3580 = sbr.rel (0) target = $region21
  $region20: #{cnn18_forward.23} parent=0 // pred_region
    _
  $region21: #{cnn18_forward.23} parent=0 // pred_fallthru
    _
  // Predicated region
  $region22: #{cnn18_forward.23} parent=0 // pred_check
    _
  $region23: #{cnn18_forward.23} parent=0 // pred_check_branch
    %3582 = sbr.rel (0) target = $region25
  $region24: #{cnn18_forward.23} parent=0 // pred_region
    _
  $region25: #{cnn18_forward.23} parent=0 // pred_fallthru
    _
  // Predicated region
  $region26: #{cnn18_forward.23} parent=0 // pred_check
    _
  $region27: #{cnn18_forward.23} parent=0 // pred_check_branch
    %3584 = sbr.rel (0) target = $region29
  $region28: #{cnn18_forward.23} parent=0 // pred_region
    _
  $region29: #{cnn18_forward.23} parent=0 // pred_fallthru
    _

// kernel: cnn18_forward.31
$region0: #{cnn18_forward.31}
  #allocation0 [shape = 'u32[]', space=smem, size = 0x4, offset = 0x4, fixed_abs, tag = 'smem constant byte address 0x4 - core index']
  #allocation1 [shape = 'u32[144,128]{1,0:T(1,128)}', space=vmem, size = 0x12000, scoped, tag = 'internal scratch']
  %s0 = inlined_call_operand.vmem [shape: bf16[272,64], index: 0, kind: input, shape index: {}]
  %s1 = inlined_call_operand.vmem [shape: bf16[9,64,128], index: 1, kind: input, shape index: {}]
  %s2 = inlined_call_operand.vmem [shape: f32[256,1], index: 2, kind: input, shape index: {}]
  %s3 = inlined_call_operand.vmem [shape: bf16[256,128], index: 3, kind: output, shape index: {0}]
  %s4 = inlined_call_operand.vmem [shape: f32[8,128], index: 4, kind: output, shape index: {1}]
  %5 = xla_tuple %s3, %s4
  %s6 = sld [smem:[#allocation0]]
  $region30: #{cnn18_forward.31} parent=0
    _
  %s8 = ssub.s32 1, %s6
  %s9 = scalar_select 0, %s8, %s6
  // Predicated region
  $region2: #{cnn18_forward.31} parent=0 // pred_check
    _
  $region3: #{cnn18_forward.31} parent=0 // pred_check_branch
    %11 = sbr.rel (0) target = $region5
  $region4: #{cnn18_forward.31} parent=0 // pred_region
    _
  $region5: #{cnn18_forward.31} parent=0 // pred_fallthru
    _
  // Predicated region
  $region6: #{cnn18_forward.31} parent=0 // pred_check
    _
  $region7: #{cnn18_forward.31} parent=0 // pred_check_branch
    %13 = sbr.rel (0) target = $region9
  $region8: #{cnn18_forward.31} parent=0 // pred_region
    _
  $region9: #{cnn18_forward.31} parent=0 // pred_fallthru
    _
  // Predicated region
  $region10: #{cnn18_forward.31} parent=0 // pred_check
    _
  $region11: #{cnn18_forward.31} parent=0 // pred_check_branch
    %15 = sbr.rel (0) target = $region13
  $region12: #{cnn18_forward.31} parent=0 // pred_region
    _
  $region13: #{cnn18_forward.31} parent=0 // pred_fallthru
    _
  %s17 = smul.u32 0, 256
  %s18 = sshra.s32 %s17, 3
  %s19 = sand.u32 %s17, 7
  %s20 = smul.addr %s18, 4
  %s21 = scalar_lea.vmem %s0, %s20
  %v22 = vld [vmem:[%s21] sm:$0xf]
  %v23 = vld [vmem:[%s21 + $0x4] sm:$0xf]
  %v24 = vld [vmem:[%s21 + $0x8] sm:$0xf]
  %v25 = vld [vmem:[%s21 + $0xc] sm:$0xf]
  %v26 = vld [vmem:[%s21 + $0x10] sm:$0xf]
  %v27 = vld [vmem:[%s21 + $0x14] sm:$0xf]
  %v28 = vld [vmem:[%s21 + $0x18] sm:$0xf]
  %v29 = vld [vmem:[%s21 + $0x1c] sm:$0xf]
  %v30 = vld [vmem:[%s21 + $0x20] sm:$0xf]
  %v31 = vld [vmem:[%s21 + $0x24] sm:$0xf]
  %v32 = vld [vmem:[%s21 + $0x28] sm:$0xf]
  %v33 = vld [vmem:[%s21 + $0x2c] sm:$0xf]
  %v34 = vld [vmem:[%s21 + $0x30] sm:$0xf]
  %v35 = vld [vmem:[%s21 + $0x34] sm:$0xf]
  %v36 = vld [vmem:[%s21 + $0x38] sm:$0xf]
  %v37 = vld [vmem:[%s21 + $0x3c] sm:$0xf]
  %v38 = vld [vmem:[%s21 + $0x40] sm:$0xf]
  %v39 = vld [vmem:[%s21 + $0x44] sm:$0xf]
  %v40 = vld [vmem:[%s21 + $0x48] sm:$0xf]
  %v41 = vld [vmem:[%s21 + $0x4c] sm:$0xf]
  %v42 = vld [vmem:[%s21 + $0x50] sm:$0xf]
  %v43 = vld [vmem:[%s21 + $0x54] sm:$0xf]
  %v44 = vld [vmem:[%s21 + $0x58] sm:$0xf]
  %v45 = vld [vmem:[%s21 + $0x5c] sm:$0xf]
  %v46 = vld [vmem:[%s21 + $0x60] sm:$0xf]
  %v47 = vld [vmem:[%s21 + $0x64] sm:$0xf]
  %v48 = vld [vmem:[%s21 + $0x68] sm:$0xf]
  %v49 = vld [vmem:[%s21 + $0x6c] sm:$0xf]
  %v50 = vld [vmem:[%s21 + $0x70] sm:$0xf]
  %v51 = vld [vmem:[%s21 + $0x74] sm:$0xf]
  %v52 = vld [vmem:[%s21 + $0x78] sm:$0xf]
  %v53 = vld [vmem:[%s21 + $0x7c] sm:$0xf]
  %v54 = vld [vmem:[%s21 + $0x80] sm:$0xf]
  %v55 = vld [vmem:[%s21 + $0x84] sm:$0xf]
  %v56 = vld [vmem:[%s1] sm:$0xf]
  %v57 = vld [vmem:[%s1 + $0x4] sm:$0xf]
  %v58 = vld [vmem:[%s1 + $0x8] sm:$0xf]
  %v59 = vld [vmem:[%s1 + $0xc] sm:$0xf]
  %v60 = vld [vmem:[%s1 + $0x10] sm:$0xf]
  %v61 = vld [vmem:[%s1 + $0x14] sm:$0xf]
  %v62 = vld [vmem:[%s1 + $0x18] sm:$0xf]
  %v63 = vld [vmem:[%s1 + $0x1c] sm:$0xf]
  %s64 = scalar_lea.vmem %s1, 32
  %v65 = vld [vmem:[%s64] sm:$0xf]
  %v66 = vld [vmem:[%s64 + $0x4] sm:$0xf]
  %v67 = vld [vmem:[%s64 + $0x8] sm:$0xf]
  %v68 = vld [vmem:[%s64 + $0xc] sm:$0xf]
  %v69 = vld [vmem:[%s64 + $0x10] sm:$0xf]
  %v70 = vld [vmem:[%s64 + $0x14] sm:$0xf]
  %v71 = vld [vmem:[%s64 + $0x18] sm:$0xf]
  %v72 = vld [vmem:[%s64 + $0x1c] sm:$0xf]
  %v106 = vunpack.c.l.b16 %v22
  %v107 = vunpack.c.l.b16 %v23
  %v108 = vunpack.c.l.b16 %v24
  %v109 = vunpack.c.l.b16 %v25
  %v110 = vunpack.c.l.b16 %v26
  %v111 = vunpack.c.l.b16 %v27
  %v112 = vunpack.c.l.b16 %v28
  %v113 = vunpack.c.l.b16 %v29
  %v114 = vunpack.c.l.b16 %v30
  %v115 = vunpack.c.l.b16 %v31
  %v116 = vunpack.c.l.b16 %v32
  %v117 = vunpack.c.l.b16 %v33
  %v118 = vunpack.c.l.b16 %v34
  %v119 = vunpack.c.l.b16 %v35
  %v120 = vunpack.c.l.b16 %v36
  %v121 = vunpack.c.l.b16 %v37
  %v122 = vunpack.c.l.b16 %v38
  %v123 = vunpack.c.l.b16 %v39
  %v124 = vunpack.c.l.b16 %v40
  %v125 = vunpack.c.l.b16 %v41
  %v126 = vunpack.c.l.b16 %v42
  %v127 = vunpack.c.l.b16 %v43
  %v128 = vunpack.c.l.b16 %v44
  %v129 = vunpack.c.l.b16 %v45
  %v130 = vunpack.c.l.b16 %v46
  %v131 = vunpack.c.l.b16 %v47
  %v132 = vunpack.c.l.b16 %v48
  %v133 = vunpack.c.l.b16 %v49
  %v134 = vunpack.c.l.b16 %v50
  %v135 = vunpack.c.l.b16 %v51
  %v136 = vunpack.c.l.b16 %v52
  %v137 = vunpack.c.l.b16 %v53
  %v138 = vunpack.c.l.b16 %v54
  %v139 = vpack.c.b16 %v107, %v106
  %v140 = vpack.c.b16 %v109, %v108
  %v141 = vpack.c.b16 %v111, %v110
  %v142 = vpack.c.b16 %v113, %v112
  %v143 = vpack.c.b16 %v115, %v114
  %v144 = vpack.c.b16 %v117, %v116
  %v145 = vpack.c.b16 %v119, %v118
  %v146 = vpack.c.b16 %v121, %v120
  %v147 = vpack.c.b16 %v123, %v122
  %v148 = vpack.c.b16 %v125, %v124
  %v149 = vpack.c.b16 %v127, %v126
  %v150 = vpack.c.b16 %v129, %v128
  %v151 = vpack.c.b16 %v131, %v130
  %v152 = vpack.c.b16 %v133, %v132
  %v153 = vpack.c.b16 %v135, %v134
  %v154 = vpack.c.b16 %v137, %v136
  %v155 = vpack.c.b16 %v138, %v138
  %vm156 = vsmask.f32 7424
  %v158 = vshrl.u32 %v139, 16
  %v160 = vshll.u32 %v139, 16
  %v162 = vrot.slane %v160, 1
  %v163 = vor.u32 %v158, %v162
  %v165 = vshll.u32 %v140, 16
  %v167 = vrot.slane %v165, 1
  %v168 = vsel %vm156, %v163, %v167
  %v169 = vshrl.u32 %v140, 16
  %v171 = vor.u32 %v169, %v167
  %v173 = vshll.u32 %v141, 16
  %v175 = vrot.slane %v173, 1
  %v176 = vsel %vm156, %v171, %v175
  %v177 = vshrl.u32 %v141, 16
  %v179 = vor.u32 %v177, %v175
  %v181 = vshll.u32 %v142, 16
  %v183 = vrot.slane %v181, 1
  %v184 = vsel %vm156, %v179, %v183
  %v185 = vshrl.u32 %v142, 16
  %v187 = vor.u32 %v185, %v183
  %v189 = vshll.u32 %v143, 16
  %v191 = vrot.slane %v189, 1
  %v192 = vsel %vm156, %v187, %v191
  %v193 = vshrl.u32 %v143, 16
  %v195 = vor.u32 %v193, %v191
  %v197 = vshll.u32 %v144, 16
  %v199 = vrot.slane %v197, 1
  %v200 = vsel %vm156, %v195, %v199
  %v201 = vshrl.u32 %v144, 16
  %v203 = vor.u32 %v201, %v199
  %v205 = vshll.u32 %v145, 16
  %v207 = vrot.slane %v205, 1
  %v208 = vsel %vm156, %v203, %v207
  %v209 = vshrl.u32 %v145, 16
  %v211 = vor.u32 %v209, %v207
  %v213 = vshll.u32 %v146, 16
  %v215 = vrot.slane %v213, 1
  %v216 = vsel %vm156, %v211, %v215
  %v217 = vshrl.u32 %v146, 16
  %v219 = vor.u32 %v217, %v215
  %v221 = vshll.u32 %v147, 16
  %v223 = vrot.slane %v221, 1
  %v224 = vsel %vm156, %v219, %v223
  %v225 = vshrl.u32 %v147, 16
  %v227 = vor.u32 %v225, %v223
  %v229 = vshll.u32 %v148, 16
  %v231 = vrot.slane %v229, 1
  %v232 = vsel %vm156, %v227, %v231
  %v233 = vshrl.u32 %v148, 16
  %v235 = vor.u32 %v233, %v231
  %v237 = vshll.u32 %v149, 16
  %v239 = vrot.slane %v237, 1
  %v240 = vsel %vm156, %v235, %v239
  %v241 = vshrl.u32 %v149, 16
  %v243 = vor.u32 %v241, %v239
  %v245 = vshll.u32 %v150, 16
  %v247 = vrot.slane %v245, 1
  %v248 = vsel %vm156, %v243, %v247
  %v249 = vshrl.u32 %v150, 16
  %v251 = vor.u32 %v249, %v247
  %v253 = vshll.u32 %v151, 16
  %v255 = vrot.slane %v253, 1
  %v256 = vsel %vm156, %v251, %v255
  %v257 = vshrl.u32 %v151, 16
  %v259 = vor.u32 %v257, %v255
  %v261 = vshll.u32 %v152, 16
  %v263 = vrot.slane %v261, 1
  %v264 = vsel %vm156, %v259, %v263
  %v265 = vshrl.u32 %v152, 16
  %v267 = vor.u32 %v265, %v263
  %v269 = vshll.u32 %v153, 16
  %v271 = vrot.slane %v269, 1
  %v272 = vsel %vm156, %v267, %v271
  %v273 = vshrl.u32 %v153, 16
  %v275 = vor.u32 %v273, %v271
  %v277 = vshll.u32 %v154, 16
  %v279 = vrot.slane %v277, 1
  %v280 = vsel %vm156, %v275, %v279
  %v281 = vshrl.u32 %v154, 16
  %v283 = vor.u32 %v281, %v279
  %v285 = vshll.u32 %v155, 16
  %v287 = vrot.slane %v285, 1
  %v288 = vsel %vm156, %v283, %v287
  %v297 = vunpack.c.l.b16 %v65
  %v298 = vunpack.c.l.b16 %v66
  %v299 = vunpack.c.l.b16 %v67
  %v300 = vunpack.c.l.b16 %v68
  %v301 = vunpack.c.l.b16 %v69
  %v302 = vunpack.c.l.b16 %v70
  %v303 = vunpack.c.l.b16 %v71
  %v304 = vunpack.c.l.b16 %v72
  %v305 = vpack.c.b16 %v298, %v297
  %v306 = vpack.c.b16 %v300, %v299
  %v307 = vpack.c.b16 %v302, %v301
  %v308 = vpack.c.b16 %v304, %v303
  %vm313 = vcmask 523264
  %v315 = vsel %vm313, %v168, 0
  %v318 = vsel %vm313, %v176, 0
  %v321 = vsel %vm313, %v184, 0
  %v324 = vsel %vm313, %v192, 0
  %v327 = vsel %vm313, %v200, 0
  %v330 = vsel %vm313, %v208, 0
  %v333 = vsel %vm313, %v216, 0
  %v336 = vsel %vm313, %v224, 0
  %v339 = vsel %vm313, %v232, 0
  %v342 = vsel %vm313, %v240, 0
  %v345 = vsel %vm313, %v248, 0
  %v348 = vsel %vm313, %v256, 0
  %v351 = vsel %vm313, %v264, 0
  %v354 = vsel %vm313, %v272, 0
  %v357 = vsel %vm313, %v280, 0
  %v360 = vsel %vm313, %v288, 0
  %362 = vmatprep.subr.bf16.mxu0 0
  %363 = vmatpush1.bf16.msra.mxu0 %v305
  %364 = vmatprep.subr.bf16.mxu0 0
  %365 = vmatpush1.bf16.msra.mxu0 %v306
  %366 = vmatprep.subr.bf16.mxu0 0
  %367 = vmatpush1.bf16.msra.mxu0 %v307
  %368 = vmatprep.subr.bf16.mxu0 0
  %369 = vmatpush1.bf16.msra.mxu0 %v308
  %370 = vmatprep.subr.bf16.mxu0 0
  %371 = vmatpush1.bf16.msra.mxu0 0
  %372 = vmatprep.subr.bf16.mxu0 0
  %373 = vmatpush1.bf16.msra.mxu0 0
  %374 = vmatprep.subr.bf16.mxu0 0
  %375 = vmatpush1.bf16.msra.mxu0 0
  %376 = vmatprep.subr.bf16.mxu0 0
  %377 = vmatpush1.bf16.msra.mxu0 0
  %378 = vmatprep.subr.bf16.mxu0 0
  %379 = vmatpush1.bf16.msra.mxu0 0
  %380 = vmatprep.subr.bf16.mxu0 0
  %381 = vmatpush1.bf16.msra.mxu0 0
  %382 = vmatprep.subr.bf16.mxu0 0
  %383 = vmatpush1.bf16.msra.mxu0 0
  %384 = vmatprep.subr.bf16.mxu0 0
  %385 = vmatpush1.bf16.msra.mxu0 0
  %386 = vmatprep.subr.bf16.mxu0 0
  %387 = vmatpush1.bf16.msra.mxu0 0
  %388 = vmatprep.subr.bf16.mxu0 0
  %389 = vmatpush1.bf16.msra.mxu0 0
  %390 = vmatprep.subr.bf16.mxu0 0
  %391 = vmatpush1.bf16.msra.mxu0 0
  %392 = vmatprep.subr.bf16.mxu0 0
  %393 = vmatpush1.bf16.msra.mxu0 0
  %394 = vmatprep.mubr.bf16.mxu0 0
  %395 = vmatmul.mubr.bf16.gmra.mrb[0].mxu0 %v315
  %v396 = vpop.f32.mrb[0].mxu0
  %v397 = vadd.f32 0.0, %v396
  %v398 = vpop.f32.mrb[0].mxu0
  %v399 = vpop.f32.mrb[0].mxu0
  %v400 = vadd.f32 0.0, %v399
  %v401 = vpop.f32.mrb[0].mxu0
  %402 = vmatprep.mubr.bf16.mxu0 0
  %403 = vmatmul.mubr.bf16.gmra.mrb[0].mxu0 %v318
  %v404 = vpop.f32.mrb[0].mxu0
  %v405 = vadd.f32 0.0, %v404
  %v406 = vpop.f32.mrb[0].mxu0
  %v407 = vpop.f32.mrb[0].mxu0
  %v408 = vadd.f32 0.0, %v407
  %v409 = vpop.f32.mrb[0].mxu0
  %410 = vmatprep.mubr.bf16.mxu0 0
  %411 = vmatmul.mubr.bf16.gmra.mrb[0].mxu0 %v321
  %v412 = vpop.f32.mrb[0].mxu0
  %v413 = vadd.f32 0.0, %v412
  %v414 = vpop.f32.mrb[0].mxu0
  %v415 = vpop.f32.mrb[0].mxu0
  %v416 = vadd.f32 0.0, %v415
  %v417 = vpop.f32.mrb[0].mxu0
  %418 = vmatprep.mubr.bf16.mxu0 0
  %419 = vmatmul.mubr.bf16.gmra.mrb[0].mxu0 %v324
  %v420 = vpop.f32.mrb[0].mxu0
  %v421 = vadd.f32 0.0, %v420
  %v422 = vpop.f32.mrb[0].mxu0
  %v423 = vpop.f32.mrb[0].mxu0
  %v424 = vadd.f32 0.0, %v423
  %v425 = vpop.f32.mrb[0].mxu0
  %426 = vmatprep.mubr.bf16.mxu0 0
  %427 = vmatmul.mubr.bf16.gmra.mrb[0].mxu0 %v327
  %v428 = vpop.f32.mrb[0].mxu0
  %v429 = vadd.f32 0.0, %v428
  %v430 = vpop.f32.mrb[0].mxu0
  %v431 = vpop.f32.mrb[0].mxu0
  %v432 = vadd.f32 0.0, %v431
  %v433 = vpop.f32.mrb[0].mxu0
  %434 = vmatprep.mubr.bf16.mxu0 0
  %435 = vmatmul.mubr.bf16.gmra.mrb[0].mxu0 %v330
  %v436 = vpop.f32.mrb[0].mxu0
  %v437 = vadd.f32 0.0, %v436
  %v438 = vpop.f32.mrb[0].mxu0
  %v439 = vpop.f32.mrb[0].mxu0
  %v440 = vadd.f32 0.0, %v439
  %v441 = vpop.f32.mrb[0].mxu0
  %442 = vmatprep.mubr.bf16.mxu0 0
  %443 = vmatmul.mubr.bf16.gmra.mrb[0].mxu0 %v333
  %v444 = vpop.f32.mrb[0].mxu0
  %v445 = vadd.f32 0.0, %v444
  %v446 = vpop.f32.mrb[0].mxu0
  %v447 = vpop.f32.mrb[0].mxu0
  %v448 = vadd.f32 0.0, %v447
  %v449 = vpop.f32.mrb[0].mxu0
  %450 = vmatprep.mubr.bf16.mxu0 0
  %451 = vmatmul.mubr.bf16.gmra.mrb[0].mxu0 %v336
  %v452 = vpop.f32.mrb[0].mxu0
  %v453 = vadd.f32 0.0, %v452
  %v454 = vpop.f32.mrb[0].mxu0
  %v455 = vpop.f32.mrb[0].mxu0
  %v456 = vadd.f32 0.0, %v455
  %v457 = vpop.f32.mrb[0].mxu0
  %458 = vmatprep.mubr.bf16.mxu0 0
  %459 = vmatmul.mubr.bf16.gmra.mrb[0].mxu0 %v339
  %v460 = vpop.f32.mrb[0].mxu0
  %v461 = vadd.f32 0.0, %v460
  %v462 = vpop.f32.mrb[0].mxu0
  %v463 = vpop.f32.mrb[0].mxu0
  %v464 = vadd.f32 0.0, %v463
  %v465 = vpop.f32.mrb[0].mxu0
  %466 = vmatprep.mubr.bf16.mxu0 0
  %467 = vmatmul.mubr.bf16.gmra.mrb[0].mxu0 %v342
  %v468 = vpop.f32.mrb[0].mxu0
  %v469 = vadd.f32 0.0, %v468
  %v470 = vpop.f32.mrb[0].mxu0
  %v471 = vpop.f32.mrb[0].mxu0
  %v472 = vadd.f32 0.0, %v471
  %v473 = vpop.f32.mrb[0].mxu0
  %474 = vmatprep.mubr.bf16.mxu0 0
  %475 = vmatmul.mubr.bf16.gmra.mrb[0].mxu0 %v345
  %v476 = vpop.f32.mrb[0].mxu0
  %v477 = vadd.f32 0.0, %v476
  %v478 = vpop.f32.mrb[0].mxu0
  %v479 = vpop.f32.mrb[0].mxu0
  %v480 = vadd.f32 0.0, %v479
  %v481 = vpop.f32.mrb[0].mxu0
  %482 = vmatprep.mubr.bf16.mxu0 0
  %483 = vmatmul.mubr.bf16.gmra.mrb[0].mxu0 %v348
  %v484 = vpop.f32.mrb[0].mxu0
  %v485 = vadd.f32 0.0, %v484
  %v486 = vpop.f32.mrb[0].mxu0
  %v487 = vpop.f32.mrb[0].mxu0
  %v488 = vadd.f32 0.0, %v487
  %v489 = vpop.f32.mrb[0].mxu0
  %490 = vmatprep.mubr.bf16.mxu0 0
  %491 = vmatmul.mubr.bf16.gmra.mrb[0].mxu0 %v351
  %v492 = vpop.f32.mrb[0].mxu0
  %v493 = vadd.f32 0.0, %v492
  %v494 = vpop.f32.mrb[0].mxu0
  %v495 = vpop.f32.mrb[0].mxu0
  %v496 = vadd.f32 0.0, %v495
  %v497 = vpop.f32.mrb[0].mxu0
  %498 = vmatprep.mubr.bf16.mxu0 0
  %499 = vmatmul.mubr.bf16.gmra.mrb[0].mxu0 %v354
  %v500 = vpop.f32.mrb[0].mxu0
  %v501 = vadd.f32 0.0, %v500
  %v502 = vpop.f32.mrb[0].mxu0
  %v503 = vpop.f32.mrb[0].mxu0
  %v504 = vadd.f32 0.0, %v503
  %v505 = vpop.f32.mrb[0].mxu0
  %506 = vmatprep.mubr.bf16.mxu0 0
  %507 = vmatmul.mubr.bf16.gmra.mrb[0].mxu0 %v357
  %v508 = vpop.f32.mrb[0].mxu0
  %v509 = vadd.f32 0.0, %v508
  %v510 = vpop.f32.mrb[0].mxu0
  %v511 = vpop.f32.mrb[0].mxu0
  %v512 = vadd.f32 0.0, %v511
  %v513 = vpop.f32.mrb[0].mxu0
  %514 = vmatprep.mubr.bf16.mxu0 0
  %515 = vmatmul.mubr.bf16.gmra.mrb[0].mxu0 %v360
  %v516 = vpop.f32.mrb[0].mxu0
  %v517 = vadd.f32 0.0, %v516
  %v518 = vpop.f32.mrb[0].mxu0
  %v519 = vpop.f32.mrb[0].mxu0
  %v520 = vadd.f32 0.0, %v519
  %v521 = vpop.f32.mrb[0].mxu0
  %522 = vdwg.mxu0
  %v531 = vunpack.c.l.b16 %v56
  %v532 = vunpack.c.l.b16 %v57
  %v533 = vunpack.c.l.b16 %v58
  %v534 = vunpack.c.l.b16 %v59
  %v535 = vunpack.c.l.b16 %v60
  %v536 = vunpack.c.l.b16 %v61
  %v537 = vunpack.c.l.b16 %v62
  %v538 = vunpack.c.l.b16 %v63
  %v539 = vpack.c.b16 %v532, %v531
  %v540 = vpack.c.b16 %v534, %v533
  %v541 = vpack.c.b16 %v536, %v535
  %v542 = vpack.c.b16 %v538, %v537
  %v547 = vsel %vm313, %v139, 0
  %v549 = vsel %vm313, %v140, 0
  %v551 = vsel %vm313, %v141, 0
  %v553 = vsel %vm313, %v142, 0
  %v555 = vsel %vm313, %v143, 0
  %v557 = vsel %vm313, %v144, 0
  %v559 = vsel %vm313, %v145, 0
  %v561 = vsel %vm313, %v146, 0
  %v563 = vsel %vm313, %v147, 0
  %v565 = vsel %vm313, %v148, 0
  %v567 = vsel %vm313, %v149, 0
  %v569 = vsel %vm313, %v150, 0
  %v571 = vsel %vm313, %v151, 0
  %v573 = vsel %vm313, %v152, 0
  %v575 = vsel %vm313, %v153, 0
  %v577 = vsel %vm313, %v154, 0
  %579 = vmatprep.subr.bf16.mxu0 0
  %580 = vmatpush1.bf16.msra.mxu0 %v539
  %581 = vmatprep.subr.bf16.mxu0 0
  %582 = vmatpush1.bf16.msra.mxu0 %v540
  %583 = vmatprep.subr.bf16.mxu0 0
  %584 = vmatpush1.bf16.msra.mxu0 %v541
  %585 = vmatprep.subr.bf16.mxu0 0
  %586 = vmatpush1.bf16.msra.mxu0 %v542
  %587 = vmatprep.subr.bf16.mxu0 0
  %588 = vmatpush1.bf16.msra.mxu0 0
  %589 = vmatprep.subr.bf16.mxu0 0
  %590 = vmatpush1.bf16.msra.mxu0 0
  %591 = vmatprep.subr.bf16.mxu0 0
  %592 = vmatpush1.bf16.msra.mxu0 0
  %593 = vmatprep.subr.bf16.mxu0 0
  %594 = vmatpush1.bf16.msra.mxu0 0
  %595 = vmatprep.subr.bf16.mxu0 0
  %596 = vmatpush1.bf16.msra.mxu0 0
  %597 = vmatprep.subr.bf16.mxu0 0
  %598 = vmatpush1.bf16.msra.mxu0 0
  %599 = vmatprep.subr.bf16.mxu0 0
  %600 = vmatpush1.bf16.msra.mxu0 0
  %601 = vmatprep.subr.bf16.mxu0 0
  %602 = vmatpush1.bf16.msra.mxu0 0
  %603 = vmatprep.subr.bf16.mxu0 0
  %604 = vmatpush1.bf16.msra.mxu0 0
  %605 = vmatprep.subr.bf16.mxu0 0
  %606 = vmatpush1.bf16.msra.mxu0 0
  %607 = vmatprep.subr.bf16.mxu0 0
  %608 = vmatpush1.bf16.msra.mxu0 0
  %609 = vmatprep.subr.bf16.mxu0 0
  %610 = vmatpush1.bf16.msra.mxu0 0
  %611 = vmatprep.mubr.bf16.mxu0 0
  %612 = vmatmul.mubr.bf16.gmra.mrb[0].mxu0 %v547
  %v613 = vpop.f32.mrb[0].mxu0
  %v614 = vadd.f32 %v397, %v613
  %v615 = vpop.f32.mrb[0].mxu0
  %v616 = vpop.f32.mrb[0].mxu0
  %v617 = vadd.f32 %v400, %v616
  %v618 = vpop.f32.mrb[0].mxu0
  %619 = vmatprep.mubr.bf16.mxu0 0
  %620 = vmatmul.mubr.bf16.gmra.mrb[0].mxu0 %v549
  %v621 = vpop.f32.mrb[0].mxu0
  %v622 = vadd.f32 %v405, %v621
  %v623 = vpop.f32.mrb[0].mxu0
  %v624 = vpop.f32.mrb[0].mxu0
  %v625 = vadd.f32 %v408, %v624
  %v626 = vpop.f32.mrb[0].mxu0
  %627 = vmatprep.mubr.bf16.mxu0 0
  %628 = vmatmul.mubr.bf16.gmra.mrb[0].mxu0 %v551
  %v629 = vpop.f32.mrb[0].mxu0
  %v630 = vadd.f32 %v413, %v629
  %v631 = vpop.f32.mrb[0].mxu0
  %v632 = vpop.f32.mrb[0].mxu0
  %v633 = vadd.f32 %v416, %v632
  %v634 = vpop.f32.mrb[0].mxu0
  %635 = vmatprep.mubr.bf16.mxu0 0
  %636 = vmatmul.mubr.bf16.gmra.mrb[0].mxu0 %v553
  %v637 = vpop.f32.mrb[0].mxu0
  %v638 = vadd.f32 %v421, %v637
  %v639 = vpop.f32.mrb[0].mxu0
  %v640 = vpop.f32.mrb[0].mxu0
  %v641 = vadd.f32 %v424, %v640
  %v642 = vpop.f32.mrb[0].mxu0
  %643 = vmatprep.mubr.bf16.mxu0 0
  %644 = vmatmul.mubr.bf16.gmra.mrb[0].mxu0 %v555
  %v645 = vpop.f32.mrb[0].mxu0
  %v646 = vadd.f32 %v429, %v645
  %v647 = vpop.f32.mrb[0].mxu0
  %v648 = vpop.f32.mrb[0].mxu0
  %v649 = vadd.f32 %v432, %v648
  %v650 = vpop.f32.mrb[0].mxu0
  %651 = vmatprep.mubr.bf16.mxu0 0
  %652 = vmatmul.mubr.bf16.gmra.mrb[0].mxu0 %v557
  %v653 = vpop.f32.mrb[0].mxu0
  %v654 = vadd.f32 %v437, %v653
  %v655 = vpop.f32.mrb[0].mxu0
  %v656 = vpop.f32.mrb[0].mxu0
  %v657 = vadd.f32 %v440, %v656
  %v658 = vpop.f32.mrb[0].mxu0
  %659 = vmatprep.mubr.bf16.mxu0 0
  %660 = vmatmul.mubr.bf16.gmra.mrb[0].mxu0 %v559
  %v661 = vpop.f32.mrb[0].mxu0
  %v662 = vadd.f32 %v445, %v661
  %v663 = vpop.f32.mrb[0].mxu0
  %v664 = vpop.f32.mrb[0].mxu0
  %v665 = vadd.f32 %v448, %v664
  %v666 = vpop.f32.mrb[0].mxu0
  %667 = vmatprep.mubr.bf16.mxu0 0
  %668 = vmatmul.mubr.bf16.gmra.mrb[0].mxu0 %v561
  %v669 = vpop.f32.mrb[0].mxu0
  %v670 = vadd.f32 %v453, %v669
  %v671 = vpop.f32.mrb[0].mxu0
  %v672 = vpop.f32.mrb[0].mxu0
  %v673 = vadd.f32 %v456, %v672
  %v674 = vpop.f32.mrb[0].mxu0
  %675 = vmatprep.mubr.bf16.mxu0 0
  %676 = vmatmul.mubr.bf16.gmra.mrb[0].mxu0 %v563
  %v677 = vpop.f32.mrb[0].mxu0
  %v678 = vadd.f32 %v461, %v677
  %v679 = vpop.f32.mrb[0].mxu0
  %v680 = vpop.f32.mrb[0].mxu0
  %v681 = vadd.f32 %v464, %v680
  %v682 = vpop.f32.mrb[0].mxu0
  %683 = vmatprep.mubr.bf16.mxu0 0
  %684 = vmatmul.mubr.bf16.gmra.mrb[0].mxu0 %v565
  %v685 = vpop.f32.mrb[0].mxu0
  %v686 = vadd.f32 %v469, %v685
  %v687 = vpop.f32.mrb[0].mxu0
  %v688 = vpop.f32.mrb[0].mxu0
  %v689 = vadd.f32 %v472, %v688
  %v690 = vpop.f32.mrb[0].mxu0
  %691 = vmatprep.mubr.bf16.mxu0 0
  %692 = vmatmul.mubr.bf16.gmra.mrb[0].mxu0 %v567
  %v693 = vpop.f32.mrb[0].mxu0
  %v694 = vadd.f32 %v477, %v693
  %v695 = vpop.f32.mrb[0].mxu0
  %v696 = vpop.f32.mrb[0].mxu0
  %v697 = vadd.f32 %v480, %v696
  %v698 = vpop.f32.mrb[0].mxu0
  %699 = vmatprep.mubr.bf16.mxu0 0
  %700 = vmatmul.mubr.bf16.gmra.mrb[0].mxu0 %v569
  %v701 = vpop.f32.mrb[0].mxu0
  %v702 = vadd.f32 %v485, %v701
  %v703 = vpop.f32.mrb[0].mxu0
  %v704 = vpop.f32.mrb[0].mxu0
  %v705 = vadd.f32 %v488, %v704
  %v706 = vpop.f32.mrb[0].mxu0
  %707 = vmatprep.mubr.bf16.mxu0 0
  %708 = vmatmul.mubr.bf16.gmra.mrb[0].mxu0 %v571
  %v709 = vpop.f32.mrb[0].mxu0
  %v710 = vadd.f32 %v493, %v709
  %v711 = vpop.f32.mrb[0].mxu0
  %v712 = vpop.f32.mrb[0].mxu0
  %v713 = vadd.f32 %v496, %v712
  %v714 = vpop.f32.mrb[0].mxu0
  %715 = vmatprep.mubr.bf16.mxu0 0
  %716 = vmatmul.mubr.bf16.gmra.mrb[0].mxu0 %v573
  %v717 = vpop.f32.mrb[0].mxu0
  %v718 = vadd.f32 %v501, %v717
  %v719 = vpop.f32.mrb[0].mxu0
  %v720 = vpop.f32.mrb[0].mxu0
  %v721 = vadd.f32 %v504, %v720
  %v722 = vpop.f32.mrb[0].mxu0
  %723 = vmatprep.mubr.bf16.mxu0 0
  %724 = vmatmul.mubr.bf16.gmra.mrb[0].mxu0 %v575
  %v725 = vpop.f32.mrb[0].mxu0
  %v726 = vadd.f32 %v509, %v725
  %v727 = vpop.f32.mrb[0].mxu0
  %v728 = vpop.f32.mrb[0].mxu0
  %v729 = vadd.f32 %v512, %v728
  %v730 = vpop.f32.mrb[0].mxu0
  %731 = vmatprep.mubr.bf16.mxu0 0
  %732 = vmatmul.mubr.bf16.gmra.mrb[0].mxu0 %v577
  %v733 = vpop.f32.mrb[0].mxu0
  %v734 = vadd.f32 %v517, %v733
  %v735 = vpop.f32.mrb[0].mxu0
  %v736 = vpop.f32.mrb[0].mxu0
  %v737 = vadd.f32 %v520, %v736
  %v738 = vpop.f32.mrb[0].mxu0
  %739 = vdwg.mxu0
  %s740 = scalar_lea.vmem %s1, 64
  %v741 = vld [vmem:[%s740] sm:$0xf]
  %v742 = vld [vmem:[%s740 + $0x4] sm:$0xf]
  %v743 = vld [vmem:[%s740 + $0x8] sm:$0xf]
  %v744 = vld [vmem:[%s740 + $0xc] sm:$0xf]
  %v745 = vld [vmem:[%s740 + $0x10] sm:$0xf]
  %v746 = vld [vmem:[%s740 + $0x14] sm:$0xf]
  %v747 = vld [vmem:[%s740 + $0x18] sm:$0xf]
  %v748 = vld [vmem:[%s740 + $0x1c] sm:$0xf]
  %vm749 = vcmask 1046528
  %v750 = vrot.slane %v139, 1
  %v751 = vrot.slane %v140, 1
  %v752 = vsel %vm749, %v750, %v751
  %v753 = vrot.slane %v141, 1
  %v754 = vsel %vm749, %v751, %v753
  %v755 = vrot.slane %v142, 1
  %v756 = vsel %vm749, %v753, %v755
  %v757 = vrot.slane %v143, 1
  %v758 = vsel %vm749, %v755, %v757
  %v759 = vrot.slane %v144, 1
  %v760 = vsel %vm749, %v757, %v759
  %v761 = vrot.slane %v145, 1
  %v762 = vsel %vm749, %v759, %v761
  %v763 = vrot.slane %v146, 1
  %v764 = vsel %vm749, %v761, %v763
  %v765 = vrot.slane %v147, 1
  %v766 = vsel %vm749, %v763, %v765
  %v767 = vrot.slane %v148, 1
  %v768 = vsel %vm749, %v765, %v767
  %v769 = vrot.slane %v149, 1
  %v770 = vsel %vm749, %v767, %v769
  %v771 = vrot.slane %v150, 1
  %v772 = vsel %vm749, %v769, %v771
  %v773 = vrot.slane %v151, 1
  %v774 = vsel %vm749, %v771, %v773
  %v775 = vrot.slane %v152, 1
  %v776 = vsel %vm749, %v773, %v775
  %v777 = vrot.slane %v153, 1
  %v778 = vsel %vm749, %v775, %v777
  %v779 = vrot.slane %v154, 1
  %v780 = vsel %vm749, %v777, %v779
  %v781 = vrot.slane %v155, 1
  %v782 = vsel %vm749, %v779, %v781
  %v791 = vunpack.c.l.b16 %v741
  %v792 = vunpack.c.l.b16 %v742
  %v793 = vunpack.c.l.b16 %v743
  %v794 = vunpack.c.l.b16 %v744
  %v795 = vunpack.c.l.b16 %v745
  %v796 = vunpack.c.l.b16 %v746
  %v797 = vunpack.c.l.b16 %v747
  %v798 = vunpack.c.l.b16 %v748
  %v799 = vpack.c.b16 %v792, %v791
  %v800 = vpack.c.b16 %v794, %v793
  %v801 = vpack.c.b16 %v796, %v795
  %v802 = vpack.c.b16 %v798, %v797
  %v808 = vsel %vm313, %v752, 0
  %v811 = vsel %vm313, %v754, 0
  %v814 = vsel %vm313, %v756, 0
  %v817 = vsel %vm313, %v758, 0
  %v820 = vsel %vm313, %v760, 0
  %v823 = vsel %vm313, %v762, 0
  %v826 = vsel %vm313, %v764, 0
  %v829 = vsel %vm313, %v766, 0
  %v832 = vsel %vm313, %v768, 0
  %v835 = vsel %vm313, %v770, 0
  %v838 = vsel %vm313, %v772, 0
  %v841 = vsel %vm313, %v774, 0
  %v844 = vsel %vm313, %v776, 0
  %v847 = vsel %vm313, %v778, 0
  %v850 = vsel %vm313, %v780, 0
  %v853 = vsel %vm313, %v782, 0
  %855 = vmatprep.subr.bf16.mxu0 0
  %856 = vmatpush1.bf16.msra.mxu0 %v799
  %857 = vmatprep.subr.bf16.mxu0 0
  %858 = vmatpush1.bf16.msra.mxu0 %v800
  %859 = vmatprep.subr.bf16.mxu0 0
  %860 = vmatpush1.bf16.msra.mxu0 %v801
  %861 = vmatprep.subr.bf16.mxu0 0
  %862 = vmatpush1.bf16.msra.mxu0 %v802
  %863 = vmatprep.subr.bf16.mxu0 0
  %864 = vmatpush1.bf16.msra.mxu0 0
  %865 = vmatprep.subr.bf16.mxu0 0
  %866 = vmatpush1.bf16.msra.mxu0 0
  %867 = vmatprep.subr.bf16.mxu0 0
  %868 = vmatpush1.bf16.msra.mxu0 0
  %869 = vmatprep.subr.bf16.mxu0 0
  %870 = vmatpush1.bf16.msra.mxu0 0
  %871 = vmatprep.subr.bf16.mxu0 0
  %872 = vmatpush1.bf16.msra.mxu0 0
  %873 = vmatprep.subr.bf16.mxu0 0
  %874 = vmatpush1.bf16.msra.mxu0 0
  %875 = vmatprep.subr.bf16.mxu0 0
  %876 = vmatpush1.bf16.msra.mxu0 0
  %877 = vmatprep.subr.bf16.mxu0 0
  %878 = vmatpush1.bf16.msra.mxu0 0
  %879 = vmatprep.subr.bf16.mxu0 0
  %880 = vmatpush1.bf16.msra.mxu0 0
  %881 = vmatprep.subr.bf16.mxu0 0
  %882 = vmatpush1.bf16.msra.mxu0 0
  %883 = vmatprep.subr.bf16.mxu0 0
  %884 = vmatpush1.bf16.msra.mxu0 0
  %885 = vmatprep.subr.bf16.mxu0 0
  %886 = vmatpush1.bf16.msra.mxu0 0
  %887 = vmatprep.mubr.bf16.mxu0 0
  %888 = vmatmul.mubr.bf16.gmra.mrb[0].mxu0 %v808
  %v889 = vpop.f32.mrb[0].mxu0
  %v890 = vadd.f32 0.0, %v889
  %v891 = vpop.f32.mrb[0].mxu0
  %v892 = vpop.f32.mrb[0].mxu0
  %v893 = vadd.f32 0.0, %v892
  %v894 = vpop.f32.mrb[0].mxu0
  %895 = vmatprep.mubr.bf16.mxu0 0
  %896 = vmatmul.mubr.bf16.gmra.mrb[0].mxu0 %v811
  %v897 = vpop.f32.mrb[0].mxu0
  %v898 = vadd.f32 0.0, %v897
  %v899 = vpop.f32.mrb[0].mxu0
  %v900 = vpop.f32.mrb[0].mxu0
  %v901 = vadd.f32 0.0, %v900
  %v902 = vpop.f32.mrb[0].mxu0
  %903 = vmatprep.mubr.bf16.mxu0 0
  %904 = vmatmul.mubr.bf16.gmra.mrb[0].mxu0 %v814
  %v905 = vpop.f32.mrb[0].mxu0
  %v906 = vadd.f32 0.0, %v905
  %v907 = vpop.f32.mrb[0].mxu0
  %v908 = vpop.f32.mrb[0].mxu0
  %v909 = vadd.f32 0.0, %v908
  %v910 = vpop.f32.mrb[0].mxu0
  %911 = vmatprep.mubr.bf16.mxu0 0
  %912 = vmatmul.mubr.bf16.gmra.mrb[0].mxu0 %v817
  %v913 = vpop.f32.mrb[0].mxu0
  %v914 = vadd.f32 0.0, %v913
  %v915 = vpop.f32.mrb[0].mxu0
  %v916 = vpop.f32.mrb[0].mxu0
  %v917 = vadd.f32 0.0, %v916
  %v918 = vpop.f32.mrb[0].mxu0
  %919 = vmatprep.mubr.bf16.mxu0 0
  %920 = vmatmul.mubr.bf16.gmra.mrb[0].mxu0 %v820
  %v921 = vpop.f32.mrb[0].mxu0
  %v922 = vadd.f32 0.0, %v921
  %v923 = vpop.f32.mrb[0].mxu0
  %v924 = vpop.f32.mrb[0].mxu0
  %v925 = vadd.f32 0.0, %v924
  %v926 = vpop.f32.mrb[0].mxu0
  %927 = vmatprep.mubr.bf16.mxu0 0
  %928 = vmatmul.mubr.bf16.gmra.mrb[0].mxu0 %v823
  %v929 = vpop.f32.mrb[0].mxu0
  %v930 = vadd.f32 0.0, %v929
  %v931 = vpop.f32.mrb[0].mxu0
  %v932 = vpop.f32.mrb[0].mxu0
  %v933 = vadd.f32 0.0, %v932
  %v934 = vpop.f32.mrb[0].mxu0
  %935 = vmatprep.mubr.bf16.mxu0 0
  %936 = vmatmul.mubr.bf16.gmra.mrb[0].mxu0 %v826
  %v937 = vpop.f32.mrb[0].mxu0
  %v938 = vadd.f32 0.0, %v937
  %v939 = vpop.f32.mrb[0].mxu0
  %v940 = vpop.f32.mrb[0].mxu0
  %v941 = vadd.f32 0.0, %v940
  %v942 = vpop.f32.mrb[0].mxu0
  %943 = vmatprep.mubr.bf16.mxu0 0
  %944 = vmatmul.mubr.bf16.gmra.mrb[0].mxu0 %v829
  %v945 = vpop.f32.mrb[0].mxu0
  %v946 = vadd.f32 0.0, %v945
  %v947 = vpop.f32.mrb[0].mxu0
  %v948 = vpop.f32.mrb[0].mxu0
  %v949 = vadd.f32 0.0, %v948
  %v950 = vpop.f32.mrb[0].mxu0
  %951 = vmatprep.mubr.bf16.mxu0 0
  %952 = vmatmul.mubr.bf16.gmra.mrb[0].mxu0 %v832
  %v953 = vpop.f32.mrb[0].mxu0
  %v954 = vadd.f32 0.0, %v953
  %v955 = vpop.f32.mrb[0].mxu0
  %v956 = vpop.f32.mrb[0].mxu0
  %v957 = vadd.f32 0.0, %v956
  %v958 = vpop.f32.mrb[0].mxu0
  %959 = vmatprep.mubr.bf16.mxu0 0
  %960 = vmatmul.mubr.bf16.gmra.mrb[0].mxu0 %v835
  %v961 = vpop.f32.mrb[0].mxu0
  %v962 = vadd.f32 0.0, %v961
  %v963 = vpop.f32.mrb[0].mxu0
  %v964 = vpop.f32.mrb[0].mxu0
  %v965 = vadd.f32 0.0, %v964
  %v966 = vpop.f32.mrb[0].mxu0
  %967 = vmatprep.mubr.bf16.mxu0 0
  %968 = vmatmul.mubr.bf16.gmra.mrb[0].mxu0 %v838
  %v969 = vpop.f32.mrb[0].mxu0
  %v970 = vadd.f32 0.0, %v969
  %v971 = vpop.f32.mrb[0].mxu0
  %v972 = vpop.f32.mrb[0].mxu0
  %v973 = vadd.f32 0.0, %v972
  %v974 = vpop.f32.mrb[0].mxu0
  %975 = vmatprep.mubr.bf16.mxu0 0
  %976 = vmatmul.mubr.bf16.gmra.mrb[0].mxu0 %v841
  %v977 = vpop.f32.mrb[0].mxu0
  %v978 = vadd.f32 0.0, %v977
  %v979 = vpop.f32.mrb[0].mxu0
  %v980 = vpop.f32.mrb[0].mxu0
  %v981 = vadd.f32 0.0, %v980
  %v982 = vpop.f32.mrb[0].mxu0
  %983 = vmatprep.mubr.bf16.mxu0 0
  %984 = vmatmul.mubr.bf16.gmra.mrb[0].mxu0 %v844
  %v985 = vpop.f32.mrb[0].mxu0
  %v986 = vadd.f32 0.0, %v985
  %v987 = vpop.f32.mrb[0].mxu0
  %v988 = vpop.f32.mrb[0].mxu0
  %v989 = vadd.f32 0.0, %v988
  %v990 = vpop.f32.mrb[0].mxu0
  %991 = vmatprep.mubr.bf16.mxu0 0
  %992 = vmatmul.mubr.bf16.gmra.mrb[0].mxu0 %v847
  %v993 = vpop.f32.mrb[0].mxu0
  %v994 = vadd.f32 0.0, %v993
  %v995 = vpop.f32.mrb[0].mxu0
  %v996 = vpop.f32.mrb[0].mxu0
  %v997 = vadd.f32 0.0, %v996
  %v998 = vpop.f32.mrb[0].mxu0
  %999 = vmatprep.mubr.bf16.mxu0 0
  %1000 = vmatmul.mubr.bf16.gmra.mrb[0].mxu0 %v850
  %v1001 = vpop.f32.mrb[0].mxu0
  %v1002 = vadd.f32 0.0, %v1001
  %v1003 = vpop.f32.mrb[0].mxu0
  %v1004 = vpop.f32.mrb[0].mxu0
  %v1005 = vadd.f32 0.0, %v1004
  %v1006 = vpop.f32.mrb[0].mxu0
  %1007 = vmatprep.mubr.bf16.mxu0 0
  %1008 = vmatmul.mubr.bf16.gmra.mrb[0].mxu0 %v853
  %v1009 = vpop.f32.mrb[0].mxu0
  %v1010 = vadd.f32 0.0, %v1009
  %v1011 = vpop.f32.mrb[0].mxu0
  %v1012 = vpop.f32.mrb[0].mxu0
  %v1013 = vadd.f32 0.0, %v1012
  %v1014 = vpop.f32.mrb[0].mxu0
  %1015 = vdwg.mxu0
  %v1016 = vadd.f32 %v614, %v890
  %v1017 = vadd.f32 %v617, %v893
  %v1018 = vadd.f32 %v622, %v898
  %v1019 = vadd.f32 %v625, %v901
  %v1020 = vadd.f32 %v630, %v906
  %v1021 = vadd.f32 %v633, %v909
  %v1022 = vadd.f32 %v638, %v914
  %v1023 = vadd.f32 %v641, %v917
  %v1024 = vadd.f32 %v646, %v922
  %v1025 = vadd.f32 %v649, %v925
  %v1026 = vadd.f32 %v654, %v930
  %v1027 = vadd.f32 %v657, %v933
  %v1028 = vadd.f32 %v662, %v938
  %v1029 = vadd.f32 %v665, %v941
  %v1030 = vadd.f32 %v670, %v946
  %v1031 = vadd.f32 %v673, %v949
  %v1032 = vadd.f32 %v678, %v954
  %v1033 = vadd.f32 %v681, %v957
  %v1034 = vadd.f32 %v686, %v962
  %v1035 = vadd.f32 %v689, %v965
  %v1036 = vadd.f32 %v694, %v970
  %v1037 = vadd.f32 %v697, %v973
  %v1038 = vadd.f32 %v702, %v978
  %v1039 = vadd.f32 %v705, %v981
  %v1040 = vadd.f32 %v710, %v986
  %v1041 = vadd.f32 %v713, %v989
  %v1042 = vadd.f32 %v718, %v994
  %v1043 = vadd.f32 %v721, %v997
  %v1044 = vadd.f32 %v726, %v1002
  %v1045 = vadd.f32 %v729, %v1005
  %v1046 = vadd.f32 %v734, %v1010
  %v1047 = vadd.f32 %v737, %v1013
  %s1048 = scalar_lea.vmem %s1, 96
  %v1049 = vld [vmem:[%s1048] sm:$0xf]
  %v1050 = vld [vmem:[%s1048 + $0x4] sm:$0xf]
  %v1051 = vld [vmem:[%s1048 + $0x8] sm:$0xf]
  %v1052 = vld [vmem:[%s1048 + $0xc] sm:$0xf]
  %v1053 = vld [vmem:[%s1048 + $0x10] sm:$0xf]
  %v1054 = vld [vmem:[%s1048 + $0x14] sm:$0xf]
  %v1055 = vld [vmem:[%s1048 + $0x18] sm:$0xf]
  %v1056 = vld [vmem:[%s1048 + $0x1c] sm:$0xf]
  %vm1057 = vcmask 1044480
  %v1058 = vrot.slane %v139, 3
  %v1059 = vrot.slane %v140, 3
  %v1060 = vsel %vm1057, %v1058, %v1059
  %v1061 = vrot.slane %v141, 3
  %v1062 = vsel %vm1057, %v1059, %v1061
  %v1063 = vrot.slane %v142, 3
  %v1064 = vsel %vm1057, %v1061, %v1063
  %v1065 = vrot.slane %v143, 3
  %v1066 = vsel %vm1057, %v1063, %v1065
  %v1067 = vrot.slane %v144, 3
  %v1068 = vsel %vm1057, %v1065, %v1067
  %v1069 = vrot.slane %v145, 3
  %v1070 = vsel %vm1057, %v1067, %v1069
  %v1071 = vrot.slane %v146, 3
  %v1072 = vsel %vm1057, %v1069, %v1071
  %v1073 = vrot.slane %v147, 3
  %v1074 = vsel %vm1057, %v1071, %v1073
  %v1075 = vrot.slane %v148, 3
  %v1076 = vsel %vm1057, %v1073, %v1075
  %v1077 = vrot.slane %v149, 3
  %v1078 = vsel %vm1057, %v1075, %v1077
  %v1079 = vrot.slane %v150, 3
  %v1080 = vsel %vm1057, %v1077, %v1079
  %v1081 = vrot.slane %v151, 3
  %v1082 = vsel %vm1057, %v1079, %v1081
  %v1083 = vrot.slane %v152, 3
  %v1084 = vsel %vm1057, %v1081, %v1083
  %v1085 = vrot.slane %v153, 3
  %v1086 = vsel %vm1057, %v1083, %v1085
  %v1087 = vrot.slane %v154, 3
  %v1088 = vsel %vm1057, %v1085, %v1087
  %v1089 = vrot.slane %v155, 3
  %v1090 = vsel %vm1057, %v1087, %v1089
  %v1099 = vunpack.c.l.b16 %v1049
  %v1100 = vunpack.c.l.b16 %v1050
  %v1101 = vunpack.c.l.b16 %v1051
  %v1102 = vunpack.c.l.b16 %v1052
  %v1103 = vunpack.c.l.b16 %v1053
  %v1104 = vunpack.c.l.b16 %v1054
  %v1105 = vunpack.c.l.b16 %v1055
  %v1106 = vunpack.c.l.b16 %v1056
  %v1107 = vpack.c.b16 %v1100, %v1099
  %v1108 = vpack.c.b16 %v1102, %v1101
  %v1109 = vpack.c.b16 %v1104, %v1103
  %v1110 = vpack.c.b16 %v1106, %v1105
  %v1116 = vsel %vm313, %v1060, 0
  %v1119 = vsel %vm313, %v1062, 0
  %v1122 = vsel %vm313, %v1064, 0
  %v1125 = vsel %vm313, %v1066, 0
  %v1128 = vsel %vm313, %v1068, 0
  %v1131 = vsel %vm313, %v1070, 0
  %v1134 = vsel %vm313, %v1072, 0
  %v1137 = vsel %vm313, %v1074, 0
  %v1140 = vsel %vm313, %v1076, 0
  %v1143 = vsel %vm313, %v1078, 0
  %v1146 = vsel %vm313, %v1080, 0
  %v1149 = vsel %vm313, %v1082, 0
  %v1152 = vsel %vm313, %v1084, 0
  %v1155 = vsel %vm313, %v1086, 0
  %v1158 = vsel %vm313, %v1088, 0
  %v1161 = vsel %vm313, %v1090, 0
  %1163 = vmatprep.subr.bf16.mxu0 0
  %1164 = vmatpush1.bf16.msra.mxu0 %v1107
  %1165 = vmatprep.subr.bf16.mxu0 0
  %1166 = vmatpush1.bf16.msra.mxu0 %v1108
  %1167 = vmatprep.subr.bf16.mxu0 0
  %1168 = vmatpush1.bf16.msra.mxu0 %v1109
  %1169 = vmatprep.subr.bf16.mxu0 0
  %1170 = vmatpush1.bf16.msra.mxu0 %v1110
  %1171 = vmatprep.subr.bf16.mxu0 0
  %1172 = vmatpush1.bf16.msra.mxu0 0
  %1173 = vmatprep.subr.bf16.mxu0 0
  %1174 = vmatpush1.bf16.msra.mxu0 0
  %1175 = vmatprep.subr.bf16.mxu0 0
  %1176 = vmatpush1.bf16.msra.mxu0 0
  %1177 = vmatprep.subr.bf16.mxu0 0
  %1178 = vmatpush1.bf16.msra.mxu0 0
  %1179 = vmatprep.subr.bf16.mxu0 0
  %1180 = vmatpush1.bf16.msra.mxu0 0
  %1181 = vmatprep.subr.bf16.mxu0 0
  %1182 = vmatpush1.bf16.msra.mxu0 0
  %1183 = vmatprep.subr.bf16.mxu0 0
  %1184 = vmatpush1.bf16.msra.mxu0 0
  %1185 = vmatprep.subr.bf16.mxu0 0
  %1186 = vmatpush1.bf16.msra.mxu0 0
  %1187 = vmatprep.subr.bf16.mxu0 0
  %1188 = vmatpush1.bf16.msra.mxu0 0
  %1189 = vmatprep.subr.bf16.mxu0 0
  %1190 = vmatpush1.bf16.msra.mxu0 0
  %1191 = vmatprep.subr.bf16.mxu0 0
  %1192 = vmatpush1.bf16.msra.mxu0 0
  %1193 = vmatprep.subr.bf16.mxu0 0
  %1194 = vmatpush1.bf16.msra.mxu0 0
  %1195 = vmatprep.mubr.bf16.mxu0 0
  %1196 = vmatmul.mubr.bf16.gmra.mrb[0].mxu0 %v1116
  %v1197 = vpop.f32.mrb[0].mxu0
  %v1198 = vadd.f32 0.0, %v1197
  %v1199 = vpop.f32.mrb[0].mxu0
  %v1200 = vpop.f32.mrb[0].mxu0
  %v1201 = vadd.f32 0.0, %v1200
  %v1202 = vpop.f32.mrb[0].mxu0
  %1203 = vmatprep.mubr.bf16.mxu0 0
  %1204 = vmatmul.mubr.bf16.gmra.mrb[0].mxu0 %v1119
  %v1205 = vpop.f32.mrb[0].mxu0
  %v1206 = vadd.f32 0.0, %v1205
  %v1207 = vpop.f32.mrb[0].mxu0
  %v1208 = vpop.f32.mrb[0].mxu0
  %v1209 = vadd.f32 0.0, %v1208
  %v1210 = vpop.f32.mrb[0].mxu0
  %1211 = vmatprep.mubr.bf16.mxu0 0
  %1212 = vmatmul.mubr.bf16.gmra.mrb[0].mxu0 %v1122
  %v1213 = vpop.f32.mrb[0].mxu0
  %v1214 = vadd.f32 0.0, %v1213
  %v1215 = vpop.f32.mrb[0].mxu0
  %v1216 = vpop.f32.mrb[0].mxu0
  %v1217 = vadd.f32 0.0, %v1216
  %v1218 = vpop.f32.mrb[0].mxu0
  %1219 = vmatprep.mubr.bf16.mxu0 0
  %1220 = vmatmul.mubr.bf16.gmra.mrb[0].mxu0 %v1125
  %v1221 = vpop.f32.mrb[0].mxu0
  %v1222 = vadd.f32 0.0, %v1221
  %v1223 = vpop.f32.mrb[0].mxu0
  %v1224 = vpop.f32.mrb[0].mxu0
  %v1225 = vadd.f32 0.0, %v1224
  %v1226 = vpop.f32.mrb[0].mxu0
  %1227 = vmatprep.mubr.bf16.mxu0 0
  %1228 = vmatmul.mubr.bf16.gmra.mrb[0].mxu0 %v1128
  %v1229 = vpop.f32.mrb[0].mxu0
  %v1230 = vadd.f32 0.0, %v1229
  %v1231 = vpop.f32.mrb[0].mxu0
  %v1232 = vpop.f32.mrb[0].mxu0
  %v1233 = vadd.f32 0.0, %v1232
  %v1234 = vpop.f32.mrb[0].mxu0
  %1235 = vmatprep.mubr.bf16.mxu0 0
  %1236 = vmatmul.mubr.bf16.gmra.mrb[0].mxu0 %v1131
  %v1237 = vpop.f32.mrb[0].mxu0
  %v1238 = vadd.f32 0.0, %v1237
  %v1239 = vpop.f32.mrb[0].mxu0
  %v1240 = vpop.f32.mrb[0].mxu0
  %v1241 = vadd.f32 0.0, %v1240
  %v1242 = vpop.f32.mrb[0].mxu0
  %1243 = vmatprep.mubr.bf16.mxu0 0
  %1244 = vmatmul.mubr.bf16.gmra.mrb[0].mxu0 %v1134
  %v1245 = vpop.f32.mrb[0].mxu0
  %v1246 = vadd.f32 0.0, %v1245
  %v1247 = vpop.f32.mrb[0].mxu0
  %v1248 = vpop.f32.mrb[0].mxu0
  %v1249 = vadd.f32 0.0, %v1248
  %v1250 = vpop.f32.mrb[0].mxu0
  %1251 = vmatprep.mubr.bf16.mxu0 0
  %1252 = vmatmul.mubr.bf16.gmra.mrb[0].mxu0 %v1137
  %v1253 = vpop.f32.mrb[0].mxu0
  %v1254 = vadd.f32 0.0, %v1253
  %v1255 = vpop.f32.mrb[0].mxu0
  %v1256 = vpop.f32.mrb[0].mxu0
  %v1257 = vadd.f32 0.0, %v1256
  %v1258 = vpop.f32.mrb[0].mxu0
  %1259 = vmatprep.mubr.bf16.mxu0 0
  %1260 = vmatmul.mubr.bf16.gmra.mrb[0].mxu0 %v1140
  %v1261 = vpop.f32.mrb[0].mxu0
  %v1262 = vadd.f32 0.0, %v1261
  %v1263 = vpop.f32.mrb[0].mxu0
  %v1264 = vpop.f32.mrb[0].mxu0
  %v1265 = vadd.f32 0.0, %v1264
  %v1266 = vpop.f32.mrb[0].mxu0
  %1267 = vmatprep.mubr.bf16.mxu0 0
  %1268 = vmatmul.mubr.bf16.gmra.mrb[0].mxu0 %v1143
  %v1269 = vpop.f32.mrb[0].mxu0
  %v1270 = vadd.f32 0.0, %v1269
  %v1271 = vpop.f32.mrb[0].mxu0
  %v1272 = vpop.f32.mrb[0].mxu0
  %v1273 = vadd.f32 0.0, %v1272
  %v1274 = vpop.f32.mrb[0].mxu0
  %1275 = vmatprep.mubr.bf16.mxu0 0
  %1276 = vmatmul.mubr.bf16.gmra.mrb[0].mxu0 %v1146
  %v1277 = vpop.f32.mrb[0].mxu0
  %v1278 = vadd.f32 0.0, %v1277
  %v1279 = vpop.f32.mrb[0].mxu0
  %v1280 = vpop.f32.mrb[0].mxu0
  %v1281 = vadd.f32 0.0, %v1280
  %v1282 = vpop.f32.mrb[0].mxu0
  %1283 = vmatprep.mubr.bf16.mxu0 0
  %1284 = vmatmul.mubr.bf16.gmra.mrb[0].mxu0 %v1149
  %v1285 = vpop.f32.mrb[0].mxu0
  %v1286 = vadd.f32 0.0, %v1285
  %v1287 = vpop.f32.mrb[0].mxu0
  %v1288 = vpop.f32.mrb[0].mxu0
  %v1289 = vadd.f32 0.0, %v1288
  %v1290 = vpop.f32.mrb[0].mxu0
  %1291 = vmatprep.mubr.bf16.mxu0 0
  %1292 = vmatmul.mubr.bf16.gmra.mrb[0].mxu0 %v1152
  %v1293 = vpop.f32.mrb[0].mxu0
  %v1294 = vadd.f32 0.0, %v1293
  %v1295 = vpop.f32.mrb[0].mxu0
  %v1296 = vpop.f32.mrb[0].mxu0
  %v1297 = vadd.f32 0.0, %v1296
  %v1298 = vpop.f32.mrb[0].mxu0
  %1299 = vmatprep.mubr.bf16.mxu0 0
  %1300 = vmatmul.mubr.bf16.gmra.mrb[0].mxu0 %v1155
  %v1301 = vpop.f32.mrb[0].mxu0
  %v1302 = vadd.f32 0.0, %v1301
  %v1303 = vpop.f32.mrb[0].mxu0
  %v1304 = vpop.f32.mrb[0].mxu0
  %v1305 = vadd.f32 0.0, %v1304
  %v1306 = vpop.f32.mrb[0].mxu0
  %1307 = vmatprep.mubr.bf16.mxu0 0
  %1308 = vmatmul.mubr.bf16.gmra.mrb[0].mxu0 %v1158
  %v1309 = vpop.f32.mrb[0].mxu0
  %v1310 = vadd.f32 0.0, %v1309
  %v1311 = vpop.f32.mrb[0].mxu0
  %v1312 = vpop.f32.mrb[0].mxu0
  %v1313 = vadd.f32 0.0, %v1312
  %v1314 = vpop.f32.mrb[0].mxu0
  %1315 = vmatprep.mubr.bf16.mxu0 0
  %1316 = vmatmul.mubr.bf16.gmra.mrb[0].mxu0 %v1161
  %v1317 = vpop.f32.mrb[0].mxu0
  %v1318 = vadd.f32 0.0, %v1317
  %v1319 = vpop.f32.mrb[0].mxu0
  %v1320 = vpop.f32.mrb[0].mxu0
  %v1321 = vadd.f32 0.0, %v1320
  %v1322 = vpop.f32.mrb[0].mxu0
  %1323 = vdwg.mxu0
  %v1324 = vadd.f32 %v1016, %v1198
  %v1325 = vadd.f32 %v1017, %v1201
  %v1326 = vadd.f32 %v1018, %v1206
  %v1327 = vadd.f32 %v1019, %v1209
  %v1328 = vadd.f32 %v1020, %v1214
  %v1329 = vadd.f32 %v1021, %v1217
  %v1330 = vadd.f32 %v1022, %v1222
  %v1331 = vadd.f32 %v1023, %v1225
  %v1332 = vadd.f32 %v1024, %v1230
  %v1333 = vadd.f32 %v1025, %v1233
  %v1334 = vadd.f32 %v1026, %v1238
  %v1335 = vadd.f32 %v1027, %v1241
  %v1336 = vadd.f32 %v1028, %v1246
  %v1337 = vadd.f32 %v1029, %v1249
  %v1338 = vadd.f32 %v1030, %v1254
  %v1339 = vadd.f32 %v1031, %v1257
  %v1340 = vadd.f32 %v1032, %v1262
  %v1341 = vadd.f32 %v1033, %v1265
  %v1342 = vadd.f32 %v1034, %v1270
  %v1343 = vadd.f32 %v1035, %v1273
  %v1344 = vadd.f32 %v1036, %v1278
  %v1345 = vadd.f32 %v1037, %v1281
  %v1346 = vadd.f32 %v1038, %v1286
  %v1347 = vadd.f32 %v1039, %v1289
  %v1348 = vadd.f32 %v1040, %v1294
  %v1349 = vadd.f32 %v1041, %v1297
  %v1350 = vadd.f32 %v1042, %v1302
  %v1351 = vadd.f32 %v1043, %v1305
  %v1352 = vadd.f32 %v1044, %v1310
  %v1353 = vadd.f32 %v1045, %v1313
  %v1354 = vadd.f32 %v1046, %v1318
  %v1355 = vadd.f32 %v1047, %v1321
  %s1356 = scalar_lea.vmem %s1, 128
  %v1357 = vld [vmem:[%s1356] sm:$0xf]
  %v1358 = vld [vmem:[%s1356 + $0x4] sm:$0xf]
  %v1359 = vld [vmem:[%s1356 + $0x8] sm:$0xf]
  %v1360 = vld [vmem:[%s1356 + $0xc] sm:$0xf]
  %v1361 = vld [vmem:[%s1356 + $0x10] sm:$0xf]
  %v1362 = vld [vmem:[%s1356 + $0x14] sm:$0xf]
  %v1363 = vld [vmem:[%s1356 + $0x18] sm:$0xf]
  %v1364 = vld [vmem:[%s1356 + $0x1c] sm:$0xf]
  %vm1365 = vsmask.f32 4352
  %v1366 = vrot.slane %v158, 3
  %v1367 = vrot.slane %v160, 4
  %v1368 = vor.u32 %v1366, %v1367
  %v1369 = vrot.slane %v169, 3
  %v1370 = vrot.slane %v165, 4
  %v1371 = vor.u32 %v1369, %v1370
  %v1372 = vsel %vm1365, %v1368, %v1371
  %v1373 = vrot.slane %v177, 3
  %v1374 = vrot.slane %v173, 4
  %v1375 = vor.u32 %v1373, %v1374
  %v1376 = vsel %vm1365, %v1371, %v1375
  %v1377 = vrot.slane %v185, 3
  %v1378 = vrot.slane %v181, 4
  %v1379 = vor.u32 %v1377, %v1378
  %v1380 = vsel %vm1365, %v1375, %v1379
  %v1381 = vrot.slane %v193, 3
  %v1382 = vrot.slane %v189, 4
  %v1383 = vor.u32 %v1381, %v1382
  %v1384 = vsel %vm1365, %v1379, %v1383
  %v1385 = vrot.slane %v201, 3
  %v1386 = vrot.slane %v197, 4
  %v1387 = vor.u32 %v1385, %v1386
  %v1388 = vsel %vm1365, %v1383, %v1387
  %v1389 = vrot.slane %v209, 3
  %v1390 = vrot.slane %v205, 4
  %v1391 = vor.u32 %v1389, %v1390
  %v1392 = vsel %vm1365, %v1387, %v1391
  %v1393 = vrot.slane %v217, 3
  %v1394 = vrot.slane %v213, 4
  %v1395 = vor.u32 %v1393, %v1394
  %v1396 = vsel %vm1365, %v1391, %v1395
  %v1397 = vrot.slane %v225, 3
  %v1398 = vrot.slane %v221, 4
  %v1399 = vor.u32 %v1397, %v1398
  %v1400 = vsel %vm1365, %v1395, %v1399
  %v1401 = vrot.slane %v233, 3
  %v1402 = vrot.slane %v229, 4
  %v1403 = vor.u32 %v1401, %v1402
  %v1404 = vsel %vm1365, %v1399, %v1403
  %v1405 = vrot.slane %v241, 3
  %v1406 = vrot.slane %v237, 4
  %v1407 = vor.u32 %v1405, %v1406
  %v1408 = vsel %vm1365, %v1403, %v1407
  %v1409 = vrot.slane %v249, 3
  %v1410 = vrot.slane %v245, 4
  %v1411 = vor.u32 %v1409, %v1410
  %v1412 = vsel %vm1365, %v1407, %v1411
  %v1413 = vrot.slane %v257, 3
  %v1414 = vrot.slane %v253, 4
  %v1415 = vor.u32 %v1413, %v1414
  %v1416 = vsel %vm1365, %v1411, %v1415
  %v1417 = vrot.slane %v265, 3
  %v1418 = vrot.slane %v261, 4
  %v1419 = vor.u32 %v1417, %v1418
  %v1420 = vsel %vm1365, %v1415, %v1419
  %v1421 = vrot.slane %v273, 3
  %v1422 = vrot.slane %v269, 4
  %v1423 = vor.u32 %v1421, %v1422
  %v1424 = vsel %vm1365, %v1419, %v1423
  %v1425 = vrot.slane %v281, 3
  %v1426 = vrot.slane %v277, 4
  %v1427 = vor.u32 %v1425, %v1426
  %v1428 = vsel %vm1365, %v1423, %v1427
  %v1429 = vshrl.u32 %v155, 16
  %v1431 = vrot.slane %v1429, 3
  %v1432 = vrot.slane %v285, 4
  %v1433 = vor.u32 %v1431, %v1432
  %v1434 = vsel %vm1365, %v1427, %v1433
  %v1443 = vunpack.c.l.b16 %v1357
  %v1444 = vunpack.c.l.b16 %v1358
  %v1445 = vunpack.c.l.b16 %v1359
  %v1446 = vunpack.c.l.b16 %v1360
  %v1447 = vunpack.c.l.b16 %v1361
  %v1448 = vunpack.c.l.b16 %v1362
  %v1449 = vunpack.c.l.b16 %v1363
  %v1450 = vunpack.c.l.b16 %v1364
  %v1451 = vpack.c.b16 %v1444, %v1443
  %v1452 = vpack.c.b16 %v1446, %v1445
  %v1453 = vpack.c.b16 %v1448, %v1447
  %v1454 = vpack.c.b16 %v1450, %v1449
  %v1460 = vsel %vm313, %v1372, 0
  %v1463 = vsel %vm313, %v1376, 0
  %v1466 = vsel %vm313, %v1380, 0
  %v1469 = vsel %vm313, %v1384, 0
  %v1472 = vsel %vm313, %v1388, 0
  %v1475 = vsel %vm313, %v1392, 0
  %v1478 = vsel %vm313, %v1396, 0
  %v1481 = vsel %vm313, %v1400, 0
  %v1484 = vsel %vm313, %v1404, 0
  %v1487 = vsel %vm313, %v1408, 0
  %v1490 = vsel %vm313, %v1412, 0
  %v1493 = vsel %vm313, %v1416, 0
  %v1496 = vsel %vm313, %v1420, 0
  %v1499 = vsel %vm313, %v1424, 0
  %v1502 = vsel %vm313, %v1428, 0
  %v1505 = vsel %vm313, %v1434, 0
  %1507 = vmatprep.subr.bf16.mxu0 0
  %1508 = vmatpush1.bf16.msra.mxu0 %v1451
  %1509 = vmatprep.subr.bf16.mxu0 0
  %1510 = vmatpush1.bf16.msra.mxu0 %v1452
  %1511 = vmatprep.subr.bf16.mxu0 0
  %1512 = vmatpush1.bf16.msra.mxu0 %v1453
  %1513 = vmatprep.subr.bf16.mxu0 0
  %1514 = vmatpush1.bf16.msra.mxu0 %v1454
  %1515 = vmatprep.subr.bf16.mxu0 0
  %1516 = vmatpush1.bf16.msra.mxu0 0
  %1517 = vmatprep.subr.bf16.mxu0 0
  %1518 = vmatpush1.bf16.msra.mxu0 0
  %1519 = vmatprep.subr.bf16.mxu0 0
  %1520 = vmatpush1.bf16.msra.mxu0 0
  %1521 = vmatprep.subr.bf16.mxu0 0
  %1522 = vmatpush1.bf16.msra.mxu0 0
  %1523 = vmatprep.subr.bf16.mxu0 0
  %1524 = vmatpush1.bf16.msra.mxu0 0
  %1525 = vmatprep.subr.bf16.mxu0 0
  %1526 = vmatpush1.bf16.msra.mxu0 0
  %1527 = vmatprep.subr.bf16.mxu0 0
  %1528 = vmatpush1.bf16.msra.mxu0 0
  %1529 = vmatprep.subr.bf16.mxu0 0
  %1530 = vmatpush1.bf16.msra.mxu0 0
  %1531 = vmatprep.subr.bf16.mxu0 0
  %1532 = vmatpush1.bf16.msra.mxu0 0
  %1533 = vmatprep.subr.bf16.mxu0 0
  %1534 = vmatpush1.bf16.msra.mxu0 0
  %1535 = vmatprep.subr.bf16.mxu0 0
  %1536 = vmatpush1.bf16.msra.mxu0 0
  %1537 = vmatprep.subr.bf16.mxu0 0
  %1538 = vmatpush1.bf16.msra.mxu0 0
  %1539 = vmatprep.mubr.bf16.mxu0 0
  %1540 = vmatmul.mubr.bf16.gmra.mrb[0].mxu0 %v1460
  %v1541 = vpop.f32.mrb[0].mxu0
  %v1542 = vadd.f32 0.0, %v1541
  %v1543 = vpop.f32.mrb[0].mxu0
  %v1544 = vpop.f32.mrb[0].mxu0
  %v1545 = vadd.f32 0.0, %v1544
  %v1546 = vpop.f32.mrb[0].mxu0
  %1547 = vmatprep.mubr.bf16.mxu0 0
  %1548 = vmatmul.mubr.bf16.gmra.mrb[0].mxu0 %v1463
  %v1549 = vpop.f32.mrb[0].mxu0
  %v1550 = vadd.f32 0.0, %v1549
  %v1551 = vpop.f32.mrb[0].mxu0
  %v1552 = vpop.f32.mrb[0].mxu0
  %v1553 = vadd.f32 0.0, %v1552
  %v1554 = vpop.f32.mrb[0].mxu0
  %1555 = vmatprep.mubr.bf16.mxu0 0
  %1556 = vmatmul.mubr.bf16.gmra.mrb[0].mxu0 %v1466
  %v1557 = vpop.f32.mrb[0].mxu0
  %v1558 = vadd.f32 0.0, %v1557
  %v1559 = vpop.f32.mrb[0].mxu0
  %v1560 = vpop.f32.mrb[0].mxu0
  %v1561 = vadd.f32 0.0, %v1560
  %v1562 = vpop.f32.mrb[0].mxu0
  %1563 = vmatprep.mubr.bf16.mxu0 0
  %1564 = vmatmul.mubr.bf16.gmra.mrb[0].mxu0 %v1469
  %v1565 = vpop.f32.mrb[0].mxu0
  %v1566 = vadd.f32 0.0, %v1565
  %v1567 = vpop.f32.mrb[0].mxu0
  %v1568 = vpop.f32.mrb[0].mxu0
  %v1569 = vadd.f32 0.0, %v1568
  %v1570 = vpop.f32.mrb[0].mxu0
  %1571 = vmatprep.mubr.bf16.mxu0 0
  %1572 = vmatmul.mubr.bf16.gmra.mrb[0].mxu0 %v1472
  %v1573 = vpop.f32.mrb[0].mxu0
  %v1574 = vadd.f32 0.0, %v1573
  %v1575 = vpop.f32.mrb[0].mxu0
  %v1576 = vpop.f32.mrb[0].mxu0
  %v1577 = vadd.f32 0.0, %v1576
  %v1578 = vpop.f32.mrb[0].mxu0
  %1579 = vmatprep.mubr.bf16.mxu0 0
  %1580 = vmatmul.mubr.bf16.gmra.mrb[0].mxu0 %v1475
  %v1581 = vpop.f32.mrb[0].mxu0
  %v1582 = vadd.f32 0.0, %v1581
  %v1583 = vpop.f32.mrb[0].mxu0
  %v1584 = vpop.f32.mrb[0].mxu0
  %v1585 = vadd.f32 0.0, %v1584
  %v1586 = vpop.f32.mrb[0].mxu0
  %1587 = vmatprep.mubr.bf16.mxu0 0
  %1588 = vmatmul.mubr.bf16.gmra.mrb[0].mxu0 %v1478
  %v1589 = vpop.f32.mrb[0].mxu0
  %v1590 = vadd.f32 0.0, %v1589
  %v1591 = vpop.f32.mrb[0].mxu0
  %v1592 = vpop.f32.mrb[0].mxu0
  %v1593 = vadd.f32 0.0, %v1592
  %v1594 = vpop.f32.mrb[0].mxu0
  %1595 = vmatprep.mubr.bf16.mxu0 0
  %1596 = vmatmul.mubr.bf16.gmra.mrb[0].mxu0 %v1481
  %v1597 = vpop.f32.mrb[0].mxu0
  %v1598 = vadd.f32 0.0, %v1597
  %v1599 = vpop.f32.mrb[0].mxu0
  %v1600 = vpop.f32.mrb[0].mxu0
  %v1601 = vadd.f32 0.0, %v1600
  %v1602 = vpop.f32.mrb[0].mxu0
  %1603 = vmatprep.mubr.bf16.mxu0 0
  %1604 = vmatmul.mubr.bf16.gmra.mrb[0].mxu0 %v1484
  %v1605 = vpop.f32.mrb[0].mxu0
  %v1606 = vadd.f32 0.0, %v1605
  %v1607 = vpop.f32.mrb[0].mxu0
  %v1608 = vpop.f32.mrb[0].mxu0
  %v1609 = vadd.f32 0.0, %v1608
  %v1610 = vpop.f32.mrb[0].mxu0
  %1611 = vmatprep.mubr.bf16.mxu0 0
  %1612 = vmatmul.mubr.bf16.gmra.mrb[0].mxu0 %v1487
  %v1613 = vpop.f32.mrb[0].mxu0
  %v1614 = vadd.f32 0.0, %v1613
  %v1615 = vpop.f32.mrb[0].mxu0
  %v1616 = vpop.f32.mrb[0].mxu0
  %v1617 = vadd.f32 0.0, %v1616
  %v1618 = vpop.f32.mrb[0].mxu0
  %1619 = vmatprep.mubr.bf16.mxu0 0
  %1620 = vmatmul.mubr.bf16.gmra.mrb[0].mxu0 %v1490
  %v1621 = vpop.f32.mrb[0].mxu0
  %v1622 = vadd.f32 0.0, %v1621
  %v1623 = vpop.f32.mrb[0].mxu0
  %v1624 = vpop.f32.mrb[0].mxu0
  %v1625 = vadd.f32 0.0, %v1624
  %v1626 = vpop.f32.mrb[0].mxu0
  %1627 = vmatprep.mubr.bf16.mxu0 0
  %1628 = vmatmul.mubr.bf16.gmra.mrb[0].mxu0 %v1493
  %v1629 = vpop.f32.mrb[0].mxu0
  %v1630 = vadd.f32 0.0, %v1629
  %v1631 = vpop.f32.mrb[0].mxu0
  %v1632 = vpop.f32.mrb[0].mxu0
  %v1633 = vadd.f32 0.0, %v1632
  %v1634 = vpop.f32.mrb[0].mxu0
  %1635 = vmatprep.mubr.bf16.mxu0 0
  %1636 = vmatmul.mubr.bf16.gmra.mrb[0].mxu0 %v1496
  %v1637 = vpop.f32.mrb[0].mxu0
  %v1638 = vadd.f32 0.0, %v1637
  %v1639 = vpop.f32.mrb[0].mxu0
  %v1640 = vpop.f32.mrb[0].mxu0
  %v1641 = vadd.f32 0.0, %v1640
  %v1642 = vpop.f32.mrb[0].mxu0
  %1643 = vmatprep.mubr.bf16.mxu0 0
  %1644 = vmatmul.mubr.bf16.gmra.mrb[0].mxu0 %v1499
  %v1645 = vpop.f32.mrb[0].mxu0
  %v1646 = vadd.f32 0.0, %v1645
  %v1647 = vpop.f32.mrb[0].mxu0
  %v1648 = vpop.f32.mrb[0].mxu0
  %v1649 = vadd.f32 0.0, %v1648
  %v1650 = vpop.f32.mrb[0].mxu0
  %1651 = vmatprep.mubr.bf16.mxu0 0
  %1652 = vmatmul.mubr.bf16.gmra.mrb[0].mxu0 %v1502
  %v1653 = vpop.f32.mrb[0].mxu0
  %v1654 = vadd.f32 0.0, %v1653
  %v1655 = vpop.f32.mrb[0].mxu0
  %v1656 = vpop.f32.mrb[0].mxu0
  %v1657 = vadd.f32 0.0, %v1656
  %v1658 = vpop.f32.mrb[0].mxu0
  %1659 = vmatprep.mubr.bf16.mxu0 0
  %1660 = vmatmul.mubr.bf16.gmra.mrb[0].mxu0 %v1505
  %v1661 = vpop.f32.mrb[0].mxu0
  %v1662 = vadd.f32 0.0, %v1661
  %v1663 = vpop.f32.mrb[0].mxu0
  %v1664 = vpop.f32.mrb[0].mxu0
  %v1665 = vadd.f32 0.0, %v1664
  %v1666 = vpop.f32.mrb[0].mxu0
  %1667 = vdwg.mxu0
  %v1668 = vadd.f32 %v1324, %v1542
  %v1669 = vadd.f32 %v1325, %v1545
  %v1670 = vadd.f32 %v1326, %v1550
  %v1671 = vadd.f32 %v1327, %v1553
  %v1672 = vadd.f32 %v1328, %v1558
  %v1673 = vadd.f32 %v1329, %v1561
  %v1674 = vadd.f32 %v1330, %v1566
  %v1675 = vadd.f32 %v1331, %v1569
  %v1676 = vadd.f32 %v1332, %v1574
  %v1677 = vadd.f32 %v1333, %v1577
  %v1678 = vadd.f32 %v1334, %v1582
  %v1679 = vadd.f32 %v1335, %v1585
  %v1680 = vadd.f32 %v1336, %v1590
  %v1681 = vadd.f32 %v1337, %v1593
  %v1682 = vadd.f32 %v1338, %v1598
  %v1683 = vadd.f32 %v1339, %v1601
  %v1684 = vadd.f32 %v1340, %v1606
  %v1685 = vadd.f32 %v1341, %v1609
  %v1686 = vadd.f32 %v1342, %v1614
  %v1687 = vadd.f32 %v1343, %v1617
  %v1688 = vadd.f32 %v1344, %v1622
  %v1689 = vadd.f32 %v1345, %v1625
  %v1690 = vadd.f32 %v1346, %v1630
  %v1691 = vadd.f32 %v1347, %v1633
  %v1692 = vadd.f32 %v1348, %v1638
  %v1693 = vadd.f32 %v1349, %v1641
  %v1694 = vadd.f32 %v1350, %v1646
  %v1695 = vadd.f32 %v1351, %v1649
  %v1696 = vadd.f32 %v1352, %v1654
  %v1697 = vadd.f32 %v1353, %v1657
  %v1698 = vadd.f32 %v1354, %v1662
  %v1699 = vadd.f32 %v1355, %v1665
  %s1700 = scalar_lea.vmem %s1, 160
  %v1701 = vld [vmem:[%s1700] sm:$0xf]
  %v1702 = vld [vmem:[%s1700 + $0x4] sm:$0xf]
  %v1703 = vld [vmem:[%s1700 + $0x8] sm:$0xf]
  %v1704 = vld [vmem:[%s1700 + $0xc] sm:$0xf]
  %v1705 = vld [vmem:[%s1700 + $0x10] sm:$0xf]
  %v1706 = vld [vmem:[%s1700 + $0x14] sm:$0xf]
  %v1707 = vld [vmem:[%s1700 + $0x18] sm:$0xf]
  %v1708 = vld [vmem:[%s1700 + $0x1c] sm:$0xf]
  %v1709 = vpack.c.b16 %v108, %v107
  %v1710 = vpack.c.b16 %v110, %v109
  %v1711 = vpack.c.b16 %v112, %v111
  %v1712 = vpack.c.b16 %v114, %v113
  %v1713 = vpack.c.b16 %v116, %v115
  %v1714 = vpack.c.b16 %v118, %v117
  %v1715 = vpack.c.b16 %v120, %v119
  %v1716 = vpack.c.b16 %v122, %v121
  %v1717 = vpack.c.b16 %v124, %v123
  %v1718 = vpack.c.b16 %v126, %v125
  %v1719 = vpack.c.b16 %v128, %v127
  %v1720 = vpack.c.b16 %v130, %v129
  %v1721 = vpack.c.b16 %v132, %v131
  %v1722 = vpack.c.b16 %v134, %v133
  %v1723 = vpack.c.b16 %v136, %v135
  %v1724 = vpack.c.b16 %v138, %v137
  %v1733 = vunpack.c.l.b16 %v1701
  %v1734 = vunpack.c.l.b16 %v1702
  %v1735 = vunpack.c.l.b16 %v1703
  %v1736 = vunpack.c.l.b16 %v1704
  %v1737 = vunpack.c.l.b16 %v1705
  %v1738 = vunpack.c.l.b16 %v1706
  %v1739 = vunpack.c.l.b16 %v1707
  %v1740 = vunpack.c.l.b16 %v1708
  %v1741 = vpack.c.b16 %v1734, %v1733
  %v1742 = vpack.c.b16 %v1736, %v1735
  %v1743 = vpack.c.b16 %v1738, %v1737
  %v1744 = vpack.c.b16 %v1740, %v1739
  %v1750 = vsel %vm313, %v1709, 0
  %v1753 = vsel %vm313, %v1710, 0
  %v1756 = vsel %vm313, %v1711, 0
  %v1759 = vsel %vm313, %v1712, 0
  %v1762 = vsel %vm313, %v1713, 0
  %v1765 = vsel %vm313, %v1714, 0
  %v1768 = vsel %vm313, %v1715, 0
  %v1771 = vsel %vm313, %v1716, 0
  %v1774 = vsel %vm313, %v1717, 0
  %v1777 = vsel %vm313, %v1718, 0
  %v1780 = vsel %vm313, %v1719, 0
  %v1783 = vsel %vm313, %v1720, 0
  %v1786 = vsel %vm313, %v1721, 0
  %v1789 = vsel %vm313, %v1722, 0
  %v1792 = vsel %vm313, %v1723, 0
  %v1795 = vsel %vm313, %v1724, 0
  %1797 = vmatprep.subr.bf16.mxu0 0
  %1798 = vmatpush1.bf16.msra.mxu0 %v1741
  %1799 = vmatprep.subr.bf16.mxu0 0
  %1800 = vmatpush1.bf16.msra.mxu0 %v1742
  %1801 = vmatprep.subr.bf16.mxu0 0
  %1802 = vmatpush1.bf16.msra.mxu0 %v1743
  %1803 = vmatprep.subr.bf16.mxu0 0
  %1804 = vmatpush1.bf16.msra.mxu0 %v1744
  %1805 = vmatprep.subr.bf16.mxu0 0
  %1806 = vmatpush1.bf16.msra.mxu0 0
  %1807 = vmatprep.subr.bf16.mxu0 0
  %1808 = vmatpush1.bf16.msra.mxu0 0
  %1809 = vmatprep.subr.bf16.mxu0 0
  %1810 = vmatpush1.bf16.msra.mxu0 0
  %1811 = vmatprep.subr.bf16.mxu0 0
  %1812 = vmatpush1.bf16.msra.mxu0 0
  %1813 = vmatprep.subr.bf16.mxu0 0
  %1814 = vmatpush1.bf16.msra.mxu0 0
  %1815 = vmatprep.subr.bf16.mxu0 0
  %1816 = vmatpush1.bf16.msra.mxu0 0
  %1817 = vmatprep.subr.bf16.mxu0 0
  %1818 = vmatpush1.bf16.msra.mxu0 0
  %1819 = vmatprep.subr.bf16.mxu0 0
  %1820 = vmatpush1.bf16.msra.mxu0 0
  %1821 = vmatprep.subr.bf16.mxu0 0
  %1822 = vmatpush1.bf16.msra.mxu0 0
  %1823 = vmatprep.subr.bf16.mxu0 0
  %1824 = vmatpush1.bf16.msra.mxu0 0
  %1825 = vmatprep.subr.bf16.mxu0 0
  %1826 = vmatpush1.bf16.msra.mxu0 0
  %1827 = vmatprep.subr.bf16.mxu0 0
  %1828 = vmatpush1.bf16.msra.mxu0 0
  %1829 = vmatprep.mubr.bf16.mxu0 0
  %1830 = vmatmul.mubr.bf16.gmra.mrb[0].mxu0 %v1750
  %v1831 = vpop.f32.mrb[0].mxu0
  %v1832 = vadd.f32 0.0, %v1831
  %v1833 = vpop.f32.mrb[0].mxu0
  %v1834 = vpop.f32.mrb[0].mxu0
  %v1835 = vadd.f32 0.0, %v1834
  %v1836 = vpop.f32.mrb[0].mxu0
  %1837 = vmatprep.mubr.bf16.mxu0 0
  %1838 = vmatmul.mubr.bf16.gmra.mrb[0].mxu0 %v1753
  %v1839 = vpop.f32.mrb[0].mxu0
  %v1840 = vadd.f32 0.0, %v1839
  %v1841 = vpop.f32.mrb[0].mxu0
  %v1842 = vpop.f32.mrb[0].mxu0
  %v1843 = vadd.f32 0.0, %v1842
  %v1844 = vpop.f32.mrb[0].mxu0
  %1845 = vmatprep.mubr.bf16.mxu0 0
  %1846 = vmatmul.mubr.bf16.gmra.mrb[0].mxu0 %v1756
  %v1847 = vpop.f32.mrb[0].mxu0
  %v1848 = vadd.f32 0.0, %v1847
  %v1849 = vpop.f32.mrb[0].mxu0
  %v1850 = vpop.f32.mrb[0].mxu0
  %v1851 = vadd.f32 0.0, %v1850
  %v1852 = vpop.f32.mrb[0].mxu0
  %1853 = vmatprep.mubr.bf16.mxu0 0
  %1854 = vmatmul.mubr.bf16.gmra.mrb[0].mxu0 %v1759
  %v1855 = vpop.f32.mrb[0].mxu0
  %v1856 = vadd.f32 0.0, %v1855
  %v1857 = vpop.f32.mrb[0].mxu0
  %v1858 = vpop.f32.mrb[0].mxu0
  %v1859 = vadd.f32 0.0, %v1858
  %v1860 = vpop.f32.mrb[0].mxu0
  %1861 = vmatprep.mubr.bf16.mxu0 0
  %1862 = vmatmul.mubr.bf16.gmra.mrb[0].mxu0 %v1762
  %v1863 = vpop.f32.mrb[0].mxu0
  %v1864 = vadd.f32 0.0, %v1863
  %v1865 = vpop.f32.mrb[0].mxu0
  %v1866 = vpop.f32.mrb[0].mxu0
  %v1867 = vadd.f32 0.0, %v1866
  %v1868 = vpop.f32.mrb[0].mxu0
  %1869 = vmatprep.mubr.bf16.mxu0 0
  %1870 = vmatmul.mubr.bf16.gmra.mrb[0].mxu0 %v1765
  %v1871 = vpop.f32.mrb[0].mxu0
  %v1872 = vadd.f32 0.0, %v1871
  %v1873 = vpop.f32.mrb[0].mxu0
  %v1874 = vpop.f32.mrb[0].mxu0
  %v1875 = vadd.f32 0.0, %v1874
  %v1876 = vpop.f32.mrb[0].mxu0
  %1877 = vmatprep.mubr.bf16.mxu0 0
  %1878 = vmatmul.mubr.bf16.gmra.mrb[0].mxu0 %v1768
  %v1879 = vpop.f32.mrb[0].mxu0
  %v1880 = vadd.f32 0.0, %v1879
  %v1881 = vpop.f32.mrb[0].mxu0
  %v1882 = vpop.f32.mrb[0].mxu0
  %v1883 = vadd.f32 0.0, %v1882
  %v1884 = vpop.f32.mrb[0].mxu0
  %1885 = vmatprep.mubr.bf16.mxu0 0
  %1886 = vmatmul.mubr.bf16.gmra.mrb[0].mxu0 %v1771
  %v1887 = vpop.f32.mrb[0].mxu0
  %v1888 = vadd.f32 0.0, %v1887
  %v1889 = vpop.f32.mrb[0].mxu0
  %v1890 = vpop.f32.mrb[0].mxu0
  %v1891 = vadd.f32 0.0, %v1890
  %v1892 = vpop.f32.mrb[0].mxu0
  %1893 = vmatprep.mubr.bf16.mxu0 0
  %1894 = vmatmul.mubr.bf16.gmra.mrb[0].mxu0 %v1774
  %v1895 = vpop.f32.mrb[0].mxu0
  %v1896 = vadd.f32 0.0, %v1895
  %v1897 = vpop.f32.mrb[0].mxu0
  %v1898 = vpop.f32.mrb[0].mxu0
  %v1899 = vadd.f32 0.0, %v1898
  %v1900 = vpop.f32.mrb[0].mxu0
  %1901 = vmatprep.mubr.bf16.mxu0 0
  %1902 = vmatmul.mubr.bf16.gmra.mrb[0].mxu0 %v1777
  %v1903 = vpop.f32.mrb[0].mxu0
  %v1904 = vadd.f32 0.0, %v1903
  %v1905 = vpop.f32.mrb[0].mxu0
  %v1906 = vpop.f32.mrb[0].mxu0
  %v1907 = vadd.f32 0.0, %v1906
  %v1908 = vpop.f32.mrb[0].mxu0
  %1909 = vmatprep.mubr.bf16.mxu0 0
  %1910 = vmatmul.mubr.bf16.gmra.mrb[0].mxu0 %v1780
  %v1911 = vpop.f32.mrb[0].mxu0
  %v1912 = vadd.f32 0.0, %v1911
  %v1913 = vpop.f32.mrb[0].mxu0
  %v1914 = vpop.f32.mrb[0].mxu0
  %v1915 = vadd.f32 0.0, %v1914
  %v1916 = vpop.f32.mrb[0].mxu0
  %1917 = vmatprep.mubr.bf16.mxu0 0
  %1918 = vmatmul.mubr.bf16.gmra.mrb[0].mxu0 %v1783
  %v1919 = vpop.f32.mrb[0].mxu0
  %v1920 = vadd.f32 0.0, %v1919
  %v1921 = vpop.f32.mrb[0].mxu0
  %v1922 = vpop.f32.mrb[0].mxu0
  %v1923 = vadd.f32 0.0, %v1922
  %v1924 = vpop.f32.mrb[0].mxu0
  %1925 = vmatprep.mubr.bf16.mxu0 0
  %1926 = vmatmul.mubr.bf16.gmra.mrb[0].mxu0 %v1786
  %v1927 = vpop.f32.mrb[0].mxu0
  %v1928 = vadd.f32 0.0, %v1927
  %v1929 = vpop.f32.mrb[0].mxu0
  %v1930 = vpop.f32.mrb[0].mxu0
  %v1931 = vadd.f32 0.0, %v1930
  %v1932 = vpop.f32.mrb[0].mxu0
  %1933 = vmatprep.mubr.bf16.mxu0 0
  %1934 = vmatmul.mubr.bf16.gmra.mrb[0].mxu0 %v1789
  %v1935 = vpop.f32.mrb[0].mxu0
  %v1936 = vadd.f32 0.0, %v1935
  %v1937 = vpop.f32.mrb[0].mxu0
  %v1938 = vpop.f32.mrb[0].mxu0
  %v1939 = vadd.f32 0.0, %v1938
  %v1940 = vpop.f32.mrb[0].mxu0
  %1941 = vmatprep.mubr.bf16.mxu0 0
  %1942 = vmatmul.mubr.bf16.gmra.mrb[0].mxu0 %v1792
  %v1943 = vpop.f32.mrb[0].mxu0
  %v1944 = vadd.f32 0.0, %v1943
  %v1945 = vpop.f32.mrb[0].mxu0
  %v1946 = vpop.f32.mrb[0].mxu0
  %v1947 = vadd.f32 0.0, %v1946
  %v1948 = vpop.f32.mrb[0].mxu0
  %1949 = vmatprep.mubr.bf16.mxu0 0
  %1950 = vmatmul.mubr.bf16.gmra.mrb[0].mxu0 %v1795
  %v1951 = vpop.f32.mrb[0].mxu0
  %v1952 = vadd.f32 0.0, %v1951
  %v1953 = vpop.f32.mrb[0].mxu0
  %v1954 = vpop.f32.mrb[0].mxu0
  %v1955 = vadd.f32 0.0, %v1954
  %v1956 = vpop.f32.mrb[0].mxu0
  %1957 = vdwg.mxu0
  %v1958 = vadd.f32 %v1668, %v1832
  %v1959 = vadd.f32 %v1669, %v1835
  %v1960 = vadd.f32 %v1670, %v1840
  %v1961 = vadd.f32 %v1671, %v1843
  %v1962 = vadd.f32 %v1672, %v1848
  %v1963 = vadd.f32 %v1673, %v1851
  %v1964 = vadd.f32 %v1674, %v1856
  %v1965 = vadd.f32 %v1675, %v1859
  %v1966 = vadd.f32 %v1676, %v1864
  %v1967 = vadd.f32 %v1677, %v1867
  %v1968 = vadd.f32 %v1678, %v1872
  %v1969 = vadd.f32 %v1679, %v1875
  %v1970 = vadd.f32 %v1680, %v1880
  %v1971 = vadd.f32 %v1681, %v1883
  %v1972 = vadd.f32 %v1682, %v1888
  %v1973 = vadd.f32 %v1683, %v1891
  %v1974 = vadd.f32 %v1684, %v1896
  %v1975 = vadd.f32 %v1685, %v1899
  %v1976 = vadd.f32 %v1686, %v1904
  %v1977 = vadd.f32 %v1687, %v1907
  %v1978 = vadd.f32 %v1688, %v1912
  %v1979 = vadd.f32 %v1689, %v1915
  %v1980 = vadd.f32 %v1690, %v1920
  %v1981 = vadd.f32 %v1691, %v1923
  %v1982 = vadd.f32 %v1692, %v1928
  %v1983 = vadd.f32 %v1693, %v1931
  %v1984 = vadd.f32 %v1694, %v1936
  %v1985 = vadd.f32 %v1695, %v1939
  %v1986 = vadd.f32 %v1696, %v1944
  %v1987 = vadd.f32 %v1697, %v1947
  %v1988 = vadd.f32 %v1698, %v1952
  %v1989 = vadd.f32 %v1699, %v1955
  %s1990 = scalar_lea.vmem %s1, 192
  %v1991 = vld [vmem:[%s1990] sm:$0xf]
  %v1992 = vld [vmem:[%s1990 + $0x4] sm:$0xf]
  %v1993 = vld [vmem:[%s1990 + $0x8] sm:$0xf]
  %v1994 = vld [vmem:[%s1990 + $0xc] sm:$0xf]
  %v1995 = vld [vmem:[%s1990 + $0x10] sm:$0xf]
  %v1996 = vld [vmem:[%s1990 + $0x14] sm:$0xf]
  %v1997 = vld [vmem:[%s1990 + $0x18] sm:$0xf]
  %v1998 = vld [vmem:[%s1990 + $0x1c] sm:$0xf]
  %v2000 = vunpack.c.l.b16 %v55
  %v2001 = vpack.c.b16 %v2000, %v2000
  %vm2002 = vcmask 1045504
  %v2003 = vrot.slane %v1709, 2
  %v2004 = vrot.slane %v1710, 2
  %v2005 = vsel %vm2002, %v2003, %v2004
  %v2006 = vrot.slane %v1711, 2
  %v2007 = vsel %vm2002, %v2004, %v2006
  %v2008 = vrot.slane %v1712, 2
  %v2009 = vsel %vm2002, %v2006, %v2008
  %v2010 = vrot.slane %v1713, 2
  %v2011 = vsel %vm2002, %v2008, %v2010
  %v2012 = vrot.slane %v1714, 2
  %v2013 = vsel %vm2002, %v2010, %v2012
  %v2014 = vrot.slane %v1715, 2
  %v2015 = vsel %vm2002, %v2012, %v2014
  %v2016 = vrot.slane %v1716, 2
  %v2017 = vsel %vm2002, %v2014, %v2016
  %v2018 = vrot.slane %v1717, 2
  %v2019 = vsel %vm2002, %v2016, %v2018
  %v2020 = vrot.slane %v1718, 2
  %v2021 = vsel %vm2002, %v2018, %v2020
  %v2022 = vrot.slane %v1719, 2
  %v2023 = vsel %vm2002, %v2020, %v2022
  %v2024 = vrot.slane %v1720, 2
  %v2025 = vsel %vm2002, %v2022, %v2024
  %v2026 = vrot.slane %v1721, 2
  %v2027 = vsel %vm2002, %v2024, %v2026
  %v2028 = vrot.slane %v1722, 2
  %v2029 = vsel %vm2002, %v2026, %v2028
  %v2030 = vrot.slane %v1723, 2
  %v2031 = vsel %vm2002, %v2028, %v2030
  %v2032 = vrot.slane %v1724, 2
  %v2033 = vsel %vm2002, %v2030, %v2032
  %v2034 = vrot.slane %v2001, 2
  %v2035 = vsel %vm2002, %v2032, %v2034
  %v2044 = vunpack.c.l.b16 %v1991
  %v2045 = vunpack.c.l.b16 %v1992
  %v2046 = vunpack.c.l.b16 %v1993
  %v2047 = vunpack.c.l.b16 %v1994
  %v2048 = vunpack.c.l.b16 %v1995
  %v2049 = vunpack.c.l.b16 %v1996
  %v2050 = vunpack.c.l.b16 %v1997
  %v2051 = vunpack.c.l.b16 %v1998
  %v2052 = vpack.c.b16 %v2045, %v2044
  %v2053 = vpack.c.b16 %v2047, %v2046
  %v2054 = vpack.c.b16 %v2049, %v2048
  %v2055 = vpack.c.b16 %v2051, %v2050
  %v2061 = vsel %vm313, %v2005, 0
  %v2064 = vsel %vm313, %v2007, 0
  %v2067 = vsel %vm313, %v2009, 0
  %v2070 = vsel %vm313, %v2011, 0
  %v2073 = vsel %vm313, %v2013, 0
  %v2076 = vsel %vm313, %v2015, 0
  %v2079 = vsel %vm313, %v2017, 0
  %v2082 = vsel %vm313, %v2019, 0
  %v2085 = vsel %vm313, %v2021, 0
  %v2088 = vsel %vm313, %v2023, 0
  %v2091 = vsel %vm313, %v2025, 0
  %v2094 = vsel %vm313, %v2027, 0
  %v2097 = vsel %vm313, %v2029, 0
  %v2100 = vsel %vm313, %v2031, 0
  %v2103 = vsel %vm313, %v2033, 0
  %v2106 = vsel %vm313, %v2035, 0
  %2108 = vmatprep.subr.bf16.mxu0 0
  %2109 = vmatpush1.bf16.msra.mxu0 %v2052
  %2110 = vmatprep.subr.bf16.mxu0 0
  %2111 = vmatpush1.bf16.msra.mxu0 %v2053
  %2112 = vmatprep.subr.bf16.mxu0 0
  %2113 = vmatpush1.bf16.msra.mxu0 %v2054
  %2114 = vmatprep.subr.bf16.mxu0 0
  %2115 = vmatpush1.bf16.msra.mxu0 %v2055
  %2116 = vmatprep.subr.bf16.mxu0 0
  %2117 = vmatpush1.bf16.msra.mxu0 0
  %2118 = vmatprep.subr.bf16.mxu0 0
  %2119 = vmatpush1.bf16.msra.mxu0 0
  %2120 = vmatprep.subr.bf16.mxu0 0
  %2121 = vmatpush1.bf16.msra.mxu0 0
  %2122 = vmatprep.subr.bf16.mxu0 0
  %2123 = vmatpush1.bf16.msra.mxu0 0
  %2124 = vmatprep.subr.bf16.mxu0 0
  %2125 = vmatpush1.bf16.msra.mxu0 0
  %2126 = vmatprep.subr.bf16.mxu0 0
  %2127 = vmatpush1.bf16.msra.mxu0 0
  %2128 = vmatprep.subr.bf16.mxu0 0
  %2129 = vmatpush1.bf16.msra.mxu0 0
  %2130 = vmatprep.subr.bf16.mxu0 0
  %2131 = vmatpush1.bf16.msra.mxu0 0
  %2132 = vmatprep.subr.bf16.mxu0 0
  %2133 = vmatpush1.bf16.msra.mxu0 0
  %2134 = vmatprep.subr.bf16.mxu0 0
  %2135 = vmatpush1.bf16.msra.mxu0 0
  %2136 = vmatprep.subr.bf16.mxu0 0
  %2137 = vmatpush1.bf16.msra.mxu0 0
  %2138 = vmatprep.subr.bf16.mxu0 0
  %2139 = vmatpush1.bf16.msra.mxu0 0
  %2140 = vmatprep.mubr.bf16.mxu0 0
  %2141 = vmatmul.mubr.bf16.gmra.mrb[0].mxu0 %v2061
  %v2142 = vpop.f32.mrb[0].mxu0
  %v2143 = vadd.f32 0.0, %v2142
  %v2144 = vpop.f32.mrb[0].mxu0
  %v2145 = vpop.f32.mrb[0].mxu0
  %v2146 = vadd.f32 0.0, %v2145
  %v2147 = vpop.f32.mrb[0].mxu0
  %2148 = vmatprep.mubr.bf16.mxu0 0
  %2149 = vmatmul.mubr.bf16.gmra.mrb[0].mxu0 %v2064
  %v2150 = vpop.f32.mrb[0].mxu0
  %v2151 = vadd.f32 0.0, %v2150
  %v2152 = vpop.f32.mrb[0].mxu0
  %v2153 = vpop.f32.mrb[0].mxu0
  %v2154 = vadd.f32 0.0, %v2153
  %v2155 = vpop.f32.mrb[0].mxu0
  %2156 = vmatprep.mubr.bf16.mxu0 0
  %2157 = vmatmul.mubr.bf16.gmra.mrb[0].mxu0 %v2067
  %v2158 = vpop.f32.mrb[0].mxu0
  %v2159 = vadd.f32 0.0, %v2158
  %v2160 = vpop.f32.mrb[0].mxu0
  %v2161 = vpop.f32.mrb[0].mxu0
  %v2162 = vadd.f32 0.0, %v2161
  %v2163 = vpop.f32.mrb[0].mxu0
  %2164 = vmatprep.mubr.bf16.mxu0 0
  %2165 = vmatmul.mubr.bf16.gmra.mrb[0].mxu0 %v2070
  %v2166 = vpop.f32.mrb[0].mxu0
  %v2167 = vadd.f32 0.0, %v2166
  %v2168 = vpop.f32.mrb[0].mxu0
  %v2169 = vpop.f32.mrb[0].mxu0
  %v2170 = vadd.f32 0.0, %v2169
  %v2171 = vpop.f32.mrb[0].mxu0
  %2172 = vmatprep.mubr.bf16.mxu0 0
  %2173 = vmatmul.mubr.bf16.gmra.mrb[0].mxu0 %v2073
  %v2174 = vpop.f32.mrb[0].mxu0
  %v2175 = vadd.f32 0.0, %v2174
  %v2176 = vpop.f32.mrb[0].mxu0
  %v2177 = vpop.f32.mrb[0].mxu0
  %v2178 = vadd.f32 0.0, %v2177
  %v2179 = vpop.f32.mrb[0].mxu0
  %2180 = vmatprep.mubr.bf16.mxu0 0
  %2181 = vmatmul.mubr.bf16.gmra.mrb[0].mxu0 %v2076
  %v2182 = vpop.f32.mrb[0].mxu0
  %v2183 = vadd.f32 0.0, %v2182
  %v2184 = vpop.f32.mrb[0].mxu0
  %v2185 = vpop.f32.mrb[0].mxu0
  %v2186 = vadd.f32 0.0, %v2185
  %v2187 = vpop.f32.mrb[0].mxu0
  %2188 = vmatprep.mubr.bf16.mxu0 0
  %2189 = vmatmul.mubr.bf16.gmra.mrb[0].mxu0 %v2079
  %v2190 = vpop.f32.mrb[0].mxu0
  %v2191 = vadd.f32 0.0, %v2190
  %v2192 = vpop.f32.mrb[0].mxu0
  %v2193 = vpop.f32.mrb[0].mxu0
  %v2194 = vadd.f32 0.0, %v2193
  %v2195 = vpop.f32.mrb[0].mxu0
  %2196 = vmatprep.mubr.bf16.mxu0 0
  %2197 = vmatmul.mubr.bf16.gmra.mrb[0].mxu0 %v2082
  %v2198 = vpop.f32.mrb[0].mxu0
  %v2199 = vadd.f32 0.0, %v2198
  %v2200 = vpop.f32.mrb[0].mxu0
  %v2201 = vpop.f32.mrb[0].mxu0
  %v2202 = vadd.f32 0.0, %v2201
  %v2203 = vpop.f32.mrb[0].mxu0
  %2204 = vmatprep.mubr.bf16.mxu0 0
  %2205 = vmatmul.mubr.bf16.gmra.mrb[0].mxu0 %v2085
  %v2206 = vpop.f32.mrb[0].mxu0
  %v2207 = vadd.f32 0.0, %v2206
  %v2208 = vpop.f32.mrb[0].mxu0
  %v2209 = vpop.f32.mrb[0].mxu0
  %v2210 = vadd.f32 0.0, %v2209
  %v2211 = vpop.f32.mrb[0].mxu0
  %2212 = vmatprep.mubr.bf16.mxu0 0
  %2213 = vmatmul.mubr.bf16.gmra.mrb[0].mxu0 %v2088
  %v2214 = vpop.f32.mrb[0].mxu0
  %v2215 = vadd.f32 0.0, %v2214
  %v2216 = vpop.f32.mrb[0].mxu0
  %v2217 = vpop.f32.mrb[0].mxu0
  %v2218 = vadd.f32 0.0, %v2217
  %v2219 = vpop.f32.mrb[0].mxu0
  %2220 = vmatprep.mubr.bf16.mxu0 0
  %2221 = vmatmul.mubr.bf16.gmra.mrb[0].mxu0 %v2091
  %v2222 = vpop.f32.mrb[0].mxu0
  %v2223 = vadd.f32 0.0, %v2222
  %v2224 = vpop.f32.mrb[0].mxu0
  %v2225 = vpop.f32.mrb[0].mxu0
  %v2226 = vadd.f32 0.0, %v2225
  %v2227 = vpop.f32.mrb[0].mxu0
  %2228 = vmatprep.mubr.bf16.mxu0 0
  %2229 = vmatmul.mubr.bf16.gmra.mrb[0].mxu0 %v2094
  %v2230 = vpop.f32.mrb[0].mxu0
  %v2231 = vadd.f32 0.0, %v2230
  %v2232 = vpop.f32.mrb[0].mxu0
  %v2233 = vpop.f32.mrb[0].mxu0
  %v2234 = vadd.f32 0.0, %v2233
  %v2235 = vpop.f32.mrb[0].mxu0
  %2236 = vmatprep.mubr.bf16.mxu0 0
  %2237 = vmatmul.mubr.bf16.gmra.mrb[0].mxu0 %v2097
  %v2238 = vpop.f32.mrb[0].mxu0
  %v2239 = vadd.f32 0.0, %v2238
  %v2240 = vpop.f32.mrb[0].mxu0
  %v2241 = vpop.f32.mrb[0].mxu0
  %v2242 = vadd.f32 0.0, %v2241
  %v2243 = vpop.f32.mrb[0].mxu0
  %2244 = vmatprep.mubr.bf16.mxu0 0
  %2245 = vmatmul.mubr.bf16.gmra.mrb[0].mxu0 %v2100
  %v2246 = vpop.f32.mrb[0].mxu0
  %v2247 = vadd.f32 0.0, %v2246
  %v2248 = vpop.f32.mrb[0].mxu0
  %v2249 = vpop.f32.mrb[0].mxu0
  %v2250 = vadd.f32 0.0, %v2249
  %v2251 = vpop.f32.mrb[0].mxu0
  %2252 = vmatprep.mubr.bf16.mxu0 0
  %2253 = vmatmul.mubr.bf16.gmra.mrb[0].mxu0 %v2103
  %v2254 = vpop.f32.mrb[0].mxu0
  %v2255 = vadd.f32 0.0, %v2254
  %v2256 = vpop.f32.mrb[0].mxu0
  %v2257 = vpop.f32.mrb[0].mxu0
  %v2258 = vadd.f32 0.0, %v2257
  %v2259 = vpop.f32.mrb[0].mxu0
  %2260 = vmatprep.mubr.bf16.mxu0 0
  %2261 = vmatmul.mubr.bf16.gmra.mrb[0].mxu0 %v2106
  %v2262 = vpop.f32.mrb[0].mxu0
  %v2263 = vadd.f32 0.0, %v2262
  %v2264 = vpop.f32.mrb[0].mxu0
  %v2265 = vpop.f32.mrb[0].mxu0
  %v2266 = vadd.f32 0.0, %v2265
  %v2267 = vpop.f32.mrb[0].mxu0
  %2268 = vdwg.mxu0
  %v2269 = vadd.f32 %v1958, %v2143
  %v2270 = vadd.f32 %v1959, %v2146
  %v2271 = vadd.f32 %v1960, %v2151
  %v2272 = vadd.f32 %v1961, %v2154
  %v2273 = vadd.f32 %v1962, %v2159
  %v2274 = vadd.f32 %v1963, %v2162
  %v2275 = vadd.f32 %v1964, %v2167
  %v2276 = vadd.f32 %v1965, %v2170
  %v2277 = vadd.f32 %v1966, %v2175
  %v2278 = vadd.f32 %v1967, %v2178
  %v2279 = vadd.f32 %v1968, %v2183
  %v2280 = vadd.f32 %v1969, %v2186
  %v2281 = vadd.f32 %v1970, %v2191
  %v2282 = vadd.f32 %v1971, %v2194
  %v2283 = vadd.f32 %v1972, %v2199
  %v2284 = vadd.f32 %v1973, %v2202
  %v2285 = vadd.f32 %v1974, %v2207
  %v2286 = vadd.f32 %v1975, %v2210
  %v2287 = vadd.f32 %v1976, %v2215
  %v2288 = vadd.f32 %v1977, %v2218
  %v2289 = vadd.f32 %v1978, %v2223
  %v2290 = vadd.f32 %v1979, %v2226
  %v2291 = vadd.f32 %v1980, %v2231
  %v2292 = vadd.f32 %v1981, %v2234
  %v2293 = vadd.f32 %v1982, %v2239
  %v2294 = vadd.f32 %v1983, %v2242
  %v2295 = vadd.f32 %v1984, %v2247
  %v2296 = vadd.f32 %v1985, %v2250
  %v2297 = vadd.f32 %v1986, %v2255
  %v2298 = vadd.f32 %v1987, %v2258
  %v2299 = vadd.f32 %v1988, %v2263
  %v2300 = vadd.f32 %v1989, %v2266
  %s2301 = scalar_lea.vmem %s1, 224
  %v2302 = vld [vmem:[%s2301] sm:$0xf]
  %v2303 = vld [vmem:[%s2301 + $0x4] sm:$0xf]
  %v2304 = vld [vmem:[%s2301 + $0x8] sm:$0xf]
  %v2305 = vld [vmem:[%s2301 + $0xc] sm:$0xf]
  %v2306 = vld [vmem:[%s2301 + $0x10] sm:$0xf]
  %v2307 = vld [vmem:[%s2301 + $0x14] sm:$0xf]
  %v2308 = vld [vmem:[%s2301 + $0x18] sm:$0xf]
  %v2309 = vld [vmem:[%s2301 + $0x1c] sm:$0xf]
  %vm2310 = vsmask.f32 5376
  %v2311 = vshrl.u32 %v1709, 16
  %v2313 = vrot.slane %v2311, 2
  %v2314 = vshll.u32 %v1709, 16
  %v2316 = vrot.slane %v2314, 3
  %v2317 = vor.u32 %v2313, %v2316
  %v2318 = vshrl.u32 %v1710, 16
  %v2320 = vrot.slane %v2318, 2
  %v2321 = vshll.u32 %v1710, 16
  %v2323 = vrot.slane %v2321, 3
  %v2324 = vor.u32 %v2320, %v2323
  %v2325 = vsel %vm2310, %v2317, %v2324
  %v2326 = vshrl.u32 %v1711, 16
  %v2328 = vrot.slane %v2326, 2
  %v2329 = vshll.u32 %v1711, 16
  %v2331 = vrot.slane %v2329, 3
  %v2332 = vor.u32 %v2328, %v2331
  %v2333 = vsel %vm2310, %v2324, %v2332
  %v2334 = vshrl.u32 %v1712, 16
  %v2336 = vrot.slane %v2334, 2
  %v2337 = vshll.u32 %v1712, 16
  %v2339 = vrot.slane %v2337, 3
  %v2340 = vor.u32 %v2336, %v2339
  %v2341 = vsel %vm2310, %v2332, %v2340
  %v2342 = vshrl.u32 %v1713, 16
  %v2344 = vrot.slane %v2342, 2
  %v2345 = vshll.u32 %v1713, 16
  %v2347 = vrot.slane %v2345, 3
  %v2348 = vor.u32 %v2344, %v2347
  %v2349 = vsel %vm2310, %v2340, %v2348
  %v2350 = vshrl.u32 %v1714, 16
  %v2352 = vrot.slane %v2350, 2
  %v2353 = vshll.u32 %v1714, 16
  %v2355 = vrot.slane %v2353, 3
  %v2356 = vor.u32 %v2352, %v2355
  %v2357 = vsel %vm2310, %v2348, %v2356
  %v2358 = vshrl.u32 %v1715, 16
  %v2360 = vrot.slane %v2358, 2
  %v2361 = vshll.u32 %v1715, 16
  %v2363 = vrot.slane %v2361, 3
  %v2364 = vor.u32 %v2360, %v2363
  %v2365 = vsel %vm2310, %v2356, %v2364
  %v2366 = vshrl.u32 %v1716, 16
  %v2368 = vrot.slane %v2366, 2
  %v2369 = vshll.u32 %v1716, 16
  %v2371 = vrot.slane %v2369, 3
  %v2372 = vor.u32 %v2368, %v2371
  %v2373 = vsel %vm2310, %v2364, %v2372
  %v2374 = vshrl.u32 %v1717, 16
  %v2376 = vrot.slane %v2374, 2
  %v2377 = vshll.u32 %v1717, 16
  %v2379 = vrot.slane %v2377, 3
  %v2380 = vor.u32 %v2376, %v2379
  %v2381 = vsel %vm2310, %v2372, %v2380
  %v2382 = vshrl.u32 %v1718, 16
  %v2384 = vrot.slane %v2382, 2
  %v2385 = vshll.u32 %v1718, 16
  %v2387 = vrot.slane %v2385, 3
  %v2388 = vor.u32 %v2384, %v2387
  %v2389 = vsel %vm2310, %v2380, %v2388
  %v2390 = vshrl.u32 %v1719, 16
  %v2392 = vrot.slane %v2390, 2
  %v2393 = vshll.u32 %v1719, 16
  %v2395 = vrot.slane %v2393, 3
  %v2396 = vor.u32 %v2392, %v2395
  %v2397 = vsel %vm2310, %v2388, %v2396
  %v2398 = vshrl.u32 %v1720, 16
  %v2400 = vrot.slane %v2398, 2
  %v2401 = vshll.u32 %v1720, 16
  %v2403 = vrot.slane %v2401, 3
  %v2404 = vor.u32 %v2400, %v2403
  %v2405 = vsel %vm2310, %v2396, %v2404
  %v2406 = vshrl.u32 %v1721, 16
  %v2408 = vrot.slane %v2406, 2
  %v2409 = vshll.u32 %v1721, 16
  %v2411 = vrot.slane %v2409, 3
  %v2412 = vor.u32 %v2408, %v2411
  %v2413 = vsel %vm2310, %v2404, %v2412
  %v2414 = vshrl.u32 %v1722, 16
  %v2416 = vrot.slane %v2414, 2
  %v2417 = vshll.u32 %v1722, 16
  %v2419 = vrot.slane %v2417, 3
  %v2420 = vor.u32 %v2416, %v2419
  %v2421 = vsel %vm2310, %v2412, %v2420
  %v2422 = vshrl.u32 %v1723, 16
  %v2424 = vrot.slane %v2422, 2
  %v2425 = vshll.u32 %v1723, 16
  %v2427 = vrot.slane %v2425, 3
  %v2428 = vor.u32 %v2424, %v2427
  %v2429 = vsel %vm2310, %v2420, %v2428
  %v2430 = vshrl.u32 %v1724, 16
  %v2432 = vrot.slane %v2430, 2
  %v2433 = vshll.u32 %v1724, 16
  %v2435 = vrot.slane %v2433, 3
  %v2436 = vor.u32 %v2432, %v2435
  %v2437 = vsel %vm2310, %v2428, %v2436
  %v2439 = vshrl.u32 %v2001, 16
  %v2441 = vrot.slane %v2439, 2
  %v2442 = vshll.u32 %v2001, 16
  %v2444 = vrot.slane %v2442, 3
  %v2445 = vor.u32 %v2441, %v2444
  %v2446 = vsel %vm2310, %v2436, %v2445
  %v2455 = vunpack.c.l.b16 %v2302
  %v2456 = vunpack.c.l.b16 %v2303
  %v2457 = vunpack.c.l.b16 %v2304
  %v2458 = vunpack.c.l.b16 %v2305
  %v2459 = vunpack.c.l.b16 %v2306
  %v2460 = vunpack.c.l.b16 %v2307
  %v2461 = vunpack.c.l.b16 %v2308
  %v2462 = vunpack.c.l.b16 %v2309
  %v2463 = vpack.c.b16 %v2456, %v2455
  %v2464 = vpack.c.b16 %v2458, %v2457
  %v2465 = vpack.c.b16 %v2460, %v2459
  %v2466 = vpack.c.b16 %v2462, %v2461
  %v2472 = vsel %vm313, %v2325, 0
  %v2475 = vsel %vm313, %v2333, 0
  %v2478 = vsel %vm313, %v2341, 0
  %v2481 = vsel %vm313, %v2349, 0
  %v2484 = vsel %vm313, %v2357, 0
  %v2487 = vsel %vm313, %v2365, 0
  %v2490 = vsel %vm313, %v2373, 0
  %v2493 = vsel %vm313, %v2381, 0
  %v2496 = vsel %vm313, %v2389, 0
  %v2499 = vsel %vm313, %v2397, 0
  %v2502 = vsel %vm313, %v2405, 0
  %v2505 = vsel %vm313, %v2413, 0
  %v2508 = vsel %vm313, %v2421, 0
  %v2511 = vsel %vm313, %v2429, 0
  %v2514 = vsel %vm313, %v2437, 0
  %v2517 = vsel %vm313, %v2446, 0
  %2519 = vmatprep.subr.bf16.mxu0 0
  %2520 = vmatpush1.bf16.msra.mxu0 %v2463
  %2521 = vmatprep.subr.bf16.mxu0 0
  %2522 = vmatpush1.bf16.msra.mxu0 %v2464
  %2523 = vmatprep.subr.bf16.mxu0 0
  %2524 = vmatpush1.bf16.msra.mxu0 %v2465
  %2525 = vmatprep.subr.bf16.mxu0 0
  %2526 = vmatpush1.bf16.msra.mxu0 %v2466
  %2527 = vmatprep.subr.bf16.mxu0 0
  %2528 = vmatpush1.bf16.msra.mxu0 0
  %2529 = vmatprep.subr.bf16.mxu0 0
  %2530 = vmatpush1.bf16.msra.mxu0 0
  %2531 = vmatprep.subr.bf16.mxu0 0
  %2532 = vmatpush1.bf16.msra.mxu0 0
  %2533 = vmatprep.subr.bf16.mxu0 0
  %2534 = vmatpush1.bf16.msra.mxu0 0
  %2535 = vmatprep.subr.bf16.mxu0 0
  %2536 = vmatpush1.bf16.msra.mxu0 0
  %2537 = vmatprep.subr.bf16.mxu0 0
  %2538 = vmatpush1.bf16.msra.mxu0 0
  %2539 = vmatprep.subr.bf16.mxu0 0
  %2540 = vmatpush1.bf16.msra.mxu0 0
  %2541 = vmatprep.subr.bf16.mxu0 0
  %2542 = vmatpush1.bf16.msra.mxu0 0
  %2543 = vmatprep.subr.bf16.mxu0 0
  %2544 = vmatpush1.bf16.msra.mxu0 0
  %2545 = vmatprep.subr.bf16.mxu0 0
  %2546 = vmatpush1.bf16.msra.mxu0 0
  %2547 = vmatprep.subr.bf16.mxu0 0
  %2548 = vmatpush1.bf16.msra.mxu0 0
  %2549 = vmatprep.subr.bf16.mxu0 0
  %2550 = vmatpush1.bf16.msra.mxu0 0
  %2551 = vmatprep.mubr.bf16.mxu0 0
  %2552 = vmatmul.mubr.bf16.gmra.mrb[0].mxu0 %v2472
  %v2553 = vpop.f32.mrb[0].mxu0
  %v2554 = vadd.f32 0.0, %v2553
  %v2555 = vpop.f32.mrb[0].mxu0
  %v2556 = vpop.f32.mrb[0].mxu0
  %v2557 = vadd.f32 0.0, %v2556
  %v2558 = vpop.f32.mrb[0].mxu0
  %2559 = vmatprep.mubr.bf16.mxu0 0
  %2560 = vmatmul.mubr.bf16.gmra.mrb[0].mxu0 %v2475
  %v2561 = vpop.f32.mrb[0].mxu0
  %v2562 = vadd.f32 0.0, %v2561
  %v2563 = vpop.f32.mrb[0].mxu0
  %v2564 = vpop.f32.mrb[0].mxu0
  %v2565 = vadd.f32 0.0, %v2564
  %v2566 = vpop.f32.mrb[0].mxu0
  %2567 = vmatprep.mubr.bf16.mxu0 0
  %2568 = vmatmul.mubr.bf16.gmra.mrb[0].mxu0 %v2478
  %v2569 = vpop.f32.mrb[0].mxu0
  %v2570 = vadd.f32 0.0, %v2569
  %v2571 = vpop.f32.mrb[0].mxu0
  %v2572 = vpop.f32.mrb[0].mxu0
  %v2573 = vadd.f32 0.0, %v2572
  %v2574 = vpop.f32.mrb[0].mxu0
  %2575 = vmatprep.mubr.bf16.mxu0 0
  %2576 = vmatmul.mubr.bf16.gmra.mrb[0].mxu0 %v2481
  %v2577 = vpop.f32.mrb[0].mxu0
  %v2578 = vadd.f32 0.0, %v2577
  %v2579 = vpop.f32.mrb[0].mxu0
  %v2580 = vpop.f32.mrb[0].mxu0
  %v2581 = vadd.f32 0.0, %v2580
  %v2582 = vpop.f32.mrb[0].mxu0
  %2583 = vmatprep.mubr.bf16.mxu0 0
  %2584 = vmatmul.mubr.bf16.gmra.mrb[0].mxu0 %v2484
  %v2585 = vpop.f32.mrb[0].mxu0
  %v2586 = vadd.f32 0.0, %v2585
  %v2587 = vpop.f32.mrb[0].mxu0
  %v2588 = vpop.f32.mrb[0].mxu0
  %v2589 = vadd.f32 0.0, %v2588
  %v2590 = vpop.f32.mrb[0].mxu0
  %2591 = vmatprep.mubr.bf16.mxu0 0
  %2592 = vmatmul.mubr.bf16.gmra.mrb[0].mxu0 %v2487
  %v2593 = vpop.f32.mrb[0].mxu0
  %v2594 = vadd.f32 0.0, %v2593
  %v2595 = vpop.f32.mrb[0].mxu0
  %v2596 = vpop.f32.mrb[0].mxu0
  %v2597 = vadd.f32 0.0, %v2596
  %v2598 = vpop.f32.mrb[0].mxu0
  %2599 = vmatprep.mubr.bf16.mxu0 0
  %2600 = vmatmul.mubr.bf16.gmra.mrb[0].mxu0 %v2490
  %v2601 = vpop.f32.mrb[0].mxu0
  %v2602 = vadd.f32 0.0, %v2601
  %v2603 = vpop.f32.mrb[0].mxu0
  %v2604 = vpop.f32.mrb[0].mxu0
  %v2605 = vadd.f32 0.0, %v2604
  %v2606 = vpop.f32.mrb[0].mxu0
  %2607 = vmatprep.mubr.bf16.mxu0 0
  %2608 = vmatmul.mubr.bf16.gmra.mrb[0].mxu0 %v2493
  %v2609 = vpop.f32.mrb[0].mxu0
  %v2610 = vadd.f32 0.0, %v2609
  %v2611 = vpop.f32.mrb[0].mxu0
  %v2612 = vpop.f32.mrb[0].mxu0
  %v2613 = vadd.f32 0.0, %v2612
  %v2614 = vpop.f32.mrb[0].mxu0
  %2615 = vmatprep.mubr.bf16.mxu0 0
  %2616 = vmatmul.mubr.bf16.gmra.mrb[0].mxu0 %v2496
  %v2617 = vpop.f32.mrb[0].mxu0
  %v2618 = vadd.f32 0.0, %v2617
  %v2619 = vpop.f32.mrb[0].mxu0
  %v2620 = vpop.f32.mrb[0].mxu0
  %v2621 = vadd.f32 0.0, %v2620
  %v2622 = vpop.f32.mrb[0].mxu0
  %2623 = vmatprep.mubr.bf16.mxu0 0
  %2624 = vmatmul.mubr.bf16.gmra.mrb[0].mxu0 %v2499
  %v2625 = vpop.f32.mrb[0].mxu0
  %v2626 = vadd.f32 0.0, %v2625
  %v2627 = vpop.f32.mrb[0].mxu0
  %v2628 = vpop.f32.mrb[0].mxu0
  %v2629 = vadd.f32 0.0, %v2628
  %v2630 = vpop.f32.mrb[0].mxu0
  %2631 = vmatprep.mubr.bf16.mxu0 0
  %2632 = vmatmul.mubr.bf16.gmra.mrb[0].mxu0 %v2502
  %v2633 = vpop.f32.mrb[0].mxu0
  %v2634 = vadd.f32 0.0, %v2633
  %v2635 = vpop.f32.mrb[0].mxu0
  %v2636 = vpop.f32.mrb[0].mxu0
  %v2637 = vadd.f32 0.0, %v2636
  %v2638 = vpop.f32.mrb[0].mxu0
  %2639 = vmatprep.mubr.bf16.mxu0 0
  %2640 = vmatmul.mubr.bf16.gmra.mrb[0].mxu0 %v2505
  %v2641 = vpop.f32.mrb[0].mxu0
  %v2642 = vadd.f32 0.0, %v2641
  %v2643 = vpop.f32.mrb[0].mxu0
  %v2644 = vpop.f32.mrb[0].mxu0
  %v2645 = vadd.f32 0.0, %v2644
  %v2646 = vpop.f32.mrb[0].mxu0
  %2647 = vmatprep.mubr.bf16.mxu0 0
  %2648 = vmatmul.mubr.bf16.gmra.mrb[0].mxu0 %v2508
  %v2649 = vpop.f32.mrb[0].mxu0
  %v2650 = vadd.f32 0.0, %v2649
  %v2651 = vpop.f32.mrb[0].mxu0
  %v2652 = vpop.f32.mrb[0].mxu0
  %v2653 = vadd.f32 0.0, %v2652
  %v2654 = vpop.f32.mrb[0].mxu0
  %2655 = vmatprep.mubr.bf16.mxu0 0
  %2656 = vmatmul.mubr.bf16.gmra.mrb[0].mxu0 %v2511
  %v2657 = vpop.f32.mrb[0].mxu0
  %v2658 = vadd.f32 0.0, %v2657
  %v2659 = vpop.f32.mrb[0].mxu0
  %v2660 = vpop.f32.mrb[0].mxu0
  %v2661 = vadd.f32 0.0, %v2660
  %v2662 = vpop.f32.mrb[0].mxu0
  %2663 = vmatprep.mubr.bf16.mxu0 0
  %2664 = vmatmul.mubr.bf16.gmra.mrb[0].mxu0 %v2514
  %v2665 = vpop.f32.mrb[0].mxu0
  %v2666 = vadd.f32 0.0, %v2665
  %v2667 = vpop.f32.mrb[0].mxu0
  %v2668 = vpop.f32.mrb[0].mxu0
  %v2669 = vadd.f32 0.0, %v2668
  %v2670 = vpop.f32.mrb[0].mxu0
  %2671 = vmatprep.mubr.bf16.mxu0 0
  %2672 = vmatmul.mubr.bf16.gmra.mrb[0].mxu0 %v2517
  %v2673 = vpop.f32.mrb[0].mxu0
  %v2674 = vadd.f32 0.0, %v2673
  %v2675 = vpop.f32.mrb[0].mxu0
  %v2676 = vpop.f32.mrb[0].mxu0
  %v2677 = vadd.f32 0.0, %v2676
  %v2678 = vpop.f32.mrb[0].mxu0
  %2679 = vdwg.mxu0
  %v2680 = vadd.f32 %v2269, %v2554
  %v2681 = vadd.f32 %v2270, %v2557
  %v2682 = vadd.f32 %v2271, %v2562
  %v2683 = vadd.f32 %v2272, %v2565
  %v2684 = vadd.f32 %v2273, %v2570
  %v2685 = vadd.f32 %v2274, %v2573
  %v2686 = vadd.f32 %v2275, %v2578
  %v2687 = vadd.f32 %v2276, %v2581
  %v2688 = vadd.f32 %v2277, %v2586
  %v2689 = vadd.f32 %v2278, %v2589
  %v2690 = vadd.f32 %v2279, %v2594
  %v2691 = vadd.f32 %v2280, %v2597
  %v2692 = vadd.f32 %v2281, %v2602
  %v2693 = vadd.f32 %v2282, %v2605
  %v2694 = vadd.f32 %v2283, %v2610
  %v2695 = vadd.f32 %v2284, %v2613
  %v2696 = vadd.f32 %v2285, %v2618
  %v2697 = vadd.f32 %v2286, %v2621
  %v2698 = vadd.f32 %v2287, %v2626
  %v2699 = vadd.f32 %v2288, %v2629
  %v2700 = vadd.f32 %v2289, %v2634
  %v2701 = vadd.f32 %v2290, %v2637
  %v2702 = vadd.f32 %v2291, %v2642
  %v2703 = vadd.f32 %v2292, %v2645
  %v2704 = vadd.f32 %v2293, %v2650
  %v2705 = vadd.f32 %v2294, %v2653
  %v2706 = vadd.f32 %v2295, %v2658
  %v2707 = vadd.f32 %v2296, %v2661
  %v2708 = vadd.f32 %v2297, %v2666
  %v2709 = vadd.f32 %v2298, %v2669
  %v2710 = vadd.f32 %v2299, %v2674
  %v2711 = vadd.f32 %v2300, %v2677
  %s2712 = scalar_lea.vmem %s1, 256
  %v2713 = vld [vmem:[%s2712] sm:$0xf]
  %v2714 = vld [vmem:[%s2712 + $0x4] sm:$0xf]
  %v2715 = vld [vmem:[%s2712 + $0x8] sm:$0xf]
  %v2716 = vld [vmem:[%s2712 + $0xc] sm:$0xf]
  %v2717 = vld [vmem:[%s2712 + $0x10] sm:$0xf]
  %v2718 = vld [vmem:[%s2712 + $0x14] sm:$0xf]
  %v2719 = vld [vmem:[%s2712 + $0x18] sm:$0xf]
  %v2720 = vld [vmem:[%s2712 + $0x1c] sm:$0xf]
  %v2721 = vrot.slane %v1709, 3
  %v2722 = vrot.slane %v1710, 3
  %v2723 = vsel %vm1057, %v2721, %v2722
  %v2724 = vrot.slane %v1711, 3
  %v2725 = vsel %vm1057, %v2722, %v2724
  %v2726 = vrot.slane %v1712, 3
  %v2727 = vsel %vm1057, %v2724, %v2726
  %v2728 = vrot.slane %v1713, 3
  %v2729 = vsel %vm1057, %v2726, %v2728
  %v2730 = vrot.slane %v1714, 3
  %v2731 = vsel %vm1057, %v2728, %v2730
  %v2732 = vrot.slane %v1715, 3
  %v2733 = vsel %vm1057, %v2730, %v2732
  %v2734 = vrot.slane %v1716, 3
  %v2735 = vsel %vm1057, %v2732, %v2734
  %v2736 = vrot.slane %v1717, 3
  %v2737 = vsel %vm1057, %v2734, %v2736
  %v2738 = vrot.slane %v1718, 3
  %v2739 = vsel %vm1057, %v2736, %v2738
  %v2740 = vrot.slane %v1719, 3
  %v2741 = vsel %vm1057, %v2738, %v2740
  %v2742 = vrot.slane %v1720, 3
  %v2743 = vsel %vm1057, %v2740, %v2742
  %v2744 = vrot.slane %v1721, 3
  %v2745 = vsel %vm1057, %v2742, %v2744
  %v2746 = vrot.slane %v1722, 3
  %v2747 = vsel %vm1057, %v2744, %v2746
  %v2748 = vrot.slane %v1723, 3
  %v2749 = vsel %vm1057, %v2746, %v2748
  %v2750 = vrot.slane %v1724, 3
  %v2751 = vsel %vm1057, %v2748, %v2750
  %v2752 = vrot.slane %v2001, 3
  %v2753 = vsel %vm1057, %v2750, %v2752
  %v2762 = vunpack.c.l.b16 %v2713
  %v2763 = vunpack.c.l.b16 %v2714
  %v2764 = vunpack.c.l.b16 %v2715
  %v2765 = vunpack.c.l.b16 %v2716
  %v2766 = vunpack.c.l.b16 %v2717
  %v2767 = vunpack.c.l.b16 %v2718
  %v2768 = vunpack.c.l.b16 %v2719
  %v2769 = vunpack.c.l.b16 %v2720
  %v2770 = vpack.c.b16 %v2763, %v2762
  %v2771 = vpack.c.b16 %v2765, %v2764
  %v2772 = vpack.c.b16 %v2767, %v2766
  %v2773 = vpack.c.b16 %v2769, %v2768
  %v2779 = vsel %vm313, %v2723, 0
  %v2782 = vsel %vm313, %v2725, 0
  %v2785 = vsel %vm313, %v2727, 0
  %v2788 = vsel %vm313, %v2729, 0
  %v2791 = vsel %vm313, %v2731, 0
  %v2794 = vsel %vm313, %v2733, 0
  %v2797 = vsel %vm313, %v2735, 0
  %v2800 = vsel %vm313, %v2737, 0
  %v2803 = vsel %vm313, %v2739, 0
  %v2806 = vsel %vm313, %v2741, 0
  %v2809 = vsel %vm313, %v2743, 0
  %v2812 = vsel %vm313, %v2745, 0
  %v2815 = vsel %vm313, %v2747, 0
  %v2818 = vsel %vm313, %v2749, 0
  %v2821 = vsel %vm313, %v2751, 0
  %v2824 = vsel %vm313, %v2753, 0
  %2826 = vmatprep.subr.bf16.mxu0 0
  %2827 = vmatpush1.bf16.msra.mxu0 %v2770
  %2828 = vmatprep.subr.bf16.mxu0 0
  %2829 = vmatpush1.bf16.msra.mxu0 %v2771
  %2830 = vmatprep.subr.bf16.mxu0 0
  %2831 = vmatpush1.bf16.msra.mxu0 %v2772
  %2832 = vmatprep.subr.bf16.mxu0 0
  %2833 = vmatpush1.bf16.msra.mxu0 %v2773
  %2834 = vmatprep.subr.bf16.mxu0 0
  %2835 = vmatpush1.bf16.msra.mxu0 0
  %2836 = vmatprep.subr.bf16.mxu0 0
  %2837 = vmatpush1.bf16.msra.mxu0 0
  %2838 = vmatprep.subr.bf16.mxu0 0
  %2839 = vmatpush1.bf16.msra.mxu0 0
  %2840 = vmatprep.subr.bf16.mxu0 0
  %2841 = vmatpush1.bf16.msra.mxu0 0
  %2842 = vmatprep.subr.bf16.mxu0 0
  %2843 = vmatpush1.bf16.msra.mxu0 0
  %2844 = vmatprep.subr.bf16.mxu0 0
  %2845 = vmatpush1.bf16.msra.mxu0 0
  %2846 = vmatprep.subr.bf16.mxu0 0
  %2847 = vmatpush1.bf16.msra.mxu0 0
  %2848 = vmatprep.subr.bf16.mxu0 0
  %2849 = vmatpush1.bf16.msra.mxu0 0
  %2850 = vmatprep.subr.bf16.mxu0 0
  %2851 = vmatpush1.bf16.msra.mxu0 0
  %2852 = vmatprep.subr.bf16.mxu0 0
  %2853 = vmatpush1.bf16.msra.mxu0 0
  %2854 = vmatprep.subr.bf16.mxu0 0
  %2855 = vmatpush1.bf16.msra.mxu0 0
  %2856 = vmatprep.subr.bf16.mxu0 0
  %2857 = vmatpush1.bf16.msra.mxu0 0
  %2858 = vmatprep.mubr.bf16.mxu0 0
  %2859 = vmatmul.mubr.bf16.gmra.mrb[0].mxu0 %v2779
  %v2860 = vpop.f32.mrb[0].mxu0
  %v2861 = vadd.f32 0.0, %v2860
  %v2862 = vpop.f32.mrb[0].mxu0
  %v2863 = vpop.f32.mrb[0].mxu0
  %v2864 = vadd.f32 0.0, %v2863
  %v2865 = vpop.f32.mrb[0].mxu0
  %2866 = vmatprep.mubr.bf16.mxu0 0
  %2867 = vmatmul.mubr.bf16.gmra.mrb[0].mxu0 %v2782
  %v2868 = vpop.f32.mrb[0].mxu0
  %v2869 = vadd.f32 0.0, %v2868
  %v2870 = vpop.f32.mrb[0].mxu0
  %v2871 = vpop.f32.mrb[0].mxu0
  %v2872 = vadd.f32 0.0, %v2871
  %v2873 = vpop.f32.mrb[0].mxu0
  %2874 = vmatprep.mubr.bf16.mxu0 0
  %2875 = vmatmul.mubr.bf16.gmra.mrb[0].mxu0 %v2785
  %v2876 = vpop.f32.mrb[0].mxu0
  %v2877 = vadd.f32 0.0, %v2876
  %v2878 = vpop.f32.mrb[0].mxu0
  %v2879 = vpop.f32.mrb[0].mxu0
  %v2880 = vadd.f32 0.0, %v2879
  %v2881 = vpop.f32.mrb[0].mxu0
  %2882 = vmatprep.mubr.bf16.mxu0 0
  %2883 = vmatmul.mubr.bf16.gmra.mrb[0].mxu0 %v2788
  %v2884 = vpop.f32.mrb[0].mxu0
  %v2885 = vadd.f32 0.0, %v2884
  %v2886 = vpop.f32.mrb[0].mxu0
  %v2887 = vpop.f32.mrb[0].mxu0
  %v2888 = vadd.f32 0.0, %v2887
  %v2889 = vpop.f32.mrb[0].mxu0
  %2890 = vmatprep.mubr.bf16.mxu0 0
  %2891 = vmatmul.mubr.bf16.gmra.mrb[0].mxu0 %v2791
  %v2892 = vpop.f32.mrb[0].mxu0
  %v2893 = vadd.f32 0.0, %v2892
  %v2894 = vpop.f32.mrb[0].mxu0
  %v2895 = vpop.f32.mrb[0].mxu0
  %v2896 = vadd.f32 0.0, %v2895
  %v2897 = vpop.f32.mrb[0].mxu0
  %2898 = vmatprep.mubr.bf16.mxu0 0
  %2899 = vmatmul.mubr.bf16.gmra.mrb[0].mxu0 %v2794
  %v2900 = vpop.f32.mrb[0].mxu0
  %v2901 = vadd.f32 0.0, %v2900
  %v2902 = vpop.f32.mrb[0].mxu0
  %v2903 = vpop.f32.mrb[0].mxu0
  %v2904 = vadd.f32 0.0, %v2903
  %v2905 = vpop.f32.mrb[0].mxu0
  %2906 = vmatprep.mubr.bf16.mxu0 0
  %2907 = vmatmul.mubr.bf16.gmra.mrb[0].mxu0 %v2797
  %v2908 = vpop.f32.mrb[0].mxu0
  %v2909 = vadd.f32 0.0, %v2908
  %v2910 = vpop.f32.mrb[0].mxu0
  %v2911 = vpop.f32.mrb[0].mxu0
  %v2912 = vadd.f32 0.0, %v2911
  %v2913 = vpop.f32.mrb[0].mxu0
  %2914 = vmatprep.mubr.bf16.mxu0 0
  %2915 = vmatmul.mubr.bf16.gmra.mrb[0].mxu0 %v2800
  %v2916 = vpop.f32.mrb[0].mxu0
  %v2917 = vadd.f32 0.0, %v2916
  %v2918 = vpop.f32.mrb[0].mxu0
  %v2919 = vpop.f32.mrb[0].mxu0
  %v2920 = vadd.f32 0.0, %v2919
  %v2921 = vpop.f32.mrb[0].mxu0
  %2922 = vmatprep.mubr.bf16.mxu0 0
  %2923 = vmatmul.mubr.bf16.gmra.mrb[0].mxu0 %v2803
  %v2924 = vpop.f32.mrb[0].mxu0
  %v2925 = vadd.f32 0.0, %v2924
  %v2926 = vpop.f32.mrb[0].mxu0
  %v2927 = vpop.f32.mrb[0].mxu0
  %v2928 = vadd.f32 0.0, %v2927
  %v2929 = vpop.f32.mrb[0].mxu0
  %2930 = vmatprep.mubr.bf16.mxu0 0
  %2931 = vmatmul.mubr.bf16.gmra.mrb[0].mxu0 %v2806
  %v2932 = vpop.f32.mrb[0].mxu0
  %v2933 = vadd.f32 0.0, %v2932
  %v2934 = vpop.f32.mrb[0].mxu0
  %v2935 = vpop.f32.mrb[0].mxu0
  %v2936 = vadd.f32 0.0, %v2935
  %v2937 = vpop.f32.mrb[0].mxu0
  %2938 = vmatprep.mubr.bf16.mxu0 0
  %2939 = vmatmul.mubr.bf16.gmra.mrb[0].mxu0 %v2809
  %v2940 = vpop.f32.mrb[0].mxu0
  %v2941 = vadd.f32 0.0, %v2940
  %v2942 = vpop.f32.mrb[0].mxu0
  %v2943 = vpop.f32.mrb[0].mxu0
  %v2944 = vadd.f32 0.0, %v2943
  %v2945 = vpop.f32.mrb[0].mxu0
  %2946 = vmatprep.mubr.bf16.mxu0 0
  %2947 = vmatmul.mubr.bf16.gmra.mrb[0].mxu0 %v2812
  %v2948 = vpop.f32.mrb[0].mxu0
  %v2949 = vadd.f32 0.0, %v2948
  %v2950 = vpop.f32.mrb[0].mxu0
  %v2951 = vpop.f32.mrb[0].mxu0
  %v2952 = vadd.f32 0.0, %v2951
  %v2953 = vpop.f32.mrb[0].mxu0
  %2954 = vmatprep.mubr.bf16.mxu0 0
  %2955 = vmatmul.mubr.bf16.gmra.mrb[0].mxu0 %v2815
  %v2956 = vpop.f32.mrb[0].mxu0
  %v2957 = vadd.f32 0.0, %v2956
  %v2958 = vpop.f32.mrb[0].mxu0
  %v2959 = vpop.f32.mrb[0].mxu0
  %v2960 = vadd.f32 0.0, %v2959
  %v2961 = vpop.f32.mrb[0].mxu0
  %2962 = vmatprep.mubr.bf16.mxu0 0
  %2963 = vmatmul.mubr.bf16.gmra.mrb[0].mxu0 %v2818
  %v2964 = vpop.f32.mrb[0].mxu0
  %v2965 = vadd.f32 0.0, %v2964
  %v2966 = vpop.f32.mrb[0].mxu0
  %v2967 = vpop.f32.mrb[0].mxu0
  %v2968 = vadd.f32 0.0, %v2967
  %v2969 = vpop.f32.mrb[0].mxu0
  %2970 = vmatprep.mubr.bf16.mxu0 0
  %2971 = vmatmul.mubr.bf16.gmra.mrb[0].mxu0 %v2821
  %v2972 = vpop.f32.mrb[0].mxu0
  %v2973 = vadd.f32 0.0, %v2972
  %v2974 = vpop.f32.mrb[0].mxu0
  %v2975 = vpop.f32.mrb[0].mxu0
  %v2976 = vadd.f32 0.0, %v2975
  %v2977 = vpop.f32.mrb[0].mxu0
  %2978 = vmatprep.mubr.bf16.mxu0 0
  %2979 = vmatmul.mubr.bf16.gmra.mrb[0].mxu0 %v2824
  %v2980 = vpop.f32.mrb[0].mxu0
  %v2981 = vadd.f32 0.0, %v2980
  %v2982 = vpop.f32.mrb[0].mxu0
  %v2983 = vpop.f32.mrb[0].mxu0
  %v2984 = vadd.f32 0.0, %v2983
  %v2985 = vpop.f32.mrb[0].mxu0
  %2986 = vdwg.mxu0
  %v2987 = vadd.f32 %v2680, %v2861
  %v2988 = vadd.f32 %v2681, %v2864
  %v2989 = vadd.f32 %v2682, %v2869
  %v2990 = vadd.f32 %v2683, %v2872
  %v2991 = vadd.f32 %v2684, %v2877
  %v2992 = vadd.f32 %v2685, %v2880
  %v2993 = vadd.f32 %v2686, %v2885
  %v2994 = vadd.f32 %v2687, %v2888
  %v2995 = vadd.f32 %v2688, %v2893
  %v2996 = vadd.f32 %v2689, %v2896
  %v2997 = vadd.f32 %v2690, %v2901
  %v2998 = vadd.f32 %v2691, %v2904
  %v2999 = vadd.f32 %v2692, %v2909
  %v3000 = vadd.f32 %v2693, %v2912
  %v3001 = vadd.f32 %v2694, %v2917
  %v3002 = vadd.f32 %v2695, %v2920
  %v3003 = vadd.f32 %v2696, %v2925
  %v3004 = vadd.f32 %v2697, %v2928
  %v3005 = vadd.f32 %v2698, %v2933
  %v3006 = vadd.f32 %v2699, %v2936
  %v3007 = vadd.f32 %v2700, %v2941
  %v3008 = vadd.f32 %v2701, %v2944
  %v3009 = vadd.f32 %v2702, %v2949
  %v3010 = vadd.f32 %v2703, %v2952
  %v3011 = vadd.f32 %v2704, %v2957
  %v3012 = vadd.f32 %v2705, %v2960
  %v3013 = vadd.f32 %v2706, %v2965
  %v3014 = vadd.f32 %v2707, %v2968
  %v3015 = vadd.f32 %v2708, %v2973
  %v3016 = vadd.f32 %v2709, %v2976
  %v3017 = vadd.f32 %v2710, %v2981
  %v3018 = vadd.f32 %v2711, %v2984
  %v3019 = vld [vmem:[%s2] sm:$0xff]
  %v3020 = vld [vmem:[%s2 + $0x8] sm:$0xff]
  %v3021 = vld [vmem:[%s2 + $0x10] sm:$0xff]
  %v3022 = vld [vmem:[%s2 + $0x18] sm:$0xff]
  %v3023 = vld [vmem:[%s2 + $0x20] sm:$0xff]
  %v3024 = vld [vmem:[%s2 + $0x28] sm:$0xff]
  %v3025 = vld [vmem:[%s2 + $0x30] sm:$0xff]
  %v3026 = vld [vmem:[%s2 + $0x38] sm:$0xff]
  %v3027 = vld [vmem:[%s2 + $0x40] sm:$0xff]
  %v3028 = vld [vmem:[%s2 + $0x48] sm:$0xff]
  %v3029 = vld [vmem:[%s2 + $0x50] sm:$0xff]
  %v3030 = vld [vmem:[%s2 + $0x58] sm:$0xff]
  %v3031 = vld [vmem:[%s2 + $0x60] sm:$0xff]
  %v3032 = vld [vmem:[%s2 + $0x68] sm:$0xff]
  %v3033 = vld [vmem:[%s2 + $0x70] sm:$0xff]
  %v3034 = vld [vmem:[%s2 + $0x78] sm:$0xff]
  %v3035 = vld [vmem:[%s2 + $0x80] sm:$0xff]
  %v3036 = vld [vmem:[%s2 + $0x88] sm:$0xff]
  %v3037 = vld [vmem:[%s2 + $0x90] sm:$0xff]
  %v3038 = vld [vmem:[%s2 + $0x98] sm:$0xff]
  %v3039 = vld [vmem:[%s2 + $0xa0] sm:$0xff]
  %v3040 = vld [vmem:[%s2 + $0xa8] sm:$0xff]
  %v3041 = vld [vmem:[%s2 + $0xb0] sm:$0xff]
  %v3042 = vld [vmem:[%s2 + $0xb8] sm:$0xff]
  %v3043 = vld [vmem:[%s2 + $0xc0] sm:$0xff]
  %v3044 = vld [vmem:[%s2 + $0xc8] sm:$0xff]
  %v3045 = vld [vmem:[%s2 + $0xd0] sm:$0xff]
  %v3046 = vld [vmem:[%s2 + $0xd8] sm:$0xff]
  %v3047 = vld [vmem:[%s2 + $0xe0] sm:$0xff]
  %v3048 = vld [vmem:[%s2 + $0xe8] sm:$0xff]
  %v3049 = vld [vmem:[%s2 + $0xf0] sm:$0xff]
  %v3050 = vld [vmem:[%s2 + $0xf8] sm:$0xff]
  %3052 = vset.pattern.permute.xlu0 0
  %3053 = vperm.xlu0 %3052, %v3019
  %v3054 = vpop.permute.xlu0 %3053
  %3057 = vset.pattern.permute.xlu0 0
  %3058 = vperm.xlu0 %3057, %v3020
  %v3059 = vpop.permute.xlu0 %3058
  %3062 = vset.pattern.permute.xlu0 0
  %3063 = vperm.xlu0 %3062, %v3021
  %v3064 = vpop.permute.xlu0 %3063
  %3067 = vset.pattern.permute.xlu0 0
  %3068 = vperm.xlu0 %3067, %v3022
  %v3069 = vpop.permute.xlu0 %3068
  %3072 = vset.pattern.permute.xlu0 0
  %3073 = vperm.xlu0 %3072, %v3023
  %v3074 = vpop.permute.xlu0 %3073
  %3077 = vset.pattern.permute.xlu0 0
  %3078 = vperm.xlu0 %3077, %v3024
  %v3079 = vpop.permute.xlu0 %3078
  %3082 = vset.pattern.permute.xlu0 0
  %3083 = vperm.xlu0 %3082, %v3025
  %v3084 = vpop.permute.xlu0 %3083
  %3087 = vset.pattern.permute.xlu0 0
  %3088 = vperm.xlu0 %3087, %v3026
  %v3089 = vpop.permute.xlu0 %3088
  %3092 = vset.pattern.permute.xlu0 0
  %3093 = vperm.xlu0 %3092, %v3027
  %v3094 = vpop.permute.xlu0 %3093
  %3097 = vset.pattern.permute.xlu0 0
  %3098 = vperm.xlu0 %3097, %v3028
  %v3099 = vpop.permute.xlu0 %3098
  %3102 = vset.pattern.permute.xlu0 0
  %3103 = vperm.xlu0 %3102, %v3029
  %v3104 = vpop.permute.xlu0 %3103
  %3107 = vset.pattern.permute.xlu0 0
  %3108 = vperm.xlu0 %3107, %v3030
  %v3109 = vpop.permute.xlu0 %3108
  %3112 = vset.pattern.permute.xlu0 0
  %3113 = vperm.xlu0 %3112, %v3031
  %v3114 = vpop.permute.xlu0 %3113
  %3117 = vset.pattern.permute.xlu0 0
  %3118 = vperm.xlu0 %3117, %v3032
  %v3119 = vpop.permute.xlu0 %3118
  %3122 = vset.pattern.permute.xlu0 0
  %3123 = vperm.xlu0 %3122, %v3033
  %v3124 = vpop.permute.xlu0 %3123
  %3127 = vset.pattern.permute.xlu0 0
  %3128 = vperm.xlu0 %3127, %v3034
  %v3129 = vpop.permute.xlu0 %3128
  %3132 = vset.pattern.permute.xlu0 0
  %3133 = vperm.xlu0 %3132, %v3035
  %v3134 = vpop.permute.xlu0 %3133
  %3137 = vset.pattern.permute.xlu0 0
  %3138 = vperm.xlu0 %3137, %v3036
  %v3139 = vpop.permute.xlu0 %3138
  %3142 = vset.pattern.permute.xlu0 0
  %3143 = vperm.xlu0 %3142, %v3037
  %v3144 = vpop.permute.xlu0 %3143
  %3147 = vset.pattern.permute.xlu0 0
  %3148 = vperm.xlu0 %3147, %v3038
  %v3149 = vpop.permute.xlu0 %3148
  %3152 = vset.pattern.permute.xlu0 0
  %3153 = vperm.xlu0 %3152, %v3039
  %v3154 = vpop.permute.xlu0 %3153
  %3157 = vset.pattern.permute.xlu0 0
  %3158 = vperm.xlu0 %3157, %v3040
  %v3159 = vpop.permute.xlu0 %3158
  %3162 = vset.pattern.permute.xlu0 0
  %3163 = vperm.xlu0 %3162, %v3041
  %v3164 = vpop.permute.xlu0 %3163
  %3167 = vset.pattern.permute.xlu0 0
  %3168 = vperm.xlu0 %3167, %v3042
  %v3169 = vpop.permute.xlu0 %3168
  %3172 = vset.pattern.permute.xlu0 0
  %3173 = vperm.xlu0 %3172, %v3043
  %v3174 = vpop.permute.xlu0 %3173
  %3177 = vset.pattern.permute.xlu0 0
  %3178 = vperm.xlu0 %3177, %v3044
  %v3179 = vpop.permute.xlu0 %3178
  %3182 = vset.pattern.permute.xlu0 0
  %3183 = vperm.xlu0 %3182, %v3045
  %v3184 = vpop.permute.xlu0 %3183
  %3187 = vset.pattern.permute.xlu0 0
  %3188 = vperm.xlu0 %3187, %v3046
  %v3189 = vpop.permute.xlu0 %3188
  %3192 = vset.pattern.permute.xlu0 0
  %3193 = vperm.xlu0 %3192, %v3047
  %v3194 = vpop.permute.xlu0 %3193
  %3197 = vset.pattern.permute.xlu0 0
  %3198 = vperm.xlu0 %3197, %v3048
  %v3199 = vpop.permute.xlu0 %3198
  %3202 = vset.pattern.permute.xlu0 0
  %3203 = vperm.xlu0 %3202, %v3049
  %v3204 = vpop.permute.xlu0 %3203
  %3207 = vset.pattern.permute.xlu0 0
  %3208 = vperm.xlu0 %3207, %v3050
  %v3209 = vpop.permute.xlu0 %3208
  %v3211 = vmul.f32 %v2987, %v3054
  %v3212 = vmul.f32 %v2988, %v3059
  %v3213 = vmul.f32 %v2989, %v3064
  %v3214 = vmul.f32 %v2990, %v3069
  %v3215 = vmul.f32 %v2991, %v3074
  %v3216 = vmul.f32 %v2992, %v3079
  %v3217 = vmul.f32 %v2993, %v3084
  %v3218 = vmul.f32 %v2994, %v3089
  %v3219 = vmul.f32 %v2995, %v3094
  %v3220 = vmul.f32 %v2996, %v3099
  %v3221 = vmul.f32 %v2997, %v3104
  %v3222 = vmul.f32 %v2998, %v3109
  %v3223 = vmul.f32 %v2999, %v3114
  %v3224 = vmul.f32 %v3000, %v3119
  %v3225 = vmul.f32 %v3001, %v3124
  %v3226 = vmul.f32 %v3002, %v3129
  %v3227 = vmul.f32 %v3003, %v3134
  %v3228 = vmul.f32 %v3004, %v3139
  %v3229 = vmul.f32 %v3005, %v3144
  %v3230 = vmul.f32 %v3006, %v3149
  %v3231 = vmul.f32 %v3007, %v3154
  %v3232 = vmul.f32 %v3008, %v3159
  %v3233 = vmul.f32 %v3009, %v3164
  %v3234 = vmul.f32 %v3010, %v3169
  %v3235 = vmul.f32 %v3011, %v3174
  %v3236 = vmul.f32 %v3012, %v3179
  %v3237 = vmul.f32 %v3013, %v3184
  %v3238 = vmul.f32 %v3014, %v3189
  %v3239 = vmul.f32 %v3015, %v3194
  %v3240 = vmul.f32 %v3016, %v3199
  %v3241 = vmul.f32 %v3017, %v3204
  %v3242 = vmul.f32 %v3018, %v3209
  %v3243 = vadd.f32 %v3211, %v3212
  %v3244 = vadd.f32 %v3243, %v3213
  %v3245 = vadd.f32 %v3244, %v3214
  %v3246 = vadd.f32 %v3245, %v3215
  %v3247 = vadd.f32 %v3246, %v3216
  %v3248 = vadd.f32 %v3247, %v3217
  %v3249 = vadd.f32 %v3248, %v3218
  %v3250 = vadd.f32 %v3249, %v3219
  %v3251 = vadd.f32 %v3250, %v3220
  %v3252 = vadd.f32 %v3251, %v3221
  %v3253 = vadd.f32 %v3252, %v3222
  %v3254 = vadd.f32 %v3253, %v3223
  %v3255 = vadd.f32 %v3254, %v3224
  %v3256 = vadd.f32 %v3255, %v3225
  %v3257 = vadd.f32 %v3256, %v3226
  %v3258 = vadd.f32 %v3257, %v3227
  %v3259 = vadd.f32 %v3258, %v3228
  %v3260 = vadd.f32 %v3259, %v3229
  %v3261 = vadd.f32 %v3260, %v3230
  %v3262 = vadd.f32 %v3261, %v3231
  %v3263 = vadd.f32 %v3262, %v3232
  %v3264 = vadd.f32 %v3263, %v3233
  %v3265 = vadd.f32 %v3264, %v3234
  %v3266 = vadd.f32 %v3265, %v3235
  %v3267 = vadd.f32 %v3266, %v3236
  %v3268 = vadd.f32 %v3267, %v3237
  %v3269 = vadd.f32 %v3268, %v3238
  %v3270 = vadd.f32 %v3269, %v3239
  %v3271 = vadd.f32 %v3270, %v3240
  %v3272 = vadd.f32 %v3271, %v3241
  %v3273 = vadd.f32 %v3272, %v3242
  %v3274 = vrot.slane %v3273, 4
  %v3275 = vadd.f32 %v3273, %v3274
  %v3276 = vrot.slane %v3275, 2
  %v3277 = vadd.f32 %v3275, %v3276
  %v3278 = vrot.slane %v3277, 1
  %v3279 = vadd.f32 %v3277, %v3278
  %3280 = vst [vmem:[%s4] sm:$0x1] %v3279
  %v3281 = vmul.f32 %v3211, %v2987
  %v3282 = vmul.f32 %v3212, %v2988
  %v3283 = vmul.f32 %v3213, %v2989
  %v3284 = vmul.f32 %v3214, %v2990
  %v3285 = vmul.f32 %v3215, %v2991
  %v3286 = vmul.f32 %v3216, %v2992
  %v3287 = vmul.f32 %v3217, %v2993
  %v3288 = vmul.f32 %v3218, %v2994
  %v3289 = vmul.f32 %v3219, %v2995
  %v3290 = vmul.f32 %v3220, %v2996
  %v3291 = vmul.f32 %v3221, %v2997
  %v3292 = vmul.f32 %v3222, %v2998
  %v3293 = vmul.f32 %v3223, %v2999
  %v3294 = vmul.f32 %v3224, %v3000
  %v3295 = vmul.f32 %v3225, %v3001
  %v3296 = vmul.f32 %v3226, %v3002
  %v3297 = vmul.f32 %v3227, %v3003
  %v3298 = vmul.f32 %v3228, %v3004
  %v3299 = vmul.f32 %v3229, %v3005
  %v3300 = vmul.f32 %v3230, %v3006
  %v3301 = vmul.f32 %v3231, %v3007
  %v3302 = vmul.f32 %v3232, %v3008
  %v3303 = vmul.f32 %v3233, %v3009
  %v3304 = vmul.f32 %v3234, %v3010
  %v3305 = vmul.f32 %v3235, %v3011
  %v3306 = vmul.f32 %v3236, %v3012
  %v3307 = vmul.f32 %v3237, %v3013
  %v3308 = vmul.f32 %v3238, %v3014
  %v3309 = vmul.f32 %v3239, %v3015
  %v3310 = vmul.f32 %v3240, %v3016
  %v3311 = vmul.f32 %v3241, %v3017
  %v3312 = vmul.f32 %v3242, %v3018
  %v3313 = vadd.f32 %v3281, %v3282
  %v3314 = vadd.f32 %v3313, %v3283
  %v3315 = vadd.f32 %v3314, %v3284
  %v3316 = vadd.f32 %v3315, %v3285
  %v3317 = vadd.f32 %v3316, %v3286
  %v3318 = vadd.f32 %v3317, %v3287
  %v3319 = vadd.f32 %v3318, %v3288
  %v3320 = vadd.f32 %v3319, %v3289
  %v3321 = vadd.f32 %v3320, %v3290
  %v3322 = vadd.f32 %v3321, %v3291
  %v3323 = vadd.f32 %v3322, %v3292
  %v3324 = vadd.f32 %v3323, %v3293
  %v3325 = vadd.f32 %v3324, %v3294
  %v3326 = vadd.f32 %v3325, %v3295
  %v3327 = vadd.f32 %v3326, %v3296
  %v3328 = vadd.f32 %v3327, %v3297
  %v3329 = vadd.f32 %v3328, %v3298
  %v3330 = vadd.f32 %v3329, %v3299
  %v3331 = vadd.f32 %v3330, %v3300
  %v3332 = vadd.f32 %v3331, %v3301
  %v3333 = vadd.f32 %v3332, %v3302
  %v3334 = vadd.f32 %v3333, %v3303
  %v3335 = vadd.f32 %v3334, %v3304
  %v3336 = vadd.f32 %v3335, %v3305
  %v3337 = vadd.f32 %v3336, %v3306
  %v3338 = vadd.f32 %v3337, %v3307
  %v3339 = vadd.f32 %v3338, %v3308
  %v3340 = vadd.f32 %v3339, %v3309
  %v3341 = vadd.f32 %v3340, %v3310
  %v3342 = vadd.f32 %v3341, %v3311
  %v3343 = vadd.f32 %v3342, %v3312
  %v3344 = vrot.slane %v3343, 4
  %v3345 = vadd.f32 %v3343, %v3344
  %v3346 = vrot.slane %v3345, 2
  %v3347 = vadd.f32 %v3345, %v3346
  %v3348 = vrot.slane %v3347, 1
  %v3349 = vadd.f32 %v3347, %v3348
  %3350 = vst [vmem:[%s4 + $0x1] sm:$0x1] %v3349
  %v3351 = vpack.c.bf16 %v2988, %v2987
  %v3352 = vpack.c.bf16 %v2990, %v2989
  %v3353 = vpack.c.bf16 %v2992, %v2991
  %v3354 = vpack.c.bf16 %v2994, %v2993
  %v3355 = vpack.c.bf16 %v2996, %v2995
  %v3356 = vpack.c.bf16 %v2998, %v2997
  %v3357 = vpack.c.bf16 %v3000, %v2999
  %v3358 = vpack.c.bf16 %v3002, %v3001
  %v3359 = vpack.c.bf16 %v3004, %v3003
  %v3360 = vpack.c.bf16 %v3006, %v3005
  %v3361 = vpack.c.bf16 %v3008, %v3007
  %v3362 = vpack.c.bf16 %v3010, %v3009
  %v3363 = vpack.c.bf16 %v3012, %v3011
  %v3364 = vpack.c.bf16 %v3014, %v3013
  %v3365 = vpack.c.bf16 %v3016, %v3015
  %v3366 = vpack.c.bf16 %v3018, %v3017
  %v3383 = vunpack.c.l.b16 %v3351
  %v3384 = vunpack.c.h.b16 %v3351
  %v3385 = vunpack.c.l.b16 %v3352
  %v3386 = vunpack.c.h.b16 %v3352
  %v3387 = vunpack.c.l.b16 %v3353
  %v3388 = vunpack.c.h.b16 %v3353
  %v3389 = vunpack.c.l.b16 %v3354
  %v3390 = vunpack.c.h.b16 %v3354
  %v3391 = vunpack.c.l.b16 %v3355
  %v3392 = vunpack.c.h.b16 %v3355
  %v3393 = vunpack.c.l.b16 %v3356
  %v3394 = vunpack.c.h.b16 %v3356
  %v3395 = vunpack.c.l.b16 %v3357
  %v3396 = vunpack.c.h.b16 %v3357
  %v3397 = vunpack.c.l.b16 %v3358
  %v3398 = vunpack.c.h.b16 %v3358
  %v3399 = vunpack.c.l.b16 %v3359
  %v3400 = vunpack.c.h.b16 %v3359
  %v3401 = vunpack.c.l.b16 %v3360
  %v3402 = vunpack.c.h.b16 %v3360
  %v3403 = vunpack.c.l.b16 %v3361
  %v3404 = vunpack.c.h.b16 %v3361
  %v3405 = vunpack.c.l.b16 %v3362
  %v3406 = vunpack.c.h.b16 %v3362
  %v3407 = vunpack.c.l.b16 %v3363
  %v3408 = vunpack.c.h.b16 %v3363
  %v3409 = vunpack.c.l.b16 %v3364
  %v3410 = vunpack.c.h.b16 %v3364
  %v3411 = vunpack.c.l.b16 %v3365
  %v3412 = vunpack.c.h.b16 %v3365
  %v3413 = vunpack.c.l.b16 %v3366
  %v3414 = vunpack.c.h.b16 %v3366
  %v3415 = vpack.c.b16 %v3383, %v3383
  %v3416 = vpack.c.b16 %v3384, %v3384
  %v3417 = vpack.c.b16 %v3385, %v3385
  %v3418 = vpack.c.b16 %v3386, %v3386
  %v3419 = vpack.c.b16 %v3387, %v3387
  %v3420 = vpack.c.b16 %v3388, %v3388
  %v3421 = vpack.c.b16 %v3389, %v3389
  %v3422 = vpack.c.b16 %v3390, %v3390
  %v3423 = vpack.c.b16 %v3391, %v3391
  %v3424 = vpack.c.b16 %v3392, %v3392
  %v3425 = vpack.c.b16 %v3393, %v3393
  %v3426 = vpack.c.b16 %v3394, %v3394
  %v3427 = vpack.c.b16 %v3395, %v3395
  %v3428 = vpack.c.b16 %v3396, %v3396
  %v3429 = vpack.c.b16 %v3397, %v3397
  %v3430 = vpack.c.b16 %v3398, %v3398
  %v3431 = vpack.c.b16 %v3399, %v3399
  %v3432 = vpack.c.b16 %v3400, %v3400
  %v3433 = vpack.c.b16 %v3401, %v3401
  %v3434 = vpack.c.b16 %v3402, %v3402
  %v3435 = vpack.c.b16 %v3403, %v3403
  %v3436 = vpack.c.b16 %v3404, %v3404
  %v3437 = vpack.c.b16 %v3405, %v3405
  %v3438 = vpack.c.b16 %v3406, %v3406
  %v3439 = vpack.c.b16 %v3407, %v3407
  %v3440 = vpack.c.b16 %v3408, %v3408
  %v3441 = vpack.c.b16 %v3409, %v3409
  %v3442 = vpack.c.b16 %v3410, %v3410
  %v3443 = vpack.c.b16 %v3411, %v3411
  %v3444 = vpack.c.b16 %v3412, %v3412
  %v3445 = vpack.c.b16 %v3413, %v3413
  %v3446 = vpack.c.b16 %v3414, %v3414
  %3479 = vst [vmem:[%s3] sm:$0xf] %v3415
  %3480 = vst [vmem:[%s3 + $0x4] sm:$0xf] %v3416
  %3481 = vst [vmem:[%s3 + $0x8] sm:$0xf] %v3417
  %3482 = vst [vmem:[%s3 + $0xc] sm:$0xf] %v3418
  %3483 = vst [vmem:[%s3 + $0x10] sm:$0xf] %v3419
  %3484 = vst [vmem:[%s3 + $0x14] sm:$0xf] %v3420
  %3485 = vst [vmem:[%s3 + $0x18] sm:$0xf] %v3421
  %3486 = vst [vmem:[%s3 + $0x1c] sm:$0xf] %v3422
  %3487 = vst [vmem:[%s3 + $0x20] sm:$0xf] %v3423
  %3488 = vst [vmem:[%s3 + $0x24] sm:$0xf] %v3424
  %3489 = vst [vmem:[%s3 + $0x28] sm:$0xf] %v3425
  %3490 = vst [vmem:[%s3 + $0x2c] sm:$0xf] %v3426
  %3491 = vst [vmem:[%s3 + $0x30] sm:$0xf] %v3427
  %3492 = vst [vmem:[%s3 + $0x34] sm:$0xf] %v3428
  %3493 = vst [vmem:[%s3 + $0x38] sm:$0xf] %v3429
  %3494 = vst [vmem:[%s3 + $0x3c] sm:$0xf] %v3430
  %3495 = vst [vmem:[%s3 + $0x40] sm:$0xf] %v3431
  %3496 = vst [vmem:[%s3 + $0x44] sm:$0xf] %v3432
  %3497 = vst [vmem:[%s3 + $0x48] sm:$0xf] %v3433
  %3498 = vst [vmem:[%s3 + $0x4c] sm:$0xf] %v3434
  %3499 = vst [vmem:[%s3 + $0x50] sm:$0xf] %v3435
  %3500 = vst [vmem:[%s3 + $0x54] sm:$0xf] %v3436
  %3501 = vst [vmem:[%s3 + $0x58] sm:$0xf] %v3437
  %3502 = vst [vmem:[%s3 + $0x5c] sm:$0xf] %v3438
  %3503 = vst [vmem:[%s3 + $0x60] sm:$0xf] %v3439
  %3504 = vst [vmem:[%s3 + $0x64] sm:$0xf] %v3440
  %3505 = vst [vmem:[%s3 + $0x68] sm:$0xf] %v3441
  %3506 = vst [vmem:[%s3 + $0x6c] sm:$0xf] %v3442
  %3507 = vst [vmem:[%s3 + $0x70] sm:$0xf] %v3443
  %3508 = vst [vmem:[%s3 + $0x74] sm:$0xf] %v3444
  %3509 = vst [vmem:[%s3 + $0x78] sm:$0xf] %v3445
  %3510 = vst [vmem:[%s3 + $0x7c] sm:$0xf] %v3446
  // Predicated region
  $region14: #{cnn18_forward.31} parent=0 // pred_check
    _
  $region15: #{cnn18_forward.31} parent=0 // pred_check_branch
    %3512 = sbr.rel (0) target = $region17
  $region16: #{cnn18_forward.31} parent=0 // pred_region
    _
  $region17: #{cnn18_forward.31} parent=0 // pred_fallthru
    _
  // Predicated region
  $region18: #{cnn18_forward.31} parent=0 // pred_check
    _
  $region19: #{cnn18_forward.31} parent=0 // pred_check_branch
    %3514 = sbr.rel (0) target = $region21
  $region20: #{cnn18_forward.31} parent=0 // pred_region
    _
  $region21: #{cnn18_forward.31} parent=0 // pred_fallthru
    _
  // Predicated region
  $region22: #{cnn18_forward.31} parent=0 // pred_check
    _
  $region23: #{cnn18_forward.31} parent=0 // pred_check_branch
    %3516 = sbr.rel (0) target = $region25
  $region24: #{cnn18_forward.31} parent=0 // pred_region
    _
  $region25: #{cnn18_forward.31} parent=0 // pred_fallthru
    _
  // Predicated region
  $region26: #{cnn18_forward.31} parent=0 // pred_check
    _
  $region27: #{cnn18_forward.31} parent=0 // pred_check_branch
    %3518 = sbr.rel (0) target = $region29
  $region28: #{cnn18_forward.31} parent=0 // pred_region
    _
  $region29: #{cnn18_forward.31} parent=0 // pred_fallthru
    _

// kernel: cnn18_forward.33
$region0: #{cnn18_forward.33}
  #allocation0 [shape = 'u32[]', space=smem, size = 0x4, offset = 0x4, fixed_abs, tag = 'smem constant byte address 0x4 - core index']
  #allocation1 [shape = 'u32[144,128]{1,0:T(1,128)}', space=vmem, size = 0x12000, scoped, tag = 'internal scratch']
  %s0 = inlined_call_operand.vmem [shape: bf16[272,128], index: 0, kind: input, shape index: {}]
  %s1 = inlined_call_operand.vmem [shape: bf16[9,128,128], index: 1, kind: input, shape index: {}]
  %s2 = inlined_call_operand.vmem [shape: f32[256,1], index: 2, kind: input, shape index: {}]
  %s3 = inlined_call_operand.vmem [shape: bf16[256,128], index: 3, kind: output, shape index: {0}]
  %s4 = inlined_call_operand.vmem [shape: f32[8,128], index: 4, kind: output, shape index: {1}]
  %5 = xla_tuple %s3, %s4
  %s6 = sld [smem:[#allocation0]]
  $region30: #{cnn18_forward.33} parent=0
    _
  %s8 = ssub.s32 1, %s6
  %s9 = scalar_select 0, %s8, %s6
  // Predicated region
  $region2: #{cnn18_forward.33} parent=0 // pred_check
    _
  $region3: #{cnn18_forward.33} parent=0 // pred_check_branch
    %11 = sbr.rel (0) target = $region5
  $region4: #{cnn18_forward.33} parent=0 // pred_region
    _
  $region5: #{cnn18_forward.33} parent=0 // pred_fallthru
    _
  // Predicated region
  $region6: #{cnn18_forward.33} parent=0 // pred_check
    _
  $region7: #{cnn18_forward.33} parent=0 // pred_check_branch
    %13 = sbr.rel (0) target = $region9
  $region8: #{cnn18_forward.33} parent=0 // pred_region
    _
  $region9: #{cnn18_forward.33} parent=0 // pred_fallthru
    _
  // Predicated region
  $region10: #{cnn18_forward.33} parent=0 // pred_check
    _
  $region11: #{cnn18_forward.33} parent=0 // pred_check_branch
    %15 = sbr.rel (0) target = $region13
  $region12: #{cnn18_forward.33} parent=0 // pred_region
    _
  $region13: #{cnn18_forward.33} parent=0 // pred_fallthru
    _
  %s17 = smul.u32 0, 256
  %s18 = sshra.s32 %s17, 3
  %s19 = sand.u32 %s17, 7
  %s20 = smul.addr %s18, 4
  %s21 = scalar_lea.vmem %s0, %s20
  %v22 = vld [vmem:[%s21] sm:$0xf]
  %v23 = vld [vmem:[%s21 + $0x4] sm:$0xf]
  %v24 = vld [vmem:[%s21 + $0x8] sm:$0xf]
  %v25 = vld [vmem:[%s21 + $0xc] sm:$0xf]
  %v26 = vld [vmem:[%s21 + $0x10] sm:$0xf]
  %v27 = vld [vmem:[%s21 + $0x14] sm:$0xf]
  %v28 = vld [vmem:[%s21 + $0x18] sm:$0xf]
  %v29 = vld [vmem:[%s21 + $0x1c] sm:$0xf]
  %v30 = vld [vmem:[%s21 + $0x20] sm:$0xf]
  %v31 = vld [vmem:[%s21 + $0x24] sm:$0xf]
  %v32 = vld [vmem:[%s21 + $0x28] sm:$0xf]
  %v33 = vld [vmem:[%s21 + $0x2c] sm:$0xf]
  %v34 = vld [vmem:[%s21 + $0x30] sm:$0xf]
  %v35 = vld [vmem:[%s21 + $0x34] sm:$0xf]
  %v36 = vld [vmem:[%s21 + $0x38] sm:$0xf]
  %v37 = vld [vmem:[%s21 + $0x3c] sm:$0xf]
  %v38 = vld [vmem:[%s21 + $0x40] sm:$0xf]
  %v39 = vld [vmem:[%s21 + $0x44] sm:$0xf]
  %v40 = vld [vmem:[%s21 + $0x48] sm:$0xf]
  %v41 = vld [vmem:[%s21 + $0x4c] sm:$0xf]
  %v42 = vld [vmem:[%s21 + $0x50] sm:$0xf]
  %v43 = vld [vmem:[%s21 + $0x54] sm:$0xf]
  %v44 = vld [vmem:[%s21 + $0x58] sm:$0xf]
  %v45 = vld [vmem:[%s21 + $0x5c] sm:$0xf]
  %v46 = vld [vmem:[%s21 + $0x60] sm:$0xf]
  %v47 = vld [vmem:[%s21 + $0x64] sm:$0xf]
  %v48 = vld [vmem:[%s21 + $0x68] sm:$0xf]
  %v49 = vld [vmem:[%s21 + $0x6c] sm:$0xf]
  %v50 = vld [vmem:[%s21 + $0x70] sm:$0xf]
  %v51 = vld [vmem:[%s21 + $0x74] sm:$0xf]
  %v52 = vld [vmem:[%s21 + $0x78] sm:$0xf]
  %v53 = vld [vmem:[%s21 + $0x7c] sm:$0xf]
  %v54 = vld [vmem:[%s21 + $0x80] sm:$0xf]
  %v55 = vld [vmem:[%s21 + $0x84] sm:$0xf]
  %v56 = vld [vmem:[%s1] sm:$0xf]
  %v57 = vld [vmem:[%s1 + $0x4] sm:$0xf]
  %v58 = vld [vmem:[%s1 + $0x8] sm:$0xf]
  %v59 = vld [vmem:[%s1 + $0xc] sm:$0xf]
  %v60 = vld [vmem:[%s1 + $0x10] sm:$0xf]
  %v61 = vld [vmem:[%s1 + $0x14] sm:$0xf]
  %v62 = vld [vmem:[%s1 + $0x18] sm:$0xf]
  %v63 = vld [vmem:[%s1 + $0x1c] sm:$0xf]
  %v64 = vld [vmem:[%s1 + $0x20] sm:$0xf]
  %v65 = vld [vmem:[%s1 + $0x24] sm:$0xf]
  %v66 = vld [vmem:[%s1 + $0x28] sm:$0xf]
  %v67 = vld [vmem:[%s1 + $0x2c] sm:$0xf]
  %v68 = vld [vmem:[%s1 + $0x30] sm:$0xf]
  %v69 = vld [vmem:[%s1 + $0x34] sm:$0xf]
  %v70 = vld [vmem:[%s1 + $0x38] sm:$0xf]
  %v71 = vld [vmem:[%s1 + $0x3c] sm:$0xf]
  %s72 = scalar_lea.vmem %s1, 64
  %v73 = vld [vmem:[%s72] sm:$0xf]
  %v74 = vld [vmem:[%s72 + $0x4] sm:$0xf]
  %v75 = vld [vmem:[%s72 + $0x8] sm:$0xf]
  %v76 = vld [vmem:[%s72 + $0xc] sm:$0xf]
  %v77 = vld [vmem:[%s72 + $0x10] sm:$0xf]
  %v78 = vld [vmem:[%s72 + $0x14] sm:$0xf]
  %v79 = vld [vmem:[%s72 + $0x18] sm:$0xf]
  %v80 = vld [vmem:[%s72 + $0x1c] sm:$0xf]
  %v81 = vld [vmem:[%s72 + $0x20] sm:$0xf]
  %v82 = vld [vmem:[%s72 + $0x24] sm:$0xf]
  %v83 = vld [vmem:[%s72 + $0x28] sm:$0xf]
  %v84 = vld [vmem:[%s72 + $0x2c] sm:$0xf]
  %v85 = vld [vmem:[%s72 + $0x30] sm:$0xf]
  %v86 = vld [vmem:[%s72 + $0x34] sm:$0xf]
  %v87 = vld [vmem:[%s72 + $0x38] sm:$0xf]
  %v88 = vld [vmem:[%s72 + $0x3c] sm:$0xf]
  %v122 = vunpack.c.l.b16 %v22
  %v123 = vunpack.c.l.b16 %v23
  %v124 = vunpack.c.l.b16 %v24
  %v125 = vunpack.c.l.b16 %v25
  %v126 = vunpack.c.l.b16 %v26
  %v127 = vunpack.c.l.b16 %v27
  %v128 = vunpack.c.l.b16 %v28
  %v129 = vunpack.c.l.b16 %v29
  %v130 = vunpack.c.l.b16 %v30
  %v131 = vunpack.c.l.b16 %v31
  %v132 = vunpack.c.l.b16 %v32
  %v133 = vunpack.c.l.b16 %v33
  %v134 = vunpack.c.l.b16 %v34
  %v135 = vunpack.c.l.b16 %v35
  %v136 = vunpack.c.l.b16 %v36
  %v137 = vunpack.c.l.b16 %v37
  %v138 = vunpack.c.l.b16 %v38
  %v139 = vunpack.c.l.b16 %v39
  %v140 = vunpack.c.l.b16 %v40
  %v141 = vunpack.c.l.b16 %v41
  %v142 = vunpack.c.l.b16 %v42
  %v143 = vunpack.c.l.b16 %v43
  %v144 = vunpack.c.l.b16 %v44
  %v145 = vunpack.c.l.b16 %v45
  %v146 = vunpack.c.l.b16 %v46
  %v147 = vunpack.c.l.b16 %v47
  %v148 = vunpack.c.l.b16 %v48
  %v149 = vunpack.c.l.b16 %v49
  %v150 = vunpack.c.l.b16 %v50
  %v151 = vunpack.c.l.b16 %v51
  %v152 = vunpack.c.l.b16 %v52
  %v153 = vunpack.c.l.b16 %v53
  %v154 = vunpack.c.l.b16 %v54
  %v155 = vpack.c.b16 %v123, %v122
  %v156 = vpack.c.b16 %v125, %v124
  %v157 = vpack.c.b16 %v127, %v126
  %v158 = vpack.c.b16 %v129, %v128
  %v159 = vpack.c.b16 %v131, %v130
  %v160 = vpack.c.b16 %v133, %v132
  %v161 = vpack.c.b16 %v135, %v134
  %v162 = vpack.c.b16 %v137, %v136
  %v163 = vpack.c.b16 %v139, %v138
  %v164 = vpack.c.b16 %v141, %v140
  %v165 = vpack.c.b16 %v143, %v142
  %v166 = vpack.c.b16 %v145, %v144
  %v167 = vpack.c.b16 %v147, %v146
  %v168 = vpack.c.b16 %v149, %v148
  %v169 = vpack.c.b16 %v151, %v150
  %v170 = vpack.c.b16 %v153, %v152
  %v171 = vpack.c.b16 %v154, %v154
  %vm172 = vsmask.f32 7424
  %v174 = vshrl.u32 %v155, 16
  %v176 = vshll.u32 %v155, 16
  %v178 = vrot.slane %v176, 1
  %v179 = vor.u32 %v174, %v178
  %v181 = vshll.u32 %v156, 16
  %v183 = vrot.slane %v181, 1
  %v184 = vsel %vm172, %v179, %v183
  %v185 = vshrl.u32 %v156, 16
  %v187 = vor.u32 %v185, %v183
  %v189 = vshll.u32 %v157, 16
  %v191 = vrot.slane %v189, 1
  %v192 = vsel %vm172, %v187, %v191
  %v193 = vshrl.u32 %v157, 16
  %v195 = vor.u32 %v193, %v191
  %v197 = vshll.u32 %v158, 16
  %v199 = vrot.slane %v197, 1
  %v200 = vsel %vm172, %v195, %v199
  %v201 = vshrl.u32 %v158, 16
  %v203 = vor.u32 %v201, %v199
  %v205 = vshll.u32 %v159, 16
  %v207 = vrot.slane %v205, 1
  %v208 = vsel %vm172, %v203, %v207
  %v209 = vshrl.u32 %v159, 16
  %v211 = vor.u32 %v209, %v207
  %v213 = vshll.u32 %v160, 16
  %v215 = vrot.slane %v213, 1
  %v216 = vsel %vm172, %v211, %v215
  %v217 = vshrl.u32 %v160, 16
  %v219 = vor.u32 %v217, %v215
  %v221 = vshll.u32 %v161, 16
  %v223 = vrot.slane %v221, 1
  %v224 = vsel %vm172, %v219, %v223
  %v225 = vshrl.u32 %v161, 16
  %v227 = vor.u32 %v225, %v223
  %v229 = vshll.u32 %v162, 16
  %v231 = vrot.slane %v229, 1
  %v232 = vsel %vm172, %v227, %v231
  %v233 = vshrl.u32 %v162, 16
  %v235 = vor.u32 %v233, %v231
  %v237 = vshll.u32 %v163, 16
  %v239 = vrot.slane %v237, 1
  %v240 = vsel %vm172, %v235, %v239
  %v241 = vshrl.u32 %v163, 16
  %v243 = vor.u32 %v241, %v239
  %v245 = vshll.u32 %v164, 16
  %v247 = vrot.slane %v245, 1
  %v248 = vsel %vm172, %v243, %v247
  %v249 = vshrl.u32 %v164, 16
  %v251 = vor.u32 %v249, %v247
  %v253 = vshll.u32 %v165, 16
  %v255 = vrot.slane %v253, 1
  %v256 = vsel %vm172, %v251, %v255
  %v257 = vshrl.u32 %v165, 16
  %v259 = vor.u32 %v257, %v255
  %v261 = vshll.u32 %v166, 16
  %v263 = vrot.slane %v261, 1
  %v264 = vsel %vm172, %v259, %v263
  %v265 = vshrl.u32 %v166, 16
  %v267 = vor.u32 %v265, %v263
  %v269 = vshll.u32 %v167, 16
  %v271 = vrot.slane %v269, 1
  %v272 = vsel %vm172, %v267, %v271
  %v273 = vshrl.u32 %v167, 16
  %v275 = vor.u32 %v273, %v271
  %v277 = vshll.u32 %v168, 16
  %v279 = vrot.slane %v277, 1
  %v280 = vsel %vm172, %v275, %v279
  %v281 = vshrl.u32 %v168, 16
  %v283 = vor.u32 %v281, %v279
  %v285 = vshll.u32 %v169, 16
  %v287 = vrot.slane %v285, 1
  %v288 = vsel %vm172, %v283, %v287
  %v289 = vshrl.u32 %v169, 16
  %v291 = vor.u32 %v289, %v287
  %v293 = vshll.u32 %v170, 16
  %v295 = vrot.slane %v293, 1
  %v296 = vsel %vm172, %v291, %v295
  %v297 = vshrl.u32 %v170, 16
  %v299 = vor.u32 %v297, %v295
  %v301 = vshll.u32 %v171, 16
  %v303 = vrot.slane %v301, 1
  %v304 = vsel %vm172, %v299, %v303
  %v337 = vunpack.c.l.b16 %v73
  %v338 = vunpack.c.l.b16 %v74
  %v339 = vunpack.c.l.b16 %v75
  %v340 = vunpack.c.l.b16 %v76
  %v341 = vunpack.c.l.b16 %v77
  %v342 = vunpack.c.l.b16 %v78
  %v343 = vunpack.c.l.b16 %v79
  %v344 = vunpack.c.l.b16 %v80
  %v345 = vunpack.c.l.b16 %v81
  %v346 = vunpack.c.l.b16 %v82
  %v347 = vunpack.c.l.b16 %v83
  %v348 = vunpack.c.l.b16 %v84
  %v349 = vunpack.c.l.b16 %v85
  %v350 = vunpack.c.l.b16 %v86
  %v351 = vunpack.c.l.b16 %v87
  %v352 = vunpack.c.l.b16 %v88
  %v353 = vpack.c.b16 %v338, %v337
  %v354 = vpack.c.b16 %v340, %v339
  %v355 = vpack.c.b16 %v342, %v341
  %v356 = vpack.c.b16 %v344, %v343
  %v357 = vpack.c.b16 %v346, %v345
  %v358 = vpack.c.b16 %v348, %v347
  %v359 = vpack.c.b16 %v350, %v349
  %v360 = vpack.c.b16 %v352, %v351
  %369 = vmatprep.subr.bf16.mxu0 0
  %370 = vmatpush1.bf16.msra.mxu0 %v353
  %371 = vmatprep.subr.bf16.mxu0 0
  %372 = vmatpush1.bf16.msra.mxu0 %v354
  %373 = vmatprep.subr.bf16.mxu0 0
  %374 = vmatpush1.bf16.msra.mxu0 %v355
  %375 = vmatprep.subr.bf16.mxu0 0
  %376 = vmatpush1.bf16.msra.mxu0 %v356
  %377 = vmatprep.subr.bf16.mxu0 0
  %378 = vmatpush1.bf16.msra.mxu0 %v357
  %379 = vmatprep.subr.bf16.mxu0 0
  %380 = vmatpush1.bf16.msra.mxu0 %v358
  %381 = vmatprep.subr.bf16.mxu0 0
  %382 = vmatpush1.bf16.msra.mxu0 %v359
  %383 = vmatprep.subr.bf16.mxu0 0
  %384 = vmatpush1.bf16.msra.mxu0 %v360
  %385 = vmatprep.subr.bf16.mxu0 0
  %386 = vmatpush1.bf16.msra.mxu0 0
  %387 = vmatprep.subr.bf16.mxu0 0
  %388 = vmatpush1.bf16.msra.mxu0 0
  %389 = vmatprep.subr.bf16.mxu0 0
  %390 = vmatpush1.bf16.msra.mxu0 0
  %391 = vmatprep.subr.bf16.mxu0 0
  %392 = vmatpush1.bf16.msra.mxu0 0
  %393 = vmatprep.subr.bf16.mxu0 0
  %394 = vmatpush1.bf16.msra.mxu0 0
  %395 = vmatprep.subr.bf16.mxu0 0
  %396 = vmatpush1.bf16.msra.mxu0 0
  %397 = vmatprep.subr.bf16.mxu0 0
  %398 = vmatpush1.bf16.msra.mxu0 0
  %399 = vmatprep.subr.bf16.mxu0 0
  %400 = vmatpush1.bf16.msra.mxu0 0
  %401 = vmatprep.mubr.bf16.mxu0 0
  %402 = vmatmul.mubr.bf16.gmra.mrb[0].mxu0 %v184
  %v403 = vpop.f32.mrb[0].mxu0
  %v404 = vadd.f32 0.0, %v403
  %v405 = vpop.f32.mrb[0].mxu0
  %v406 = vpop.f32.mrb[0].mxu0
  %v407 = vadd.f32 0.0, %v406
  %v408 = vpop.f32.mrb[0].mxu0
  %409 = vmatprep.mubr.bf16.mxu0 0
  %410 = vmatmul.mubr.bf16.gmra.mrb[0].mxu0 %v192
  %v411 = vpop.f32.mrb[0].mxu0
  %v412 = vadd.f32 0.0, %v411
  %v413 = vpop.f32.mrb[0].mxu0
  %v414 = vpop.f32.mrb[0].mxu0
  %v415 = vadd.f32 0.0, %v414
  %v416 = vpop.f32.mrb[0].mxu0
  %417 = vmatprep.mubr.bf16.mxu0 0
  %418 = vmatmul.mubr.bf16.gmra.mrb[0].mxu0 %v200
  %v419 = vpop.f32.mrb[0].mxu0
  %v420 = vadd.f32 0.0, %v419
  %v421 = vpop.f32.mrb[0].mxu0
  %v422 = vpop.f32.mrb[0].mxu0
  %v423 = vadd.f32 0.0, %v422
  %v424 = vpop.f32.mrb[0].mxu0
  %425 = vmatprep.mubr.bf16.mxu0 0
  %426 = vmatmul.mubr.bf16.gmra.mrb[0].mxu0 %v208
  %v427 = vpop.f32.mrb[0].mxu0
  %v428 = vadd.f32 0.0, %v427
  %v429 = vpop.f32.mrb[0].mxu0
  %v430 = vpop.f32.mrb[0].mxu0
  %v431 = vadd.f32 0.0, %v430
  %v432 = vpop.f32.mrb[0].mxu0
  %433 = vmatprep.mubr.bf16.mxu0 0
  %434 = vmatmul.mubr.bf16.gmra.mrb[0].mxu0 %v216
  %v435 = vpop.f32.mrb[0].mxu0
  %v436 = vadd.f32 0.0, %v435
  %v437 = vpop.f32.mrb[0].mxu0
  %v438 = vpop.f32.mrb[0].mxu0
  %v439 = vadd.f32 0.0, %v438
  %v440 = vpop.f32.mrb[0].mxu0
  %441 = vmatprep.mubr.bf16.mxu0 0
  %442 = vmatmul.mubr.bf16.gmra.mrb[0].mxu0 %v224
  %v443 = vpop.f32.mrb[0].mxu0
  %v444 = vadd.f32 0.0, %v443
  %v445 = vpop.f32.mrb[0].mxu0
  %v446 = vpop.f32.mrb[0].mxu0
  %v447 = vadd.f32 0.0, %v446
  %v448 = vpop.f32.mrb[0].mxu0
  %449 = vmatprep.mubr.bf16.mxu0 0
  %450 = vmatmul.mubr.bf16.gmra.mrb[0].mxu0 %v232
  %v451 = vpop.f32.mrb[0].mxu0
  %v452 = vadd.f32 0.0, %v451
  %v453 = vpop.f32.mrb[0].mxu0
  %v454 = vpop.f32.mrb[0].mxu0
  %v455 = vadd.f32 0.0, %v454
  %v456 = vpop.f32.mrb[0].mxu0
  %457 = vmatprep.mubr.bf16.mxu0 0
  %458 = vmatmul.mubr.bf16.gmra.mrb[0].mxu0 %v240
  %v459 = vpop.f32.mrb[0].mxu0
  %v460 = vadd.f32 0.0, %v459
  %v461 = vpop.f32.mrb[0].mxu0
  %v462 = vpop.f32.mrb[0].mxu0
  %v463 = vadd.f32 0.0, %v462
  %v464 = vpop.f32.mrb[0].mxu0
  %465 = vmatprep.mubr.bf16.mxu0 0
  %466 = vmatmul.mubr.bf16.gmra.mrb[0].mxu0 %v248
  %v467 = vpop.f32.mrb[0].mxu0
  %v468 = vadd.f32 0.0, %v467
  %v469 = vpop.f32.mrb[0].mxu0
  %v470 = vpop.f32.mrb[0].mxu0
  %v471 = vadd.f32 0.0, %v470
  %v472 = vpop.f32.mrb[0].mxu0
  %473 = vmatprep.mubr.bf16.mxu0 0
  %474 = vmatmul.mubr.bf16.gmra.mrb[0].mxu0 %v256
  %v475 = vpop.f32.mrb[0].mxu0
  %v476 = vadd.f32 0.0, %v475
  %v477 = vpop.f32.mrb[0].mxu0
  %v478 = vpop.f32.mrb[0].mxu0
  %v479 = vadd.f32 0.0, %v478
  %v480 = vpop.f32.mrb[0].mxu0
  %481 = vmatprep.mubr.bf16.mxu0 0
  %482 = vmatmul.mubr.bf16.gmra.mrb[0].mxu0 %v264
  %v483 = vpop.f32.mrb[0].mxu0
  %v484 = vadd.f32 0.0, %v483
  %v485 = vpop.f32.mrb[0].mxu0
  %v486 = vpop.f32.mrb[0].mxu0
  %v487 = vadd.f32 0.0, %v486
  %v488 = vpop.f32.mrb[0].mxu0
  %489 = vmatprep.mubr.bf16.mxu0 0
  %490 = vmatmul.mubr.bf16.gmra.mrb[0].mxu0 %v272
  %v491 = vpop.f32.mrb[0].mxu0
  %v492 = vadd.f32 0.0, %v491
  %v493 = vpop.f32.mrb[0].mxu0
  %v494 = vpop.f32.mrb[0].mxu0
  %v495 = vadd.f32 0.0, %v494
  %v496 = vpop.f32.mrb[0].mxu0
  %497 = vmatprep.mubr.bf16.mxu0 0
  %498 = vmatmul.mubr.bf16.gmra.mrb[0].mxu0 %v280
  %v499 = vpop.f32.mrb[0].mxu0
  %v500 = vadd.f32 0.0, %v499
  %v501 = vpop.f32.mrb[0].mxu0
  %v502 = vpop.f32.mrb[0].mxu0
  %v503 = vadd.f32 0.0, %v502
  %v504 = vpop.f32.mrb[0].mxu0
  %505 = vmatprep.mubr.bf16.mxu0 0
  %506 = vmatmul.mubr.bf16.gmra.mrb[0].mxu0 %v288
  %v507 = vpop.f32.mrb[0].mxu0
  %v508 = vadd.f32 0.0, %v507
  %v509 = vpop.f32.mrb[0].mxu0
  %v510 = vpop.f32.mrb[0].mxu0
  %v511 = vadd.f32 0.0, %v510
  %v512 = vpop.f32.mrb[0].mxu0
  %513 = vmatprep.mubr.bf16.mxu0 0
  %514 = vmatmul.mubr.bf16.gmra.mrb[0].mxu0 %v296
  %v515 = vpop.f32.mrb[0].mxu0
  %v516 = vadd.f32 0.0, %v515
  %v517 = vpop.f32.mrb[0].mxu0
  %v518 = vpop.f32.mrb[0].mxu0
  %v519 = vadd.f32 0.0, %v518
  %v520 = vpop.f32.mrb[0].mxu0
  %521 = vmatprep.mubr.bf16.mxu0 0
  %522 = vmatmul.mubr.bf16.gmra.mrb[0].mxu0 %v304
  %v523 = vpop.f32.mrb[0].mxu0
  %v524 = vadd.f32 0.0, %v523
  %v525 = vpop.f32.mrb[0].mxu0
  %v526 = vpop.f32.mrb[0].mxu0
  %v527 = vadd.f32 0.0, %v526
  %v528 = vpop.f32.mrb[0].mxu0
  %529 = vdwg.mxu0
  %v562 = vunpack.c.l.b16 %v56
  %v563 = vunpack.c.l.b16 %v57
  %v564 = vunpack.c.l.b16 %v58
  %v565 = vunpack.c.l.b16 %v59
  %v566 = vunpack.c.l.b16 %v60
  %v567 = vunpack.c.l.b16 %v61
  %v568 = vunpack.c.l.b16 %v62
  %v569 = vunpack.c.l.b16 %v63
  %v570 = vunpack.c.l.b16 %v64
  %v571 = vunpack.c.l.b16 %v65
  %v572 = vunpack.c.l.b16 %v66
  %v573 = vunpack.c.l.b16 %v67
  %v574 = vunpack.c.l.b16 %v68
  %v575 = vunpack.c.l.b16 %v69
  %v576 = vunpack.c.l.b16 %v70
  %v577 = vunpack.c.l.b16 %v71
  %v578 = vpack.c.b16 %v563, %v562
  %v579 = vpack.c.b16 %v565, %v564
  %v580 = vpack.c.b16 %v567, %v566
  %v581 = vpack.c.b16 %v569, %v568
  %v582 = vpack.c.b16 %v571, %v570
  %v583 = vpack.c.b16 %v573, %v572
  %v584 = vpack.c.b16 %v575, %v574
  %v585 = vpack.c.b16 %v577, %v576
  %594 = vmatprep.subr.bf16.mxu0 0
  %595 = vmatpush1.bf16.msra.mxu0 %v578
  %596 = vmatprep.subr.bf16.mxu0 0
  %597 = vmatpush1.bf16.msra.mxu0 %v579
  %598 = vmatprep.subr.bf16.mxu0 0
  %599 = vmatpush1.bf16.msra.mxu0 %v580
  %600 = vmatprep.subr.bf16.mxu0 0
  %601 = vmatpush1.bf16.msra.mxu0 %v581
  %602 = vmatprep.subr.bf16.mxu0 0
  %603 = vmatpush1.bf16.msra.mxu0 %v582
  %604 = vmatprep.subr.bf16.mxu0 0
  %605 = vmatpush1.bf16.msra.mxu0 %v583
  %606 = vmatprep.subr.bf16.mxu0 0
  %607 = vmatpush1.bf16.msra.mxu0 %v584
  %608 = vmatprep.subr.bf16.mxu0 0
  %609 = vmatpush1.bf16.msra.mxu0 %v585
  %610 = vmatprep.subr.bf16.mxu0 0
  %611 = vmatpush1.bf16.msra.mxu0 0
  %612 = vmatprep.subr.bf16.mxu0 0
  %613 = vmatpush1.bf16.msra.mxu0 0
  %614 = vmatprep.subr.bf16.mxu0 0
  %615 = vmatpush1.bf16.msra.mxu0 0
  %616 = vmatprep.subr.bf16.mxu0 0
  %617 = vmatpush1.bf16.msra.mxu0 0
  %618 = vmatprep.subr.bf16.mxu0 0
  %619 = vmatpush1.bf16.msra.mxu0 0
  %620 = vmatprep.subr.bf16.mxu0 0
  %621 = vmatpush1.bf16.msra.mxu0 0
  %622 = vmatprep.subr.bf16.mxu0 0
  %623 = vmatpush1.bf16.msra.mxu0 0
  %624 = vmatprep.subr.bf16.mxu0 0
  %625 = vmatpush1.bf16.msra.mxu0 0
  %626 = vmatprep.mubr.bf16.mxu0 0
  %627 = vmatmul.mubr.bf16.gmra.mrb[0].mxu0 %v155
  %v628 = vpop.f32.mrb[0].mxu0
  %v629 = vadd.f32 %v404, %v628
  %v630 = vpop.f32.mrb[0].mxu0
  %v631 = vpop.f32.mrb[0].mxu0
  %v632 = vadd.f32 %v407, %v631
  %v633 = vpop.f32.mrb[0].mxu0
  %634 = vmatprep.mubr.bf16.mxu0 0
  %635 = vmatmul.mubr.bf16.gmra.mrb[0].mxu0 %v156
  %v636 = vpop.f32.mrb[0].mxu0
  %v637 = vadd.f32 %v412, %v636
  %v638 = vpop.f32.mrb[0].mxu0
  %v639 = vpop.f32.mrb[0].mxu0
  %v640 = vadd.f32 %v415, %v639
  %v641 = vpop.f32.mrb[0].mxu0
  %642 = vmatprep.mubr.bf16.mxu0 0
  %643 = vmatmul.mubr.bf16.gmra.mrb[0].mxu0 %v157
  %v644 = vpop.f32.mrb[0].mxu0
  %v645 = vadd.f32 %v420, %v644
  %v646 = vpop.f32.mrb[0].mxu0
  %v647 = vpop.f32.mrb[0].mxu0
  %v648 = vadd.f32 %v423, %v647
  %v649 = vpop.f32.mrb[0].mxu0
  %650 = vmatprep.mubr.bf16.mxu0 0
  %651 = vmatmul.mubr.bf16.gmra.mrb[0].mxu0 %v158
  %v652 = vpop.f32.mrb[0].mxu0
  %v653 = vadd.f32 %v428, %v652
  %v654 = vpop.f32.mrb[0].mxu0
  %v655 = vpop.f32.mrb[0].mxu0
  %v656 = vadd.f32 %v431, %v655
  %v657 = vpop.f32.mrb[0].mxu0
  %658 = vmatprep.mubr.bf16.mxu0 0
  %659 = vmatmul.mubr.bf16.gmra.mrb[0].mxu0 %v159
  %v660 = vpop.f32.mrb[0].mxu0
  %v661 = vadd.f32 %v436, %v660
  %v662 = vpop.f32.mrb[0].mxu0
  %v663 = vpop.f32.mrb[0].mxu0
  %v664 = vadd.f32 %v439, %v663
  %v665 = vpop.f32.mrb[0].mxu0
  %666 = vmatprep.mubr.bf16.mxu0 0
  %667 = vmatmul.mubr.bf16.gmra.mrb[0].mxu0 %v160
  %v668 = vpop.f32.mrb[0].mxu0
  %v669 = vadd.f32 %v444, %v668
  %v670 = vpop.f32.mrb[0].mxu0
  %v671 = vpop.f32.mrb[0].mxu0
  %v672 = vadd.f32 %v447, %v671
  %v673 = vpop.f32.mrb[0].mxu0
  %674 = vmatprep.mubr.bf16.mxu0 0
  %675 = vmatmul.mubr.bf16.gmra.mrb[0].mxu0 %v161
  %v676 = vpop.f32.mrb[0].mxu0
  %v677 = vadd.f32 %v452, %v676
  %v678 = vpop.f32.mrb[0].mxu0
  %v679 = vpop.f32.mrb[0].mxu0
  %v680 = vadd.f32 %v455, %v679
  %v681 = vpop.f32.mrb[0].mxu0
  %682 = vmatprep.mubr.bf16.mxu0 0
  %683 = vmatmul.mubr.bf16.gmra.mrb[0].mxu0 %v162
  %v684 = vpop.f32.mrb[0].mxu0
  %v685 = vadd.f32 %v460, %v684
  %v686 = vpop.f32.mrb[0].mxu0
  %v687 = vpop.f32.mrb[0].mxu0
  %v688 = vadd.f32 %v463, %v687
  %v689 = vpop.f32.mrb[0].mxu0
  %690 = vmatprep.mubr.bf16.mxu0 0
  %691 = vmatmul.mubr.bf16.gmra.mrb[0].mxu0 %v163
  %v692 = vpop.f32.mrb[0].mxu0
  %v693 = vadd.f32 %v468, %v692
  %v694 = vpop.f32.mrb[0].mxu0
  %v695 = vpop.f32.mrb[0].mxu0
  %v696 = vadd.f32 %v471, %v695
  %v697 = vpop.f32.mrb[0].mxu0
  %698 = vmatprep.mubr.bf16.mxu0 0
  %699 = vmatmul.mubr.bf16.gmra.mrb[0].mxu0 %v164
  %v700 = vpop.f32.mrb[0].mxu0
  %v701 = vadd.f32 %v476, %v700
  %v702 = vpop.f32.mrb[0].mxu0
  %v703 = vpop.f32.mrb[0].mxu0
  %v704 = vadd.f32 %v479, %v703
  %v705 = vpop.f32.mrb[0].mxu0
  %706 = vmatprep.mubr.bf16.mxu0 0
  %707 = vmatmul.mubr.bf16.gmra.mrb[0].mxu0 %v165
  %v708 = vpop.f32.mrb[0].mxu0
  %v709 = vadd.f32 %v484, %v708
  %v710 = vpop.f32.mrb[0].mxu0
  %v711 = vpop.f32.mrb[0].mxu0
  %v712 = vadd.f32 %v487, %v711
  %v713 = vpop.f32.mrb[0].mxu0
  %714 = vmatprep.mubr.bf16.mxu0 0
  %715 = vmatmul.mubr.bf16.gmra.mrb[0].mxu0 %v166
  %v716 = vpop.f32.mrb[0].mxu0
  %v717 = vadd.f32 %v492, %v716
  %v718 = vpop.f32.mrb[0].mxu0
  %v719 = vpop.f32.mrb[0].mxu0
  %v720 = vadd.f32 %v495, %v719
  %v721 = vpop.f32.mrb[0].mxu0
  %722 = vmatprep.mubr.bf16.mxu0 0
  %723 = vmatmul.mubr.bf16.gmra.mrb[0].mxu0 %v167
  %v724 = vpop.f32.mrb[0].mxu0
  %v725 = vadd.f32 %v500, %v724
  %v726 = vpop.f32.mrb[0].mxu0
  %v727 = vpop.f32.mrb[0].mxu0
  %v728 = vadd.f32 %v503, %v727
  %v729 = vpop.f32.mrb[0].mxu0
  %730 = vmatprep.mubr.bf16.mxu0 0
  %731 = vmatmul.mubr.bf16.gmra.mrb[0].mxu0 %v168
  %v732 = vpop.f32.mrb[0].mxu0
  %v733 = vadd.f32 %v508, %v732
  %v734 = vpop.f32.mrb[0].mxu0
  %v735 = vpop.f32.mrb[0].mxu0
  %v736 = vadd.f32 %v511, %v735
  %v737 = vpop.f32.mrb[0].mxu0
  %738 = vmatprep.mubr.bf16.mxu0 0
  %739 = vmatmul.mubr.bf16.gmra.mrb[0].mxu0 %v169
  %v740 = vpop.f32.mrb[0].mxu0
  %v741 = vadd.f32 %v516, %v740
  %v742 = vpop.f32.mrb[0].mxu0
  %v743 = vpop.f32.mrb[0].mxu0
  %v744 = vadd.f32 %v519, %v743
  %v745 = vpop.f32.mrb[0].mxu0
  %746 = vmatprep.mubr.bf16.mxu0 0
  %747 = vmatmul.mubr.bf16.gmra.mrb[0].mxu0 %v170
  %v748 = vpop.f32.mrb[0].mxu0
  %v749 = vadd.f32 %v524, %v748
  %v750 = vpop.f32.mrb[0].mxu0
  %v751 = vpop.f32.mrb[0].mxu0
  %v752 = vadd.f32 %v527, %v751
  %v753 = vpop.f32.mrb[0].mxu0
  %754 = vdwg.mxu0
  %s755 = scalar_lea.vmem %s1, 128
  %v756 = vld [vmem:[%s755] sm:$0xf]
  %v757 = vld [vmem:[%s755 + $0x4] sm:$0xf]
  %v758 = vld [vmem:[%s755 + $0x8] sm:$0xf]
  %v759 = vld [vmem:[%s755 + $0xc] sm:$0xf]
  %v760 = vld [vmem:[%s755 + $0x10] sm:$0xf]
  %v761 = vld [vmem:[%s755 + $0x14] sm:$0xf]
  %v762 = vld [vmem:[%s755 + $0x18] sm:$0xf]
  %v763 = vld [vmem:[%s755 + $0x1c] sm:$0xf]
  %v764 = vld [vmem:[%s755 + $0x20] sm:$0xf]
  %v765 = vld [vmem:[%s755 + $0x24] sm:$0xf]
  %v766 = vld [vmem:[%s755 + $0x28] sm:$0xf]
  %v767 = vld [vmem:[%s755 + $0x2c] sm:$0xf]
  %v768 = vld [vmem:[%s755 + $0x30] sm:$0xf]
  %v769 = vld [vmem:[%s755 + $0x34] sm:$0xf]
  %v770 = vld [vmem:[%s755 + $0x38] sm:$0xf]
  %v771 = vld [vmem:[%s755 + $0x3c] sm:$0xf]
  %vm772 = vcmask 1046528
  %v773 = vrot.slane %v155, 1
  %v774 = vrot.slane %v156, 1
  %v775 = vsel %vm772, %v773, %v774
  %v776 = vrot.slane %v157, 1
  %v777 = vsel %vm772, %v774, %v776
  %v778 = vrot.slane %v158, 1
  %v779 = vsel %vm772, %v776, %v778
  %v780 = vrot.slane %v159, 1
  %v781 = vsel %vm772, %v778, %v780
  %v782 = vrot.slane %v160, 1
  %v783 = vsel %vm772, %v780, %v782
  %v784 = vrot.slane %v161, 1
  %v785 = vsel %vm772, %v782, %v784
  %v786 = vrot.slane %v162, 1
  %v787 = vsel %vm772, %v784, %v786
  %v788 = vrot.slane %v163, 1
  %v789 = vsel %vm772, %v786, %v788
  %v790 = vrot.slane %v164, 1
  %v791 = vsel %vm772, %v788, %v790
  %v792 = vrot.slane %v165, 1
  %v793 = vsel %vm772, %v790, %v792
  %v794 = vrot.slane %v166, 1
  %v795 = vsel %vm772, %v792, %v794
  %v796 = vrot.slane %v167, 1
  %v797 = vsel %vm772, %v794, %v796
  %v798 = vrot.slane %v168, 1
  %v799 = vsel %vm772, %v796, %v798
  %v800 = vrot.slane %v169, 1
  %v801 = vsel %vm772, %v798, %v800
  %v802 = vrot.slane %v170, 1
  %v803 = vsel %vm772, %v800, %v802
  %v804 = vrot.slane %v171, 1
  %v805 = vsel %vm772, %v802, %v804
  %v838 = vunpack.c.l.b16 %v756
  %v839 = vunpack.c.l.b16 %v757
  %v840 = vunpack.c.l.b16 %v758
  %v841 = vunpack.c.l.b16 %v759
  %v842 = vunpack.c.l.b16 %v760
  %v843 = vunpack.c.l.b16 %v761
  %v844 = vunpack.c.l.b16 %v762
  %v845 = vunpack.c.l.b16 %v763
  %v846 = vunpack.c.l.b16 %v764
  %v847 = vunpack.c.l.b16 %v765
  %v848 = vunpack.c.l.b16 %v766
  %v849 = vunpack.c.l.b16 %v767
  %v850 = vunpack.c.l.b16 %v768
  %v851 = vunpack.c.l.b16 %v769
  %v852 = vunpack.c.l.b16 %v770
  %v853 = vunpack.c.l.b16 %v771
  %v854 = vpack.c.b16 %v839, %v838
  %v855 = vpack.c.b16 %v841, %v840
  %v856 = vpack.c.b16 %v843, %v842
  %v857 = vpack.c.b16 %v845, %v844
  %v858 = vpack.c.b16 %v847, %v846
  %v859 = vpack.c.b16 %v849, %v848
  %v860 = vpack.c.b16 %v851, %v850
  %v861 = vpack.c.b16 %v853, %v852
  %870 = vmatprep.subr.bf16.mxu0 0
  %871 = vmatpush1.bf16.msra.mxu0 %v854
  %872 = vmatprep.subr.bf16.mxu0 0
  %873 = vmatpush1.bf16.msra.mxu0 %v855
  %874 = vmatprep.subr.bf16.mxu0 0
  %875 = vmatpush1.bf16.msra.mxu0 %v856
  %876 = vmatprep.subr.bf16.mxu0 0
  %877 = vmatpush1.bf16.msra.mxu0 %v857
  %878 = vmatprep.subr.bf16.mxu0 0
  %879 = vmatpush1.bf16.msra.mxu0 %v858
  %880 = vmatprep.subr.bf16.mxu0 0
  %881 = vmatpush1.bf16.msra.mxu0 %v859
  %882 = vmatprep.subr.bf16.mxu0 0
  %883 = vmatpush1.bf16.msra.mxu0 %v860
  %884 = vmatprep.subr.bf16.mxu0 0
  %885 = vmatpush1.bf16.msra.mxu0 %v861
  %886 = vmatprep.subr.bf16.mxu0 0
  %887 = vmatpush1.bf16.msra.mxu0 0
  %888 = vmatprep.subr.bf16.mxu0 0
  %889 = vmatpush1.bf16.msra.mxu0 0
  %890 = vmatprep.subr.bf16.mxu0 0
  %891 = vmatpush1.bf16.msra.mxu0 0
  %892 = vmatprep.subr.bf16.mxu0 0
  %893 = vmatpush1.bf16.msra.mxu0 0
  %894 = vmatprep.subr.bf16.mxu0 0
  %895 = vmatpush1.bf16.msra.mxu0 0
  %896 = vmatprep.subr.bf16.mxu0 0
  %897 = vmatpush1.bf16.msra.mxu0 0
  %898 = vmatprep.subr.bf16.mxu0 0
  %899 = vmatpush1.bf16.msra.mxu0 0
  %900 = vmatprep.subr.bf16.mxu0 0
  %901 = vmatpush1.bf16.msra.mxu0 0
  %902 = vmatprep.mubr.bf16.mxu0 0
  %903 = vmatmul.mubr.bf16.gmra.mrb[0].mxu0 %v775
  %v904 = vpop.f32.mrb[0].mxu0
  %v905 = vadd.f32 0.0, %v904
  %v906 = vpop.f32.mrb[0].mxu0
  %v907 = vpop.f32.mrb[0].mxu0
  %v908 = vadd.f32 0.0, %v907
  %v909 = vpop.f32.mrb[0].mxu0
  %910 = vmatprep.mubr.bf16.mxu0 0
  %911 = vmatmul.mubr.bf16.gmra.mrb[0].mxu0 %v777
  %v912 = vpop.f32.mrb[0].mxu0
  %v913 = vadd.f32 0.0, %v912
  %v914 = vpop.f32.mrb[0].mxu0
  %v915 = vpop.f32.mrb[0].mxu0
  %v916 = vadd.f32 0.0, %v915
  %v917 = vpop.f32.mrb[0].mxu0
  %918 = vmatprep.mubr.bf16.mxu0 0
  %919 = vmatmul.mubr.bf16.gmra.mrb[0].mxu0 %v779
  %v920 = vpop.f32.mrb[0].mxu0
  %v921 = vadd.f32 0.0, %v920
  %v922 = vpop.f32.mrb[0].mxu0
  %v923 = vpop.f32.mrb[0].mxu0
  %v924 = vadd.f32 0.0, %v923
  %v925 = vpop.f32.mrb[0].mxu0
  %926 = vmatprep.mubr.bf16.mxu0 0
  %927 = vmatmul.mubr.bf16.gmra.mrb[0].mxu0 %v781
  %v928 = vpop.f32.mrb[0].mxu0
  %v929 = vadd.f32 0.0, %v928
  %v930 = vpop.f32.mrb[0].mxu0
  %v931 = vpop.f32.mrb[0].mxu0
  %v932 = vadd.f32 0.0, %v931
  %v933 = vpop.f32.mrb[0].mxu0
  %934 = vmatprep.mubr.bf16.mxu0 0
  %935 = vmatmul.mubr.bf16.gmra.mrb[0].mxu0 %v783
  %v936 = vpop.f32.mrb[0].mxu0
  %v937 = vadd.f32 0.0, %v936
  %v938 = vpop.f32.mrb[0].mxu0
  %v939 = vpop.f32.mrb[0].mxu0
  %v940 = vadd.f32 0.0, %v939
  %v941 = vpop.f32.mrb[0].mxu0
  %942 = vmatprep.mubr.bf16.mxu0 0
  %943 = vmatmul.mubr.bf16.gmra.mrb[0].mxu0 %v785
  %v944 = vpop.f32.mrb[0].mxu0
  %v945 = vadd.f32 0.0, %v944
  %v946 = vpop.f32.mrb[0].mxu0
  %v947 = vpop.f32.mrb[0].mxu0
  %v948 = vadd.f32 0.0, %v947
  %v949 = vpop.f32.mrb[0].mxu0
  %950 = vmatprep.mubr.bf16.mxu0 0
  %951 = vmatmul.mubr.bf16.gmra.mrb[0].mxu0 %v787
  %v952 = vpop.f32.mrb[0].mxu0
  %v953 = vadd.f32 0.0, %v952
  %v954 = vpop.f32.mrb[0].mxu0
  %v955 = vpop.f32.mrb[0].mxu0
  %v956 = vadd.f32 0.0, %v955
  %v957 = vpop.f32.mrb[0].mxu0
  %958 = vmatprep.mubr.bf16.mxu0 0
  %959 = vmatmul.mubr.bf16.gmra.mrb[0].mxu0 %v789
  %v960 = vpop.f32.mrb[0].mxu0
  %v961 = vadd.f32 0.0, %v960
  %v962 = vpop.f32.mrb[0].mxu0
  %v963 = vpop.f32.mrb[0].mxu0
  %v964 = vadd.f32 0.0, %v963
  %v965 = vpop.f32.mrb[0].mxu0
  %966 = vmatprep.mubr.bf16.mxu0 0
  %967 = vmatmul.mubr.bf16.gmra.mrb[0].mxu0 %v791
  %v968 = vpop.f32.mrb[0].mxu0
  %v969 = vadd.f32 0.0, %v968
  %v970 = vpop.f32.mrb[0].mxu0
  %v971 = vpop.f32.mrb[0].mxu0
  %v972 = vadd.f32 0.0, %v971
  %v973 = vpop.f32.mrb[0].mxu0
  %974 = vmatprep.mubr.bf16.mxu0 0
  %975 = vmatmul.mubr.bf16.gmra.mrb[0].mxu0 %v793
  %v976 = vpop.f32.mrb[0].mxu0
  %v977 = vadd.f32 0.0, %v976
  %v978 = vpop.f32.mrb[0].mxu0
  %v979 = vpop.f32.mrb[0].mxu0
  %v980 = vadd.f32 0.0, %v979
  %v981 = vpop.f32.mrb[0].mxu0
  %982 = vmatprep.mubr.bf16.mxu0 0
  %983 = vmatmul.mubr.bf16.gmra.mrb[0].mxu0 %v795
  %v984 = vpop.f32.mrb[0].mxu0
  %v985 = vadd.f32 0.0, %v984
  %v986 = vpop.f32.mrb[0].mxu0
  %v987 = vpop.f32.mrb[0].mxu0
  %v988 = vadd.f32 0.0, %v987
  %v989 = vpop.f32.mrb[0].mxu0
  %990 = vmatprep.mubr.bf16.mxu0 0
  %991 = vmatmul.mubr.bf16.gmra.mrb[0].mxu0 %v797
  %v992 = vpop.f32.mrb[0].mxu0
  %v993 = vadd.f32 0.0, %v992
  %v994 = vpop.f32.mrb[0].mxu0
  %v995 = vpop.f32.mrb[0].mxu0
  %v996 = vadd.f32 0.0, %v995
  %v997 = vpop.f32.mrb[0].mxu0
  %998 = vmatprep.mubr.bf16.mxu0 0
  %999 = vmatmul.mubr.bf16.gmra.mrb[0].mxu0 %v799
  %v1000 = vpop.f32.mrb[0].mxu0
  %v1001 = vadd.f32 0.0, %v1000
  %v1002 = vpop.f32.mrb[0].mxu0
  %v1003 = vpop.f32.mrb[0].mxu0
  %v1004 = vadd.f32 0.0, %v1003
  %v1005 = vpop.f32.mrb[0].mxu0
  %1006 = vmatprep.mubr.bf16.mxu0 0
  %1007 = vmatmul.mubr.bf16.gmra.mrb[0].mxu0 %v801
  %v1008 = vpop.f32.mrb[0].mxu0
  %v1009 = vadd.f32 0.0, %v1008
  %v1010 = vpop.f32.mrb[0].mxu0
  %v1011 = vpop.f32.mrb[0].mxu0
  %v1012 = vadd.f32 0.0, %v1011
  %v1013 = vpop.f32.mrb[0].mxu0
  %1014 = vmatprep.mubr.bf16.mxu0 0
  %1015 = vmatmul.mubr.bf16.gmra.mrb[0].mxu0 %v803
  %v1016 = vpop.f32.mrb[0].mxu0
  %v1017 = vadd.f32 0.0, %v1016
  %v1018 = vpop.f32.mrb[0].mxu0
  %v1019 = vpop.f32.mrb[0].mxu0
  %v1020 = vadd.f32 0.0, %v1019
  %v1021 = vpop.f32.mrb[0].mxu0
  %1022 = vmatprep.mubr.bf16.mxu0 0
  %1023 = vmatmul.mubr.bf16.gmra.mrb[0].mxu0 %v805
  %v1024 = vpop.f32.mrb[0].mxu0
  %v1025 = vadd.f32 0.0, %v1024
  %v1026 = vpop.f32.mrb[0].mxu0
  %v1027 = vpop.f32.mrb[0].mxu0
  %v1028 = vadd.f32 0.0, %v1027
  %v1029 = vpop.f32.mrb[0].mxu0
  %1030 = vdwg.mxu0
  %v1031 = vadd.f32 %v629, %v905
  %v1032 = vadd.f32 %v632, %v908
  %v1033 = vadd.f32 %v637, %v913
  %v1034 = vadd.f32 %v640, %v916
  %v1035 = vadd.f32 %v645, %v921
  %v1036 = vadd.f32 %v648, %v924
  %v1037 = vadd.f32 %v653, %v929
  %v1038 = vadd.f32 %v656, %v932
  %v1039 = vadd.f32 %v661, %v937
  %v1040 = vadd.f32 %v664, %v940
  %v1041 = vadd.f32 %v669, %v945
  %v1042 = vadd.f32 %v672, %v948
  %v1043 = vadd.f32 %v677, %v953
  %v1044 = vadd.f32 %v680, %v956
  %v1045 = vadd.f32 %v685, %v961
  %v1046 = vadd.f32 %v688, %v964
  %v1047 = vadd.f32 %v693, %v969
  %v1048 = vadd.f32 %v696, %v972
  %v1049 = vadd.f32 %v701, %v977
  %v1050 = vadd.f32 %v704, %v980
  %v1051 = vadd.f32 %v709, %v985
  %v1052 = vadd.f32 %v712, %v988
  %v1053 = vadd.f32 %v717, %v993
  %v1054 = vadd.f32 %v720, %v996
  %v1055 = vadd.f32 %v725, %v1001
  %v1056 = vadd.f32 %v728, %v1004
  %v1057 = vadd.f32 %v733, %v1009
  %v1058 = vadd.f32 %v736, %v1012
  %v1059 = vadd.f32 %v741, %v1017
  %v1060 = vadd.f32 %v744, %v1020
  %v1061 = vadd.f32 %v749, %v1025
  %v1062 = vadd.f32 %v752, %v1028
  %s1063 = scalar_lea.vmem %s1, 192
  %v1064 = vld [vmem:[%s1063] sm:$0xf]
  %v1065 = vld [vmem:[%s1063 + $0x4] sm:$0xf]
  %v1066 = vld [vmem:[%s1063 + $0x8] sm:$0xf]
  %v1067 = vld [vmem:[%s1063 + $0xc] sm:$0xf]
  %v1068 = vld [vmem:[%s1063 + $0x10] sm:$0xf]
  %v1069 = vld [vmem:[%s1063 + $0x14] sm:$0xf]
  %v1070 = vld [vmem:[%s1063 + $0x18] sm:$0xf]
  %v1071 = vld [vmem:[%s1063 + $0x1c] sm:$0xf]
  %v1072 = vld [vmem:[%s1063 + $0x20] sm:$0xf]
  %v1073 = vld [vmem:[%s1063 + $0x24] sm:$0xf]
  %v1074 = vld [vmem:[%s1063 + $0x28] sm:$0xf]
  %v1075 = vld [vmem:[%s1063 + $0x2c] sm:$0xf]
  %v1076 = vld [vmem:[%s1063 + $0x30] sm:$0xf]
  %v1077 = vld [vmem:[%s1063 + $0x34] sm:$0xf]
  %v1078 = vld [vmem:[%s1063 + $0x38] sm:$0xf]
  %v1079 = vld [vmem:[%s1063 + $0x3c] sm:$0xf]
  %vm1080 = vcmask 1044480
  %v1081 = vrot.slane %v155, 3
  %v1082 = vrot.slane %v156, 3
  %v1083 = vsel %vm1080, %v1081, %v1082
  %v1084 = vrot.slane %v157, 3
  %v1085 = vsel %vm1080, %v1082, %v1084
  %v1086 = vrot.slane %v158, 3
  %v1087 = vsel %vm1080, %v1084, %v1086
  %v1088 = vrot.slane %v159, 3
  %v1089 = vsel %vm1080, %v1086, %v1088
  %v1090 = vrot.slane %v160, 3
  %v1091 = vsel %vm1080, %v1088, %v1090
  %v1092 = vrot.slane %v161, 3
  %v1093 = vsel %vm1080, %v1090, %v1092
  %v1094 = vrot.slane %v162, 3
  %v1095 = vsel %vm1080, %v1092, %v1094
  %v1096 = vrot.slane %v163, 3
  %v1097 = vsel %vm1080, %v1094, %v1096
  %v1098 = vrot.slane %v164, 3
  %v1099 = vsel %vm1080, %v1096, %v1098
  %v1100 = vrot.slane %v165, 3
  %v1101 = vsel %vm1080, %v1098, %v1100
  %v1102 = vrot.slane %v166, 3
  %v1103 = vsel %vm1080, %v1100, %v1102
  %v1104 = vrot.slane %v167, 3
  %v1105 = vsel %vm1080, %v1102, %v1104
  %v1106 = vrot.slane %v168, 3
  %v1107 = vsel %vm1080, %v1104, %v1106
  %v1108 = vrot.slane %v169, 3
  %v1109 = vsel %vm1080, %v1106, %v1108
  %v1110 = vrot.slane %v170, 3
  %v1111 = vsel %vm1080, %v1108, %v1110
  %v1112 = vrot.slane %v171, 3
  %v1113 = vsel %vm1080, %v1110, %v1112
  %v1146 = vunpack.c.l.b16 %v1064
  %v1147 = vunpack.c.l.b16 %v1065
  %v1148 = vunpack.c.l.b16 %v1066
  %v1149 = vunpack.c.l.b16 %v1067
  %v1150 = vunpack.c.l.b16 %v1068
  %v1151 = vunpack.c.l.b16 %v1069
  %v1152 = vunpack.c.l.b16 %v1070
  %v1153 = vunpack.c.l.b16 %v1071
  %v1154 = vunpack.c.l.b16 %v1072
  %v1155 = vunpack.c.l.b16 %v1073
  %v1156 = vunpack.c.l.b16 %v1074
  %v1157 = vunpack.c.l.b16 %v1075
  %v1158 = vunpack.c.l.b16 %v1076
  %v1159 = vunpack.c.l.b16 %v1077
  %v1160 = vunpack.c.l.b16 %v1078
  %v1161 = vunpack.c.l.b16 %v1079
  %v1162 = vpack.c.b16 %v1147, %v1146
  %v1163 = vpack.c.b16 %v1149, %v1148
  %v1164 = vpack.c.b16 %v1151, %v1150
  %v1165 = vpack.c.b16 %v1153, %v1152
  %v1166 = vpack.c.b16 %v1155, %v1154
  %v1167 = vpack.c.b16 %v1157, %v1156
  %v1168 = vpack.c.b16 %v1159, %v1158
  %v1169 = vpack.c.b16 %v1161, %v1160
  %1178 = vmatprep.subr.bf16.mxu0 0
  %1179 = vmatpush1.bf16.msra.mxu0 %v1162
  %1180 = vmatprep.subr.bf16.mxu0 0
  %1181 = vmatpush1.bf16.msra.mxu0 %v1163
  %1182 = vmatprep.subr.bf16.mxu0 0
  %1183 = vmatpush1.bf16.msra.mxu0 %v1164
  %1184 = vmatprep.subr.bf16.mxu0 0
  %1185 = vmatpush1.bf16.msra.mxu0 %v1165
  %1186 = vmatprep.subr.bf16.mxu0 0
  %1187 = vmatpush1.bf16.msra.mxu0 %v1166
  %1188 = vmatprep.subr.bf16.mxu0 0
  %1189 = vmatpush1.bf16.msra.mxu0 %v1167
  %1190 = vmatprep.subr.bf16.mxu0 0
  %1191 = vmatpush1.bf16.msra.mxu0 %v1168
  %1192 = vmatprep.subr.bf16.mxu0 0
  %1193 = vmatpush1.bf16.msra.mxu0 %v1169
  %1194 = vmatprep.subr.bf16.mxu0 0
  %1195 = vmatpush1.bf16.msra.mxu0 0
  %1196 = vmatprep.subr.bf16.mxu0 0
  %1197 = vmatpush1.bf16.msra.mxu0 0
  %1198 = vmatprep.subr.bf16.mxu0 0
  %1199 = vmatpush1.bf16.msra.mxu0 0
  %1200 = vmatprep.subr.bf16.mxu0 0
  %1201 = vmatpush1.bf16.msra.mxu0 0
  %1202 = vmatprep.subr.bf16.mxu0 0
  %1203 = vmatpush1.bf16.msra.mxu0 0
  %1204 = vmatprep.subr.bf16.mxu0 0
  %1205 = vmatpush1.bf16.msra.mxu0 0
  %1206 = vmatprep.subr.bf16.mxu0 0
  %1207 = vmatpush1.bf16.msra.mxu0 0
  %1208 = vmatprep.subr.bf16.mxu0 0
  %1209 = vmatpush1.bf16.msra.mxu0 0
  %1210 = vmatprep.mubr.bf16.mxu0 0
  %1211 = vmatmul.mubr.bf16.gmra.mrb[0].mxu0 %v1083
  %v1212 = vpop.f32.mrb[0].mxu0
  %v1213 = vadd.f32 0.0, %v1212
  %v1214 = vpop.f32.mrb[0].mxu0
  %v1215 = vpop.f32.mrb[0].mxu0
  %v1216 = vadd.f32 0.0, %v1215
  %v1217 = vpop.f32.mrb[0].mxu0
  %1218 = vmatprep.mubr.bf16.mxu0 0
  %1219 = vmatmul.mubr.bf16.gmra.mrb[0].mxu0 %v1085
  %v1220 = vpop.f32.mrb[0].mxu0
  %v1221 = vadd.f32 0.0, %v1220
  %v1222 = vpop.f32.mrb[0].mxu0
  %v1223 = vpop.f32.mrb[0].mxu0
  %v1224 = vadd.f32 0.0, %v1223
  %v1225 = vpop.f32.mrb[0].mxu0
  %1226 = vmatprep.mubr.bf16.mxu0 0
  %1227 = vmatmul.mubr.bf16.gmra.mrb[0].mxu0 %v1087
  %v1228 = vpop.f32.mrb[0].mxu0
  %v1229 = vadd.f32 0.0, %v1228
  %v1230 = vpop.f32.mrb[0].mxu0
  %v1231 = vpop.f32.mrb[0].mxu0
  %v1232 = vadd.f32 0.0, %v1231
  %v1233 = vpop.f32.mrb[0].mxu0
  %1234 = vmatprep.mubr.bf16.mxu0 0
  %1235 = vmatmul.mubr.bf16.gmra.mrb[0].mxu0 %v1089
  %v1236 = vpop.f32.mrb[0].mxu0
  %v1237 = vadd.f32 0.0, %v1236
  %v1238 = vpop.f32.mrb[0].mxu0
  %v1239 = vpop.f32.mrb[0].mxu0
  %v1240 = vadd.f32 0.0, %v1239
  %v1241 = vpop.f32.mrb[0].mxu0
  %1242 = vmatprep.mubr.bf16.mxu0 0
  %1243 = vmatmul.mubr.bf16.gmra.mrb[0].mxu0 %v1091
  %v1244 = vpop.f32.mrb[0].mxu0
  %v1245 = vadd.f32 0.0, %v1244
  %v1246 = vpop.f32.mrb[0].mxu0
  %v1247 = vpop.f32.mrb[0].mxu0
  %v1248 = vadd.f32 0.0, %v1247
  %v1249 = vpop.f32.mrb[0].mxu0
  %1250 = vmatprep.mubr.bf16.mxu0 0
  %1251 = vmatmul.mubr.bf16.gmra.mrb[0].mxu0 %v1093
  %v1252 = vpop.f32.mrb[0].mxu0
  %v1253 = vadd.f32 0.0, %v1252
  %v1254 = vpop.f32.mrb[0].mxu0
  %v1255 = vpop.f32.mrb[0].mxu0
  %v1256 = vadd.f32 0.0, %v1255
  %v1257 = vpop.f32.mrb[0].mxu0
  %1258 = vmatprep.mubr.bf16.mxu0 0
  %1259 = vmatmul.mubr.bf16.gmra.mrb[0].mxu0 %v1095
  %v1260 = vpop.f32.mrb[0].mxu0
  %v1261 = vadd.f32 0.0, %v1260
  %v1262 = vpop.f32.mrb[0].mxu0
  %v1263 = vpop.f32.mrb[0].mxu0
  %v1264 = vadd.f32 0.0, %v1263
  %v1265 = vpop.f32.mrb[0].mxu0
  %1266 = vmatprep.mubr.bf16.mxu0 0
  %1267 = vmatmul.mubr.bf16.gmra.mrb[0].mxu0 %v1097
  %v1268 = vpop.f32.mrb[0].mxu0
  %v1269 = vadd.f32 0.0, %v1268
  %v1270 = vpop.f32.mrb[0].mxu0
  %v1271 = vpop.f32.mrb[0].mxu0
  %v1272 = vadd.f32 0.0, %v1271
  %v1273 = vpop.f32.mrb[0].mxu0
  %1274 = vmatprep.mubr.bf16.mxu0 0
  %1275 = vmatmul.mubr.bf16.gmra.mrb[0].mxu0 %v1099
  %v1276 = vpop.f32.mrb[0].mxu0
  %v1277 = vadd.f32 0.0, %v1276
  %v1278 = vpop.f32.mrb[0].mxu0
  %v1279 = vpop.f32.mrb[0].mxu0
  %v1280 = vadd.f32 0.0, %v1279
  %v1281 = vpop.f32.mrb[0].mxu0
  %1282 = vmatprep.mubr.bf16.mxu0 0
  %1283 = vmatmul.mubr.bf16.gmra.mrb[0].mxu0 %v1101
  %v1284 = vpop.f32.mrb[0].mxu0
  %v1285 = vadd.f32 0.0, %v1284
  %v1286 = vpop.f32.mrb[0].mxu0
  %v1287 = vpop.f32.mrb[0].mxu0
  %v1288 = vadd.f32 0.0, %v1287
  %v1289 = vpop.f32.mrb[0].mxu0
  %1290 = vmatprep.mubr.bf16.mxu0 0
  %1291 = vmatmul.mubr.bf16.gmra.mrb[0].mxu0 %v1103
  %v1292 = vpop.f32.mrb[0].mxu0
  %v1293 = vadd.f32 0.0, %v1292
  %v1294 = vpop.f32.mrb[0].mxu0
  %v1295 = vpop.f32.mrb[0].mxu0
  %v1296 = vadd.f32 0.0, %v1295
  %v1297 = vpop.f32.mrb[0].mxu0
  %1298 = vmatprep.mubr.bf16.mxu0 0
  %1299 = vmatmul.mubr.bf16.gmra.mrb[0].mxu0 %v1105
  %v1300 = vpop.f32.mrb[0].mxu0
  %v1301 = vadd.f32 0.0, %v1300
  %v1302 = vpop.f32.mrb[0].mxu0
  %v1303 = vpop.f32.mrb[0].mxu0
  %v1304 = vadd.f32 0.0, %v1303
  %v1305 = vpop.f32.mrb[0].mxu0
  %1306 = vmatprep.mubr.bf16.mxu0 0
  %1307 = vmatmul.mubr.bf16.gmra.mrb[0].mxu0 %v1107
  %v1308 = vpop.f32.mrb[0].mxu0
  %v1309 = vadd.f32 0.0, %v1308
  %v1310 = vpop.f32.mrb[0].mxu0
  %v1311 = vpop.f32.mrb[0].mxu0
  %v1312 = vadd.f32 0.0, %v1311
  %v1313 = vpop.f32.mrb[0].mxu0
  %1314 = vmatprep.mubr.bf16.mxu0 0
  %1315 = vmatmul.mubr.bf16.gmra.mrb[0].mxu0 %v1109
  %v1316 = vpop.f32.mrb[0].mxu0
  %v1317 = vadd.f32 0.0, %v1316
  %v1318 = vpop.f32.mrb[0].mxu0
  %v1319 = vpop.f32.mrb[0].mxu0
  %v1320 = vadd.f32 0.0, %v1319
  %v1321 = vpop.f32.mrb[0].mxu0
  %1322 = vmatprep.mubr.bf16.mxu0 0
  %1323 = vmatmul.mubr.bf16.gmra.mrb[0].mxu0 %v1111
  %v1324 = vpop.f32.mrb[0].mxu0
  %v1325 = vadd.f32 0.0, %v1324
  %v1326 = vpop.f32.mrb[0].mxu0
  %v1327 = vpop.f32.mrb[0].mxu0
  %v1328 = vadd.f32 0.0, %v1327
  %v1329 = vpop.f32.mrb[0].mxu0
  %1330 = vmatprep.mubr.bf16.mxu0 0
  %1331 = vmatmul.mubr.bf16.gmra.mrb[0].mxu0 %v1113
  %v1332 = vpop.f32.mrb[0].mxu0
  %v1333 = vadd.f32 0.0, %v1332
  %v1334 = vpop.f32.mrb[0].mxu0
  %v1335 = vpop.f32.mrb[0].mxu0
  %v1336 = vadd.f32 0.0, %v1335
  %v1337 = vpop.f32.mrb[0].mxu0
  %1338 = vdwg.mxu0
  %v1339 = vadd.f32 %v1031, %v1213
  %v1340 = vadd.f32 %v1032, %v1216
  %v1341 = vadd.f32 %v1033, %v1221
  %v1342 = vadd.f32 %v1034, %v1224
  %v1343 = vadd.f32 %v1035, %v1229
  %v1344 = vadd.f32 %v1036, %v1232
  %v1345 = vadd.f32 %v1037, %v1237
  %v1346 = vadd.f32 %v1038, %v1240
  %v1347 = vadd.f32 %v1039, %v1245
  %v1348 = vadd.f32 %v1040, %v1248
  %v1349 = vadd.f32 %v1041, %v1253
  %v1350 = vadd.f32 %v1042, %v1256
  %v1351 = vadd.f32 %v1043, %v1261
  %v1352 = vadd.f32 %v1044, %v1264
  %v1353 = vadd.f32 %v1045, %v1269
  %v1354 = vadd.f32 %v1046, %v1272
  %v1355 = vadd.f32 %v1047, %v1277
  %v1356 = vadd.f32 %v1048, %v1280
  %v1357 = vadd.f32 %v1049, %v1285
  %v1358 = vadd.f32 %v1050, %v1288
  %v1359 = vadd.f32 %v1051, %v1293
  %v1360 = vadd.f32 %v1052, %v1296
  %v1361 = vadd.f32 %v1053, %v1301
  %v1362 = vadd.f32 %v1054, %v1304
  %v1363 = vadd.f32 %v1055, %v1309
  %v1364 = vadd.f32 %v1056, %v1312
  %v1365 = vadd.f32 %v1057, %v1317
  %v1366 = vadd.f32 %v1058, %v1320
  %v1367 = vadd.f32 %v1059, %v1325
  %v1368 = vadd.f32 %v1060, %v1328
  %v1369 = vadd.f32 %v1061, %v1333
  %v1370 = vadd.f32 %v1062, %v1336
  %s1371 = scalar_lea.vmem %s1, 256
  %v1372 = vld [vmem:[%s1371] sm:$0xf]
  %v1373 = vld [vmem:[%s1371 + $0x4] sm:$0xf]
  %v1374 = vld [vmem:[%s1371 + $0x8] sm:$0xf]
  %v1375 = vld [vmem:[%s1371 + $0xc] sm:$0xf]
  %v1376 = vld [vmem:[%s1371 + $0x10] sm:$0xf]
  %v1377 = vld [vmem:[%s1371 + $0x14] sm:$0xf]
  %v1378 = vld [vmem:[%s1371 + $0x18] sm:$0xf]
  %v1379 = vld [vmem:[%s1371 + $0x1c] sm:$0xf]
  %v1380 = vld [vmem:[%s1371 + $0x20] sm:$0xf]
  %v1381 = vld [vmem:[%s1371 + $0x24] sm:$0xf]
  %v1382 = vld [vmem:[%s1371 + $0x28] sm:$0xf]
  %v1383 = vld [vmem:[%s1371 + $0x2c] sm:$0xf]
  %v1384 = vld [vmem:[%s1371 + $0x30] sm:$0xf]
  %v1385 = vld [vmem:[%s1371 + $0x34] sm:$0xf]
  %v1386 = vld [vmem:[%s1371 + $0x38] sm:$0xf]
  %v1387 = vld [vmem:[%s1371 + $0x3c] sm:$0xf]
  %vm1388 = vsmask.f32 4352
  %v1389 = vrot.slane %v174, 3
  %v1390 = vrot.slane %v176, 4
  %v1391 = vor.u32 %v1389, %v1390
  %v1392 = vrot.slane %v185, 3
  %v1393 = vrot.slane %v181, 4
  %v1394 = vor.u32 %v1392, %v1393
  %v1395 = vsel %vm1388, %v1391, %v1394
  %v1396 = vrot.slane %v193, 3
  %v1397 = vrot.slane %v189, 4
  %v1398 = vor.u32 %v1396, %v1397
  %v1399 = vsel %vm1388, %v1394, %v1398
  %v1400 = vrot.slane %v201, 3
  %v1401 = vrot.slane %v197, 4
  %v1402 = vor.u32 %v1400, %v1401
  %v1403 = vsel %vm1388, %v1398, %v1402
  %v1404 = vrot.slane %v209, 3
  %v1405 = vrot.slane %v205, 4
  %v1406 = vor.u32 %v1404, %v1405
  %v1407 = vsel %vm1388, %v1402, %v1406
  %v1408 = vrot.slane %v217, 3
  %v1409 = vrot.slane %v213, 4
  %v1410 = vor.u32 %v1408, %v1409
  %v1411 = vsel %vm1388, %v1406, %v1410
  %v1412 = vrot.slane %v225, 3
  %v1413 = vrot.slane %v221, 4
  %v1414 = vor.u32 %v1412, %v1413
  %v1415 = vsel %vm1388, %v1410, %v1414
  %v1416 = vrot.slane %v233, 3
  %v1417 = vrot.slane %v229, 4
  %v1418 = vor.u32 %v1416, %v1417
  %v1419 = vsel %vm1388, %v1414, %v1418
  %v1420 = vrot.slane %v241, 3
  %v1421 = vrot.slane %v237, 4
  %v1422 = vor.u32 %v1420, %v1421
  %v1423 = vsel %vm1388, %v1418, %v1422
  %v1424 = vrot.slane %v249, 3
  %v1425 = vrot.slane %v245, 4
  %v1426 = vor.u32 %v1424, %v1425
  %v1427 = vsel %vm1388, %v1422, %v1426
  %v1428 = vrot.slane %v257, 3
  %v1429 = vrot.slane %v253, 4
  %v1430 = vor.u32 %v1428, %v1429
  %v1431 = vsel %vm1388, %v1426, %v1430
  %v1432 = vrot.slane %v265, 3
  %v1433 = vrot.slane %v261, 4
  %v1434 = vor.u32 %v1432, %v1433
  %v1435 = vsel %vm1388, %v1430, %v1434
  %v1436 = vrot.slane %v273, 3
  %v1437 = vrot.slane %v269, 4
  %v1438 = vor.u32 %v1436, %v1437
  %v1439 = vsel %vm1388, %v1434, %v1438
  %v1440 = vrot.slane %v281, 3
  %v1441 = vrot.slane %v277, 4
  %v1442 = vor.u32 %v1440, %v1441
  %v1443 = vsel %vm1388, %v1438, %v1442
  %v1444 = vrot.slane %v289, 3
  %v1445 = vrot.slane %v285, 4
  %v1446 = vor.u32 %v1444, %v1445
  %v1447 = vsel %vm1388, %v1442, %v1446
  %v1448 = vrot.slane %v297, 3
  %v1449 = vrot.slane %v293, 4
  %v1450 = vor.u32 %v1448, %v1449
  %v1451 = vsel %vm1388, %v1446, %v1450
  %v1452 = vshrl.u32 %v171, 16
  %v1454 = vrot.slane %v1452, 3
  %v1455 = vrot.slane %v301, 4
  %v1456 = vor.u32 %v1454, %v1455
  %v1457 = vsel %vm1388, %v1450, %v1456
  %v1490 = vunpack.c.l.b16 %v1372
  %v1491 = vunpack.c.l.b16 %v1373
  %v1492 = vunpack.c.l.b16 %v1374
  %v1493 = vunpack.c.l.b16 %v1375
  %v1494 = vunpack.c.l.b16 %v1376
  %v1495 = vunpack.c.l.b16 %v1377
  %v1496 = vunpack.c.l.b16 %v1378
  %v1497 = vunpack.c.l.b16 %v1379
  %v1498 = vunpack.c.l.b16 %v1380
  %v1499 = vunpack.c.l.b16 %v1381
  %v1500 = vunpack.c.l.b16 %v1382
  %v1501 = vunpack.c.l.b16 %v1383
  %v1502 = vunpack.c.l.b16 %v1384
  %v1503 = vunpack.c.l.b16 %v1385
  %v1504 = vunpack.c.l.b16 %v1386
  %v1505 = vunpack.c.l.b16 %v1387
  %v1506 = vpack.c.b16 %v1491, %v1490
  %v1507 = vpack.c.b16 %v1493, %v1492
  %v1508 = vpack.c.b16 %v1495, %v1494
  %v1509 = vpack.c.b16 %v1497, %v1496
  %v1510 = vpack.c.b16 %v1499, %v1498
  %v1511 = vpack.c.b16 %v1501, %v1500
  %v1512 = vpack.c.b16 %v1503, %v1502
  %v1513 = vpack.c.b16 %v1505, %v1504
  %1522 = vmatprep.subr.bf16.mxu0 0
  %1523 = vmatpush1.bf16.msra.mxu0 %v1506
  %1524 = vmatprep.subr.bf16.mxu0 0
  %1525 = vmatpush1.bf16.msra.mxu0 %v1507
  %1526 = vmatprep.subr.bf16.mxu0 0
  %1527 = vmatpush1.bf16.msra.mxu0 %v1508
  %1528 = vmatprep.subr.bf16.mxu0 0
  %1529 = vmatpush1.bf16.msra.mxu0 %v1509
  %1530 = vmatprep.subr.bf16.mxu0 0
  %1531 = vmatpush1.bf16.msra.mxu0 %v1510
  %1532 = vmatprep.subr.bf16.mxu0 0
  %1533 = vmatpush1.bf16.msra.mxu0 %v1511
  %1534 = vmatprep.subr.bf16.mxu0 0
  %1535 = vmatpush1.bf16.msra.mxu0 %v1512
  %1536 = vmatprep.subr.bf16.mxu0 0
  %1537 = vmatpush1.bf16.msra.mxu0 %v1513
  %1538 = vmatprep.subr.bf16.mxu0 0
  %1539 = vmatpush1.bf16.msra.mxu0 0
  %1540 = vmatprep.subr.bf16.mxu0 0
  %1541 = vmatpush1.bf16.msra.mxu0 0
  %1542 = vmatprep.subr.bf16.mxu0 0
  %1543 = vmatpush1.bf16.msra.mxu0 0
  %1544 = vmatprep.subr.bf16.mxu0 0
  %1545 = vmatpush1.bf16.msra.mxu0 0
  %1546 = vmatprep.subr.bf16.mxu0 0
  %1547 = vmatpush1.bf16.msra.mxu0 0
  %1548 = vmatprep.subr.bf16.mxu0 0
  %1549 = vmatpush1.bf16.msra.mxu0 0
  %1550 = vmatprep.subr.bf16.mxu0 0
  %1551 = vmatpush1.bf16.msra.mxu0 0
  %1552 = vmatprep.subr.bf16.mxu0 0
  %1553 = vmatpush1.bf16.msra.mxu0 0
  %1554 = vmatprep.mubr.bf16.mxu0 0
  %1555 = vmatmul.mubr.bf16.gmra.mrb[0].mxu0 %v1395
  %v1556 = vpop.f32.mrb[0].mxu0
  %v1557 = vadd.f32 0.0, %v1556
  %v1558 = vpop.f32.mrb[0].mxu0
  %v1559 = vpop.f32.mrb[0].mxu0
  %v1560 = vadd.f32 0.0, %v1559
  %v1561 = vpop.f32.mrb[0].mxu0
  %1562 = vmatprep.mubr.bf16.mxu0 0
  %1563 = vmatmul.mubr.bf16.gmra.mrb[0].mxu0 %v1399
  %v1564 = vpop.f32.mrb[0].mxu0
  %v1565 = vadd.f32 0.0, %v1564
  %v1566 = vpop.f32.mrb[0].mxu0
  %v1567 = vpop.f32.mrb[0].mxu0
  %v1568 = vadd.f32 0.0, %v1567
  %v1569 = vpop.f32.mrb[0].mxu0
  %1570 = vmatprep.mubr.bf16.mxu0 0
  %1571 = vmatmul.mubr.bf16.gmra.mrb[0].mxu0 %v1403
  %v1572 = vpop.f32.mrb[0].mxu0
  %v1573 = vadd.f32 0.0, %v1572
  %v1574 = vpop.f32.mrb[0].mxu0
  %v1575 = vpop.f32.mrb[0].mxu0
  %v1576 = vadd.f32 0.0, %v1575
  %v1577 = vpop.f32.mrb[0].mxu0
  %1578 = vmatprep.mubr.bf16.mxu0 0
  %1579 = vmatmul.mubr.bf16.gmra.mrb[0].mxu0 %v1407
  %v1580 = vpop.f32.mrb[0].mxu0
  %v1581 = vadd.f32 0.0, %v1580
  %v1582 = vpop.f32.mrb[0].mxu0
  %v1583 = vpop.f32.mrb[0].mxu0
  %v1584 = vadd.f32 0.0, %v1583
  %v1585 = vpop.f32.mrb[0].mxu0
  %1586 = vmatprep.mubr.bf16.mxu0 0
  %1587 = vmatmul.mubr.bf16.gmra.mrb[0].mxu0 %v1411
  %v1588 = vpop.f32.mrb[0].mxu0
  %v1589 = vadd.f32 0.0, %v1588
  %v1590 = vpop.f32.mrb[0].mxu0
  %v1591 = vpop.f32.mrb[0].mxu0
  %v1592 = vadd.f32 0.0, %v1591
  %v1593 = vpop.f32.mrb[0].mxu0
  %1594 = vmatprep.mubr.bf16.mxu0 0
  %1595 = vmatmul.mubr.bf16.gmra.mrb[0].mxu0 %v1415
  %v1596 = vpop.f32.mrb[0].mxu0
  %v1597 = vadd.f32 0.0, %v1596
  %v1598 = vpop.f32.mrb[0].mxu0
  %v1599 = vpop.f32.mrb[0].mxu0
  %v1600 = vadd.f32 0.0, %v1599
  %v1601 = vpop.f32.mrb[0].mxu0
  %1602 = vmatprep.mubr.bf16.mxu0 0
  %1603 = vmatmul.mubr.bf16.gmra.mrb[0].mxu0 %v1419
  %v1604 = vpop.f32.mrb[0].mxu0
  %v1605 = vadd.f32 0.0, %v1604
  %v1606 = vpop.f32.mrb[0].mxu0
  %v1607 = vpop.f32.mrb[0].mxu0
  %v1608 = vadd.f32 0.0, %v1607
  %v1609 = vpop.f32.mrb[0].mxu0
  %1610 = vmatprep.mubr.bf16.mxu0 0
  %1611 = vmatmul.mubr.bf16.gmra.mrb[0].mxu0 %v1423
  %v1612 = vpop.f32.mrb[0].mxu0
  %v1613 = vadd.f32 0.0, %v1612
  %v1614 = vpop.f32.mrb[0].mxu0
  %v1615 = vpop.f32.mrb[0].mxu0
  %v1616 = vadd.f32 0.0, %v1615
  %v1617 = vpop.f32.mrb[0].mxu0
  %1618 = vmatprep.mubr.bf16.mxu0 0
  %1619 = vmatmul.mubr.bf16.gmra.mrb[0].mxu0 %v1427
  %v1620 = vpop.f32.mrb[0].mxu0
  %v1621 = vadd.f32 0.0, %v1620
  %v1622 = vpop.f32.mrb[0].mxu0
  %v1623 = vpop.f32.mrb[0].mxu0
  %v1624 = vadd.f32 0.0, %v1623
  %v1625 = vpop.f32.mrb[0].mxu0
  %1626 = vmatprep.mubr.bf16.mxu0 0
  %1627 = vmatmul.mubr.bf16.gmra.mrb[0].mxu0 %v1431
  %v1628 = vpop.f32.mrb[0].mxu0
  %v1629 = vadd.f32 0.0, %v1628
  %v1630 = vpop.f32.mrb[0].mxu0
  %v1631 = vpop.f32.mrb[0].mxu0
  %v1632 = vadd.f32 0.0, %v1631
  %v1633 = vpop.f32.mrb[0].mxu0
  %1634 = vmatprep.mubr.bf16.mxu0 0
  %1635 = vmatmul.mubr.bf16.gmra.mrb[0].mxu0 %v1435
  %v1636 = vpop.f32.mrb[0].mxu0
  %v1637 = vadd.f32 0.0, %v1636
  %v1638 = vpop.f32.mrb[0].mxu0
  %v1639 = vpop.f32.mrb[0].mxu0
  %v1640 = vadd.f32 0.0, %v1639
  %v1641 = vpop.f32.mrb[0].mxu0
  %1642 = vmatprep.mubr.bf16.mxu0 0
  %1643 = vmatmul.mubr.bf16.gmra.mrb[0].mxu0 %v1439
  %v1644 = vpop.f32.mrb[0].mxu0
  %v1645 = vadd.f32 0.0, %v1644
  %v1646 = vpop.f32.mrb[0].mxu0
  %v1647 = vpop.f32.mrb[0].mxu0
  %v1648 = vadd.f32 0.0, %v1647
  %v1649 = vpop.f32.mrb[0].mxu0
  %1650 = vmatprep.mubr.bf16.mxu0 0
  %1651 = vmatmul.mubr.bf16.gmra.mrb[0].mxu0 %v1443
  %v1652 = vpop.f32.mrb[0].mxu0
  %v1653 = vadd.f32 0.0, %v1652
  %v1654 = vpop.f32.mrb[0].mxu0
  %v1655 = vpop.f32.mrb[0].mxu0
  %v1656 = vadd.f32 0.0, %v1655
  %v1657 = vpop.f32.mrb[0].mxu0
  %1658 = vmatprep.mubr.bf16.mxu0 0
  %1659 = vmatmul.mubr.bf16.gmra.mrb[0].mxu0 %v1447
  %v1660 = vpop.f32.mrb[0].mxu0
  %v1661 = vadd.f32 0.0, %v1660
  %v1662 = vpop.f32.mrb[0].mxu0
  %v1663 = vpop.f32.mrb[0].mxu0
  %v1664 = vadd.f32 0.0, %v1663
  %v1665 = vpop.f32.mrb[0].mxu0
  %1666 = vmatprep.mubr.bf16.mxu0 0
  %1667 = vmatmul.mubr.bf16.gmra.mrb[0].mxu0 %v1451
  %v1668 = vpop.f32.mrb[0].mxu0
  %v1669 = vadd.f32 0.0, %v1668
  %v1670 = vpop.f32.mrb[0].mxu0
  %v1671 = vpop.f32.mrb[0].mxu0
  %v1672 = vadd.f32 0.0, %v1671
  %v1673 = vpop.f32.mrb[0].mxu0
  %1674 = vmatprep.mubr.bf16.mxu0 0
  %1675 = vmatmul.mubr.bf16.gmra.mrb[0].mxu0 %v1457
  %v1676 = vpop.f32.mrb[0].mxu0
  %v1677 = vadd.f32 0.0, %v1676
  %v1678 = vpop.f32.mrb[0].mxu0
  %v1679 = vpop.f32.mrb[0].mxu0
  %v1680 = vadd.f32 0.0, %v1679
  %v1681 = vpop.f32.mrb[0].mxu0
  %1682 = vdwg.mxu0
  %v1683 = vadd.f32 %v1339, %v1557
  %v1684 = vadd.f32 %v1340, %v1560
  %v1685 = vadd.f32 %v1341, %v1565
  %v1686 = vadd.f32 %v1342, %v1568
  %v1687 = vadd.f32 %v1343, %v1573
  %v1688 = vadd.f32 %v1344, %v1576
  %v1689 = vadd.f32 %v1345, %v1581
  %v1690 = vadd.f32 %v1346, %v1584
  %v1691 = vadd.f32 %v1347, %v1589
  %v1692 = vadd.f32 %v1348, %v1592
  %v1693 = vadd.f32 %v1349, %v1597
  %v1694 = vadd.f32 %v1350, %v1600
  %v1695 = vadd.f32 %v1351, %v1605
  %v1696 = vadd.f32 %v1352, %v1608
  %v1697 = vadd.f32 %v1353, %v1613
  %v1698 = vadd.f32 %v1354, %v1616
  %v1699 = vadd.f32 %v1355, %v1621
  %v1700 = vadd.f32 %v1356, %v1624
  %v1701 = vadd.f32 %v1357, %v1629
  %v1702 = vadd.f32 %v1358, %v1632
  %v1703 = vadd.f32 %v1359, %v1637
  %v1704 = vadd.f32 %v1360, %v1640
  %v1705 = vadd.f32 %v1361, %v1645
  %v1706 = vadd.f32 %v1362, %v1648
  %v1707 = vadd.f32 %v1363, %v1653
  %v1708 = vadd.f32 %v1364, %v1656
  %v1709 = vadd.f32 %v1365, %v1661
  %v1710 = vadd.f32 %v1366, %v1664
  %v1711 = vadd.f32 %v1367, %v1669
  %v1712 = vadd.f32 %v1368, %v1672
  %v1713 = vadd.f32 %v1369, %v1677
  %v1714 = vadd.f32 %v1370, %v1680
  %s1715 = scalar_lea.vmem %s1, 320
  %v1716 = vld [vmem:[%s1715] sm:$0xf]
  %v1717 = vld [vmem:[%s1715 + $0x4] sm:$0xf]
  %v1718 = vld [vmem:[%s1715 + $0x8] sm:$0xf]
  %v1719 = vld [vmem:[%s1715 + $0xc] sm:$0xf]
  %v1720 = vld [vmem:[%s1715 + $0x10] sm:$0xf]
  %v1721 = vld [vmem:[%s1715 + $0x14] sm:$0xf]
  %v1722 = vld [vmem:[%s1715 + $0x18] sm:$0xf]
  %v1723 = vld [vmem:[%s1715 + $0x1c] sm:$0xf]
  %v1724 = vld [vmem:[%s1715 + $0x20] sm:$0xf]
  %v1725 = vld [vmem:[%s1715 + $0x24] sm:$0xf]
  %v1726 = vld [vmem:[%s1715 + $0x28] sm:$0xf]
  %v1727 = vld [vmem:[%s1715 + $0x2c] sm:$0xf]
  %v1728 = vld [vmem:[%s1715 + $0x30] sm:$0xf]
  %v1729 = vld [vmem:[%s1715 + $0x34] sm:$0xf]
  %v1730 = vld [vmem:[%s1715 + $0x38] sm:$0xf]
  %v1731 = vld [vmem:[%s1715 + $0x3c] sm:$0xf]
  %v1732 = vpack.c.b16 %v124, %v123
  %v1733 = vpack.c.b16 %v126, %v125
  %v1734 = vpack.c.b16 %v128, %v127
  %v1735 = vpack.c.b16 %v130, %v129
  %v1736 = vpack.c.b16 %v132, %v131
  %v1737 = vpack.c.b16 %v134, %v133
  %v1738 = vpack.c.b16 %v136, %v135
  %v1739 = vpack.c.b16 %v138, %v137
  %v1740 = vpack.c.b16 %v140, %v139
  %v1741 = vpack.c.b16 %v142, %v141
  %v1742 = vpack.c.b16 %v144, %v143
  %v1743 = vpack.c.b16 %v146, %v145
  %v1744 = vpack.c.b16 %v148, %v147
  %v1745 = vpack.c.b16 %v150, %v149
  %v1746 = vpack.c.b16 %v152, %v151
  %v1747 = vpack.c.b16 %v154, %v153
  %v1780 = vunpack.c.l.b16 %v1716
  %v1781 = vunpack.c.l.b16 %v1717
  %v1782 = vunpack.c.l.b16 %v1718
  %v1783 = vunpack.c.l.b16 %v1719
  %v1784 = vunpack.c.l.b16 %v1720
  %v1785 = vunpack.c.l.b16 %v1721
  %v1786 = vunpack.c.l.b16 %v1722
  %v1787 = vunpack.c.l.b16 %v1723
  %v1788 = vunpack.c.l.b16 %v1724
  %v1789 = vunpack.c.l.b16 %v1725
  %v1790 = vunpack.c.l.b16 %v1726
  %v1791 = vunpack.c.l.b16 %v1727
  %v1792 = vunpack.c.l.b16 %v1728
  %v1793 = vunpack.c.l.b16 %v1729
  %v1794 = vunpack.c.l.b16 %v1730
  %v1795 = vunpack.c.l.b16 %v1731
  %v1796 = vpack.c.b16 %v1781, %v1780
  %v1797 = vpack.c.b16 %v1783, %v1782
  %v1798 = vpack.c.b16 %v1785, %v1784
  %v1799 = vpack.c.b16 %v1787, %v1786
  %v1800 = vpack.c.b16 %v1789, %v1788
  %v1801 = vpack.c.b16 %v1791, %v1790
  %v1802 = vpack.c.b16 %v1793, %v1792
  %v1803 = vpack.c.b16 %v1795, %v1794
  %1812 = vmatprep.subr.bf16.mxu0 0
  %1813 = vmatpush1.bf16.msra.mxu0 %v1796
  %1814 = vmatprep.subr.bf16.mxu0 0
  %1815 = vmatpush1.bf16.msra.mxu0 %v1797
  %1816 = vmatprep.subr.bf16.mxu0 0
  %1817 = vmatpush1.bf16.msra.mxu0 %v1798
  %1818 = vmatprep.subr.bf16.mxu0 0
  %1819 = vmatpush1.bf16.msra.mxu0 %v1799
  %1820 = vmatprep.subr.bf16.mxu0 0
  %1821 = vmatpush1.bf16.msra.mxu0 %v1800
  %1822 = vmatprep.subr.bf16.mxu0 0
  %1823 = vmatpush1.bf16.msra.mxu0 %v1801
  %1824 = vmatprep.subr.bf16.mxu0 0
  %1825 = vmatpush1.bf16.msra.mxu0 %v1802
  %1826 = vmatprep.subr.bf16.mxu0 0
  %1827 = vmatpush1.bf16.msra.mxu0 %v1803
  %1828 = vmatprep.subr.bf16.mxu0 0
  %1829 = vmatpush1.bf16.msra.mxu0 0
  %1830 = vmatprep.subr.bf16.mxu0 0
  %1831 = vmatpush1.bf16.msra.mxu0 0
  %1832 = vmatprep.subr.bf16.mxu0 0
  %1833 = vmatpush1.bf16.msra.mxu0 0
  %1834 = vmatprep.subr.bf16.mxu0 0
  %1835 = vmatpush1.bf16.msra.mxu0 0
  %1836 = vmatprep.subr.bf16.mxu0 0
  %1837 = vmatpush1.bf16.msra.mxu0 0
  %1838 = vmatprep.subr.bf16.mxu0 0
  %1839 = vmatpush1.bf16.msra.mxu0 0
  %1840 = vmatprep.subr.bf16.mxu0 0
  %1841 = vmatpush1.bf16.msra.mxu0 0
  %1842 = vmatprep.subr.bf16.mxu0 0
  %1843 = vmatpush1.bf16.msra.mxu0 0
  %1844 = vmatprep.mubr.bf16.mxu0 0
  %1845 = vmatmul.mubr.bf16.gmra.mrb[0].mxu0 %v1732
  %v1846 = vpop.f32.mrb[0].mxu0
  %v1847 = vadd.f32 0.0, %v1846
  %v1848 = vpop.f32.mrb[0].mxu0
  %v1849 = vpop.f32.mrb[0].mxu0
  %v1850 = vadd.f32 0.0, %v1849
  %v1851 = vpop.f32.mrb[0].mxu0
  %1852 = vmatprep.mubr.bf16.mxu0 0
  %1853 = vmatmul.mubr.bf16.gmra.mrb[0].mxu0 %v1733
  %v1854 = vpop.f32.mrb[0].mxu0
  %v1855 = vadd.f32 0.0, %v1854
  %v1856 = vpop.f32.mrb[0].mxu0
  %v1857 = vpop.f32.mrb[0].mxu0
  %v1858 = vadd.f32 0.0, %v1857
  %v1859 = vpop.f32.mrb[0].mxu0
  %1860 = vmatprep.mubr.bf16.mxu0 0
  %1861 = vmatmul.mubr.bf16.gmra.mrb[0].mxu0 %v1734
  %v1862 = vpop.f32.mrb[0].mxu0
  %v1863 = vadd.f32 0.0, %v1862
  %v1864 = vpop.f32.mrb[0].mxu0
  %v1865 = vpop.f32.mrb[0].mxu0
  %v1866 = vadd.f32 0.0, %v1865
  %v1867 = vpop.f32.mrb[0].mxu0
  %1868 = vmatprep.mubr.bf16.mxu0 0
  %1869 = vmatmul.mubr.bf16.gmra.mrb[0].mxu0 %v1735
  %v1870 = vpop.f32.mrb[0].mxu0
  %v1871 = vadd.f32 0.0, %v1870
  %v1872 = vpop.f32.mrb[0].mxu0
  %v1873 = vpop.f32.mrb[0].mxu0
  %v1874 = vadd.f32 0.0, %v1873
  %v1875 = vpop.f32.mrb[0].mxu0
  %1876 = vmatprep.mubr.bf16.mxu0 0
  %1877 = vmatmul.mubr.bf16.gmra.mrb[0].mxu0 %v1736
  %v1878 = vpop.f32.mrb[0].mxu0
  %v1879 = vadd.f32 0.0, %v1878
  %v1880 = vpop.f32.mrb[0].mxu0
  %v1881 = vpop.f32.mrb[0].mxu0
  %v1882 = vadd.f32 0.0, %v1881
  %v1883 = vpop.f32.mrb[0].mxu0
  %1884 = vmatprep.mubr.bf16.mxu0 0
  %1885 = vmatmul.mubr.bf16.gmra.mrb[0].mxu0 %v1737
  %v1886 = vpop.f32.mrb[0].mxu0
  %v1887 = vadd.f32 0.0, %v1886
  %v1888 = vpop.f32.mrb[0].mxu0
  %v1889 = vpop.f32.mrb[0].mxu0
  %v1890 = vadd.f32 0.0, %v1889
  %v1891 = vpop.f32.mrb[0].mxu0
  %1892 = vmatprep.mubr.bf16.mxu0 0
  %1893 = vmatmul.mubr.bf16.gmra.mrb[0].mxu0 %v1738
  %v1894 = vpop.f32.mrb[0].mxu0
  %v1895 = vadd.f32 0.0, %v1894
  %v1896 = vpop.f32.mrb[0].mxu0
  %v1897 = vpop.f32.mrb[0].mxu0
  %v1898 = vadd.f32 0.0, %v1897
  %v1899 = vpop.f32.mrb[0].mxu0
  %1900 = vmatprep.mubr.bf16.mxu0 0
  %1901 = vmatmul.mubr.bf16.gmra.mrb[0].mxu0 %v1739
  %v1902 = vpop.f32.mrb[0].mxu0
  %v1903 = vadd.f32 0.0, %v1902
  %v1904 = vpop.f32.mrb[0].mxu0
  %v1905 = vpop.f32.mrb[0].mxu0
  %v1906 = vadd.f32 0.0, %v1905
  %v1907 = vpop.f32.mrb[0].mxu0
  %1908 = vmatprep.mubr.bf16.mxu0 0
  %1909 = vmatmul.mubr.bf16.gmra.mrb[0].mxu0 %v1740
  %v1910 = vpop.f32.mrb[0].mxu0
  %v1911 = vadd.f32 0.0, %v1910
  %v1912 = vpop.f32.mrb[0].mxu0
  %v1913 = vpop.f32.mrb[0].mxu0
  %v1914 = vadd.f32 0.0, %v1913
  %v1915 = vpop.f32.mrb[0].mxu0
  %1916 = vmatprep.mubr.bf16.mxu0 0
  %1917 = vmatmul.mubr.bf16.gmra.mrb[0].mxu0 %v1741
  %v1918 = vpop.f32.mrb[0].mxu0
  %v1919 = vadd.f32 0.0, %v1918
  %v1920 = vpop.f32.mrb[0].mxu0
  %v1921 = vpop.f32.mrb[0].mxu0
  %v1922 = vadd.f32 0.0, %v1921
  %v1923 = vpop.f32.mrb[0].mxu0
  %1924 = vmatprep.mubr.bf16.mxu0 0
  %1925 = vmatmul.mubr.bf16.gmra.mrb[0].mxu0 %v1742
  %v1926 = vpop.f32.mrb[0].mxu0
  %v1927 = vadd.f32 0.0, %v1926
  %v1928 = vpop.f32.mrb[0].mxu0
  %v1929 = vpop.f32.mrb[0].mxu0
  %v1930 = vadd.f32 0.0, %v1929
  %v1931 = vpop.f32.mrb[0].mxu0
  %1932 = vmatprep.mubr.bf16.mxu0 0
  %1933 = vmatmul.mubr.bf16.gmra.mrb[0].mxu0 %v1743
  %v1934 = vpop.f32.mrb[0].mxu0
  %v1935 = vadd.f32 0.0, %v1934
  %v1936 = vpop.f32.mrb[0].mxu0
  %v1937 = vpop.f32.mrb[0].mxu0
  %v1938 = vadd.f32 0.0, %v1937
  %v1939 = vpop.f32.mrb[0].mxu0
  %1940 = vmatprep.mubr.bf16.mxu0 0
  %1941 = vmatmul.mubr.bf16.gmra.mrb[0].mxu0 %v1744
  %v1942 = vpop.f32.mrb[0].mxu0
  %v1943 = vadd.f32 0.0, %v1942
  %v1944 = vpop.f32.mrb[0].mxu0
  %v1945 = vpop.f32.mrb[0].mxu0
  %v1946 = vadd.f32 0.0, %v1945
  %v1947 = vpop.f32.mrb[0].mxu0
  %1948 = vmatprep.mubr.bf16.mxu0 0
  %1949 = vmatmul.mubr.bf16.gmra.mrb[0].mxu0 %v1745
  %v1950 = vpop.f32.mrb[0].mxu0
  %v1951 = vadd.f32 0.0, %v1950
  %v1952 = vpop.f32.mrb[0].mxu0
  %v1953 = vpop.f32.mrb[0].mxu0
  %v1954 = vadd.f32 0.0, %v1953
  %v1955 = vpop.f32.mrb[0].mxu0
  %1956 = vmatprep.mubr.bf16.mxu0 0
  %1957 = vmatmul.mubr.bf16.gmra.mrb[0].mxu0 %v1746
  %v1958 = vpop.f32.mrb[0].mxu0
  %v1959 = vadd.f32 0.0, %v1958
  %v1960 = vpop.f32.mrb[0].mxu0
  %v1961 = vpop.f32.mrb[0].mxu0
  %v1962 = vadd.f32 0.0, %v1961
  %v1963 = vpop.f32.mrb[0].mxu0
  %1964 = vmatprep.mubr.bf16.mxu0 0
  %1965 = vmatmul.mubr.bf16.gmra.mrb[0].mxu0 %v1747
  %v1966 = vpop.f32.mrb[0].mxu0
  %v1967 = vadd.f32 0.0, %v1966
  %v1968 = vpop.f32.mrb[0].mxu0
  %v1969 = vpop.f32.mrb[0].mxu0
  %v1970 = vadd.f32 0.0, %v1969
  %v1971 = vpop.f32.mrb[0].mxu0
  %1972 = vdwg.mxu0
  %v1973 = vadd.f32 %v1683, %v1847
  %v1974 = vadd.f32 %v1684, %v1850
  %v1975 = vadd.f32 %v1685, %v1855
  %v1976 = vadd.f32 %v1686, %v1858
  %v1977 = vadd.f32 %v1687, %v1863
  %v1978 = vadd.f32 %v1688, %v1866
  %v1979 = vadd.f32 %v1689, %v1871
  %v1980 = vadd.f32 %v1690, %v1874
  %v1981 = vadd.f32 %v1691, %v1879
  %v1982 = vadd.f32 %v1692, %v1882
  %v1983 = vadd.f32 %v1693, %v1887
  %v1984 = vadd.f32 %v1694, %v1890
  %v1985 = vadd.f32 %v1695, %v1895
  %v1986 = vadd.f32 %v1696, %v1898
  %v1987 = vadd.f32 %v1697, %v1903
  %v1988 = vadd.f32 %v1698, %v1906
  %v1989 = vadd.f32 %v1699, %v1911
  %v1990 = vadd.f32 %v1700, %v1914
  %v1991 = vadd.f32 %v1701, %v1919
  %v1992 = vadd.f32 %v1702, %v1922
  %v1993 = vadd.f32 %v1703, %v1927
  %v1994 = vadd.f32 %v1704, %v1930
  %v1995 = vadd.f32 %v1705, %v1935
  %v1996 = vadd.f32 %v1706, %v1938
  %v1997 = vadd.f32 %v1707, %v1943
  %v1998 = vadd.f32 %v1708, %v1946
  %v1999 = vadd.f32 %v1709, %v1951
  %v2000 = vadd.f32 %v1710, %v1954
  %v2001 = vadd.f32 %v1711, %v1959
  %v2002 = vadd.f32 %v1712, %v1962
  %v2003 = vadd.f32 %v1713, %v1967
  %v2004 = vadd.f32 %v1714, %v1970
  %s2005 = scalar_lea.vmem %s1, 384
  %v2006 = vld [vmem:[%s2005] sm:$0xf]
  %v2007 = vld [vmem:[%s2005 + $0x4] sm:$0xf]
  %v2008 = vld [vmem:[%s2005 + $0x8] sm:$0xf]
  %v2009 = vld [vmem:[%s2005 + $0xc] sm:$0xf]
  %v2010 = vld [vmem:[%s2005 + $0x10] sm:$0xf]
  %v2011 = vld [vmem:[%s2005 + $0x14] sm:$0xf]
  %v2012 = vld [vmem:[%s2005 + $0x18] sm:$0xf]
  %v2013 = vld [vmem:[%s2005 + $0x1c] sm:$0xf]
  %v2014 = vld [vmem:[%s2005 + $0x20] sm:$0xf]
  %v2015 = vld [vmem:[%s2005 + $0x24] sm:$0xf]
  %v2016 = vld [vmem:[%s2005 + $0x28] sm:$0xf]
  %v2017 = vld [vmem:[%s2005 + $0x2c] sm:$0xf]
  %v2018 = vld [vmem:[%s2005 + $0x30] sm:$0xf]
  %v2019 = vld [vmem:[%s2005 + $0x34] sm:$0xf]
  %v2020 = vld [vmem:[%s2005 + $0x38] sm:$0xf]
  %v2021 = vld [vmem:[%s2005 + $0x3c] sm:$0xf]
  %v2023 = vunpack.c.l.b16 %v55
  %v2024 = vpack.c.b16 %v2023, %v2023
  %vm2025 = vcmask 1045504
  %v2026 = vrot.slane %v1732, 2
  %v2027 = vrot.slane %v1733, 2
  %v2028 = vsel %vm2025, %v2026, %v2027
  %v2029 = vrot.slane %v1734, 2
  %v2030 = vsel %vm2025, %v2027, %v2029
  %v2031 = vrot.slane %v1735, 2
  %v2032 = vsel %vm2025, %v2029, %v2031
  %v2033 = vrot.slane %v1736, 2
  %v2034 = vsel %vm2025, %v2031, %v2033
  %v2035 = vrot.slane %v1737, 2
  %v2036 = vsel %vm2025, %v2033, %v2035
  %v2037 = vrot.slane %v1738, 2
  %v2038 = vsel %vm2025, %v2035, %v2037
  %v2039 = vrot.slane %v1739, 2
  %v2040 = vsel %vm2025, %v2037, %v2039
  %v2041 = vrot.slane %v1740, 2
  %v2042 = vsel %vm2025, %v2039, %v2041
  %v2043 = vrot.slane %v1741, 2
  %v2044 = vsel %vm2025, %v2041, %v2043
  %v2045 = vrot.slane %v1742, 2
  %v2046 = vsel %vm2025, %v2043, %v2045
  %v2047 = vrot.slane %v1743, 2
  %v2048 = vsel %vm2025, %v2045, %v2047
  %v2049 = vrot.slane %v1744, 2
  %v2050 = vsel %vm2025, %v2047, %v2049
  %v2051 = vrot.slane %v1745, 2
  %v2052 = vsel %vm2025, %v2049, %v2051
  %v2053 = vrot.slane %v1746, 2
  %v2054 = vsel %vm2025, %v2051, %v2053
  %v2055 = vrot.slane %v1747, 2
  %v2056 = vsel %vm2025, %v2053, %v2055
  %v2057 = vrot.slane %v2024, 2
  %v2058 = vsel %vm2025, %v2055, %v2057
  %v2091 = vunpack.c.l.b16 %v2006
  %v2092 = vunpack.c.l.b16 %v2007
  %v2093 = vunpack.c.l.b16 %v2008
  %v2094 = vunpack.c.l.b16 %v2009
  %v2095 = vunpack.c.l.b16 %v2010
  %v2096 = vunpack.c.l.b16 %v2011
  %v2097 = vunpack.c.l.b16 %v2012
  %v2098 = vunpack.c.l.b16 %v2013
  %v2099 = vunpack.c.l.b16 %v2014
  %v2100 = vunpack.c.l.b16 %v2015
  %v2101 = vunpack.c.l.b16 %v2016
  %v2102 = vunpack.c.l.b16 %v2017
  %v2103 = vunpack.c.l.b16 %v2018
  %v2104 = vunpack.c.l.b16 %v2019
  %v2105 = vunpack.c.l.b16 %v2020
  %v2106 = vunpack.c.l.b16 %v2021
  %v2107 = vpack.c.b16 %v2092, %v2091
  %v2108 = vpack.c.b16 %v2094, %v2093
  %v2109 = vpack.c.b16 %v2096, %v2095
  %v2110 = vpack.c.b16 %v2098, %v2097
  %v2111 = vpack.c.b16 %v2100, %v2099
  %v2112 = vpack.c.b16 %v2102, %v2101
  %v2113 = vpack.c.b16 %v2104, %v2103
  %v2114 = vpack.c.b16 %v2106, %v2105
  %2123 = vmatprep.subr.bf16.mxu0 0
  %2124 = vmatpush1.bf16.msra.mxu0 %v2107
  %2125 = vmatprep.subr.bf16.mxu0 0
  %2126 = vmatpush1.bf16.msra.mxu0 %v2108
  %2127 = vmatprep.subr.bf16.mxu0 0
  %2128 = vmatpush1.bf16.msra.mxu0 %v2109
  %2129 = vmatprep.subr.bf16.mxu0 0
  %2130 = vmatpush1.bf16.msra.mxu0 %v2110
  %2131 = vmatprep.subr.bf16.mxu0 0
  %2132 = vmatpush1.bf16.msra.mxu0 %v2111
  %2133 = vmatprep.subr.bf16.mxu0 0
  %2134 = vmatpush1.bf16.msra.mxu0 %v2112
  %2135 = vmatprep.subr.bf16.mxu0 0
  %2136 = vmatpush1.bf16.msra.mxu0 %v2113
  %2137 = vmatprep.subr.bf16.mxu0 0
  %2138 = vmatpush1.bf16.msra.mxu0 %v2114
  %2139 = vmatprep.subr.bf16.mxu0 0
  %2140 = vmatpush1.bf16.msra.mxu0 0
  %2141 = vmatprep.subr.bf16.mxu0 0
  %2142 = vmatpush1.bf16.msra.mxu0 0
  %2143 = vmatprep.subr.bf16.mxu0 0
  %2144 = vmatpush1.bf16.msra.mxu0 0
  %2145 = vmatprep.subr.bf16.mxu0 0
  %2146 = vmatpush1.bf16.msra.mxu0 0
  %2147 = vmatprep.subr.bf16.mxu0 0
  %2148 = vmatpush1.bf16.msra.mxu0 0
  %2149 = vmatprep.subr.bf16.mxu0 0
  %2150 = vmatpush1.bf16.msra.mxu0 0
  %2151 = vmatprep.subr.bf16.mxu0 0
  %2152 = vmatpush1.bf16.msra.mxu0 0
  %2153 = vmatprep.subr.bf16.mxu0 0
  %2154 = vmatpush1.bf16.msra.mxu0 0
  %2155 = vmatprep.mubr.bf16.mxu0 0
  %2156 = vmatmul.mubr.bf16.gmra.mrb[0].mxu0 %v2028
  %v2157 = vpop.f32.mrb[0].mxu0
  %v2158 = vadd.f32 0.0, %v2157
  %v2159 = vpop.f32.mrb[0].mxu0
  %v2160 = vpop.f32.mrb[0].mxu0
  %v2161 = vadd.f32 0.0, %v2160
  %v2162 = vpop.f32.mrb[0].mxu0
  %2163 = vmatprep.mubr.bf16.mxu0 0
  %2164 = vmatmul.mubr.bf16.gmra.mrb[0].mxu0 %v2030
  %v2165 = vpop.f32.mrb[0].mxu0
  %v2166 = vadd.f32 0.0, %v2165
  %v2167 = vpop.f32.mrb[0].mxu0
  %v2168 = vpop.f32.mrb[0].mxu0
  %v2169 = vadd.f32 0.0, %v2168
  %v2170 = vpop.f32.mrb[0].mxu0
  %2171 = vmatprep.mubr.bf16.mxu0 0
  %2172 = vmatmul.mubr.bf16.gmra.mrb[0].mxu0 %v2032
  %v2173 = vpop.f32.mrb[0].mxu0
  %v2174 = vadd.f32 0.0, %v2173
  %v2175 = vpop.f32.mrb[0].mxu0
  %v2176 = vpop.f32.mrb[0].mxu0
  %v2177 = vadd.f32 0.0, %v2176
  %v2178 = vpop.f32.mrb[0].mxu0
  %2179 = vmatprep.mubr.bf16.mxu0 0
  %2180 = vmatmul.mubr.bf16.gmra.mrb[0].mxu0 %v2034
  %v2181 = vpop.f32.mrb[0].mxu0
  %v2182 = vadd.f32 0.0, %v2181
  %v2183 = vpop.f32.mrb[0].mxu0
  %v2184 = vpop.f32.mrb[0].mxu0
  %v2185 = vadd.f32 0.0, %v2184
  %v2186 = vpop.f32.mrb[0].mxu0
  %2187 = vmatprep.mubr.bf16.mxu0 0
  %2188 = vmatmul.mubr.bf16.gmra.mrb[0].mxu0 %v2036
  %v2189 = vpop.f32.mrb[0].mxu0
  %v2190 = vadd.f32 0.0, %v2189
  %v2191 = vpop.f32.mrb[0].mxu0
  %v2192 = vpop.f32.mrb[0].mxu0
  %v2193 = vadd.f32 0.0, %v2192
  %v2194 = vpop.f32.mrb[0].mxu0
  %2195 = vmatprep.mubr.bf16.mxu0 0
  %2196 = vmatmul.mubr.bf16.gmra.mrb[0].mxu0 %v2038
  %v2197 = vpop.f32.mrb[0].mxu0
  %v2198 = vadd.f32 0.0, %v2197
  %v2199 = vpop.f32.mrb[0].mxu0
  %v2200 = vpop.f32.mrb[0].mxu0
  %v2201 = vadd.f32 0.0, %v2200
  %v2202 = vpop.f32.mrb[0].mxu0
  %2203 = vmatprep.mubr.bf16.mxu0 0
  %2204 = vmatmul.mubr.bf16.gmra.mrb[0].mxu0 %v2040
  %v2205 = vpop.f32.mrb[0].mxu0
  %v2206 = vadd.f32 0.0, %v2205
  %v2207 = vpop.f32.mrb[0].mxu0
  %v2208 = vpop.f32.mrb[0].mxu0
  %v2209 = vadd.f32 0.0, %v2208
  %v2210 = vpop.f32.mrb[0].mxu0
  %2211 = vmatprep.mubr.bf16.mxu0 0
  %2212 = vmatmul.mubr.bf16.gmra.mrb[0].mxu0 %v2042
  %v2213 = vpop.f32.mrb[0].mxu0
  %v2214 = vadd.f32 0.0, %v2213
  %v2215 = vpop.f32.mrb[0].mxu0
  %v2216 = vpop.f32.mrb[0].mxu0
  %v2217 = vadd.f32 0.0, %v2216
  %v2218 = vpop.f32.mrb[0].mxu0
  %2219 = vmatprep.mubr.bf16.mxu0 0
  %2220 = vmatmul.mubr.bf16.gmra.mrb[0].mxu0 %v2044
  %v2221 = vpop.f32.mrb[0].mxu0
  %v2222 = vadd.f32 0.0, %v2221
  %v2223 = vpop.f32.mrb[0].mxu0
  %v2224 = vpop.f32.mrb[0].mxu0
  %v2225 = vadd.f32 0.0, %v2224
  %v2226 = vpop.f32.mrb[0].mxu0
  %2227 = vmatprep.mubr.bf16.mxu0 0
  %2228 = vmatmul.mubr.bf16.gmra.mrb[0].mxu0 %v2046
  %v2229 = vpop.f32.mrb[0].mxu0
  %v2230 = vadd.f32 0.0, %v2229
  %v2231 = vpop.f32.mrb[0].mxu0
  %v2232 = vpop.f32.mrb[0].mxu0
  %v2233 = vadd.f32 0.0, %v2232
  %v2234 = vpop.f32.mrb[0].mxu0
  %2235 = vmatprep.mubr.bf16.mxu0 0
  %2236 = vmatmul.mubr.bf16.gmra.mrb[0].mxu0 %v2048
  %v2237 = vpop.f32.mrb[0].mxu0
  %v2238 = vadd.f32 0.0, %v2237
  %v2239 = vpop.f32.mrb[0].mxu0
  %v2240 = vpop.f32.mrb[0].mxu0
  %v2241 = vadd.f32 0.0, %v2240
  %v2242 = vpop.f32.mrb[0].mxu0
  %2243 = vmatprep.mubr.bf16.mxu0 0
  %2244 = vmatmul.mubr.bf16.gmra.mrb[0].mxu0 %v2050
  %v2245 = vpop.f32.mrb[0].mxu0
  %v2246 = vadd.f32 0.0, %v2245
  %v2247 = vpop.f32.mrb[0].mxu0
  %v2248 = vpop.f32.mrb[0].mxu0
  %v2249 = vadd.f32 0.0, %v2248
  %v2250 = vpop.f32.mrb[0].mxu0
  %2251 = vmatprep.mubr.bf16.mxu0 0
  %2252 = vmatmul.mubr.bf16.gmra.mrb[0].mxu0 %v2052
  %v2253 = vpop.f32.mrb[0].mxu0
  %v2254 = vadd.f32 0.0, %v2253
  %v2255 = vpop.f32.mrb[0].mxu0
  %v2256 = vpop.f32.mrb[0].mxu0
  %v2257 = vadd.f32 0.0, %v2256
  %v2258 = vpop.f32.mrb[0].mxu0
  %2259 = vmatprep.mubr.bf16.mxu0 0
  %2260 = vmatmul.mubr.bf16.gmra.mrb[0].mxu0 %v2054
  %v2261 = vpop.f32.mrb[0].mxu0
  %v2262 = vadd.f32 0.0, %v2261
  %v2263 = vpop.f32.mrb[0].mxu0
  %v2264 = vpop.f32.mrb[0].mxu0
  %v2265 = vadd.f32 0.0, %v2264
  %v2266 = vpop.f32.mrb[0].mxu0
  %2267 = vmatprep.mubr.bf16.mxu0 0
  %2268 = vmatmul.mubr.bf16.gmra.mrb[0].mxu0 %v2056
  %v2269 = vpop.f32.mrb[0].mxu0
  %v2270 = vadd.f32 0.0, %v2269
  %v2271 = vpop.f32.mrb[0].mxu0
  %v2272 = vpop.f32.mrb[0].mxu0
  %v2273 = vadd.f32 0.0, %v2272
  %v2274 = vpop.f32.mrb[0].mxu0
  %2275 = vmatprep.mubr.bf16.mxu0 0
  %2276 = vmatmul.mubr.bf16.gmra.mrb[0].mxu0 %v2058
  %v2277 = vpop.f32.mrb[0].mxu0
  %v2278 = vadd.f32 0.0, %v2277
  %v2279 = vpop.f32.mrb[0].mxu0
  %v2280 = vpop.f32.mrb[0].mxu0
  %v2281 = vadd.f32 0.0, %v2280
  %v2282 = vpop.f32.mrb[0].mxu0
  %2283 = vdwg.mxu0
  %v2284 = vadd.f32 %v1973, %v2158
  %v2285 = vadd.f32 %v1974, %v2161
  %v2286 = vadd.f32 %v1975, %v2166
  %v2287 = vadd.f32 %v1976, %v2169
  %v2288 = vadd.f32 %v1977, %v2174
  %v2289 = vadd.f32 %v1978, %v2177
  %v2290 = vadd.f32 %v1979, %v2182
  %v2291 = vadd.f32 %v1980, %v2185
  %v2292 = vadd.f32 %v1981, %v2190
  %v2293 = vadd.f32 %v1982, %v2193
  %v2294 = vadd.f32 %v1983, %v2198
  %v2295 = vadd.f32 %v1984, %v2201
  %v2296 = vadd.f32 %v1985, %v2206
  %v2297 = vadd.f32 %v1986, %v2209
  %v2298 = vadd.f32 %v1987, %v2214
  %v2299 = vadd.f32 %v1988, %v2217
  %v2300 = vadd.f32 %v1989, %v2222
  %v2301 = vadd.f32 %v1990, %v2225
  %v2302 = vadd.f32 %v1991, %v2230
  %v2303 = vadd.f32 %v1992, %v2233
  %v2304 = vadd.f32 %v1993, %v2238
  %v2305 = vadd.f32 %v1994, %v2241
  %v2306 = vadd.f32 %v1995, %v2246
  %v2307 = vadd.f32 %v1996, %v2249
  %v2308 = vadd.f32 %v1997, %v2254
  %v2309 = vadd.f32 %v1998, %v2257
  %v2310 = vadd.f32 %v1999, %v2262
  %v2311 = vadd.f32 %v2000, %v2265
  %v2312 = vadd.f32 %v2001, %v2270
  %v2313 = vadd.f32 %v2002, %v2273
  %v2314 = vadd.f32 %v2003, %v2278
  %v2315 = vadd.f32 %v2004, %v2281
  %s2316 = scalar_lea.vmem %s1, 448
  %v2317 = vld [vmem:[%s2316] sm:$0xf]
  %v2318 = vld [vmem:[%s2316 + $0x4] sm:$0xf]
  %v2319 = vld [vmem:[%s2316 + $0x8] sm:$0xf]
  %v2320 = vld [vmem:[%s2316 + $0xc] sm:$0xf]
  %v2321 = vld [vmem:[%s2316 + $0x10] sm:$0xf]
  %v2322 = vld [vmem:[%s2316 + $0x14] sm:$0xf]
  %v2323 = vld [vmem:[%s2316 + $0x18] sm:$0xf]
  %v2324 = vld [vmem:[%s2316 + $0x1c] sm:$0xf]
  %v2325 = vld [vmem:[%s2316 + $0x20] sm:$0xf]
  %v2326 = vld [vmem:[%s2316 + $0x24] sm:$0xf]
  %v2327 = vld [vmem:[%s2316 + $0x28] sm:$0xf]
  %v2328 = vld [vmem:[%s2316 + $0x2c] sm:$0xf]
  %v2329 = vld [vmem:[%s2316 + $0x30] sm:$0xf]
  %v2330 = vld [vmem:[%s2316 + $0x34] sm:$0xf]
  %v2331 = vld [vmem:[%s2316 + $0x38] sm:$0xf]
  %v2332 = vld [vmem:[%s2316 + $0x3c] sm:$0xf]
  %vm2333 = vsmask.f32 5376
  %v2335 = vshrl.u32 %v1732, 16
  %v2337 = vrot.slane %v2335, 2
  %v2338 = vshll.u32 %v1732, 16
  %v2340 = vrot.slane %v2338, 3
  %v2341 = vor.u32 %v2337, %v2340
  %v2343 = vshrl.u32 %v1733, 16
  %v2345 = vrot.slane %v2343, 2
  %v2346 = vshll.u32 %v1733, 16
  %v2348 = vrot.slane %v2346, 3
  %v2349 = vor.u32 %v2345, %v2348
  %v2350 = vsel %vm2333, %v2341, %v2349
  %v2352 = vshrl.u32 %v1734, 16
  %v2354 = vrot.slane %v2352, 2
  %v2355 = vshll.u32 %v1734, 16
  %v2357 = vrot.slane %v2355, 3
  %v2358 = vor.u32 %v2354, %v2357
  %v2359 = vsel %vm2333, %v2349, %v2358
  %v2361 = vshrl.u32 %v1735, 16
  %v2363 = vrot.slane %v2361, 2
  %v2364 = vshll.u32 %v1735, 16
  %v2366 = vrot.slane %v2364, 3
  %v2367 = vor.u32 %v2363, %v2366
  %v2368 = vsel %vm2333, %v2358, %v2367
  %v2370 = vshrl.u32 %v1736, 16
  %v2372 = vrot.slane %v2370, 2
  %v2373 = vshll.u32 %v1736, 16
  %v2375 = vrot.slane %v2373, 3
  %v2376 = vor.u32 %v2372, %v2375
  %v2377 = vsel %vm2333, %v2367, %v2376
  %v2379 = vshrl.u32 %v1737, 16
  %v2381 = vrot.slane %v2379, 2
  %v2382 = vshll.u32 %v1737, 16
  %v2384 = vrot.slane %v2382, 3
  %v2385 = vor.u32 %v2381, %v2384
  %v2386 = vsel %vm2333, %v2376, %v2385
  %v2388 = vshrl.u32 %v1738, 16
  %v2390 = vrot.slane %v2388, 2
  %v2391 = vshll.u32 %v1738, 16
  %v2393 = vrot.slane %v2391, 3
  %v2394 = vor.u32 %v2390, %v2393
  %v2395 = vsel %vm2333, %v2385, %v2394
  %v2397 = vshrl.u32 %v1739, 16
  %v2399 = vrot.slane %v2397, 2
  %v2400 = vshll.u32 %v1739, 16
  %v2402 = vrot.slane %v2400, 3
  %v2403 = vor.u32 %v2399, %v2402
  %v2404 = vsel %vm2333, %v2394, %v2403
  %v2406 = vshrl.u32 %v1740, 16
  %v2408 = vrot.slane %v2406, 2
  %v2409 = vshll.u32 %v1740, 16
  %v2411 = vrot.slane %v2409, 3
  %v2412 = vor.u32 %v2408, %v2411
  %v2413 = vsel %vm2333, %v2403, %v2412
  %v2415 = vshrl.u32 %v1741, 16
  %v2417 = vrot.slane %v2415, 2
  %v2418 = vshll.u32 %v1741, 16
  %v2420 = vrot.slane %v2418, 3
  %v2421 = vor.u32 %v2417, %v2420
  %v2422 = vsel %vm2333, %v2412, %v2421
  %v2424 = vshrl.u32 %v1742, 16
  %v2426 = vrot.slane %v2424, 2
  %v2427 = vshll.u32 %v1742, 16
  %v2429 = vrot.slane %v2427, 3
  %v2430 = vor.u32 %v2426, %v2429
  %v2431 = vsel %vm2333, %v2421, %v2430
  %v2433 = vshrl.u32 %v1743, 16
  %v2435 = vrot.slane %v2433, 2
  %v2436 = vshll.u32 %v1743, 16
  %v2438 = vrot.slane %v2436, 3
  %v2439 = vor.u32 %v2435, %v2438
  %v2440 = vsel %vm2333, %v2430, %v2439
  %v2442 = vshrl.u32 %v1744, 16
  %v2444 = vrot.slane %v2442, 2
  %v2445 = vshll.u32 %v1744, 16
  %v2447 = vrot.slane %v2445, 3
  %v2448 = vor.u32 %v2444, %v2447
  %v2449 = vsel %vm2333, %v2439, %v2448
  %v2451 = vshrl.u32 %v1745, 16
  %v2453 = vrot.slane %v2451, 2
  %v2454 = vshll.u32 %v1745, 16
  %v2456 = vrot.slane %v2454, 3
  %v2457 = vor.u32 %v2453, %v2456
  %v2458 = vsel %vm2333, %v2448, %v2457
  %v2460 = vshrl.u32 %v1746, 16
  %v2462 = vrot.slane %v2460, 2
  %v2463 = vshll.u32 %v1746, 16
  %v2465 = vrot.slane %v2463, 3
  %v2466 = vor.u32 %v2462, %v2465
  %v2467 = vsel %vm2333, %v2457, %v2466
  %v2469 = vshrl.u32 %v1747, 16
  %v2471 = vrot.slane %v2469, 2
  %v2472 = vshll.u32 %v1747, 16
  %v2474 = vrot.slane %v2472, 3
  %v2475 = vor.u32 %v2471, %v2474
  %v2476 = vsel %vm2333, %v2466, %v2475
  %v2478 = vshrl.u32 %v2024, 16
  %v2480 = vrot.slane %v2478, 2
  %v2481 = vshll.u32 %v2024, 16
  %v2483 = vrot.slane %v2481, 3
  %v2484 = vor.u32 %v2480, %v2483
  %v2485 = vsel %vm2333, %v2475, %v2484
  %v2518 = vunpack.c.l.b16 %v2317
  %v2519 = vunpack.c.l.b16 %v2318
  %v2520 = vunpack.c.l.b16 %v2319
  %v2521 = vunpack.c.l.b16 %v2320
  %v2522 = vunpack.c.l.b16 %v2321
  %v2523 = vunpack.c.l.b16 %v2322
  %v2524 = vunpack.c.l.b16 %v2323
  %v2525 = vunpack.c.l.b16 %v2324
  %v2526 = vunpack.c.l.b16 %v2325
  %v2527 = vunpack.c.l.b16 %v2326
  %v2528 = vunpack.c.l.b16 %v2327
  %v2529 = vunpack.c.l.b16 %v2328
  %v2530 = vunpack.c.l.b16 %v2329
  %v2531 = vunpack.c.l.b16 %v2330
  %v2532 = vunpack.c.l.b16 %v2331
  %v2533 = vunpack.c.l.b16 %v2332
  %v2534 = vpack.c.b16 %v2519, %v2518
  %v2535 = vpack.c.b16 %v2521, %v2520
  %v2536 = vpack.c.b16 %v2523, %v2522
  %v2537 = vpack.c.b16 %v2525, %v2524
  %v2538 = vpack.c.b16 %v2527, %v2526
  %v2539 = vpack.c.b16 %v2529, %v2528
  %v2540 = vpack.c.b16 %v2531, %v2530
  %v2541 = vpack.c.b16 %v2533, %v2532
  %2550 = vmatprep.subr.bf16.mxu0 0
  %2551 = vmatpush1.bf16.msra.mxu0 %v2534
  %2552 = vmatprep.subr.bf16.mxu0 0
  %2553 = vmatpush1.bf16.msra.mxu0 %v2535
  %2554 = vmatprep.subr.bf16.mxu0 0
  %2555 = vmatpush1.bf16.msra.mxu0 %v2536
  %2556 = vmatprep.subr.bf16.mxu0 0
  %2557 = vmatpush1.bf16.msra.mxu0 %v2537
  %2558 = vmatprep.subr.bf16.mxu0 0
  %2559 = vmatpush1.bf16.msra.mxu0 %v2538
  %2560 = vmatprep.subr.bf16.mxu0 0
  %2561 = vmatpush1.bf16.msra.mxu0 %v2539
  %2562 = vmatprep.subr.bf16.mxu0 0
  %2563 = vmatpush1.bf16.msra.mxu0 %v2540
  %2564 = vmatprep.subr.bf16.mxu0 0
  %2565 = vmatpush1.bf16.msra.mxu0 %v2541
  %2566 = vmatprep.subr.bf16.mxu0 0
  %2567 = vmatpush1.bf16.msra.mxu0 0
  %2568 = vmatprep.subr.bf16.mxu0 0
  %2569 = vmatpush1.bf16.msra.mxu0 0
  %2570 = vmatprep.subr.bf16.mxu0 0
  %2571 = vmatpush1.bf16.msra.mxu0 0
  %2572 = vmatprep.subr.bf16.mxu0 0
  %2573 = vmatpush1.bf16.msra.mxu0 0
  %2574 = vmatprep.subr.bf16.mxu0 0
  %2575 = vmatpush1.bf16.msra.mxu0 0
  %2576 = vmatprep.subr.bf16.mxu0 0
  %2577 = vmatpush1.bf16.msra.mxu0 0
  %2578 = vmatprep.subr.bf16.mxu0 0
  %2579 = vmatpush1.bf16.msra.mxu0 0
  %2580 = vmatprep.subr.bf16.mxu0 0
  %2581 = vmatpush1.bf16.msra.mxu0 0
  %2582 = vmatprep.mubr.bf16.mxu0 0
  %2583 = vmatmul.mubr.bf16.gmra.mrb[0].mxu0 %v2350
  %v2584 = vpop.f32.mrb[0].mxu0
  %v2585 = vadd.f32 0.0, %v2584
  %v2586 = vpop.f32.mrb[0].mxu0
  %v2587 = vpop.f32.mrb[0].mxu0
  %v2588 = vadd.f32 0.0, %v2587
  %v2589 = vpop.f32.mrb[0].mxu0
  %2590 = vmatprep.mubr.bf16.mxu0 0
  %2591 = vmatmul.mubr.bf16.gmra.mrb[0].mxu0 %v2359
  %v2592 = vpop.f32.mrb[0].mxu0
  %v2593 = vadd.f32 0.0, %v2592
  %v2594 = vpop.f32.mrb[0].mxu0
  %v2595 = vpop.f32.mrb[0].mxu0
  %v2596 = vadd.f32 0.0, %v2595
  %v2597 = vpop.f32.mrb[0].mxu0
  %2598 = vmatprep.mubr.bf16.mxu0 0
  %2599 = vmatmul.mubr.bf16.gmra.mrb[0].mxu0 %v2368
  %v2600 = vpop.f32.mrb[0].mxu0
  %v2601 = vadd.f32 0.0, %v2600
  %v2602 = vpop.f32.mrb[0].mxu0
  %v2603 = vpop.f32.mrb[0].mxu0
  %v2604 = vadd.f32 0.0, %v2603
  %v2605 = vpop.f32.mrb[0].mxu0
  %2606 = vmatprep.mubr.bf16.mxu0 0
  %2607 = vmatmul.mubr.bf16.gmra.mrb[0].mxu0 %v2377
  %v2608 = vpop.f32.mrb[0].mxu0
  %v2609 = vadd.f32 0.0, %v2608
  %v2610 = vpop.f32.mrb[0].mxu0
  %v2611 = vpop.f32.mrb[0].mxu0
  %v2612 = vadd.f32 0.0, %v2611
  %v2613 = vpop.f32.mrb[0].mxu0
  %2614 = vmatprep.mubr.bf16.mxu0 0
  %2615 = vmatmul.mubr.bf16.gmra.mrb[0].mxu0 %v2386
  %v2616 = vpop.f32.mrb[0].mxu0
  %v2617 = vadd.f32 0.0, %v2616
  %v2618 = vpop.f32.mrb[0].mxu0
  %v2619 = vpop.f32.mrb[0].mxu0
  %v2620 = vadd.f32 0.0, %v2619
  %v2621 = vpop.f32.mrb[0].mxu0
  %2622 = vmatprep.mubr.bf16.mxu0 0
  %2623 = vmatmul.mubr.bf16.gmra.mrb[0].mxu0 %v2395
  %v2624 = vpop.f32.mrb[0].mxu0
  %v2625 = vadd.f32 0.0, %v2624
  %v2626 = vpop.f32.mrb[0].mxu0
  %v2627 = vpop.f32.mrb[0].mxu0
  %v2628 = vadd.f32 0.0, %v2627
  %v2629 = vpop.f32.mrb[0].mxu0
  %2630 = vmatprep.mubr.bf16.mxu0 0
  %2631 = vmatmul.mubr.bf16.gmra.mrb[0].mxu0 %v2404
  %v2632 = vpop.f32.mrb[0].mxu0
  %v2633 = vadd.f32 0.0, %v2632
  %v2634 = vpop.f32.mrb[0].mxu0
  %v2635 = vpop.f32.mrb[0].mxu0
  %v2636 = vadd.f32 0.0, %v2635
  %v2637 = vpop.f32.mrb[0].mxu0
  %2638 = vmatprep.mubr.bf16.mxu0 0
  %2639 = vmatmul.mubr.bf16.gmra.mrb[0].mxu0 %v2413
  %v2640 = vpop.f32.mrb[0].mxu0
  %v2641 = vadd.f32 0.0, %v2640
  %v2642 = vpop.f32.mrb[0].mxu0
  %v2643 = vpop.f32.mrb[0].mxu0
  %v2644 = vadd.f32 0.0, %v2643
  %v2645 = vpop.f32.mrb[0].mxu0
  %2646 = vmatprep.mubr.bf16.mxu0 0
  %2647 = vmatmul.mubr.bf16.gmra.mrb[0].mxu0 %v2422
  %v2648 = vpop.f32.mrb[0].mxu0
  %v2649 = vadd.f32 0.0, %v2648
  %v2650 = vpop.f32.mrb[0].mxu0
  %v2651 = vpop.f32.mrb[0].mxu0
  %v2652 = vadd.f32 0.0, %v2651
  %v2653 = vpop.f32.mrb[0].mxu0
  %2654 = vmatprep.mubr.bf16.mxu0 0
  %2655 = vmatmul.mubr.bf16.gmra.mrb[0].mxu0 %v2431
  %v2656 = vpop.f32.mrb[0].mxu0
  %v2657 = vadd.f32 0.0, %v2656
  %v2658 = vpop.f32.mrb[0].mxu0
  %v2659 = vpop.f32.mrb[0].mxu0
  %v2660 = vadd.f32 0.0, %v2659
  %v2661 = vpop.f32.mrb[0].mxu0
  %2662 = vmatprep.mubr.bf16.mxu0 0
  %2663 = vmatmul.mubr.bf16.gmra.mrb[0].mxu0 %v2440
  %v2664 = vpop.f32.mrb[0].mxu0
  %v2665 = vadd.f32 0.0, %v2664
  %v2666 = vpop.f32.mrb[0].mxu0
  %v2667 = vpop.f32.mrb[0].mxu0
  %v2668 = vadd.f32 0.0, %v2667
  %v2669 = vpop.f32.mrb[0].mxu0
  %2670 = vmatprep.mubr.bf16.mxu0 0
  %2671 = vmatmul.mubr.bf16.gmra.mrb[0].mxu0 %v2449
  %v2672 = vpop.f32.mrb[0].mxu0
  %v2673 = vadd.f32 0.0, %v2672
  %v2674 = vpop.f32.mrb[0].mxu0
  %v2675 = vpop.f32.mrb[0].mxu0
  %v2676 = vadd.f32 0.0, %v2675
  %v2677 = vpop.f32.mrb[0].mxu0
  %2678 = vmatprep.mubr.bf16.mxu0 0
  %2679 = vmatmul.mubr.bf16.gmra.mrb[0].mxu0 %v2458
  %v2680 = vpop.f32.mrb[0].mxu0
  %v2681 = vadd.f32 0.0, %v2680
  %v2682 = vpop.f32.mrb[0].mxu0
  %v2683 = vpop.f32.mrb[0].mxu0
  %v2684 = vadd.f32 0.0, %v2683
  %v2685 = vpop.f32.mrb[0].mxu0
  %2686 = vmatprep.mubr.bf16.mxu0 0
  %2687 = vmatmul.mubr.bf16.gmra.mrb[0].mxu0 %v2467
  %v2688 = vpop.f32.mrb[0].mxu0
  %v2689 = vadd.f32 0.0, %v2688
  %v2690 = vpop.f32.mrb[0].mxu0
  %v2691 = vpop.f32.mrb[0].mxu0
  %v2692 = vadd.f32 0.0, %v2691
  %v2693 = vpop.f32.mrb[0].mxu0
  %2694 = vmatprep.mubr.bf16.mxu0 0
  %2695 = vmatmul.mubr.bf16.gmra.mrb[0].mxu0 %v2476
  %v2696 = vpop.f32.mrb[0].mxu0
  %v2697 = vadd.f32 0.0, %v2696
  %v2698 = vpop.f32.mrb[0].mxu0
  %v2699 = vpop.f32.mrb[0].mxu0
  %v2700 = vadd.f32 0.0, %v2699
  %v2701 = vpop.f32.mrb[0].mxu0
  %2702 = vmatprep.mubr.bf16.mxu0 0
  %2703 = vmatmul.mubr.bf16.gmra.mrb[0].mxu0 %v2485
  %v2704 = vpop.f32.mrb[0].mxu0
  %v2705 = vadd.f32 0.0, %v2704
  %v2706 = vpop.f32.mrb[0].mxu0
  %v2707 = vpop.f32.mrb[0].mxu0
  %v2708 = vadd.f32 0.0, %v2707
  %v2709 = vpop.f32.mrb[0].mxu0
  %2710 = vdwg.mxu0
  %v2711 = vadd.f32 %v2284, %v2585
  %v2712 = vadd.f32 %v2285, %v2588
  %v2713 = vadd.f32 %v2286, %v2593
  %v2714 = vadd.f32 %v2287, %v2596
  %v2715 = vadd.f32 %v2288, %v2601
  %v2716 = vadd.f32 %v2289, %v2604
  %v2717 = vadd.f32 %v2290, %v2609
  %v2718 = vadd.f32 %v2291, %v2612
  %v2719 = vadd.f32 %v2292, %v2617
  %v2720 = vadd.f32 %v2293, %v2620
  %v2721 = vadd.f32 %v2294, %v2625
  %v2722 = vadd.f32 %v2295, %v2628
  %v2723 = vadd.f32 %v2296, %v2633
  %v2724 = vadd.f32 %v2297, %v2636
  %v2725 = vadd.f32 %v2298, %v2641
  %v2726 = vadd.f32 %v2299, %v2644
  %v2727 = vadd.f32 %v2300, %v2649
  %v2728 = vadd.f32 %v2301, %v2652
  %v2729 = vadd.f32 %v2302, %v2657
  %v2730 = vadd.f32 %v2303, %v2660
  %v2731 = vadd.f32 %v2304, %v2665
  %v2732 = vadd.f32 %v2305, %v2668
  %v2733 = vadd.f32 %v2306, %v2673
  %v2734 = vadd.f32 %v2307, %v2676
  %v2735 = vadd.f32 %v2308, %v2681
  %v2736 = vadd.f32 %v2309, %v2684
  %v2737 = vadd.f32 %v2310, %v2689
  %v2738 = vadd.f32 %v2311, %v2692
  %v2739 = vadd.f32 %v2312, %v2697
  %v2740 = vadd.f32 %v2313, %v2700
  %v2741 = vadd.f32 %v2314, %v2705
  %v2742 = vadd.f32 %v2315, %v2708
  %s2743 = scalar_lea.vmem %s1, 512
  %v2744 = vld [vmem:[%s2743] sm:$0xf]
  %v2745 = vld [vmem:[%s2743 + $0x4] sm:$0xf]
  %v2746 = vld [vmem:[%s2743 + $0x8] sm:$0xf]
  %v2747 = vld [vmem:[%s2743 + $0xc] sm:$0xf]
  %v2748 = vld [vmem:[%s2743 + $0x10] sm:$0xf]
  %v2749 = vld [vmem:[%s2743 + $0x14] sm:$0xf]
  %v2750 = vld [vmem:[%s2743 + $0x18] sm:$0xf]
  %v2751 = vld [vmem:[%s2743 + $0x1c] sm:$0xf]
  %v2752 = vld [vmem:[%s2743 + $0x20] sm:$0xf]
  %v2753 = vld [vmem:[%s2743 + $0x24] sm:$0xf]
  %v2754 = vld [vmem:[%s2743 + $0x28] sm:$0xf]
  %v2755 = vld [vmem:[%s2743 + $0x2c] sm:$0xf]
  %v2756 = vld [vmem:[%s2743 + $0x30] sm:$0xf]
  %v2757 = vld [vmem:[%s2743 + $0x34] sm:$0xf]
  %v2758 = vld [vmem:[%s2743 + $0x38] sm:$0xf]
  %v2759 = vld [vmem:[%s2743 + $0x3c] sm:$0xf]
  %v2760 = vrot.slane %v1732, 3
  %v2761 = vrot.slane %v1733, 3
  %v2762 = vsel %vm1080, %v2760, %v2761
  %v2763 = vrot.slane %v1734, 3
  %v2764 = vsel %vm1080, %v2761, %v2763
  %v2765 = vrot.slane %v1735, 3
  %v2766 = vsel %vm1080, %v2763, %v2765
  %v2767 = vrot.slane %v1736, 3
  %v2768 = vsel %vm1080, %v2765, %v2767
  %v2769 = vrot.slane %v1737, 3
  %v2770 = vsel %vm1080, %v2767, %v2769
  %v2771 = vrot.slane %v1738, 3
  %v2772 = vsel %vm1080, %v2769, %v2771
  %v2773 = vrot.slane %v1739, 3
  %v2774 = vsel %vm1080, %v2771, %v2773
  %v2775 = vrot.slane %v1740, 3
  %v2776 = vsel %vm1080, %v2773, %v2775
  %v2777 = vrot.slane %v1741, 3
  %v2778 = vsel %vm1080, %v2775, %v2777
  %v2779 = vrot.slane %v1742, 3
  %v2780 = vsel %vm1080, %v2777, %v2779
  %v2781 = vrot.slane %v1743, 3
  %v2782 = vsel %vm1080, %v2779, %v2781
  %v2783 = vrot.slane %v1744, 3
  %v2784 = vsel %vm1080, %v2781, %v2783
  %v2785 = vrot.slane %v1745, 3
  %v2786 = vsel %vm1080, %v2783, %v2785
  %v2787 = vrot.slane %v1746, 3
  %v2788 = vsel %vm1080, %v2785, %v2787
  %v2789 = vrot.slane %v1747, 3
  %v2790 = vsel %vm1080, %v2787, %v2789
  %v2791 = vrot.slane %v2024, 3
  %v2792 = vsel %vm1080, %v2789, %v2791
  %v2825 = vunpack.c.l.b16 %v2744
  %v2826 = vunpack.c.l.b16 %v2745
  %v2827 = vunpack.c.l.b16 %v2746
  %v2828 = vunpack.c.l.b16 %v2747
  %v2829 = vunpack.c.l.b16 %v2748
  %v2830 = vunpack.c.l.b16 %v2749
  %v2831 = vunpack.c.l.b16 %v2750
  %v2832 = vunpack.c.l.b16 %v2751
  %v2833 = vunpack.c.l.b16 %v2752
  %v2834 = vunpack.c.l.b16 %v2753
  %v2835 = vunpack.c.l.b16 %v2754
  %v2836 = vunpack.c.l.b16 %v2755
  %v2837 = vunpack.c.l.b16 %v2756
  %v2838 = vunpack.c.l.b16 %v2757
  %v2839 = vunpack.c.l.b16 %v2758
  %v2840 = vunpack.c.l.b16 %v2759
  %v2841 = vpack.c.b16 %v2826, %v2825
  %v2842 = vpack.c.b16 %v2828, %v2827
  %v2843 = vpack.c.b16 %v2830, %v2829
  %v2844 = vpack.c.b16 %v2832, %v2831
  %v2845 = vpack.c.b16 %v2834, %v2833
  %v2846 = vpack.c.b16 %v2836, %v2835
  %v2847 = vpack.c.b16 %v2838, %v2837
  %v2848 = vpack.c.b16 %v2840, %v2839
  %2857 = vmatprep.subr.bf16.mxu0 0
  %2858 = vmatpush1.bf16.msra.mxu0 %v2841
  %2859 = vmatprep.subr.bf16.mxu0 0
  %2860 = vmatpush1.bf16.msra.mxu0 %v2842
  %2861 = vmatprep.subr.bf16.mxu0 0
  %2862 = vmatpush1.bf16.msra.mxu0 %v2843
  %2863 = vmatprep.subr.bf16.mxu0 0
  %2864 = vmatpush1.bf16.msra.mxu0 %v2844
  %2865 = vmatprep.subr.bf16.mxu0 0
  %2866 = vmatpush1.bf16.msra.mxu0 %v2845
  %2867 = vmatprep.subr.bf16.mxu0 0
  %2868 = vmatpush1.bf16.msra.mxu0 %v2846
  %2869 = vmatprep.subr.bf16.mxu0 0
  %2870 = vmatpush1.bf16.msra.mxu0 %v2847
  %2871 = vmatprep.subr.bf16.mxu0 0
  %2872 = vmatpush1.bf16.msra.mxu0 %v2848
  %2873 = vmatprep.subr.bf16.mxu0 0
  %2874 = vmatpush1.bf16.msra.mxu0 0
  %2875 = vmatprep.subr.bf16.mxu0 0
  %2876 = vmatpush1.bf16.msra.mxu0 0
  %2877 = vmatprep.subr.bf16.mxu0 0
  %2878 = vmatpush1.bf16.msra.mxu0 0
  %2879 = vmatprep.subr.bf16.mxu0 0
  %2880 = vmatpush1.bf16.msra.mxu0 0
  %2881 = vmatprep.subr.bf16.mxu0 0
  %2882 = vmatpush1.bf16.msra.mxu0 0
  %2883 = vmatprep.subr.bf16.mxu0 0
  %2884 = vmatpush1.bf16.msra.mxu0 0
  %2885 = vmatprep.subr.bf16.mxu0 0
  %2886 = vmatpush1.bf16.msra.mxu0 0
  %2887 = vmatprep.subr.bf16.mxu0 0
  %2888 = vmatpush1.bf16.msra.mxu0 0
  %2889 = vmatprep.mubr.bf16.mxu0 0
  %2890 = vmatmul.mubr.bf16.gmra.mrb[0].mxu0 %v2762
  %v2891 = vpop.f32.mrb[0].mxu0
  %v2892 = vadd.f32 0.0, %v2891
  %v2893 = vpop.f32.mrb[0].mxu0
  %v2894 = vpop.f32.mrb[0].mxu0
  %v2895 = vadd.f32 0.0, %v2894
  %v2896 = vpop.f32.mrb[0].mxu0
  %2897 = vmatprep.mubr.bf16.mxu0 0
  %2898 = vmatmul.mubr.bf16.gmra.mrb[0].mxu0 %v2764
  %v2899 = vpop.f32.mrb[0].mxu0
  %v2900 = vadd.f32 0.0, %v2899
  %v2901 = vpop.f32.mrb[0].mxu0
  %v2902 = vpop.f32.mrb[0].mxu0
  %v2903 = vadd.f32 0.0, %v2902
  %v2904 = vpop.f32.mrb[0].mxu0
  %2905 = vmatprep.mubr.bf16.mxu0 0
  %2906 = vmatmul.mubr.bf16.gmra.mrb[0].mxu0 %v2766
  %v2907 = vpop.f32.mrb[0].mxu0
  %v2908 = vadd.f32 0.0, %v2907
  %v2909 = vpop.f32.mrb[0].mxu0
  %v2910 = vpop.f32.mrb[0].mxu0
  %v2911 = vadd.f32 0.0, %v2910
  %v2912 = vpop.f32.mrb[0].mxu0
  %2913 = vmatprep.mubr.bf16.mxu0 0
  %2914 = vmatmul.mubr.bf16.gmra.mrb[0].mxu0 %v2768
  %v2915 = vpop.f32.mrb[0].mxu0
  %v2916 = vadd.f32 0.0, %v2915
  %v2917 = vpop.f32.mrb[0].mxu0
  %v2918 = vpop.f32.mrb[0].mxu0
  %v2919 = vadd.f32 0.0, %v2918
  %v2920 = vpop.f32.mrb[0].mxu0
  %2921 = vmatprep.mubr.bf16.mxu0 0
  %2922 = vmatmul.mubr.bf16.gmra.mrb[0].mxu0 %v2770
  %v2923 = vpop.f32.mrb[0].mxu0
  %v2924 = vadd.f32 0.0, %v2923
  %v2925 = vpop.f32.mrb[0].mxu0
  %v2926 = vpop.f32.mrb[0].mxu0
  %v2927 = vadd.f32 0.0, %v2926
  %v2928 = vpop.f32.mrb[0].mxu0
  %2929 = vmatprep.mubr.bf16.mxu0 0
  %2930 = vmatmul.mubr.bf16.gmra.mrb[0].mxu0 %v2772
  %v2931 = vpop.f32.mrb[0].mxu0
  %v2932 = vadd.f32 0.0, %v2931
  %v2933 = vpop.f32.mrb[0].mxu0
  %v2934 = vpop.f32.mrb[0].mxu0
  %v2935 = vadd.f32 0.0, %v2934
  %v2936 = vpop.f32.mrb[0].mxu0
  %2937 = vmatprep.mubr.bf16.mxu0 0
  %2938 = vmatmul.mubr.bf16.gmra.mrb[0].mxu0 %v2774
  %v2939 = vpop.f32.mrb[0].mxu0
  %v2940 = vadd.f32 0.0, %v2939
  %v2941 = vpop.f32.mrb[0].mxu0
  %v2942 = vpop.f32.mrb[0].mxu0
  %v2943 = vadd.f32 0.0, %v2942
  %v2944 = vpop.f32.mrb[0].mxu0
  %2945 = vmatprep.mubr.bf16.mxu0 0
  %2946 = vmatmul.mubr.bf16.gmra.mrb[0].mxu0 %v2776
  %v2947 = vpop.f32.mrb[0].mxu0
  %v2948 = vadd.f32 0.0, %v2947
  %v2949 = vpop.f32.mrb[0].mxu0
  %v2950 = vpop.f32.mrb[0].mxu0
  %v2951 = vadd.f32 0.0, %v2950
  %v2952 = vpop.f32.mrb[0].mxu0
  %2953 = vmatprep.mubr.bf16.mxu0 0
  %2954 = vmatmul.mubr.bf16.gmra.mrb[0].mxu0 %v2778
  %v2955 = vpop.f32.mrb[0].mxu0
  %v2956 = vadd.f32 0.0, %v2955
  %v2957 = vpop.f32.mrb[0].mxu0
  %v2958 = vpop.f32.mrb[0].mxu0
  %v2959 = vadd.f32 0.0, %v2958
  %v2960 = vpop.f32.mrb[0].mxu0
  %2961 = vmatprep.mubr.bf16.mxu0 0
  %2962 = vmatmul.mubr.bf16.gmra.mrb[0].mxu0 %v2780
  %v2963 = vpop.f32.mrb[0].mxu0
  %v2964 = vadd.f32 0.0, %v2963
  %v2965 = vpop.f32.mrb[0].mxu0
  %v2966 = vpop.f32.mrb[0].mxu0
  %v2967 = vadd.f32 0.0, %v2966
  %v2968 = vpop.f32.mrb[0].mxu0
  %2969 = vmatprep.mubr.bf16.mxu0 0
  %2970 = vmatmul.mubr.bf16.gmra.mrb[0].mxu0 %v2782
  %v2971 = vpop.f32.mrb[0].mxu0
  %v2972 = vadd.f32 0.0, %v2971
  %v2973 = vpop.f32.mrb[0].mxu0
  %v2974 = vpop.f32.mrb[0].mxu0
  %v2975 = vadd.f32 0.0, %v2974
  %v2976 = vpop.f32.mrb[0].mxu0
  %2977 = vmatprep.mubr.bf16.mxu0 0
  %2978 = vmatmul.mubr.bf16.gmra.mrb[0].mxu0 %v2784
  %v2979 = vpop.f32.mrb[0].mxu0
  %v2980 = vadd.f32 0.0, %v2979
  %v2981 = vpop.f32.mrb[0].mxu0
  %v2982 = vpop.f32.mrb[0].mxu0
  %v2983 = vadd.f32 0.0, %v2982
  %v2984 = vpop.f32.mrb[0].mxu0
  %2985 = vmatprep.mubr.bf16.mxu0 0
  %2986 = vmatmul.mubr.bf16.gmra.mrb[0].mxu0 %v2786
  %v2987 = vpop.f32.mrb[0].mxu0
  %v2988 = vadd.f32 0.0, %v2987
  %v2989 = vpop.f32.mrb[0].mxu0
  %v2990 = vpop.f32.mrb[0].mxu0
  %v2991 = vadd.f32 0.0, %v2990
  %v2992 = vpop.f32.mrb[0].mxu0
  %2993 = vmatprep.mubr.bf16.mxu0 0
  %2994 = vmatmul.mubr.bf16.gmra.mrb[0].mxu0 %v2788
  %v2995 = vpop.f32.mrb[0].mxu0
  %v2996 = vadd.f32 0.0, %v2995
  %v2997 = vpop.f32.mrb[0].mxu0
  %v2998 = vpop.f32.mrb[0].mxu0
  %v2999 = vadd.f32 0.0, %v2998
  %v3000 = vpop.f32.mrb[0].mxu0
  %3001 = vmatprep.mubr.bf16.mxu0 0
  %3002 = vmatmul.mubr.bf16.gmra.mrb[0].mxu0 %v2790
  %v3003 = vpop.f32.mrb[0].mxu0
  %v3004 = vadd.f32 0.0, %v3003
  %v3005 = vpop.f32.mrb[0].mxu0
  %v3006 = vpop.f32.mrb[0].mxu0
  %v3007 = vadd.f32 0.0, %v3006
  %v3008 = vpop.f32.mrb[0].mxu0
  %3009 = vmatprep.mubr.bf16.mxu0 0
  %3010 = vmatmul.mubr.bf16.gmra.mrb[0].mxu0 %v2792
  %v3011 = vpop.f32.mrb[0].mxu0
  %v3012 = vadd.f32 0.0, %v3011
  %v3013 = vpop.f32.mrb[0].mxu0
  %v3014 = vpop.f32.mrb[0].mxu0
  %v3015 = vadd.f32 0.0, %v3014
  %v3016 = vpop.f32.mrb[0].mxu0
  %3017 = vdwg.mxu0
  %v3018 = vadd.f32 %v2711, %v2892
  %v3019 = vadd.f32 %v2712, %v2895
  %v3020 = vadd.f32 %v2713, %v2900
  %v3021 = vadd.f32 %v2714, %v2903
  %v3022 = vadd.f32 %v2715, %v2908
  %v3023 = vadd.f32 %v2716, %v2911
  %v3024 = vadd.f32 %v2717, %v2916
  %v3025 = vadd.f32 %v2718, %v2919
  %v3026 = vadd.f32 %v2719, %v2924
  %v3027 = vadd.f32 %v2720, %v2927
  %v3028 = vadd.f32 %v2721, %v2932
  %v3029 = vadd.f32 %v2722, %v2935
  %v3030 = vadd.f32 %v2723, %v2940
  %v3031 = vadd.f32 %v2724, %v2943
  %v3032 = vadd.f32 %v2725, %v2948
  %v3033 = vadd.f32 %v2726, %v2951
  %v3034 = vadd.f32 %v2727, %v2956
  %v3035 = vadd.f32 %v2728, %v2959
  %v3036 = vadd.f32 %v2729, %v2964
  %v3037 = vadd.f32 %v2730, %v2967
  %v3038 = vadd.f32 %v2731, %v2972
  %v3039 = vadd.f32 %v2732, %v2975
  %v3040 = vadd.f32 %v2733, %v2980
  %v3041 = vadd.f32 %v2734, %v2983
  %v3042 = vadd.f32 %v2735, %v2988
  %v3043 = vadd.f32 %v2736, %v2991
  %v3044 = vadd.f32 %v2737, %v2996
  %v3045 = vadd.f32 %v2738, %v2999
  %v3046 = vadd.f32 %v2739, %v3004
  %v3047 = vadd.f32 %v2740, %v3007
  %v3048 = vadd.f32 %v2741, %v3012
  %v3049 = vadd.f32 %v2742, %v3015
  %v3050 = vld [vmem:[%s2] sm:$0xff]
  %v3051 = vld [vmem:[%s2 + $0x8] sm:$0xff]
  %v3052 = vld [vmem:[%s2 + $0x10] sm:$0xff]
  %v3053 = vld [vmem:[%s2 + $0x18] sm:$0xff]
  %v3054 = vld [vmem:[%s2 + $0x20] sm:$0xff]
  %v3055 = vld [vmem:[%s2 + $0x28] sm:$0xff]
  %v3056 = vld [vmem:[%s2 + $0x30] sm:$0xff]
  %v3057 = vld [vmem:[%s2 + $0x38] sm:$0xff]
  %v3058 = vld [vmem:[%s2 + $0x40] sm:$0xff]
  %v3059 = vld [vmem:[%s2 + $0x48] sm:$0xff]
  %v3060 = vld [vmem:[%s2 + $0x50] sm:$0xff]
  %v3061 = vld [vmem:[%s2 + $0x58] sm:$0xff]
  %v3062 = vld [vmem:[%s2 + $0x60] sm:$0xff]
  %v3063 = vld [vmem:[%s2 + $0x68] sm:$0xff]
  %v3064 = vld [vmem:[%s2 + $0x70] sm:$0xff]
  %v3065 = vld [vmem:[%s2 + $0x78] sm:$0xff]
  %v3066 = vld [vmem:[%s2 + $0x80] sm:$0xff]
  %v3067 = vld [vmem:[%s2 + $0x88] sm:$0xff]
  %v3068 = vld [vmem:[%s2 + $0x90] sm:$0xff]
  %v3069 = vld [vmem:[%s2 + $0x98] sm:$0xff]
  %v3070 = vld [vmem:[%s2 + $0xa0] sm:$0xff]
  %v3071 = vld [vmem:[%s2 + $0xa8] sm:$0xff]
  %v3072 = vld [vmem:[%s2 + $0xb0] sm:$0xff]
  %v3073 = vld [vmem:[%s2 + $0xb8] sm:$0xff]
  %v3074 = vld [vmem:[%s2 + $0xc0] sm:$0xff]
  %v3075 = vld [vmem:[%s2 + $0xc8] sm:$0xff]
  %v3076 = vld [vmem:[%s2 + $0xd0] sm:$0xff]
  %v3077 = vld [vmem:[%s2 + $0xd8] sm:$0xff]
  %v3078 = vld [vmem:[%s2 + $0xe0] sm:$0xff]
  %v3079 = vld [vmem:[%s2 + $0xe8] sm:$0xff]
  %v3080 = vld [vmem:[%s2 + $0xf0] sm:$0xff]
  %v3081 = vld [vmem:[%s2 + $0xf8] sm:$0xff]
  %3083 = vset.pattern.permute.xlu0 0
  %3084 = vperm.xlu0 %3083, %v3050
  %v3085 = vpop.permute.xlu0 %3084
  %3088 = vset.pattern.permute.xlu0 0
  %3089 = vperm.xlu0 %3088, %v3051
  %v3090 = vpop.permute.xlu0 %3089
  %3093 = vset.pattern.permute.xlu0 0
  %3094 = vperm.xlu0 %3093, %v3052
  %v3095 = vpop.permute.xlu0 %3094
  %3098 = vset.pattern.permute.xlu0 0
  %3099 = vperm.xlu0 %3098, %v3053
  %v3100 = vpop.permute.xlu0 %3099
  %3103 = vset.pattern.permute.xlu0 0
  %3104 = vperm.xlu0 %3103, %v3054
  %v3105 = vpop.permute.xlu0 %3104
  %3108 = vset.pattern.permute.xlu0 0
  %3109 = vperm.xlu0 %3108, %v3055
  %v3110 = vpop.permute.xlu0 %3109
  %3113 = vset.pattern.permute.xlu0 0
  %3114 = vperm.xlu0 %3113, %v3056
  %v3115 = vpop.permute.xlu0 %3114
  %3118 = vset.pattern.permute.xlu0 0
  %3119 = vperm.xlu0 %3118, %v3057
  %v3120 = vpop.permute.xlu0 %3119
  %3123 = vset.pattern.permute.xlu0 0
  %3124 = vperm.xlu0 %3123, %v3058
  %v3125 = vpop.permute.xlu0 %3124
  %3128 = vset.pattern.permute.xlu0 0
  %3129 = vperm.xlu0 %3128, %v3059
  %v3130 = vpop.permute.xlu0 %3129
  %3133 = vset.pattern.permute.xlu0 0
  %3134 = vperm.xlu0 %3133, %v3060
  %v3135 = vpop.permute.xlu0 %3134
  %3138 = vset.pattern.permute.xlu0 0
  %3139 = vperm.xlu0 %3138, %v3061
  %v3140 = vpop.permute.xlu0 %3139
  %3143 = vset.pattern.permute.xlu0 0
  %3144 = vperm.xlu0 %3143, %v3062
  %v3145 = vpop.permute.xlu0 %3144
  %3148 = vset.pattern.permute.xlu0 0
  %3149 = vperm.xlu0 %3148, %v3063
  %v3150 = vpop.permute.xlu0 %3149
  %3153 = vset.pattern.permute.xlu0 0
  %3154 = vperm.xlu0 %3153, %v3064
  %v3155 = vpop.permute.xlu0 %3154
  %3158 = vset.pattern.permute.xlu0 0
  %3159 = vperm.xlu0 %3158, %v3065
  %v3160 = vpop.permute.xlu0 %3159
  %3163 = vset.pattern.permute.xlu0 0
  %3164 = vperm.xlu0 %3163, %v3066
  %v3165 = vpop.permute.xlu0 %3164
  %3168 = vset.pattern.permute.xlu0 0
  %3169 = vperm.xlu0 %3168, %v3067
  %v3170 = vpop.permute.xlu0 %3169
  %3173 = vset.pattern.permute.xlu0 0
  %3174 = vperm.xlu0 %3173, %v3068
  %v3175 = vpop.permute.xlu0 %3174
  %3178 = vset.pattern.permute.xlu0 0
  %3179 = vperm.xlu0 %3178, %v3069
  %v3180 = vpop.permute.xlu0 %3179
  %3183 = vset.pattern.permute.xlu0 0
  %3184 = vperm.xlu0 %3183, %v3070
  %v3185 = vpop.permute.xlu0 %3184
  %3188 = vset.pattern.permute.xlu0 0
  %3189 = vperm.xlu0 %3188, %v3071
  %v3190 = vpop.permute.xlu0 %3189
  %3193 = vset.pattern.permute.xlu0 0
  %3194 = vperm.xlu0 %3193, %v3072
  %v3195 = vpop.permute.xlu0 %3194
  %3198 = vset.pattern.permute.xlu0 0
  %3199 = vperm.xlu0 %3198, %v3073
  %v3200 = vpop.permute.xlu0 %3199
  %3203 = vset.pattern.permute.xlu0 0
  %3204 = vperm.xlu0 %3203, %v3074
  %v3205 = vpop.permute.xlu0 %3204
  %3208 = vset.pattern.permute.xlu0 0
  %3209 = vperm.xlu0 %3208, %v3075
  %v3210 = vpop.permute.xlu0 %3209
  %3213 = vset.pattern.permute.xlu0 0
  %3214 = vperm.xlu0 %3213, %v3076
  %v3215 = vpop.permute.xlu0 %3214
  %3218 = vset.pattern.permute.xlu0 0
  %3219 = vperm.xlu0 %3218, %v3077
  %v3220 = vpop.permute.xlu0 %3219
  %3223 = vset.pattern.permute.xlu0 0
  %3224 = vperm.xlu0 %3223, %v3078
  %v3225 = vpop.permute.xlu0 %3224
  %3228 = vset.pattern.permute.xlu0 0
  %3229 = vperm.xlu0 %3228, %v3079
  %v3230 = vpop.permute.xlu0 %3229
  %3233 = vset.pattern.permute.xlu0 0
  %3234 = vperm.xlu0 %3233, %v3080
  %v3235 = vpop.permute.xlu0 %3234
  %3238 = vset.pattern.permute.xlu0 0
  %3239 = vperm.xlu0 %3238, %v3081
  %v3240 = vpop.permute.xlu0 %3239
  %v3242 = vmul.f32 %v3018, %v3085
  %v3243 = vmul.f32 %v3019, %v3090
  %v3244 = vmul.f32 %v3020, %v3095
  %v3245 = vmul.f32 %v3021, %v3100
  %v3246 = vmul.f32 %v3022, %v3105
  %v3247 = vmul.f32 %v3023, %v3110
  %v3248 = vmul.f32 %v3024, %v3115
  %v3249 = vmul.f32 %v3025, %v3120
  %v3250 = vmul.f32 %v3026, %v3125
  %v3251 = vmul.f32 %v3027, %v3130
  %v3252 = vmul.f32 %v3028, %v3135
  %v3253 = vmul.f32 %v3029, %v3140
  %v3254 = vmul.f32 %v3030, %v3145
  %v3255 = vmul.f32 %v3031, %v3150
  %v3256 = vmul.f32 %v3032, %v3155
  %v3257 = vmul.f32 %v3033, %v3160
  %v3258 = vmul.f32 %v3034, %v3165
  %v3259 = vmul.f32 %v3035, %v3170
  %v3260 = vmul.f32 %v3036, %v3175
  %v3261 = vmul.f32 %v3037, %v3180
  %v3262 = vmul.f32 %v3038, %v3185
  %v3263 = vmul.f32 %v3039, %v3190
  %v3264 = vmul.f32 %v3040, %v3195
  %v3265 = vmul.f32 %v3041, %v3200
  %v3266 = vmul.f32 %v3042, %v3205
  %v3267 = vmul.f32 %v3043, %v3210
  %v3268 = vmul.f32 %v3044, %v3215
  %v3269 = vmul.f32 %v3045, %v3220
  %v3270 = vmul.f32 %v3046, %v3225
  %v3271 = vmul.f32 %v3047, %v3230
  %v3272 = vmul.f32 %v3048, %v3235
  %v3273 = vmul.f32 %v3049, %v3240
  %v3274 = vadd.f32 %v3242, %v3243
  %v3275 = vadd.f32 %v3274, %v3244
  %v3276 = vadd.f32 %v3275, %v3245
  %v3277 = vadd.f32 %v3276, %v3246
  %v3278 = vadd.f32 %v3277, %v3247
  %v3279 = vadd.f32 %v3278, %v3248
  %v3280 = vadd.f32 %v3279, %v3249
  %v3281 = vadd.f32 %v3280, %v3250
  %v3282 = vadd.f32 %v3281, %v3251
  %v3283 = vadd.f32 %v3282, %v3252
  %v3284 = vadd.f32 %v3283, %v3253
  %v3285 = vadd.f32 %v3284, %v3254
  %v3286 = vadd.f32 %v3285, %v3255
  %v3287 = vadd.f32 %v3286, %v3256
  %v3288 = vadd.f32 %v3287, %v3257
  %v3289 = vadd.f32 %v3288, %v3258
  %v3290 = vadd.f32 %v3289, %v3259
  %v3291 = vadd.f32 %v3290, %v3260
  %v3292 = vadd.f32 %v3291, %v3261
  %v3293 = vadd.f32 %v3292, %v3262
  %v3294 = vadd.f32 %v3293, %v3263
  %v3295 = vadd.f32 %v3294, %v3264
  %v3296 = vadd.f32 %v3295, %v3265
  %v3297 = vadd.f32 %v3296, %v3266
  %v3298 = vadd.f32 %v3297, %v3267
  %v3299 = vadd.f32 %v3298, %v3268
  %v3300 = vadd.f32 %v3299, %v3269
  %v3301 = vadd.f32 %v3300, %v3270
  %v3302 = vadd.f32 %v3301, %v3271
  %v3303 = vadd.f32 %v3302, %v3272
  %v3304 = vadd.f32 %v3303, %v3273
  %v3305 = vrot.slane %v3304, 4
  %v3306 = vadd.f32 %v3304, %v3305
  %v3307 = vrot.slane %v3306, 2
  %v3308 = vadd.f32 %v3306, %v3307
  %v3309 = vrot.slane %v3308, 1
  %v3310 = vadd.f32 %v3308, %v3309
  %3311 = vst [vmem:[%s4] sm:$0x1] %v3310
  %v3312 = vmul.f32 %v3242, %v3018
  %v3313 = vmul.f32 %v3243, %v3019
  %v3314 = vmul.f32 %v3244, %v3020
  %v3315 = vmul.f32 %v3245, %v3021
  %v3316 = vmul.f32 %v3246, %v3022
  %v3317 = vmul.f32 %v3247, %v3023
  %v3318 = vmul.f32 %v3248, %v3024
  %v3319 = vmul.f32 %v3249, %v3025
  %v3320 = vmul.f32 %v3250, %v3026
  %v3321 = vmul.f32 %v3251, %v3027
  %v3322 = vmul.f32 %v3252, %v3028
  %v3323 = vmul.f32 %v3253, %v3029
  %v3324 = vmul.f32 %v3254, %v3030
  %v3325 = vmul.f32 %v3255, %v3031
  %v3326 = vmul.f32 %v3256, %v3032
  %v3327 = vmul.f32 %v3257, %v3033
  %v3328 = vmul.f32 %v3258, %v3034
  %v3329 = vmul.f32 %v3259, %v3035
  %v3330 = vmul.f32 %v3260, %v3036
  %v3331 = vmul.f32 %v3261, %v3037
  %v3332 = vmul.f32 %v3262, %v3038
  %v3333 = vmul.f32 %v3263, %v3039
  %v3334 = vmul.f32 %v3264, %v3040
  %v3335 = vmul.f32 %v3265, %v3041
  %v3336 = vmul.f32 %v3266, %v3042
  %v3337 = vmul.f32 %v3267, %v3043
  %v3338 = vmul.f32 %v3268, %v3044
  %v3339 = vmul.f32 %v3269, %v3045
  %v3340 = vmul.f32 %v3270, %v3046
  %v3341 = vmul.f32 %v3271, %v3047
  %v3342 = vmul.f32 %v3272, %v3048
  %v3343 = vmul.f32 %v3273, %v3049
  %v3344 = vadd.f32 %v3312, %v3313
  %v3345 = vadd.f32 %v3344, %v3314
  %v3346 = vadd.f32 %v3345, %v3315
  %v3347 = vadd.f32 %v3346, %v3316
  %v3348 = vadd.f32 %v3347, %v3317
  %v3349 = vadd.f32 %v3348, %v3318
  %v3350 = vadd.f32 %v3349, %v3319
  %v3351 = vadd.f32 %v3350, %v3320
  %v3352 = vadd.f32 %v3351, %v3321
  %v3353 = vadd.f32 %v3352, %v3322
  %v3354 = vadd.f32 %v3353, %v3323
  %v3355 = vadd.f32 %v3354, %v3324
  %v3356 = vadd.f32 %v3355, %v3325
  %v3357 = vadd.f32 %v3356, %v3326
  %v3358 = vadd.f32 %v3357, %v3327
  %v3359 = vadd.f32 %v3358, %v3328
  %v3360 = vadd.f32 %v3359, %v3329
  %v3361 = vadd.f32 %v3360, %v3330
  %v3362 = vadd.f32 %v3361, %v3331
  %v3363 = vadd.f32 %v3362, %v3332
  %v3364 = vadd.f32 %v3363, %v3333
  %v3365 = vadd.f32 %v3364, %v3334
  %v3366 = vadd.f32 %v3365, %v3335
  %v3367 = vadd.f32 %v3366, %v3336
  %v3368 = vadd.f32 %v3367, %v3337
  %v3369 = vadd.f32 %v3368, %v3338
  %v3370 = vadd.f32 %v3369, %v3339
  %v3371 = vadd.f32 %v3370, %v3340
  %v3372 = vadd.f32 %v3371, %v3341
  %v3373 = vadd.f32 %v3372, %v3342
  %v3374 = vadd.f32 %v3373, %v3343
  %v3375 = vrot.slane %v3374, 4
  %v3376 = vadd.f32 %v3374, %v3375
  %v3377 = vrot.slane %v3376, 2
  %v3378 = vadd.f32 %v3376, %v3377
  %v3379 = vrot.slane %v3378, 1
  %v3380 = vadd.f32 %v3378, %v3379
  %3381 = vst [vmem:[%s4 + $0x1] sm:$0x1] %v3380
  %v3382 = vpack.c.bf16 %v3019, %v3018
  %v3383 = vpack.c.bf16 %v3021, %v3020
  %v3384 = vpack.c.bf16 %v3023, %v3022
  %v3385 = vpack.c.bf16 %v3025, %v3024
  %v3386 = vpack.c.bf16 %v3027, %v3026
  %v3387 = vpack.c.bf16 %v3029, %v3028
  %v3388 = vpack.c.bf16 %v3031, %v3030
  %v3389 = vpack.c.bf16 %v3033, %v3032
  %v3390 = vpack.c.bf16 %v3035, %v3034
  %v3391 = vpack.c.bf16 %v3037, %v3036
  %v3392 = vpack.c.bf16 %v3039, %v3038
  %v3393 = vpack.c.bf16 %v3041, %v3040
  %v3394 = vpack.c.bf16 %v3043, %v3042
  %v3395 = vpack.c.bf16 %v3045, %v3044
  %v3396 = vpack.c.bf16 %v3047, %v3046
  %v3397 = vpack.c.bf16 %v3049, %v3048
  %v3414 = vunpack.c.l.b16 %v3382
  %v3415 = vunpack.c.h.b16 %v3382
  %v3416 = vunpack.c.l.b16 %v3383
  %v3417 = vunpack.c.h.b16 %v3383
  %v3418 = vunpack.c.l.b16 %v3384
  %v3419 = vunpack.c.h.b16 %v3384
  %v3420 = vunpack.c.l.b16 %v3385
  %v3421 = vunpack.c.h.b16 %v3385
  %v3422 = vunpack.c.l.b16 %v3386
  %v3423 = vunpack.c.h.b16 %v3386
  %v3424 = vunpack.c.l.b16 %v3387
  %v3425 = vunpack.c.h.b16 %v3387
  %v3426 = vunpack.c.l.b16 %v3388
  %v3427 = vunpack.c.h.b16 %v3388
  %v3428 = vunpack.c.l.b16 %v3389
  %v3429 = vunpack.c.h.b16 %v3389
  %v3430 = vunpack.c.l.b16 %v3390
  %v3431 = vunpack.c.h.b16 %v3390
  %v3432 = vunpack.c.l.b16 %v3391
  %v3433 = vunpack.c.h.b16 %v3391
  %v3434 = vunpack.c.l.b16 %v3392
  %v3435 = vunpack.c.h.b16 %v3392
  %v3436 = vunpack.c.l.b16 %v3393
  %v3437 = vunpack.c.h.b16 %v3393
  %v3438 = vunpack.c.l.b16 %v3394
  %v3439 = vunpack.c.h.b16 %v3394
  %v3440 = vunpack.c.l.b16 %v3395
  %v3441 = vunpack.c.h.b16 %v3395
  %v3442 = vunpack.c.l.b16 %v3396
  %v3443 = vunpack.c.h.b16 %v3396
  %v3444 = vunpack.c.l.b16 %v3397
  %v3445 = vunpack.c.h.b16 %v3397
  %v3446 = vpack.c.b16 %v3414, %v3414
  %v3447 = vpack.c.b16 %v3415, %v3415
  %v3448 = vpack.c.b16 %v3416, %v3416
  %v3449 = vpack.c.b16 %v3417, %v3417
  %v3450 = vpack.c.b16 %v3418, %v3418
  %v3451 = vpack.c.b16 %v3419, %v3419
  %v3452 = vpack.c.b16 %v3420, %v3420
  %v3453 = vpack.c.b16 %v3421, %v3421
  %v3454 = vpack.c.b16 %v3422, %v3422
  %v3455 = vpack.c.b16 %v3423, %v3423
  %v3456 = vpack.c.b16 %v3424, %v3424
  %v3457 = vpack.c.b16 %v3425, %v3425
  %v3458 = vpack.c.b16 %v3426, %v3426
  %v3459 = vpack.c.b16 %v3427, %v3427
  %v3460 = vpack.c.b16 %v3428, %v3428
  %v3461 = vpack.c.b16 %v3429, %v3429
  %v3462 = vpack.c.b16 %v3430, %v3430
  %v3463 = vpack.c.b16 %v3431, %v3431
  %v3464 = vpack.c.b16 %v3432, %v3432
  %v3465 = vpack.c.b16 %v3433, %v3433
  %v3466 = vpack.c.b16 %v3434, %v3434
  %v3467 = vpack.c.b16 %v3435, %v3435
  %v3468 = vpack.c.b16 %v3436, %v3436
  %v3469 = vpack.c.b16 %v3437, %v3437
  %v3470 = vpack.c.b16 %v3438, %v3438
  %v3471 = vpack.c.b16 %v3439, %v3439
  %v3472 = vpack.c.b16 %v3440, %v3440
  %v3473 = vpack.c.b16 %v3441, %v3441
  %v3474 = vpack.c.b16 %v3442, %v3442
  %v3475 = vpack.c.b16 %v3443, %v3443
  %v3476 = vpack.c.b16 %v3444, %v3444
  %v3477 = vpack.c.b16 %v3445, %v3445
  %3510 = vst [vmem:[%s3] sm:$0xf] %v3446
  %3511 = vst [vmem:[%s3 + $0x4] sm:$0xf] %v3447
  %3512 = vst [vmem:[%s3 + $0x8] sm:$0xf] %v3448
  %3513 = vst [vmem:[%s3 + $0xc] sm:$0xf] %v3449
  %3514 = vst [vmem:[%s3 + $0x10] sm:$0xf] %v3450
  %3515 = vst [vmem:[%s3 + $0x14] sm:$0xf] %v3451
  %3516 = vst [vmem:[%s3 + $0x18] sm:$0xf] %v3452
  %3517 = vst [vmem:[%s3 + $0x1c] sm:$0xf] %v3453
  %3518 = vst [vmem:[%s3 + $0x20] sm:$0xf] %v3454
  %3519 = vst [vmem:[%s3 + $0x24] sm:$0xf] %v3455
  %3520 = vst [vmem:[%s3 + $0x28] sm:$0xf] %v3456
  %3521 = vst [vmem:[%s3 + $0x2c] sm:$0xf] %v3457
  %3522 = vst [vmem:[%s3 + $0x30] sm:$0xf] %v3458
  %3523 = vst [vmem:[%s3 + $0x34] sm:$0xf] %v3459
  %3524 = vst [vmem:[%s3 + $0x38] sm:$0xf] %v3460
  %3525 = vst [vmem:[%s3 + $0x3c] sm:$0xf] %v3461
  %3526 = vst [vmem:[%s3 + $0x40] sm:$0xf] %v3462
  %3527 = vst [vmem:[%s3 + $0x44] sm:$0xf] %v3463
  %3528 = vst [vmem:[%s3 + $0x48] sm:$0xf] %v3464
  %3529 = vst [vmem:[%s3 + $0x4c] sm:$0xf] %v3465
  %3530 = vst [vmem:[%s3 + $0x50] sm:$0xf] %v3466
  %3531 = vst [vmem:[%s3 + $0x54] sm:$0xf] %v3467
  %3532 = vst [vmem:[%s3 + $0x58] sm:$0xf] %v3468
  %3533 = vst [vmem:[%s3 + $0x5c] sm:$0xf] %v3469
  %3534 = vst [vmem:[%s3 + $0x60] sm:$0xf] %v3470
  %3535 = vst [vmem:[%s3 + $0x64] sm:$0xf] %v3471
  %3536 = vst [vmem:[%s3 + $0x68] sm:$0xf] %v3472
  %3537 = vst [vmem:[%s3 + $0x6c] sm:$0xf] %v3473
  %3538 = vst [vmem:[%s3 + $0x70] sm:$0xf] %v3474
  %3539 = vst [vmem:[%s3 + $0x74] sm:$0xf] %v3475
  %3540 = vst [vmem:[%s3 + $0x78] sm:$0xf] %v3476
  %3541 = vst [vmem:[%s3 + $0x7c] sm:$0xf] %v3477
  // Predicated region
  $region14: #{cnn18_forward.33} parent=0 // pred_check
    _
  $region15: #{cnn18_forward.33} parent=0 // pred_check_branch
    %3543 = sbr.rel (0) target = $region17
  $region16: #{cnn18_forward.33} parent=0 // pred_region
    _
  $region17: #{cnn18_forward.33} parent=0 // pred_fallthru
    _
  // Predicated region
  $region18: #{cnn18_forward.33} parent=0 // pred_check
    _
  $region19: #{cnn18_forward.33} parent=0 // pred_check_branch
    %3545 = sbr.rel (0) target = $region21
  $region20: #{cnn18_forward.33} parent=0 // pred_region
    _
  $region21: #{cnn18_forward.33} parent=0 // pred_fallthru
    _
  // Predicated region
  $region22: #{cnn18_forward.33} parent=0 // pred_check
    _
  $region23: #{cnn18_forward.33} parent=0 // pred_check_branch
    %3547 = sbr.rel (0) target = $region25
  $region24: #{cnn18_forward.33} parent=0 // pred_region
    _
  $region25: #{cnn18_forward.33} parent=0 // pred_fallthru
    _
  // Predicated region
  $region26: #{cnn18_forward.33} parent=0 // pred_check
    _
  $region27: #{cnn18_forward.33} parent=0 // pred_check_branch
    %3549 = sbr.rel (0) target = $region29
  $region28: #{cnn18_forward.33} parent=0 // pred_region
    _
  $region29: #{cnn18_forward.33} parent=0 // pred_fallthru
    _

</llo_original>
